<compile_context>
chip_gen: v7x
topology: tpu7x:2x2x1
jax: 0.10.0
libtpu: 0.0.40
codegen_flags: <defaults>
</compile_context>

<pallas_src>
import jax
import jax.numpy as jnp
import numpy as np
from jax.experimental import pallas as pl
from jax.experimental.pallas import tpu as pltpu


def _round_up(x: int, m: int) -> int:
    return (x + m - 1) // m * m


# ----------------------------------------------------------------------------
# Fused Pallas kernel: conv3x3 -> ReLU -> conv3x3 -> ReLU -> maxpool 2x2 / 2
# ----------------------------------------------------------------------------
def _fused_conv_block_kernel(x_ref, w1_ref, w2_ref, o_ref,
                             acc1_ref, y1_ref, acc2_ref, wpool_ref):
    # x_ref : (1, H, W, CP)   NHWC, channel-padded, one image per grid step
    # w1_ref: (K, CP, K*CP)   column block kw holds W[kh, kw] as (Cin, Cout)
    # w2_ref: (K, CP, K*CP)
    # o_ref : (1, Hp, Wp, CP)
    _, H, W, CP = x_ref.shape
    K = w1_ref.shape[0]
    PAD = K - 1                      # accumulator column offset for kw shifts
    H1 = H - (K - 1)                 # conv1 output rows
    H2 = H - 2 * (K - 1)             # conv2 output rows
    W2 = W - 2 * (K - 1)             # conv2 output cols (padded-width frame)
    Hp, Wp = H2 // 2, W2 // 2        # pooled output

    def conv_accumulate(load_rows, w_ref, acc_ref, rows_out):
        # acc[h, PAD+wo, :] = sum_{kh,kw,ci} src[h+kh, wo+kw, ci] * w[kh,kw,ci,:]
        acc_ref[...] = jnp.zeros_like(acc_ref)
        for kh in range(K):
            # Leading-dim slice + sublane-aligned flatten (W % 8 == 0).
            lhs = load_rows(kh, rows_out).reshape(rows_out * W, CP)
            r = jnp.dot(lhs, w_ref[kh], preferred_element_type=jnp.float32)
            r = r.reshape(rows_out, W, K * CP)
            for kw in range(K):
                acc_ref[:, PAD - kw:PAD - kw + W, :] += (
                    r[:, :, kw * CP:(kw + 1) * CP])

    # conv1 + ReLU, kept at full padded width W (columns past the valid conv
    # width hold finite junk that the downstream valid slices exclude).
    conv_accumulate(lambda kh, rows: x_ref[0, kh:kh + rows, :, :],
                    w1_ref, acc1_ref, H1)
    y1_ref[...] = jnp.maximum(acc1_ref[:, PAD:PAD + W, :], 0.0)

    # conv2 (its ReLU is fused into the pooling epilogue below).
    conv_accumulate(lambda kh, rows: y1_ref[kh:kh + rows, :, :],
                    w2_ref, acc2_ref, H2)

    # ReLU + 2x2 stride-2 max-pool epilogue: pair W columns first, then H rows.
    for wp in range(Wp):
        c0 = jnp.maximum(acc2_ref[:, PAD + 2 * wp, :], 0.0)      # (H2, CP)
        c1 = jnp.maximum(acc2_ref[:, PAD + 2 * wp + 1, :], 0.0)
        wpool_ref[wp] = jnp.maximum(c0, c1)                      # (H2, CP)
    for hp in range(Hp):
        o_ref[0, hp] = jnp.maximum(wpool_ref[:, 2 * hp, :],
                                   wpool_ref[:, 2 * hp + 1, :]
                                   ).astype(o_ref.dtype)         # (Wp, CP)


# ----------------------------------------------------------------------------
# Wrapper: layout/padding glue around the single fused pallas_call
# ----------------------------------------------------------------------------
def conv_block_forward(x_nchw, weights):
    """ConvBlock.forward, downsample=True path. x: NCHW float32 -> NCHW."""
    assert len(weights) == 2, "fused kernel implements the default crs=2"
    N, C, H, W = x_nchw.shape
    K = weights[0].shape[-1]
    CP = _round_up(C, 128)           # lane-dense channel padding
    Wk = _round_up(W, 8)             # sublane-aligned width for in-kernel flattens

    H1 = H - (K - 1)
    H2 = H - 2 * (K - 1)
    W2k = Wk - 2 * (K - 1)
    Hp, Wpk = H2 // 2, W2k // 2
    Hp_true, Wp_true = (H - 2 * (K - 1)) // 2, (W - 2 * (K - 1)) // 2

    # NCHW -> NHWC, zero-pad channels (lanes) and width (sublane alignment).
    x = jnp.transpose(x_nchw, (0, 2, 3, 1)).astype(jnp.float32)
    x = jnp.pad(x, ((0, 0), (0, 0), (0, Wk - W), (0, CP - C)))

    # Conv weight (Cout, Cin, kh, kw) -> per-kh (CP, K*CP) with the kw blocks
    # concatenated along the output/lane axis; channel-padded with zeros.
    def prep(w):
        wt = jnp.transpose(w, (2, 3, 1, 0)).astype(jnp.float32)  # (K, K, Cin, Cout)
        wt = jnp.pad(wt, ((0, 0), (0, 0), (0, CP - C), (0, CP - C)))
        return jnp.concatenate([wt[:, kw] for kw in range(K)], axis=-1)

    w1c, w2c = prep(weights[0]), prep(weights[1])

    out = pl.pallas_call(
        _fused_conv_block_kernel,
        out_shape=jax.ShapeDtypeStruct((N, Hp, Wpk, CP), jnp.float32),
        grid=(N,),
        in_specs=[
            pl.BlockSpec((1, H, Wk, CP), lambda n: (n, 0, 0, 0)),
            pl.BlockSpec((K, CP, K * CP), lambda n: (0, 0, 0)),   # resident weights
            pl.BlockSpec((K, CP, K * CP), lambda n: (0, 0, 0)),   # resident weights
        ],
        out_specs=pl.BlockSpec((1, Hp, Wpk, CP), lambda n: (n, 0, 0, 0)),
        scratch_shapes=[
            pltpu.VMEM((H1, Wk + K - 1, CP), jnp.float32),   # conv1 accumulator
            pltpu.VMEM((H1, Wk, CP), jnp.float32),           # ReLU(conv1)
            pltpu.VMEM((H2, Wk + K - 1, CP), jnp.float32),   # conv2 accumulator
            pltpu.VMEM((Wpk, H2, CP), jnp.float32),          # W-pooled intermediate
        ],
        compiler_params=pltpu.CompilerParams(
            dimension_semantics=("parallel",)),
    )(x, w1c, w2c)

    # Drop channel / width padding, back to NCHW.
    out = out[:, :Hp_true, :Wp_true, :C]
    return jnp.transpose(out, (0, 3, 1, 2))


# ----------------------------------------------------------------------------
# Pure-JAX reference for validation
# ----------------------------------------------------------------------------
def conv_block_reference(x_nchw, weights):
    x = x_nchw
    for w in weights:
        x = jax.lax.conv_general_dilated(
            x, w, window_strides=(1, 1), padding="VALID",
            dimension_numbers=("NCHW", "OIHW", "NCHW"),
            precision=jax.lax.Precision.HIGHEST)
        x = jnp.maximum(x, 0.0)
    return jax.lax.reduce_window(
        x, -jnp.inf, jax.lax.max,
        window_dimensions=(1, 1, 2, 2), window_strides=(1, 1, 2, 2),
        padding="VALID")


# ----------------------------------------------------------------------------
if __name__ == "__main__":
    key = jax.random.PRNGKey(0)
    n_filters, kernel_size = 4, 3

    # Deterministic synthetic params (PyTorch Conv2d-style uniform init, no bias).
    fan_in = n_filters * kernel_size * kernel_size
    bound = 1.0 / np.sqrt(fan_in)
    k_x, k_w1, k_w2 = jax.random.split(key, 3)
    weights = [
        jax.random.uniform(k_w1, (n_filters, n_filters, kernel_size, kernel_size),
                           jnp.float32, -bound, bound),
        jax.random.uniform(k_w2, (n_filters, n_filters, kernel_size, kernel_size),
                           jnp.float32, -bound, bound),
    ]
    # Input: NCHW, batch=2, channels=4, spatial=16
    x = jax.random.normal(k_x, (2, n_filters, 16, 16), jnp.float32)

    out = jax.block_until_ready(jax.jit(conv_block_forward)(x, weights))
    ref = jax.block_until_ready(conv_block_reference(x, weights))

    assert out.shape == (2, n_filters, 6, 6), out.shape
    err = float(np.max(np.abs(np.asarray(out) - np.asarray(ref))))
    # All-f32 path: typically agrees to ~1e-5; the bound leaves headroom for MXU
    # f32 pass-decomposition differences between the Pallas dot and XLA's conv.
    assert np.allclose(np.asarray(out), np.asarray(ref), atol=5e-3, rtol=5e-3), (
        "mismatch vs reference: max abs err = %g" % err)

    print("KERNEL_OK")
</pallas_src>

<mosaic_0001>
module attributes {stable_mosaic.version = 11 : i64} {
  func.func @_fused_conv_block_kernel(%arg0: i32, %arg1: memref<1x16x16x128xf32, #tpu.memory_space<vmem>>, %arg2: memref<3x128x384xf32, #tpu.memory_space<vmem>>, %arg3: memref<3x128x384xf32, #tpu.memory_space<vmem>>, %arg4: memref<1x6x6x128xf32, #tpu.memory_space<vmem>>, %arg5: memref<14x18x128xf32, #tpu.memory_space<vmem>>, %arg6: memref<14x16x128xf32, #tpu.memory_space<vmem>>, %arg7: memref<12x18x128xf32, #tpu.memory_space<vmem>>, %arg8: memref<6x12x128xf32, #tpu.memory_space<vmem>>) attributes {dimension_semantics = [#tpu.dimension_semantics<parallel>], iteration_bounds = array<i64: 2>, scalar_prefetch = 0 : i64, scratch_operands = 4 : i64, tpu.core_type = #tpu.core_type<tc>, window_params = [{transform_indices = @transform_0, window_bounds = array<i64: 1, 16, 16, 128>}, {pipeline_mode = #tpu.pipeline_mode<synchronous>, transform_indices = @transform_1, window_bounds = array<i64: 3, 128, 384>}, {pipeline_mode = #tpu.pipeline_mode<synchronous>, transform_indices = @transform_2, window_bounds = array<i64: 3, 128, 384>}, {transform_indices = @transform_3, window_bounds = array<i64: 1, 6, 6, 128>}]} {
    %cst = arith.constant 0.000000e+00 : f32
    %0 = vector.broadcast %cst : f32 to vector<14x18x128xf32>
    %c0 = arith.constant 0 : index
    %c0_0 = arith.constant 0 : index
    %c0_1 = arith.constant 0 : index
    %1 = vector.load %arg5[%c0, %c0_0, %c0_1] : memref<14x18x128xf32, #tpu.memory_space<vmem>>, vector<14x18x128xf32>
    tpu.vector_store %arg5[%c0, %c0_0, %c0_1], %0 {strides = array<i32>} : memref<14x18x128xf32, #tpu.memory_space<vmem>>, vector<14x18x128xf32>,
    %c0_2 = arith.constant 0 : index
    %c0_3 = arith.constant 0 : index
    %c0_4 = arith.constant 0 : index
    %c0_5 = arith.constant 0 : index
    %2 = vector.load %arg1[%c0_2, %c0_3, %c0_4, %c0_5] : memref<1x16x16x128xf32, #tpu.memory_space<vmem>>, vector<1x14x16x128xf32>
    %3 = vector.shape_cast %2 : vector<1x14x16x128xf32> to vector<14x16x128xf32>
    %4 = vector.shape_cast %3 : vector<14x16x128xf32> to vector<224x128xf32>
    %c0_6 = arith.constant 0 : index
    %c0_7 = arith.constant 0 : index
    %c0_8 = arith.constant 0 : index
    %5 = vector.load %arg2[%c0_6, %c0_7, %c0_8] : memref<3x128x384xf32, #tpu.memory_space<vmem>>, vector<1x128x384xf32>
    %6 = vector.shape_cast %5 : vector<1x128x384xf32> to vector<128x384xf32>
    %cst_9 = arith.constant dense<0.000000e+00> : vector<224x384xf32>
    %7 = tpu.matmul %4, %6, %cst_9 {dimension_numbers = #tpu.dot_dimension_numbers<[1], [0], [0], [1], [0, 0, 1, 1], [], []>} : vector<224x128xf32>, vector<128x384xf32>, vector<224x384xf32> -> vector<224x384xf32>
    %8 = vector.shape_cast %7 : vector<224x384xf32> to vector<14x16x384xf32>
    %c0_10 = arith.constant 0 : index
    %c2 = arith.constant 2 : index
    %c0_11 = arith.constant 0 : index
    %9 = vector.load %arg5[%c0_10, %c2, %c0_11] : memref<14x18x128xf32, #tpu.memory_space<vmem>>, vector<14x16x128xf32>
    %10 = vector.extract_strided_slice %8 {offsets = [0, 0, 0], sizes = [14, 16, 128], strides = [1, 1, 1]} : vector<14x16x384xf32> to vector<14x16x128xf32>
    %11 = arith.addf %9, %10 : vector<14x16x128xf32>
    %c0_12 = arith.constant 0 : index
    %c2_13 = arith.constant 2 : index
    %c0_14 = arith.constant 0 : index
    %12 = vector.load %arg5[%c0_12, %c2_13, %c0_14] : memref<14x18x128xf32, #tpu.memory_space<vmem>>, vector<14x16x128xf32>
    tpu.vector_store %arg5[%c0_12, %c2_13, %c0_14], %11 {strides = array<i32>} : memref<14x18x128xf32, #tpu.memory_space<vmem>>, vector<14x16x128xf32>,
    %c0_15 = arith.constant 0 : index
    %c1 = arith.constant 1 : index
    %c0_16 = arith.constant 0 : index
    %13 = vector.load %arg5[%c0_15, %c1, %c0_16] : memref<14x18x128xf32, #tpu.memory_space<vmem>>, vector<14x16x128xf32>
    %14 = vector.extract_strided_slice %8 {offsets = [0, 0, 128], sizes = [14, 16, 128], strides = [1, 1, 1]} : vector<14x16x384xf32> to vector<14x16x128xf32>
    %15 = arith.addf %13, %14 : vector<14x16x128xf32>
    %c0_17 = arith.constant 0 : index
    %c1_18 = arith.constant 1 : index
    %c0_19 = arith.constant 0 : index
    %16 = vector.load %arg5[%c0_17, %c1_18, %c0_19] : memref<14x18x128xf32, #tpu.memory_space<vmem>>, vector<14x16x128xf32>
    tpu.vector_store %arg5[%c0_17, %c1_18, %c0_19], %15 {strides = array<i32>} : memref<14x18x128xf32, #tpu.memory_space<vmem>>, vector<14x16x128xf32>,
    %c0_20 = arith.constant 0 : index
    %c0_21 = arith.constant 0 : index
    %c0_22 = arith.constant 0 : index
    %17 = vector.load %arg5[%c0_20, %c0_21, %c0_22] : memref<14x18x128xf32, #tpu.memory_space<vmem>>, vector<14x16x128xf32>
    %18 = vector.extract_strided_slice %8 {offsets = [0, 0, 256], sizes = [14, 16, 128], strides = [1, 1, 1]} : vector<14x16x384xf32> to vector<14x16x128xf32>
    %19 = arith.addf %17, %18 : vector<14x16x128xf32>
    %c0_23 = arith.constant 0 : index
    %c0_24 = arith.constant 0 : index
    %c0_25 = arith.constant 0 : index
    %20 = vector.load %arg5[%c0_23, %c0_24, %c0_25] : memref<14x18x128xf32, #tpu.memory_space<vmem>>, vector<14x16x128xf32>
    tpu.vector_store %arg5[%c0_23, %c0_24, %c0_25], %19 {strides = array<i32>} : memref<14x18x128xf32, #tpu.memory_space<vmem>>, vector<14x16x128xf32>,
    %c0_26 = arith.constant 0 : index
    %c1_27 = arith.constant 1 : index
    %c0_28 = arith.constant 0 : index
    %c0_29 = arith.constant 0 : index
    %21 = vector.load %arg1[%c0_26, %c1_27, %c0_28, %c0_29] : memref<1x16x16x128xf32, #tpu.memory_space<vmem>>, vector<1x14x16x128xf32>
    %22 = vector.shape_cast %21 : vector<1x14x16x128xf32> to vector<14x16x128xf32>
    %23 = vector.shape_cast %22 : vector<14x16x128xf32> to vector<224x128xf32>
    %c1_30 = arith.constant 1 : index
    %c0_31 = arith.constant 0 : index
    %c0_32 = arith.constant 0 : index
    %24 = vector.load %arg2[%c1_30, %c0_31, %c0_32] : memref<3x128x384xf32, #tpu.memory_space<vmem>>, vector<1x128x384xf32>
    %25 = vector.shape_cast %24 : vector<1x128x384xf32> to vector<128x384xf32>
    %cst_33 = arith.constant dense<0.000000e+00> : vector<224x384xf32>
    %26 = tpu.matmul %23, %25, %cst_33 {dimension_numbers = #tpu.dot_dimension_numbers<[1], [0], [0], [1], [0, 0, 1, 1], [], []>} : vector<224x128xf32>, vector<128x384xf32>, vector<224x384xf32> -> vector<224x384xf32>
    %27 = vector.shape_cast %26 : vector<224x384xf32> to vector<14x16x384xf32>
    %c0_34 = arith.constant 0 : index
    %c2_35 = arith.constant 2 : index
    %c0_36 = arith.constant 0 : index
    %28 = vector.load %arg5[%c0_34, %c2_35, %c0_36] : memref<14x18x128xf32, #tpu.memory_space<vmem>>, vector<14x16x128xf32>
    %29 = vector.extract_strided_slice %27 {offsets = [0, 0, 0], sizes = [14, 16, 128], strides = [1, 1, 1]} : vector<14x16x384xf32> to vector<14x16x128xf32>
    %30 = arith.addf %28, %29 : vector<14x16x128xf32>
    %c0_37 = arith.constant 0 : index
    %c2_38 = arith.constant 2 : index
    %c0_39 = arith.constant 0 : index
    %31 = vector.load %arg5[%c0_37, %c2_38, %c0_39] : memref<14x18x128xf32, #tpu.memory_space<vmem>>, vector<14x16x128xf32>
    tpu.vector_store %arg5[%c0_37, %c2_38, %c0_39], %30 {strides = array<i32>} : memref<14x18x128xf32, #tpu.memory_space<vmem>>, vector<14x16x128xf32>,
    %c0_40 = arith.constant 0 : index
    %c1_41 = arith.constant 1 : index
    %c0_42 = arith.constant 0 : index
    %32 = vector.load %arg5[%c0_40, %c1_41, %c0_42] : memref<14x18x128xf32, #tpu.memory_space<vmem>>, vector<14x16x128xf32>
    %33 = vector.extract_strided_slice %27 {offsets = [0, 0, 128], sizes = [14, 16, 128], strides = [1, 1, 1]} : vector<14x16x384xf32> to vector<14x16x128xf32>
    %34 = arith.addf %32, %33 : vector<14x16x128xf32>
    %c0_43 = arith.constant 0 : index
    %c1_44 = arith.constant 1 : index
    %c0_45 = arith.constant 0 : index
    %35 = vector.load %arg5[%c0_43, %c1_44, %c0_45] : memref<14x18x128xf32, #tpu.memory_space<vmem>>, vector<14x16x128xf32>
    tpu.vector_store %arg5[%c0_43, %c1_44, %c0_45], %34 {strides = array<i32>} : memref<14x18x128xf32, #tpu.memory_space<vmem>>, vector<14x16x128xf32>,
    %c0_46 = arith.constant 0 : index
    %c0_47 = arith.constant 0 : index
    %c0_48 = arith.constant 0 : index
    %36 = vector.load %arg5[%c0_46, %c0_47, %c0_48] : memref<14x18x128xf32, #tpu.memory_space<vmem>>, vector<14x16x128xf32>
    %37 = vector.extract_strided_slice %27 {offsets = [0, 0, 256], sizes = [14, 16, 128], strides = [1, 1, 1]} : vector<14x16x384xf32> to vector<14x16x128xf32>
    %38 = arith.addf %36, %37 : vector<14x16x128xf32>
    %c0_49 = arith.constant 0 : index
    %c0_50 = arith.constant 0 : index
    %c0_51 = arith.constant 0 : index
    %39 = vector.load %arg5[%c0_49, %c0_50, %c0_51] : memref<14x18x128xf32, #tpu.memory_space<vmem>>, vector<14x16x128xf32>
    tpu.vector_store %arg5[%c0_49, %c0_50, %c0_51], %38 {strides = array<i32>} : memref<14x18x128xf32, #tpu.memory_space<vmem>>, vector<14x16x128xf32>,
    %c0_52 = arith.constant 0 : index
    %c2_53 = arith.constant 2 : index
    %c0_54 = arith.constant 0 : index
    %c0_55 = arith.constant 0 : index
    %40 = vector.load %arg1[%c0_52, %c2_53, %c0_54, %c0_55] : memref<1x16x16x128xf32, #tpu.memory_space<vmem>>, vector<1x14x16x128xf32>
    %41 = vector.shape_cast %40 : vector<1x14x16x128xf32> to vector<14x16x128xf32>
    %42 = vector.shape_cast %41 : vector<14x16x128xf32> to vector<224x128xf32>
    %c2_56 = arith.constant 2 : index
    %c0_57 = arith.constant 0 : index
    %c0_58 = arith.constant 0 : index
    %43 = vector.load %arg2[%c2_56, %c0_57, %c0_58] : memref<3x128x384xf32, #tpu.memory_space<vmem>>, vector<1x128x384xf32>
    %44 = vector.shape_cast %43 : vector<1x128x384xf32> to vector<128x384xf32>
    %cst_59 = arith.constant dense<0.000000e+00> : vector<224x384xf32>
    %45 = tpu.matmul %42, %44, %cst_59 {dimension_numbers = #tpu.dot_dimension_numbers<[1], [0], [0], [1], [0, 0, 1, 1], [], []>} : vector<224x128xf32>, vector<128x384xf32>, vector<224x384xf32> -> vector<224x384xf32>
    %46 = vector.shape_cast %45 : vector<224x384xf32> to vector<14x16x384xf32>
    %c0_60 = arith.constant 0 : index
    %c2_61 = arith.constant 2 : index
    %c0_62 = arith.constant 0 : index
    %47 = vector.load %arg5[%c0_60, %c2_61, %c0_62] : memref<14x18x128xf32, #tpu.memory_space<vmem>>, vector<14x16x128xf32>
    %48 = vector.extract_strided_slice %46 {offsets = [0, 0, 0], sizes = [14, 16, 128], strides = [1, 1, 1]} : vector<14x16x384xf32> to vector<14x16x128xf32>
    %49 = arith.addf %47, %48 : vector<14x16x128xf32>
    %c0_63 = arith.constant 0 : index
    %c2_64 = arith.constant 2 : index
    %c0_65 = arith.constant 0 : index
    %50 = vector.load %arg5[%c0_63, %c2_64, %c0_65] : memref<14x18x128xf32, #tpu.memory_space<vmem>>, vector<14x16x128xf32>
    tpu.vector_store %arg5[%c0_63, %c2_64, %c0_65], %49 {strides = array<i32>} : memref<14x18x128xf32, #tpu.memory_space<vmem>>, vector<14x16x128xf32>,
    %c0_66 = arith.constant 0 : index
    %c1_67 = arith.constant 1 : index
    %c0_68 = arith.constant 0 : index
    %51 = vector.load %arg5[%c0_66, %c1_67, %c0_68] : memref<14x18x128xf32, #tpu.memory_space<vmem>>, vector<14x16x128xf32>
    %52 = vector.extract_strided_slice %46 {offsets = [0, 0, 128], sizes = [14, 16, 128], strides = [1, 1, 1]} : vector<14x16x384xf32> to vector<14x16x128xf32>
    %53 = arith.addf %51, %52 : vector<14x16x128xf32>
    %c0_69 = arith.constant 0 : index
    %c1_70 = arith.constant 1 : index
    %c0_71 = arith.constant 0 : index
    %54 = vector.load %arg5[%c0_69, %c1_70, %c0_71] : memref<14x18x128xf32, #tpu.memory_space<vmem>>, vector<14x16x128xf32>
    tpu.vector_store %arg5[%c0_69, %c1_70, %c0_71], %53 {strides = array<i32>} : memref<14x18x128xf32, #tpu.memory_space<vmem>>, vector<14x16x128xf32>,
    %c0_72 = arith.constant 0 : index
    %c0_73 = arith.constant 0 : index
    %c0_74 = arith.constant 0 : index
    %55 = vector.load %arg5[%c0_72, %c0_73, %c0_74] : memref<14x18x128xf32, #tpu.memory_space<vmem>>, vector<14x16x128xf32>
    %56 = vector.extract_strided_slice %46 {offsets = [0, 0, 256], sizes = [14, 16, 128], strides = [1, 1, 1]} : vector<14x16x384xf32> to vector<14x16x128xf32>
    %57 = arith.addf %55, %56 : vector<14x16x128xf32>
    %c0_75 = arith.constant 0 : index
    %c0_76 = arith.constant 0 : index
    %c0_77 = arith.constant 0 : index
    %58 = vector.load %arg5[%c0_75, %c0_76, %c0_77] : memref<14x18x128xf32, #tpu.memory_space<vmem>>, vector<14x16x128xf32>
    tpu.vector_store %arg5[%c0_75, %c0_76, %c0_77], %57 {strides = array<i32>} : memref<14x18x128xf32, #tpu.memory_space<vmem>>, vector<14x16x128xf32>,
    %c0_78 = arith.constant 0 : index
    %c2_79 = arith.constant 2 : index
    %c0_80 = arith.constant 0 : index
    %59 = vector.load %arg5[%c0_78, %c2_79, %c0_80] : memref<14x18x128xf32, #tpu.memory_space<vmem>>, vector<14x16x128xf32>
    %cst_81 = arith.constant 0.000000e+00 : f32
    %60 = vector.broadcast %cst_81 : f32 to vector<14x16x128xf32>
    %61 = arith.maximumf %59, %60 : vector<14x16x128xf32>
    %c0_82 = arith.constant 0 : index
    %c0_83 = arith.constant 0 : index
    %c0_84 = arith.constant 0 : index
    %62 = vector.load %arg6[%c0_82, %c0_83, %c0_84] : memref<14x16x128xf32, #tpu.memory_space<vmem>>, vector<14x16x128xf32>
    tpu.vector_store %arg6[%c0_82, %c0_83, %c0_84], %61 {strides = array<i32>} : memref<14x16x128xf32, #tpu.memory_space<vmem>>, vector<14x16x128xf32>,
    %cst_85 = arith.constant 0.000000e+00 : f32
    %63 = vector.broadcast %cst_85 : f32 to vector<12x18x128xf32>
    %c0_86 = arith.constant 0 : index
    %c0_87 = arith.constant 0 : index
    %c0_88 = arith.constant 0 : index
    %64 = vector.load %arg7[%c0_86, %c0_87, %c0_88] : memref<12x18x128xf32, #tpu.memory_space<vmem>>, vector<12x18x128xf32>
    tpu.vector_store %arg7[%c0_86, %c0_87, %c0_88], %63 {strides = array<i32>} : memref<12x18x128xf32, #tpu.memory_space<vmem>>, vector<12x18x128xf32>,
    %c0_89 = arith.constant 0 : index
    %c0_90 = arith.constant 0 : index
    %c0_91 = arith.constant 0 : index
    %65 = vector.load %arg6[%c0_89, %c0_90, %c0_91] : memref<14x16x128xf32, #tpu.memory_space<vmem>>, vector<12x16x128xf32>
    %66 = vector.shape_cast %65 : vector<12x16x128xf32> to vector<192x128xf32>
    %c0_92 = arith.constant 0 : index
    %c0_93 = arith.constant 0 : index
    %c0_94 = arith.constant 0 : index
    %67 = vector.load %arg3[%c0_92, %c0_93, %c0_94] : memref<3x128x384xf32, #tpu.memory_space<vmem>>, vector<1x128x384xf32>
    %68 = vector.shape_cast %67 : vector<1x128x384xf32> to vector<128x384xf32>
    %cst_95 = arith.constant dense<0.000000e+00> : vector<192x384xf32>
    %69 = tpu.matmul %66, %68, %cst_95 {dimension_numbers = #tpu.dot_dimension_numbers<[1], [0], [0], [1], [0, 0, 1, 1], [], []>} : vector<192x128xf32>, vector<128x384xf32>, vector<192x384xf32> -> vector<192x384xf32>
    %70 = vector.shape_cast %69 : vector<192x384xf32> to vector<12x16x384xf32>
    %c0_96 = arith.constant 0 : index
    %c2_97 = arith.constant 2 : index
    %c0_98 = arith.constant 0 : index
    %71 = vector.load %arg7[%c0_96, %c2_97, %c0_98] : memref<12x18x128xf32, #tpu.memory_space<vmem>>, vector<12x16x128xf32>
    %72 = vector.extract_strided_slice %70 {offsets = [0, 0, 0], sizes = [12, 16, 128], strides = [1, 1, 1]} : vector<12x16x384xf32> to vector<12x16x128xf32>
    %73 = arith.addf %71, %72 : vector<12x16x128xf32>
    %c0_99 = arith.constant 0 : index
    %c2_100 = arith.constant 2 : index
    %c0_101 = arith.constant 0 : index
    %74 = vector.load %arg7[%c0_99, %c2_100, %c0_101] : memref<12x18x128xf32, #tpu.memory_space<vmem>>, vector<12x16x128xf32>
    tpu.vector_store %arg7[%c0_99, %c2_100, %c0_101], %73 {strides = array<i32>} : memref<12x18x128xf32, #tpu.memory_space<vmem>>, vector<12x16x128xf32>,
    %c0_102 = arith.constant 0 : index
    %c1_103 = arith.constant 1 : index
    %c0_104 = arith.constant 0 : index
    %75 = vector.load %arg7[%c0_102, %c1_103, %c0_104] : memref<12x18x128xf32, #tpu.memory_space<vmem>>, vector<12x16x128xf32>
    %76 = vector.extract_strided_slice %70 {offsets = [0, 0, 128], sizes = [12, 16, 128], strides = [1, 1, 1]} : vector<12x16x384xf32> to vector<12x16x128xf32>
    %77 = arith.addf %75, %76 : vector<12x16x128xf32>
    %c0_105 = arith.constant 0 : index
    %c1_106 = arith.constant 1 : index
    %c0_107 = arith.constant 0 : index
    %78 = vector.load %arg7[%c0_105, %c1_106, %c0_107] : memref<12x18x128xf32, #tpu.memory_space<vmem>>, vector<12x16x128xf32>
    tpu.vector_store %arg7[%c0_105, %c1_106, %c0_107], %77 {strides = array<i32>} : memref<12x18x128xf32, #tpu.memory_space<vmem>>, vector<12x16x128xf32>,
    %c0_108 = arith.constant 0 : index
    %c0_109 = arith.constant 0 : index
    %c0_110 = arith.constant 0 : index
    %79 = vector.load %arg7[%c0_108, %c0_109, %c0_110] : memref<12x18x128xf32, #tpu.memory_space<vmem>>, vector<12x16x128xf32>
    %80 = vector.extract_strided_slice %70 {offsets = [0, 0, 256], sizes = [12, 16, 128], strides = [1, 1, 1]} : vector<12x16x384xf32> to vector<12x16x128xf32>
    %81 = arith.addf %79, %80 : vector<12x16x128xf32>
    %c0_111 = arith.constant 0 : index
    %c0_112 = arith.constant 0 : index
    %c0_113 = arith.constant 0 : index
    %82 = vector.load %arg7[%c0_111, %c0_112, %c0_113] : memref<12x18x128xf32, #tpu.memory_space<vmem>>, vector<12x16x128xf32>
    tpu.vector_store %arg7[%c0_111, %c0_112, %c0_113], %81 {strides = array<i32>} : memref<12x18x128xf32, #tpu.memory_space<vmem>>, vector<12x16x128xf32>,
    %c1_114 = arith.constant 1 : index
    %c0_115 = arith.constant 0 : index
    %c0_116 = arith.constant 0 : index
    %83 = vector.load %arg6[%c1_114, %c0_115, %c0_116] : memref<14x16x128xf32, #tpu.memory_space<vmem>>, vector<12x16x128xf32>
    %84 = vector.shape_cast %83 : vector<12x16x128xf32> to vector<192x128xf32>
    %c1_117 = arith.constant 1 : index
    %c0_118 = arith.constant 0 : index
    %c0_119 = arith.constant 0 : index
    %85 = vector.load %arg3[%c1_117, %c0_118, %c0_119] : memref<3x128x384xf32, #tpu.memory_space<vmem>>, vector<1x128x384xf32>
    %86 = vector.shape_cast %85 : vector<1x128x384xf32> to vector<128x384xf32>
    %cst_120 = arith.constant dense<0.000000e+00> : vector<192x384xf32>
    %87 = tpu.matmul %84, %86, %cst_120 {dimension_numbers = #tpu.dot_dimension_numbers<[1], [0], [0], [1], [0, 0, 1, 1], [], []>} : vector<192x128xf32>, vector<128x384xf32>, vector<192x384xf32> -> vector<192x384xf32>
    %88 = vector.shape_cast %87 : vector<192x384xf32> to vector<12x16x384xf32>
    %c0_121 = arith.constant 0 : index
    %c2_122 = arith.constant 2 : index
    %c0_123 = arith.constant 0 : index
    %89 = vector.load %arg7[%c0_121, %c2_122, %c0_123] : memref<12x18x128xf32, #tpu.memory_space<vmem>>, vector<12x16x128xf32>
    %90 = vector.extract_strided_slice %88 {offsets = [0, 0, 0], sizes = [12, 16, 128], strides = [1, 1, 1]} : vector<12x16x384xf32> to vector<12x16x128xf32>
    %91 = arith.addf %89, %90 : vector<12x16x128xf32>
    %c0_124 = arith.constant 0 : index
    %c2_125 = arith.constant 2 : index
    %c0_126 = arith.constant 0 : index
    %92 = vector.load %arg7[%c0_124, %c2_125, %c0_126] : memref<12x18x128xf32, #tpu.memory_space<vmem>>, vector<12x16x128xf32>
    tpu.vector_store %arg7[%c0_124, %c2_125, %c0_126], %91 {strides = array<i32>} : memref<12x18x128xf32, #tpu.memory_space<vmem>>, vector<12x16x128xf32>,
    %c0_127 = arith.constant 0 : index
    %c1_128 = arith.constant 1 : index
    %c0_129 = arith.constant 0 : index
    %93 = vector.load %arg7[%c0_127, %c1_128, %c0_129] : memref<12x18x128xf32, #tpu.memory_space<vmem>>, vector<12x16x128xf32>
    %94 = vector.extract_strided_slice %88 {offsets = [0, 0, 128], sizes = [12, 16, 128], strides = [1, 1, 1]} : vector<12x16x384xf32> to vector<12x16x128xf32>
    %95 = arith.addf %93, %94 : vector<12x16x128xf32>
    %c0_130 = arith.constant 0 : index
    %c1_131 = arith.constant 1 : index
    %c0_132 = arith.constant 0 : index
    %96 = vector.load %arg7[%c0_130, %c1_131, %c0_132] : memref<12x18x128xf32, #tpu.memory_space<vmem>>, vector<12x16x128xf32>
    tpu.vector_store %arg7[%c0_130, %c1_131, %c0_132], %95 {strides = array<i32>} : memref<12x18x128xf32, #tpu.memory_space<vmem>>, vector<12x16x128xf32>,
    %c0_133 = arith.constant 0 : index
    %c0_134 = arith.constant 0 : index
    %c0_135 = arith.constant 0 : index
    %97 = vector.load %arg7[%c0_133, %c0_134, %c0_135] : memref<12x18x128xf32, #tpu.memory_space<vmem>>, vector<12x16x128xf32>
    %98 = vector.extract_strided_slice %88 {offsets = [0, 0, 256], sizes = [12, 16, 128], strides = [1, 1, 1]} : vector<12x16x384xf32> to vector<12x16x128xf32>
    %99 = arith.addf %97, %98 : vector<12x16x128xf32>
    %c0_136 = arith.constant 0 : index
    %c0_137 = arith.constant 0 : index
    %c0_138 = arith.constant 0 : index
    %100 = vector.load %arg7[%c0_136, %c0_137, %c0_138] : memref<12x18x128xf32, #tpu.memory_space<vmem>>, vector<12x16x128xf32>
    tpu.vector_store %arg7[%c0_136, %c0_137, %c0_138], %99 {strides = array<i32>} : memref<12x18x128xf32, #tpu.memory_space<vmem>>, vector<12x16x128xf32>,
    %c2_139 = arith.constant 2 : index
    %c0_140 = arith.constant 0 : index
    %c0_141 = arith.constant 0 : index
    %101 = vector.load %arg6[%c2_139, %c0_140, %c0_141] : memref<14x16x128xf32, #tpu.memory_space<vmem>>, vector<12x16x128xf32>
    %102 = vector.shape_cast %101 : vector<12x16x128xf32> to vector<192x128xf32>
    %c2_142 = arith.constant 2 : index
    %c0_143 = arith.constant 0 : index
    %c0_144 = arith.constant 0 : index
    %103 = vector.load %arg3[%c2_142, %c0_143, %c0_144] : memref<3x128x384xf32, #tpu.memory_space<vmem>>, vector<1x128x384xf32>
    %104 = vector.shape_cast %103 : vector<1x128x384xf32> to vector<128x384xf32>
    %cst_145 = arith.constant dense<0.000000e+00> : vector<192x384xf32>
    %105 = tpu.matmul %102, %104, %cst_145 {dimension_numbers = #tpu.dot_dimension_numbers<[1], [0], [0], [1], [0, 0, 1, 1], [], []>} : vector<192x128xf32>, vector<128x384xf32>, vector<192x384xf32> -> vector<192x384xf32>
    %106 = vector.shape_cast %105 : vector<192x384xf32> to vector<12x16x384xf32>
    %c0_146 = arith.constant 0 : index
    %c2_147 = arith.constant 2 : index
    %c0_148 = arith.constant 0 : index
    %107 = vector.load %arg7[%c0_146, %c2_147, %c0_148] : memref<12x18x128xf32, #tpu.memory_space<vmem>>, vector<12x16x128xf32>
    %108 = vector.extract_strided_slice %106 {offsets = [0, 0, 0], sizes = [12, 16, 128], strides = [1, 1, 1]} : vector<12x16x384xf32> to vector<12x16x128xf32>
    %109 = arith.addf %107, %108 : vector<12x16x128xf32>
    %c0_149 = arith.constant 0 : index
    %c2_150 = arith.constant 2 : index
    %c0_151 = arith.constant 0 : index
    %110 = vector.load %arg7[%c0_149, %c2_150, %c0_151] : memref<12x18x128xf32, #tpu.memory_space<vmem>>, vector<12x16x128xf32>
    tpu.vector_store %arg7[%c0_149, %c2_150, %c0_151], %109 {strides = array<i32>} : memref<12x18x128xf32, #tpu.memory_space<vmem>>, vector<12x16x128xf32>,
    %c0_152 = arith.constant 0 : index
    %c1_153 = arith.constant 1 : index
    %c0_154 = arith.constant 0 : index
    %111 = vector.load %arg7[%c0_152, %c1_153, %c0_154] : memref<12x18x128xf32, #tpu.memory_space<vmem>>, vector<12x16x128xf32>
    %112 = vector.extract_strided_slice %106 {offsets = [0, 0, 128], sizes = [12, 16, 128], strides = [1, 1, 1]} : vector<12x16x384xf32> to vector<12x16x128xf32>
    %113 = arith.addf %111, %112 : vector<12x16x128xf32>
    %c0_155 = arith.constant 0 : index
    %c1_156 = arith.constant 1 : index
    %c0_157 = arith.constant 0 : index
    %114 = vector.load %arg7[%c0_155, %c1_156, %c0_157] : memref<12x18x128xf32, #tpu.memory_space<vmem>>, vector<12x16x128xf32>
    tpu.vector_store %arg7[%c0_155, %c1_156, %c0_157], %113 {strides = array<i32>} : memref<12x18x128xf32, #tpu.memory_space<vmem>>, vector<12x16x128xf32>,
    %c0_158 = arith.constant 0 : index
    %c0_159 = arith.constant 0 : index
    %c0_160 = arith.constant 0 : index
    %115 = vector.load %arg7[%c0_158, %c0_159, %c0_160] : memref<12x18x128xf32, #tpu.memory_space<vmem>>, vector<12x16x128xf32>
    %116 = vector.extract_strided_slice %106 {offsets = [0, 0, 256], sizes = [12, 16, 128], strides = [1, 1, 1]} : vector<12x16x384xf32> to vector<12x16x128xf32>
    %117 = arith.addf %115, %116 : vector<12x16x128xf32>
    %c0_161 = arith.constant 0 : index
    %c0_162 = arith.constant 0 : index
    %c0_163 = arith.constant 0 : index
    %118 = vector.load %arg7[%c0_161, %c0_162, %c0_163] : memref<12x18x128xf32, #tpu.memory_space<vmem>>, vector<12x16x128xf32>
    tpu.vector_store %arg7[%c0_161, %c0_162, %c0_163], %117 {strides = array<i32>} : memref<12x18x128xf32, #tpu.memory_space<vmem>>, vector<12x16x128xf32>,
    %c0_164 = arith.constant 0 : index
    %c2_165 = arith.constant 2 : index
    %c0_166 = arith.constant 0 : index
    %119 = vector.load %arg7[%c0_164, %c2_165, %c0_166] : memref<12x18x128xf32, #tpu.memory_space<vmem>>, vector<12x1x128xf32>
    %120 = vector.shape_cast %119 : vector<12x1x128xf32> to vector<12x128xf32>
    %cst_167 = arith.constant 0.000000e+00 : f32
    %121 = vector.broadcast %cst_167 : f32 to vector<12x128xf32>
    %122 = arith.maximumf %120, %121 : vector<12x128xf32>
    %c0_168 = arith.constant 0 : index
    %c3 = arith.constant 3 : index
    %c0_169 = arith.constant 0 : index
    %123 = vector.load %arg7[%c0_168, %c3, %c0_169] : memref<12x18x128xf32, #tpu.memory_space<vmem>>, vector<12x1x128xf32>
    %124 = vector.shape_cast %123 : vector<12x1x128xf32> to vector<12x128xf32>
    %cst_170 = arith.constant 0.000000e+00 : f32
    %125 = vector.broadcast %cst_170 : f32 to vector<12x128xf32>
    %126 = arith.maximumf %124, %125 : vector<12x128xf32>
    %127 = arith.maximumf %122, %126 : vector<12x128xf32>
    %c0_171 = arith.constant 0 : index
    %c0_172 = arith.constant 0 : index
    %c0_173 = arith.constant 0 : index
    %128 = vector.load %arg8[%c0_171, %c0_172, %c0_173] : memref<6x12x128xf32, #tpu.memory_space<vmem>>, vector<1x12x128xf32>
    %129 = vector.shape_cast %128 : vector<1x12x128xf32> to vector<12x128xf32>
    %130 = vector.shape_cast %127 : vector<12x128xf32> to vector<1x12x128xf32>
    tpu.vector_store %arg8[%c0_171, %c0_172, %c0_173], %130 {strides = array<i32>} : memref<6x12x128xf32, #tpu.memory_space<vmem>>, vector<1x12x128xf32>,
    %c0_174 = arith.constant 0 : index
    %c4 = arith.constant 4 : index
    %c0_175 = arith.constant 0 : index
    %131 = vector.load %arg7[%c0_174, %c4, %c0_175] : memref<12x18x128xf32, #tpu.memory_space<vmem>>, vector<12x1x128xf32>
    %132 = vector.shape_cast %131 : vector<12x1x128xf32> to vector<12x128xf32>
    %cst_176 = arith.constant 0.000000e+00 : f32
    %133 = vector.broadcast %cst_176 : f32 to vector<12x128xf32>
    %134 = arith.maximumf %132, %133 : vector<12x128xf32>
    %c0_177 = arith.constant 0 : index
    %c5 = arith.constant 5 : index
    %c0_178 = arith.constant 0 : index
    %135 = vector.load %arg7[%c0_177, %c5, %c0_178] : memref<12x18x128xf32, #tpu.memory_space<vmem>>, vector<12x1x128xf32>
    %136 = vector.shape_cast %135 : vector<12x1x128xf32> to vector<12x128xf32>
    %cst_179 = arith.constant 0.000000e+00 : f32
    %137 = vector.broadcast %cst_179 : f32 to vector<12x128xf32>
    %138 = arith.maximumf %136, %137 : vector<12x128xf32>
    %139 = arith.maximumf %134, %138 : vector<12x128xf32>
    %c1_180 = arith.constant 1 : index
    %c0_181 = arith.constant 0 : index
    %c0_182 = arith.constant 0 : index
    %140 = vector.load %arg8[%c1_180, %c0_181, %c0_182] : memref<6x12x128xf32, #tpu.memory_space<vmem>>, vector<1x12x128xf32>
    %141 = vector.shape_cast %140 : vector<1x12x128xf32> to vector<12x128xf32>
    %142 = vector.shape_cast %139 : vector<12x128xf32> to vector<1x12x128xf32>
    tpu.vector_store %arg8[%c1_180, %c0_181, %c0_182], %142 {strides = array<i32>} : memref<6x12x128xf32, #tpu.memory_space<vmem>>, vector<1x12x128xf32>,
    %c0_183 = arith.constant 0 : index
    %c6 = arith.constant 6 : index
    %c0_184 = arith.constant 0 : index
    %143 = vector.load %arg7[%c0_183, %c6, %c0_184] : memref<12x18x128xf32, #tpu.memory_space<vmem>>, vector<12x1x128xf32>
    %144 = vector.shape_cast %143 : vector<12x1x128xf32> to vector<12x128xf32>
    %cst_185 = arith.constant 0.000000e+00 : f32
    %145 = vector.broadcast %cst_185 : f32 to vector<12x128xf32>
    %146 = arith.maximumf %144, %145 : vector<12x128xf32>
    %c0_186 = arith.constant 0 : index
    %c7 = arith.constant 7 : index
    %c0_187 = arith.constant 0 : index
    %147 = vector.load %arg7[%c0_186, %c7, %c0_187] : memref<12x18x128xf32, #tpu.memory_space<vmem>>, vector<12x1x128xf32>
    %148 = vector.shape_cast %147 : vector<12x1x128xf32> to vector<12x128xf32>
    %cst_188 = arith.constant 0.000000e+00 : f32
    %149 = vector.broadcast %cst_188 : f32 to vector<12x128xf32>
    %150 = arith.maximumf %148, %149 : vector<12x128xf32>
    %151 = arith.maximumf %146, %150 : vector<12x128xf32>
    %c2_189 = arith.constant 2 : index
    %c0_190 = arith.constant 0 : index
    %c0_191 = arith.constant 0 : index
    %152 = vector.load %arg8[%c2_189, %c0_190, %c0_191] : memref<6x12x128xf32, #tpu.memory_space<vmem>>, vector<1x12x128xf32>
    %153 = vector.shape_cast %152 : vector<1x12x128xf32> to vector<12x128xf32>
    %154 = vector.shape_cast %151 : vector<12x128xf32> to vector<1x12x128xf32>
    tpu.vector_store %arg8[%c2_189, %c0_190, %c0_191], %154 {strides = array<i32>} : memref<6x12x128xf32, #tpu.memory_space<vmem>>, vector<1x12x128xf32>,
    %c0_192 = arith.constant 0 : index
    %c8 = arith.constant 8 : index
    %c0_193 = arith.constant 0 : index
    %155 = vector.load %arg7[%c0_192, %c8, %c0_193] : memref<12x18x128xf32, #tpu.memory_space<vmem>>, vector<12x1x128xf32>
    %156 = vector.shape_cast %155 : vector<12x1x128xf32> to vector<12x128xf32>
    %cst_194 = arith.constant 0.000000e+00 : f32
    %157 = vector.broadcast %cst_194 : f32 to vector<12x128xf32>
    %158 = arith.maximumf %156, %157 : vector<12x128xf32>
    %c0_195 = arith.constant 0 : index
    %c9 = arith.constant 9 : index
    %c0_196 = arith.constant 0 : index
    %159 = vector.load %arg7[%c0_195, %c9, %c0_196] : memref<12x18x128xf32, #tpu.memory_space<vmem>>, vector<12x1x128xf32>
    %160 = vector.shape_cast %159 : vector<12x1x128xf32> to vector<12x128xf32>
    %cst_197 = arith.constant 0.000000e+00 : f32
    %161 = vector.broadcast %cst_197 : f32 to vector<12x128xf32>
    %162 = arith.maximumf %160, %161 : vector<12x128xf32>
    %163 = arith.maximumf %158, %162 : vector<12x128xf32>
    %c3_198 = arith.constant 3 : index
    %c0_199 = arith.constant 0 : index
    %c0_200 = arith.constant 0 : index
    %164 = vector.load %arg8[%c3_198, %c0_199, %c0_200] : memref<6x12x128xf32, #tpu.memory_space<vmem>>, vector<1x12x128xf32>
    %165 = vector.shape_cast %164 : vector<1x12x128xf32> to vector<12x128xf32>
    %166 = vector.shape_cast %163 : vector<12x128xf32> to vector<1x12x128xf32>
    tpu.vector_store %arg8[%c3_198, %c0_199, %c0_200], %166 {strides = array<i32>} : memref<6x12x128xf32, #tpu.memory_space<vmem>>, vector<1x12x128xf32>,
    %c0_201 = arith.constant 0 : index
    %c10 = arith.constant 10 : index
    %c0_202 = arith.constant 0 : index
    %167 = vector.load %arg7[%c0_201, %c10, %c0_202] : memref<12x18x128xf32, #tpu.memory_space<vmem>>, vector<12x1x128xf32>
    %168 = vector.shape_cast %167 : vector<12x1x128xf32> to vector<12x128xf32>
    %cst_203 = arith.constant 0.000000e+00 : f32
    %169 = vector.broadcast %cst_203 : f32 to vector<12x128xf32>
    %170 = arith.maximumf %168, %169 : vector<12x128xf32>
    %c0_204 = arith.constant 0 : index
    %c11 = arith.constant 11 : index
    %c0_205 = arith.constant 0 : index
    %171 = vector.load %arg7[%c0_204, %c11, %c0_205] : memref<12x18x128xf32, #tpu.memory_space<vmem>>, vector<12x1x128xf32>
    %172 = vector.shape_cast %171 : vector<12x1x128xf32> to vector<12x128xf32>
    %cst_206 = arith.constant 0.000000e+00 : f32
    %173 = vector.broadcast %cst_206 : f32 to vector<12x128xf32>
    %174 = arith.maximumf %172, %173 : vector<12x128xf32>
    %175 = arith.maximumf %170, %174 : vector<12x128xf32>
    %c4_207 = arith.constant 4 : index
    %c0_208 = arith.constant 0 : index
    %c0_209 = arith.constant 0 : index
    %176 = vector.load %arg8[%c4_207, %c0_208, %c0_209] : memref<6x12x128xf32, #tpu.memory_space<vmem>>, vector<1x12x128xf32>
    %177 = vector.shape_cast %176 : vector<1x12x128xf32> to vector<12x128xf32>
    %178 = vector.shape_cast %175 : vector<12x128xf32> to vector<1x12x128xf32>
    tpu.vector_store %arg8[%c4_207, %c0_208, %c0_209], %178 {strides = array<i32>} : memref<6x12x128xf32, #tpu.memory_space<vmem>>, vector<1x12x128xf32>,
    %c0_210 = arith.constant 0 : index
    %c12 = arith.constant 12 : index
    %c0_211 = arith.constant 0 : index
    %179 = vector.load %arg7[%c0_210, %c12, %c0_211] : memref<12x18x128xf32, #tpu.memory_space<vmem>>, vector<12x1x128xf32>
    %180 = vector.shape_cast %179 : vector<12x1x128xf32> to vector<12x128xf32>
    %cst_212 = arith.constant 0.000000e+00 : f32
    %181 = vector.broadcast %cst_212 : f32 to vector<12x128xf32>
    %182 = arith.maximumf %180, %181 : vector<12x128xf32>
    %c0_213 = arith.constant 0 : index
    %c13 = arith.constant 13 : index
    %c0_214 = arith.constant 0 : index
    %183 = vector.load %arg7[%c0_213, %c13, %c0_214] : memref<12x18x128xf32, #tpu.memory_space<vmem>>, vector<12x1x128xf32>
    %184 = vector.shape_cast %183 : vector<12x1x128xf32> to vector<12x128xf32>
    %cst_215 = arith.constant 0.000000e+00 : f32
    %185 = vector.broadcast %cst_215 : f32 to vector<12x128xf32>
    %186 = arith.maximumf %184, %185 : vector<12x128xf32>
    %187 = arith.maximumf %182, %186 : vector<12x128xf32>
    %c5_216 = arith.constant 5 : index
    %c0_217 = arith.constant 0 : index
    %c0_218 = arith.constant 0 : index
    %188 = vector.load %arg8[%c5_216, %c0_217, %c0_218] : memref<6x12x128xf32, #tpu.memory_space<vmem>>, vector<1x12x128xf32>
    %189 = vector.shape_cast %188 : vector<1x12x128xf32> to vector<12x128xf32>
    %190 = vector.shape_cast %187 : vector<12x128xf32> to vector<1x12x128xf32>
    tpu.vector_store %arg8[%c5_216, %c0_217, %c0_218], %190 {strides = array<i32>} : memref<6x12x128xf32, #tpu.memory_space<vmem>>, vector<1x12x128xf32>,
    %c0_219 = arith.constant 0 : index
    %c0_220 = arith.constant 0 : index
    %c0_221 = arith.constant 0 : index
    %191 = vector.load %arg8[%c0_219, %c0_220, %c0_221] : memref<6x12x128xf32, #tpu.memory_space<vmem>>, vector<6x1x128xf32>
    %192 = vector.shape_cast %191 : vector<6x1x128xf32> to vector<6x128xf32>
    %c0_222 = arith.constant 0 : index
    %c1_223 = arith.constant 1 : index
    %c0_224 = arith.constant 0 : index
    %193 = vector.load %arg8[%c0_222, %c1_223, %c0_224] : memref<6x12x128xf32, #tpu.memory_space<vmem>>, vector<6x1x128xf32>
    %194 = vector.shape_cast %193 : vector<6x1x128xf32> to vector<6x128xf32>
    %195 = arith.maximumf %192, %194 : vector<6x128xf32>
    %c0_225 = arith.constant 0 : index
    %c0_226 = arith.constant 0 : index
    %c0_227 = arith.constant 0 : index
    %c0_228 = arith.constant 0 : index
    %196 = vector.load %arg4[%c0_225, %c0_226, %c0_227, %c0_228] : memref<1x6x6x128xf32, #tpu.memory_space<vmem>>, vector<1x1x6x128xf32>
    %197 = vector.shape_cast %196 : vector<1x1x6x128xf32> to vector<6x128xf32>
    %198 = vector.shape_cast %195 : vector<6x128xf32> to vector<1x1x6x128xf32>
    tpu.vector_store %arg4[%c0_225, %c0_226, %c0_227, %c0_228], %198 {strides = array<i32>} : memref<1x6x6x128xf32, #tpu.memory_space<vmem>>, vector<1x1x6x128xf32>,
    %c0_229 = arith.constant 0 : index
    %c2_230 = arith.constant 2 : index
    %c0_231 = arith.constant 0 : index
    %199 = vector.load %arg8[%c0_229, %c2_230, %c0_231] : memref<6x12x128xf32, #tpu.memory_space<vmem>>, vector<6x1x128xf32>
    %200 = vector.shape_cast %199 : vector<6x1x128xf32> to vector<6x128xf32>
    %c0_232 = arith.constant 0 : index
    %c3_233 = arith.constant 3 : index
    %c0_234 = arith.constant 0 : index
    %201 = vector.load %arg8[%c0_232, %c3_233, %c0_234] : memref<6x12x128xf32, #tpu.memory_space<vmem>>, vector<6x1x128xf32>
    %202 = vector.shape_cast %201 : vector<6x1x128xf32> to vector<6x128xf32>
    %203 = arith.maximumf %200, %202 : vector<6x128xf32>
    %c0_235 = arith.constant 0 : index
    %c1_236 = arith.constant 1 : index
    %c0_237 = arith.constant 0 : index
    %c0_238 = arith.constant 0 : index
    %204 = vector.load %arg4[%c0_235, %c1_236, %c0_237, %c0_238] : memref<1x6x6x128xf32, #tpu.memory_space<vmem>>, vector<1x1x6x128xf32>
    %205 = vector.shape_cast %204 : vector<1x1x6x128xf32> to vector<6x128xf32>
    %206 = vector.shape_cast %203 : vector<6x128xf32> to vector<1x1x6x128xf32>
    tpu.vector_store %arg4[%c0_235, %c1_236, %c0_237, %c0_238], %206 {strides = array<i32>} : memref<1x6x6x128xf32, #tpu.memory_space<vmem>>, vector<1x1x6x128xf32>,
    %c0_239 = arith.constant 0 : index
    %c4_240 = arith.constant 4 : index
    %c0_241 = arith.constant 0 : index
    %207 = vector.load %arg8[%c0_239, %c4_240, %c0_241] : memref<6x12x128xf32, #tpu.memory_space<vmem>>, vector<6x1x128xf32>
    %208 = vector.shape_cast %207 : vector<6x1x128xf32> to vector<6x128xf32>
    %c0_242 = arith.constant 0 : index
    %c5_243 = arith.constant 5 : index
    %c0_244 = arith.constant 0 : index
    %209 = vector.load %arg8[%c0_242, %c5_243, %c0_244] : memref<6x12x128xf32, #tpu.memory_space<vmem>>, vector<6x1x128xf32>
    %210 = vector.shape_cast %209 : vector<6x1x128xf32> to vector<6x128xf32>
    %211 = arith.maximumf %208, %210 : vector<6x128xf32>
    %c0_245 = arith.constant 0 : index
    %c2_246 = arith.constant 2 : index
    %c0_247 = arith.constant 0 : index
    %c0_248 = arith.constant 0 : index
    %212 = vector.load %arg4[%c0_245, %c2_246, %c0_247, %c0_248] : memref<1x6x6x128xf32, #tpu.memory_space<vmem>>, vector<1x1x6x128xf32>
    %213 = vector.shape_cast %212 : vector<1x1x6x128xf32> to vector<6x128xf32>
    %214 = vector.shape_cast %211 : vector<6x128xf32> to vector<1x1x6x128xf32>
    tpu.vector_store %arg4[%c0_245, %c2_246, %c0_247, %c0_248], %214 {strides = array<i32>} : memref<1x6x6x128xf32, #tpu.memory_space<vmem>>, vector<1x1x6x128xf32>,
    %c0_249 = arith.constant 0 : index
    %c6_250 = arith.constant 6 : index
    %c0_251 = arith.constant 0 : index
    %215 = vector.load %arg8[%c0_249, %c6_250, %c0_251] : memref<6x12x128xf32, #tpu.memory_space<vmem>>, vector<6x1x128xf32>
    %216 = vector.shape_cast %215 : vector<6x1x128xf32> to vector<6x128xf32>
    %c0_252 = arith.constant 0 : index
    %c7_253 = arith.constant 7 : index
    %c0_254 = arith.constant 0 : index
    %217 = vector.load %arg8[%c0_252, %c7_253, %c0_254] : memref<6x12x128xf32, #tpu.memory_space<vmem>>, vector<6x1x128xf32>
    %218 = vector.shape_cast %217 : vector<6x1x128xf32> to vector<6x128xf32>
    %219 = arith.maximumf %216, %218 : vector<6x128xf32>
    %c0_255 = arith.constant 0 : index
    %c3_256 = arith.constant 3 : index
    %c0_257 = arith.constant 0 : index
    %c0_258 = arith.constant 0 : index
    %220 = vector.load %arg4[%c0_255, %c3_256, %c0_257, %c0_258] : memref<1x6x6x128xf32, #tpu.memory_space<vmem>>, vector<1x1x6x128xf32>
    %221 = vector.shape_cast %220 : vector<1x1x6x128xf32> to vector<6x128xf32>
    %222 = vector.shape_cast %219 : vector<6x128xf32> to vector<1x1x6x128xf32>
    tpu.vector_store %arg4[%c0_255, %c3_256, %c0_257, %c0_258], %222 {strides = array<i32>} : memref<1x6x6x128xf32, #tpu.memory_space<vmem>>, vector<1x1x6x128xf32>,
    %c0_259 = arith.constant 0 : index
    %c8_260 = arith.constant 8 : index
    %c0_261 = arith.constant 0 : index
    %223 = vector.load %arg8[%c0_259, %c8_260, %c0_261] : memref<6x12x128xf32, #tpu.memory_space<vmem>>, vector<6x1x128xf32>
    %224 = vector.shape_cast %223 : vector<6x1x128xf32> to vector<6x128xf32>
    %c0_262 = arith.constant 0 : index
    %c9_263 = arith.constant 9 : index
    %c0_264 = arith.constant 0 : index
    %225 = vector.load %arg8[%c0_262, %c9_263, %c0_264] : memref<6x12x128xf32, #tpu.memory_space<vmem>>, vector<6x1x128xf32>
    %226 = vector.shape_cast %225 : vector<6x1x128xf32> to vector<6x128xf32>
    %227 = arith.maximumf %224, %226 : vector<6x128xf32>
    %c0_265 = arith.constant 0 : index
    %c4_266 = arith.constant 4 : index
    %c0_267 = arith.constant 0 : index
    %c0_268 = arith.constant 0 : index
    %228 = vector.load %arg4[%c0_265, %c4_266, %c0_267, %c0_268] : memref<1x6x6x128xf32, #tpu.memory_space<vmem>>, vector<1x1x6x128xf32>
    %229 = vector.shape_cast %228 : vector<1x1x6x128xf32> to vector<6x128xf32>
    %230 = vector.shape_cast %227 : vector<6x128xf32> to vector<1x1x6x128xf32>
    tpu.vector_store %arg4[%c0_265, %c4_266, %c0_267, %c0_268], %230 {strides = array<i32>} : memref<1x6x6x128xf32, #tpu.memory_space<vmem>>, vector<1x1x6x128xf32>,
    %c0_269 = arith.constant 0 : index
    %c10_270 = arith.constant 10 : index
    %c0_271 = arith.constant 0 : index
    %231 = vector.load %arg8[%c0_269, %c10_270, %c0_271] : memref<6x12x128xf32, #tpu.memory_space<vmem>>, vector<6x1x128xf32>
    %232 = vector.shape_cast %231 : vector<6x1x128xf32> to vector<6x128xf32>
    %c0_272 = arith.constant 0 : index
    %c11_273 = arith.constant 11 : index
    %c0_274 = arith.constant 0 : index
    %233 = vector.load %arg8[%c0_272, %c11_273, %c0_274] : memref<6x12x128xf32, #tpu.memory_space<vmem>>, vector<6x1x128xf32>
    %234 = vector.shape_cast %233 : vector<6x1x128xf32> to vector<6x128xf32>
    %235 = arith.maximumf %232, %234 : vector<6x128xf32>
    %c0_275 = arith.constant 0 : index
    %c5_276 = arith.constant 5 : index
    %c0_277 = arith.constant 0 : index
    %c0_278 = arith.constant 0 : index
    %236 = vector.load %arg4[%c0_275, %c5_276, %c0_277, %c0_278] : memref<1x6x6x128xf32, #tpu.memory_space<vmem>>, vector<1x1x6x128xf32>
    %237 = vector.shape_cast %236 : vector<1x1x6x128xf32> to vector<6x128xf32>
    %238 = vector.shape_cast %235 : vector<6x128xf32> to vector<1x1x6x128xf32>
    tpu.vector_store %arg4[%c0_275, %c5_276, %c0_277, %c0_278], %238 {strides = array<i32>} : memref<1x6x6x128xf32, #tpu.memory_space<vmem>>, vector<1x1x6x128xf32>,
    return
  }
  func.func @transform_0(%arg0: i32) -> (i32, i32, i32, i32) {
    %c0_i32 = arith.constant 0 : i32
    %c0_i32_0 = arith.constant 0 : i32
    %c0_i32_1 = arith.constant 0 : i32
    %c0_i32_2 = arith.constant 0 : i32
    return %arg0, %c0_i32, %c0_i32_0, %c0_i32_1 : i32, i32, i32, i32
  }
  func.func @transform_1(%arg0: i32) -> (i32, i32, i32) {
    %c0_i32 = arith.constant 0 : i32
    %c0_i32_0 = arith.constant 0 : i32
    %c0_i32_1 = arith.constant 0 : i32
    %c0_i32_2 = arith.constant 0 : i32
    return %c0_i32, %c0_i32_0, %c0_i32_1 : i32, i32, i32
  }
  func.func @transform_2(%arg0: i32) -> (i32, i32, i32) {
    %c0_i32 = arith.constant 0 : i32
    %c0_i32_0 = arith.constant 0 : i32
    %c0_i32_1 = arith.constant 0 : i32
    %c0_i32_2 = arith.constant 0 : i32
    return %c0_i32, %c0_i32_0, %c0_i32_1 : i32, i32, i32
  }
  func.func @transform_3(%arg0: i32) -> (i32, i32, i32, i32) {
    %c0_i32 = arith.constant 0 : i32
    %c0_i32_0 = arith.constant 0 : i32
    %c0_i32_1 = arith.constant 0 : i32
    %c0_i32_2 = arith.constant 0 : i32
    return %arg0, %c0_i32, %c0_i32_0, %c0_i32_1 : i32, i32, i32, i32
  }
}

</mosaic_0001>

<llo_original>
// kernel: conv_block_forward.1
$region0: #{conv_block_forward.1}
  #allocation0 [shape = 'u32[]', space=smem, size = 0x4, offset = 0x4, fixed_abs, tag = 'smem constant byte address 0x4 - core index']
  #allocation1 [shape = 'u32[144,128]{1,0:T(1,128)}', space=vmem, size = 0x12000, scoped, tag = 'internal scratch']
  #allocation2 [shape = 'f32[14,18,128]{2,1,0:T(8,128)}', space=vmem, size = 0x2a000, scoped, tag = 'scratch operand']
  #allocation3 [shape = 'f32[14,16,128]{2,1,0:T(8,128)}', space=vmem, size = 0x1c000, scoped, tag = 'scratch operand']
  #allocation4 [shape = 'f32[12,18,128]{2,1,0:T(8,128)}', space=vmem, size = 0x24000, scoped, tag = 'scratch operand']
  #allocation5 [shape = 'f32[6,12,128]{2,1,0:T(8,128)}', space=vmem, size = 0xc000, scoped, tag = 'scratch operand']
  %s0 = inlined_call_operand.vmem [shape: f32[2,16,16,128], index: 0, kind: input, shape index: {}]
  %s1 = inlined_call_operand.vmem [shape: f32[3,128,384], index: 1, kind: input, shape index: {}]
  %s2 = inlined_call_operand.vmem [shape: f32[3,128,384], index: 2, kind: input, shape index: {}]
  %s3 = inlined_call_operand.vmem [shape: f32[2,6,6,128], index: 3, kind: output, shape index: {}]
  %s4 = sld [smem:[#allocation0]]
  $region45: #{conv_block_forward.1} parent=0
    _
  %s6 = ssub.s32 1, %s4
  %s7 = scalar_select 0, %s6, %s4
  loop: start=0, step=1, limit=4
  $region2: #{conv_block_forward.1} parent=0 // loop_pre_header
    _
  $region3: #{conv_block_forward.1} parent=0 // loop_header
    %s9 = sphi 0, %s13
    %p10 = scmp.ge.s32.totalorder %s9, 4
    %s19 = sphi 0, %s21
    %s22 = sphi 0, %s19
    %s23 = sphi 0, %s22
    %s39 = sphi 0, %s23
    %s43 = sphi 0, %s43
    %s45 = sphi 0, %s43
    %s46 = sphi 0, %s45
    %s60 = sphi 0, %s46
    %s64 = sphi 0, %s64
    %s66 = sphi 0, %s64
    %s67 = sphi 0, %s66
    %s81 = sphi 0, %s67
    %s87 = sphi 0, %s89
    %s90 = sphi 0, %s87
    %s91 = sphi 0, %s90
    %s107 = sphi 0, %s91
  $region4: #{conv_block_forward.1} parent=0 // loop_header_branch
    %12 = sbr.rel (%p10) target = $region8
  $region5: #{conv_block_forward.1} parent=0 // loop_body
    %s14 = ssub.s32 %s9, 1
    %s15 = ssub.s32 %s9, 2
    %s16 = sadd.s32 %s9, 1
    %s17 = ssub.s32 %s9, %s16
    %p18 = scmp.eq.s32.totalorder %s17, 0
    %s20 = sadd.s32 %s19, 1
    %s21 = scalar_select %p18, %s19, %s20
    %p24 = pneg %p18
    %p25 = scmp.eq.s32.totalorder %s9, 1
    %p26 = por %p24, %p25
    %p27 = scmp.ne.s32.totalorder %s19, %s22
    %p28 = scmp.eq.s32.totalorder %s9, 0
    %p29 = por %p27, %p28
    %p30 = scmp.ne.s32.totalorder %s19, %s22
    %p31 = scmp.eq.s32.totalorder %s14, 1
    %p32 = por %p30, %p31
    %p33 = scmp.ne.s32.totalorder %s22, %s23
    %p34 = scmp.eq.s32.totalorder %s14, 0
    %p35 = por %p33, %p34
    %p36 = scmp.ne.s32.totalorder %s22, %s23
    %p37 = scmp.eq.s32.totalorder %s15, 1
    %p38 = por %p36, %p37
    %p40 = scmp.ne.s32.totalorder %s23, %s39
    %p41 = scmp.eq.s32.totalorder %s15, 0
    %p42 = por %p40, %p41
    %s44 = sadd.s32 %s43, 1
    %p47 = scmp.eq.s32.totalorder %s9, 1
    %p48 = scmp.ne.s32.totalorder %s43, %s45
    %p49 = scmp.eq.s32.totalorder %s9, 0
    %p50 = por %p48, %p49
    %p51 = scmp.ne.s32.totalorder %s43, %s45
    %p52 = scmp.eq.s32.totalorder %s14, 1
    %p53 = por %p51, %p52
    %p54 = scmp.ne.s32.totalorder %s45, %s46
    %p55 = scmp.eq.s32.totalorder %s14, 0
    %p56 = por %p54, %p55
    %p57 = scmp.ne.s32.totalorder %s45, %s46
    %p58 = scmp.eq.s32.totalorder %s15, 1
    %p59 = por %p57, %p58
    %p61 = scmp.ne.s32.totalorder %s46, %s60
    %p62 = scmp.eq.s32.totalorder %s15, 0
    %p63 = por %p61, %p62
    %s65 = sadd.s32 %s64, 1
    %p68 = scmp.eq.s32.totalorder %s9, 1
    %p69 = scmp.ne.s32.totalorder %s64, %s66
    %p70 = scmp.eq.s32.totalorder %s9, 0
    %p71 = por %p69, %p70
    %p72 = scmp.ne.s32.totalorder %s64, %s66
    %p73 = scmp.eq.s32.totalorder %s14, 1
    %p74 = por %p72, %p73
    %p75 = scmp.ne.s32.totalorder %s66, %s67
    %p76 = scmp.eq.s32.totalorder %s14, 0
    %p77 = por %p75, %p76
    %p78 = scmp.ne.s32.totalorder %s66, %s67
    %p79 = scmp.eq.s32.totalorder %s15, 1
    %p80 = por %p78, %p79
    %p82 = scmp.ne.s32.totalorder %s67, %s81
    %p83 = scmp.eq.s32.totalorder %s15, 0
    %p84 = por %p82, %p83
    %s85 = ssub.s32 %s9, %s16
    %p86 = scmp.eq.s32.totalorder %s85, 0
    %s88 = sadd.s32 %s87, 1
    %s89 = scalar_select %p86, %s87, %s88
    %p92 = pneg %p86
    %p93 = scmp.eq.s32.totalorder %s9, 1
    %p94 = por %p92, %p93
    %p95 = scmp.ne.s32.totalorder %s87, %s90
    %p96 = scmp.eq.s32.totalorder %s9, 0
    %p97 = por %p95, %p96
    %p98 = scmp.ne.s32.totalorder %s87, %s90
    %p99 = scmp.eq.s32.totalorder %s14, 1
    %p100 = por %p98, %p99
    %p101 = scmp.ne.s32.totalorder %s90, %s91
    %p102 = scmp.eq.s32.totalorder %s14, 0
    %p103 = por %p101, %p102
    %p104 = scmp.ne.s32.totalorder %s90, %s91
    %p105 = scmp.eq.s32.totalorder %s15, 1
    %p106 = por %p104, %p105
    %p108 = scmp.ne.s32.totalorder %s91, %s107
    %p109 = scmp.eq.s32.totalorder %s15, 0
    %p110 = por %p108, %p109
    %p111 = scmp.le.s32.totalorder 1, %s9
    %p112 = scmp.lt.s32.totalorder %s9, 3
    %p113 = pnand %p111, %p112
    %p114 = pneg %p113
    // Predicated region
    $region9: #{conv_block_forward.1} parent=5 // pred_check
      _
    $region10: #{conv_block_forward.1} parent=5 // pred_check_branch
      %116 = sbr.rel (%p113) target = $region12
    $region11: #{conv_block_forward.1} parent=5 // pred_region
      %s117 = ssub.s32 %s9, 1
      // Predicated region
      $region13: #{conv_block_forward.1} parent=11 // pred_check
        %p118 = pneg %p56
      $region14: #{conv_block_forward.1} parent=11 // pred_check_branch
        %120 = sbr.rel (%p118) target = $region16
      $region15: #{conv_block_forward.1} parent=11 // pred_region
        _
      $region16: #{conv_block_forward.1} parent=11 // pred_fallthru
        _
      // Predicated region
      $region17: #{conv_block_forward.1} parent=11 // pred_check
        %p121 = pneg %p77
      $region18: #{conv_block_forward.1} parent=11 // pred_check_branch
        %123 = sbr.rel (%p121) target = $region20
      $region19: #{conv_block_forward.1} parent=11 // pred_region
        _
      $region20: #{conv_block_forward.1} parent=11 // pred_fallthru
        _
    $region12: #{conv_block_forward.1} parent=5 // pred_fallthru
      _
    %p124 = scmp.lt.s32.totalorder %s9, 2
    // Predicated region
    $region21: #{conv_block_forward.1} parent=5 // pred_check
      %p125 = pneg %p124
    $region22: #{conv_block_forward.1} parent=5 // pred_check_branch
      %127 = sbr.rel (%p125) target = $region24
    $region23: #{conv_block_forward.1} parent=5 // pred_region
      // Predicated region
      $region25: #{conv_block_forward.1} parent=23 // pred_check
        %p128 = pneg %p29
      $region26: #{conv_block_forward.1} parent=23 // pred_check_branch
        %130 = sbr.rel (%p128) target = $region28
      $region27: #{conv_block_forward.1} parent=23 // pred_region
        %p131 = scmp.lt.s32.totalorder %s9, 1
        %s132 = scalar_select %p131, %s9, 1
        %s133 = smul.addr %s132, 32
        %s134 = smul.addr %s133, 8
        %s135 = scalar_lea.vmem %s0, %s134
      $region28: #{conv_block_forward.1} parent=23 // pred_fallthru
        _
    $region24: #{conv_block_forward.1} parent=5 // pred_fallthru
      _
    %p136 = scmp.le.s32.totalorder 1, %s9
    %p137 = scmp.lt.s32.totalorder %s9, 3
    %p138 = pnand %p136, %p137
    %p139 = pneg %p138
    // Predicated region
    $region29: #{conv_block_forward.1} parent=5 // pred_check
      _
    $region30: #{conv_block_forward.1} parent=5 // pred_check_branch
      %141 = sbr.rel (%p138) target = $region32
    $region31: #{conv_block_forward.1} parent=5 // pred_region
      %s142 = ssub.s32 %s9, 1
      %p143 = scmp.lt.s32.totalorder %s14, 1
      %s144 = scalar_select %p143, %s14, 1
      %s145 = smul.addr %s144, 32
      %s146 = smul.addr %s145, 8
      %s147 = scalar_lea.vmem %s0, %s146
      %p148 = pneg %p35
      %p149 = pneg %p32
      %p150 = pneg %p56
      %p151 = pneg %p53
      %p152 = pneg %p77
      %p153 = pneg %p74
      %p154 = pneg %p103
      %p155 = pneg %p100
      %p156 = scmp.lt.s32.totalorder %s14, 1
      %s157 = scalar_select %p156, %s14, 1
      %s158 = smul.addr %s157, 6
      %s159 = smul.addr %s158, 8
      %s160 = scalar_lea.vmem %s3, %s159
      %p161 = scmp.lt.s32.totalorder %s14, 1
      %s162 = scalar_select %p161, %s14, 1
      %s163 = smul.addr %s162, 32
      %s164 = smul.addr %s163, 8
      %s165 = scalar_lea.vmem %s0, %s164
      %p166 = scmp.lt.s32.totalorder %s14, 1
      %s167 = scalar_select %p166, %s14, 1
      %s168 = smul.addr %s167, 6
      %s169 = smul.addr %s168, 8
      %s170 = scalar_lea.vmem %s3, %s169
      %171 = vst [vmem:[#allocation2] sm:$0xff] 0.0
      %172 = vst [vmem:[#allocation2 + $0x8] sm:$0xff] 0.0
      %173 = vst [vmem:[#allocation2 + $0x10] sm:$0x3] 0.0
      %174 = vst [vmem:[#allocation2 + $0x18] sm:$0xff] 0.0
      %175 = vst [vmem:[#allocation2 + $0x20] sm:$0xff] 0.0
      %176 = vst [vmem:[#allocation2 + $0x28] sm:$0x3] 0.0
      %177 = vst [vmem:[#allocation2 + $0x30] sm:$0xff] 0.0
      %178 = vst [vmem:[#allocation2 + $0x38] sm:$0xff] 0.0
      %179 = vst [vmem:[#allocation2 + $0x40] sm:$0x3] 0.0
      %180 = vst [vmem:[#allocation2 + $0x48] sm:$0xff] 0.0
      %181 = vst [vmem:[#allocation2 + $0x50] sm:$0xff] 0.0
      %182 = vst [vmem:[#allocation2 + $0x58] sm:$0x3] 0.0
      %183 = vst [vmem:[#allocation2 + $0x60] sm:$0xff] 0.0
      %184 = vst [vmem:[#allocation2 + $0x68] sm:$0xff] 0.0
      %185 = vst [vmem:[#allocation2 + $0x70] sm:$0x3] 0.0
      %186 = vst [vmem:[#allocation2 + $0x78] sm:$0xff] 0.0
      %187 = vst [vmem:[#allocation2 + $0x80] sm:$0xff] 0.0
      %188 = vst [vmem:[#allocation2 + $0x88] sm:$0x3] 0.0
      %189 = vst [vmem:[#allocation2 + $0x90] sm:$0xff] 0.0
      %190 = vst [vmem:[#allocation2 + $0x98] sm:$0xff] 0.0
      %191 = vst [vmem:[#allocation2 + $0xa0] sm:$0x3] 0.0
      %192 = vst [vmem:[#allocation2 + $0xa8] sm:$0xff] 0.0
      %193 = vst [vmem:[#allocation2 + $0xb0] sm:$0xff] 0.0
      %194 = vst [vmem:[#allocation2 + $0xb8] sm:$0x3] 0.0
      %195 = vst [vmem:[#allocation2 + $0xc0] sm:$0xff] 0.0
      %196 = vst [vmem:[#allocation2 + $0xc8] sm:$0xff] 0.0
      %197 = vst [vmem:[#allocation2 + $0xd0] sm:$0x3] 0.0
      %198 = vst [vmem:[#allocation2 + $0xd8] sm:$0xff] 0.0
      %199 = vst [vmem:[#allocation2 + $0xe0] sm:$0xff] 0.0
      %200 = vst [vmem:[#allocation2 + $0xe8] sm:$0x3] 0.0
      %201 = vst [vmem:[#allocation2 + $0xf0] sm:$0xff] 0.0
      %202 = vst [vmem:[#allocation2 + $0xf8] sm:$0xff] 0.0
      %203 = vst [vmem:[#allocation2 + $0x100] sm:$0x3] 0.0
      %204 = vst [vmem:[#allocation2 + $0x108] sm:$0xff] 0.0
      %205 = vst [vmem:[#allocation2 + $0x110] sm:$0xff] 0.0
      %206 = vst [vmem:[#allocation2 + $0x118] sm:$0x3] 0.0
      %207 = vst [vmem:[#allocation2 + $0x120] sm:$0xff] 0.0
      %208 = vst [vmem:[#allocation2 + $0x128] sm:$0xff] 0.0
      %209 = vst [vmem:[#allocation2 + $0x130] sm:$0x3] 0.0
      %210 = vst [vmem:[#allocation2 + $0x138] sm:$0xff] 0.0
      %211 = vst [vmem:[#allocation2 + $0x140] sm:$0xff] 0.0
      %212 = vst [vmem:[#allocation2 + $0x148] sm:$0x3] 0.0
      %v213 = vld [vmem:[%s165] sm:$0xff]
      %v214 = vld [vmem:[%s165 + $0x8] sm:$0xff]
      %v215 = vld [vmem:[%s165 + $0x10] sm:$0xff]
      %v216 = vld [vmem:[%s165 + $0x18] sm:$0xff]
      %v217 = vld [vmem:[%s165 + $0x20] sm:$0xff]
      %v218 = vld [vmem:[%s165 + $0x28] sm:$0xff]
      %v219 = vld [vmem:[%s165 + $0x30] sm:$0xff]
      %v220 = vld [vmem:[%s165 + $0x38] sm:$0xff]
      %v221 = vld [vmem:[%s165 + $0x40] sm:$0xff]
      %v222 = vld [vmem:[%s165 + $0x48] sm:$0xff]
      %v223 = vld [vmem:[%s165 + $0x50] sm:$0xff]
      %v224 = vld [vmem:[%s165 + $0x58] sm:$0xff]
      %v225 = vld [vmem:[%s165 + $0x60] sm:$0xff]
      %v226 = vld [vmem:[%s165 + $0x68] sm:$0xff]
      %v227 = vld [vmem:[%s165 + $0x70] sm:$0xff]
      %v228 = vld [vmem:[%s165 + $0x78] sm:$0xff]
      %v229 = vld [vmem:[%s165 + $0x80] sm:$0xff]
      %v230 = vld [vmem:[%s165 + $0x88] sm:$0xff]
      %v231 = vld [vmem:[%s165 + $0x90] sm:$0xff]
      %v232 = vld [vmem:[%s165 + $0x98] sm:$0xff]
      %v233 = vld [vmem:[%s165 + $0xa0] sm:$0xff]
      %v234 = vld [vmem:[%s165 + $0xa8] sm:$0xff]
      %v235 = vld [vmem:[%s165 + $0xb0] sm:$0xff]
      %v236 = vld [vmem:[%s165 + $0xb8] sm:$0xff]
      %v237 = vld [vmem:[%s165 + $0xc0] sm:$0xff]
      %v238 = vld [vmem:[%s165 + $0xc8] sm:$0xff]
      %v239 = vld [vmem:[%s165 + $0xd0] sm:$0xff]
      %v240 = vld [vmem:[%s165 + $0xd8] sm:$0xff]
      %v241 = vld [vmem:[%s1] sm:$0xff]
      %v242 = vld [vmem:[%s1 + $0x8] sm:$0xff]
      %v243 = vld [vmem:[%s1 + $0x10] sm:$0xff]
      %v244 = vld [vmem:[%s1 + $0x18] sm:$0xff]
      %v245 = vld [vmem:[%s1 + $0x20] sm:$0xff]
      %v246 = vld [vmem:[%s1 + $0x28] sm:$0xff]
      %v247 = vld [vmem:[%s1 + $0x30] sm:$0xff]
      %v248 = vld [vmem:[%s1 + $0x38] sm:$0xff]
      %v249 = vld [vmem:[%s1 + $0x40] sm:$0xff]
      %v250 = vld [vmem:[%s1 + $0x48] sm:$0xff]
      %v251 = vld [vmem:[%s1 + $0x50] sm:$0xff]
      %v252 = vld [vmem:[%s1 + $0x58] sm:$0xff]
      %v253 = vld [vmem:[%s1 + $0x60] sm:$0xff]
      %v254 = vld [vmem:[%s1 + $0x68] sm:$0xff]
      %v255 = vld [vmem:[%s1 + $0x70] sm:$0xff]
      %v256 = vld [vmem:[%s1 + $0x78] sm:$0xff]
      %v257 = vld [vmem:[%s1 + $0x80] sm:$0xff]
      %v258 = vld [vmem:[%s1 + $0x88] sm:$0xff]
      %v259 = vld [vmem:[%s1 + $0x90] sm:$0xff]
      %v260 = vld [vmem:[%s1 + $0x98] sm:$0xff]
      %v261 = vld [vmem:[%s1 + $0xa0] sm:$0xff]
      %v262 = vld [vmem:[%s1 + $0xa8] sm:$0xff]
      %v263 = vld [vmem:[%s1 + $0xb0] sm:$0xff]
      %v264 = vld [vmem:[%s1 + $0xb8] sm:$0xff]
      %v265 = vld [vmem:[%s1 + $0xc0] sm:$0xff]
      %v266 = vld [vmem:[%s1 + $0xc8] sm:$0xff]
      %v267 = vld [vmem:[%s1 + $0xd0] sm:$0xff]
      %v268 = vld [vmem:[%s1 + $0xd8] sm:$0xff]
      %v269 = vld [vmem:[%s1 + $0xe0] sm:$0xff]
      %v270 = vld [vmem:[%s1 + $0xe8] sm:$0xff]
      %v271 = vld [vmem:[%s1 + $0xf0] sm:$0xff]
      %v272 = vld [vmem:[%s1 + $0xf8] sm:$0xff]
      %v273 = vld [vmem:[%s1 + $0x100] sm:$0xff]
      %v274 = vld [vmem:[%s1 + $0x108] sm:$0xff]
      %v275 = vld [vmem:[%s1 + $0x110] sm:$0xff]
      %v276 = vld [vmem:[%s1 + $0x118] sm:$0xff]
      %v277 = vld [vmem:[%s1 + $0x120] sm:$0xff]
      %v278 = vld [vmem:[%s1 + $0x128] sm:$0xff]
      %v279 = vld [vmem:[%s1 + $0x130] sm:$0xff]
      %v280 = vld [vmem:[%s1 + $0x138] sm:$0xff]
      %v281 = vld [vmem:[%s1 + $0x140] sm:$0xff]
      %v282 = vld [vmem:[%s1 + $0x148] sm:$0xff]
      %v283 = vld [vmem:[%s1 + $0x150] sm:$0xff]
      %v284 = vld [vmem:[%s1 + $0x158] sm:$0xff]
      %v285 = vld [vmem:[%s1 + $0x160] sm:$0xff]
      %v286 = vld [vmem:[%s1 + $0x168] sm:$0xff]
      %v287 = vld [vmem:[%s1 + $0x170] sm:$0xff]
      %v288 = vld [vmem:[%s1 + $0x178] sm:$0xff]
      %289 = vmatprep.subr.mxu0 %v242
      %290 = vmatpush1.msra.mxu0 %v241
      %291 = vmatprep.subr.mxu0 %v245
      %292 = vmatpush1.msra.mxu0 %v244
      %293 = vmatprep.subr.mxu0 %v248
      %294 = vmatpush1.msra.mxu0 %v247
      %295 = vmatprep.subr.mxu0 %v251
      %296 = vmatpush1.msra.mxu0 %v250
      %297 = vmatprep.subr.mxu0 %v254
      %298 = vmatpush1.msra.mxu0 %v253
      %299 = vmatprep.subr.mxu0 %v257
      %300 = vmatpush1.msra.mxu0 %v256
      %301 = vmatprep.subr.mxu0 %v260
      %302 = vmatpush1.msra.mxu0 %v259
      %303 = vmatprep.subr.mxu0 %v263
      %304 = vmatpush1.msra.mxu0 %v262
      %305 = vmatprep.subr.mxu0 %v266
      %306 = vmatpush1.msra.mxu0 %v265
      %307 = vmatprep.subr.mxu0 %v269
      %308 = vmatpush1.msra.mxu0 %v268
      %309 = vmatprep.subr.mxu0 %v272
      %310 = vmatpush1.msra.mxu0 %v271
      %311 = vmatprep.subr.mxu0 %v275
      %312 = vmatpush1.msra.mxu0 %v274
      %313 = vmatprep.subr.mxu0 %v278
      %314 = vmatpush1.msra.mxu0 %v277
      %315 = vmatprep.subr.mxu0 %v281
      %316 = vmatpush1.msra.mxu0 %v280
      %317 = vmatprep.subr.mxu0 %v284
      %318 = vmatpush1.msra.mxu0 %v283
      %319 = vmatprep.subr.mxu0 %v287
      %320 = vmatpush1.msra.mxu0 %v286
      %321 = vmatprep.subr.mxu0 0.0
      %322 = vmatpush1.msra.mxu0 0.0
      %323 = vmatprep.subr.mxu0 0.0
      %324 = vmatpush1.msra.mxu0 0.0
      %325 = vmatprep.subr.mxu0 0.0
      %326 = vmatpush1.msra.mxu0 0.0
      %327 = vmatprep.subr.mxu0 0.0
      %328 = vmatpush1.msra.mxu0 0.0
      %329 = vmatprep.subr.mxu0 0.0
      %330 = vmatpush1.msra.mxu0 0.0
      %331 = vmatprep.subr.mxu0 0.0
      %332 = vmatpush1.msra.mxu0 0.0
      %333 = vmatprep.subr.mxu0 0.0
      %334 = vmatpush1.msra.mxu0 0.0
      %335 = vmatprep.subr.mxu0 0.0
      %336 = vmatpush1.msra.mxu0 0.0
      %337 = vmatprep.subr.mxu0 0.0
      %338 = vmatpush1.msra.mxu0 0.0
      %339 = vmatprep.subr.mxu0 0.0
      %340 = vmatpush1.msra.mxu0 0.0
      %341 = vmatprep.subr.mxu0 0.0
      %342 = vmatpush1.msra.mxu0 0.0
      %343 = vmatprep.subr.mxu0 0.0
      %344 = vmatpush1.msra.mxu0 0.0
      %345 = vmatprep.subr.mxu0 0.0
      %346 = vmatpush1.msra.mxu0 0.0
      %347 = vmatprep.subr.mxu0 0.0
      %348 = vmatpush1.msra.mxu0 0.0
      %349 = vmatprep.subr.mxu0 0.0
      %350 = vmatpush1.msra.mxu0 0.0
      %351 = vmatprep.subr.mxu0 0.0
      %352 = vmatpush1.msra.mxu0 0.0
      %353 = vmatprep.mubr.f32.mxu0 0.0
      %354 = vmatmul.mubr.f32.gmra.mrb[0].mxu0 %v213
      %v355 = vpop.f32.mrb[0].mxu0
      %v356 = vadd.f32 0.0, %v355
      %v357 = vpop.f32.mrb[0].mxu0
      %v358 = vadd.f32 0.0, %v357
      %359 = vmatprep.mubr.f32.mxu0 0.0
      %360 = vmatmul.mubr.f32.gmra.mrb[0].mxu0 %v214
      %v361 = vpop.f32.mrb[0].mxu0
      %v362 = vadd.f32 0.0, %v361
      %v363 = vpop.f32.mrb[0].mxu0
      %v364 = vadd.f32 0.0, %v363
      %365 = vmatprep.mubr.f32.mxu0 0.0
      %366 = vmatmul.mubr.f32.gmra.mrb[0].mxu0 %v215
      %v367 = vpop.f32.mrb[0].mxu0
      %v368 = vadd.f32 0.0, %v367
      %v369 = vpop.f32.mrb[0].mxu0
      %v370 = vadd.f32 0.0, %v369
      %371 = vmatprep.mubr.f32.mxu0 0.0
      %372 = vmatmul.mubr.f32.gmra.mrb[0].mxu0 %v216
      %v373 = vpop.f32.mrb[0].mxu0
      %v374 = vadd.f32 0.0, %v373
      %v375 = vpop.f32.mrb[0].mxu0
      %v376 = vadd.f32 0.0, %v375
      %377 = vmatprep.mubr.f32.mxu0 0.0
      %378 = vmatmul.mubr.f32.gmra.mrb[0].mxu0 %v217
      %v379 = vpop.f32.mrb[0].mxu0
      %v380 = vadd.f32 0.0, %v379
      %v381 = vpop.f32.mrb[0].mxu0
      %v382 = vadd.f32 0.0, %v381
      %383 = vmatprep.mubr.f32.mxu0 0.0
      %384 = vmatmul.mubr.f32.gmra.mrb[0].mxu0 %v218
      %v385 = vpop.f32.mrb[0].mxu0
      %v386 = vadd.f32 0.0, %v385
      %v387 = vpop.f32.mrb[0].mxu0
      %v388 = vadd.f32 0.0, %v387
      %389 = vmatprep.mubr.f32.mxu0 0.0
      %390 = vmatmul.mubr.f32.gmra.mrb[0].mxu0 %v219
      %v391 = vpop.f32.mrb[0].mxu0
      %v392 = vadd.f32 0.0, %v391
      %v393 = vpop.f32.mrb[0].mxu0
      %v394 = vadd.f32 0.0, %v393
      %395 = vmatprep.mubr.f32.mxu0 0.0
      %396 = vmatmul.mubr.f32.gmra.mrb[0].mxu0 %v220
      %v397 = vpop.f32.mrb[0].mxu0
      %v398 = vadd.f32 0.0, %v397
      %v399 = vpop.f32.mrb[0].mxu0
      %v400 = vadd.f32 0.0, %v399
      %401 = vmatprep.mubr.f32.mxu0 0.0
      %402 = vmatmul.mubr.f32.gmra.mrb[0].mxu0 %v221
      %v403 = vpop.f32.mrb[0].mxu0
      %v404 = vadd.f32 0.0, %v403
      %v405 = vpop.f32.mrb[0].mxu0
      %v406 = vadd.f32 0.0, %v405
      %407 = vmatprep.mubr.f32.mxu0 0.0
      %408 = vmatmul.mubr.f32.gmra.mrb[0].mxu0 %v222
      %v409 = vpop.f32.mrb[0].mxu0
      %v410 = vadd.f32 0.0, %v409
      %v411 = vpop.f32.mrb[0].mxu0
      %v412 = vadd.f32 0.0, %v411
      %413 = vmatprep.mubr.f32.mxu0 0.0
      %414 = vmatmul.mubr.f32.gmra.mrb[0].mxu0 %v223
      %v415 = vpop.f32.mrb[0].mxu0
      %v416 = vadd.f32 0.0, %v415
      %v417 = vpop.f32.mrb[0].mxu0
      %v418 = vadd.f32 0.0, %v417
      %419 = vmatprep.mubr.f32.mxu0 0.0
      %420 = vmatmul.mubr.f32.gmra.mrb[0].mxu0 %v224
      %v421 = vpop.f32.mrb[0].mxu0
      %v422 = vadd.f32 0.0, %v421
      %v423 = vpop.f32.mrb[0].mxu0
      %v424 = vadd.f32 0.0, %v423
      %425 = vmatprep.mubr.f32.mxu0 0.0
      %426 = vmatmul.mubr.f32.gmra.mrb[0].mxu0 %v225
      %v427 = vpop.f32.mrb[0].mxu0
      %v428 = vadd.f32 0.0, %v427
      %v429 = vpop.f32.mrb[0].mxu0
      %v430 = vadd.f32 0.0, %v429
      %431 = vmatprep.mubr.f32.mxu0 0.0
      %432 = vmatmul.mubr.f32.gmra.mrb[0].mxu0 %v226
      %v433 = vpop.f32.mrb[0].mxu0
      %v434 = vadd.f32 0.0, %v433
      %v435 = vpop.f32.mrb[0].mxu0
      %v436 = vadd.f32 0.0, %v435
      %437 = vmatprep.mubr.f32.mxu0 0.0
      %438 = vmatmul.mubr.f32.gmra.mrb[0].mxu0 %v227
      %v439 = vpop.f32.mrb[0].mxu0
      %v440 = vadd.f32 0.0, %v439
      %v441 = vpop.f32.mrb[0].mxu0
      %v442 = vadd.f32 0.0, %v441
      %443 = vmatprep.mubr.f32.mxu0 0.0
      %444 = vmatmul.mubr.f32.gmra.mrb[0].mxu0 %v228
      %v445 = vpop.f32.mrb[0].mxu0
      %v446 = vadd.f32 0.0, %v445
      %v447 = vpop.f32.mrb[0].mxu0
      %v448 = vadd.f32 0.0, %v447
      %449 = vmatprep.mubr.f32.mxu0 0.0
      %450 = vmatmul.mubr.f32.gmra.mrb[0].mxu0 %v229
      %v451 = vpop.f32.mrb[0].mxu0
      %v452 = vadd.f32 0.0, %v451
      %v453 = vpop.f32.mrb[0].mxu0
      %v454 = vadd.f32 0.0, %v453
      %455 = vmatprep.mubr.f32.mxu0 0.0
      %456 = vmatmul.mubr.f32.gmra.mrb[0].mxu0 %v230
      %v457 = vpop.f32.mrb[0].mxu0
      %v458 = vadd.f32 0.0, %v457
      %v459 = vpop.f32.mrb[0].mxu0
      %v460 = vadd.f32 0.0, %v459
      %461 = vmatprep.mubr.f32.mxu0 0.0
      %462 = vmatmul.mubr.f32.gmra.mrb[0].mxu0 %v231
      %v463 = vpop.f32.mrb[0].mxu0
      %v464 = vadd.f32 0.0, %v463
      %v465 = vpop.f32.mrb[0].mxu0
      %v466 = vadd.f32 0.0, %v465
      %467 = vmatprep.mubr.f32.mxu0 0.0
      %468 = vmatmul.mubr.f32.gmra.mrb[0].mxu0 %v232
      %v469 = vpop.f32.mrb[0].mxu0
      %v470 = vadd.f32 0.0, %v469
      %v471 = vpop.f32.mrb[0].mxu0
      %v472 = vadd.f32 0.0, %v471
      %473 = vmatprep.mubr.f32.mxu0 0.0
      %474 = vmatmul.mubr.f32.gmra.mrb[0].mxu0 %v233
      %v475 = vpop.f32.mrb[0].mxu0
      %v476 = vadd.f32 0.0, %v475
      %v477 = vpop.f32.mrb[0].mxu0
      %v478 = vadd.f32 0.0, %v477
      %479 = vmatprep.mubr.f32.mxu0 0.0
      %480 = vmatmul.mubr.f32.gmra.mrb[0].mxu0 %v234
      %v481 = vpop.f32.mrb[0].mxu0
      %v482 = vadd.f32 0.0, %v481
      %v483 = vpop.f32.mrb[0].mxu0
      %v484 = vadd.f32 0.0, %v483
      %485 = vmatprep.mubr.f32.mxu0 0.0
      %486 = vmatmul.mubr.f32.gmra.mrb[0].mxu0 %v235
      %v487 = vpop.f32.mrb[0].mxu0
      %v488 = vadd.f32 0.0, %v487
      %v489 = vpop.f32.mrb[0].mxu0
      %v490 = vadd.f32 0.0, %v489
      %491 = vmatprep.mubr.f32.mxu0 0.0
      %492 = vmatmul.mubr.f32.gmra.mrb[0].mxu0 %v236
      %v493 = vpop.f32.mrb[0].mxu0
      %v494 = vadd.f32 0.0, %v493
      %v495 = vpop.f32.mrb[0].mxu0
      %v496 = vadd.f32 0.0, %v495
      %497 = vmatprep.mubr.f32.mxu0 0.0
      %498 = vmatmul.mubr.f32.gmra.mrb[0].mxu0 %v237
      %v499 = vpop.f32.mrb[0].mxu0
      %v500 = vadd.f32 0.0, %v499
      %v501 = vpop.f32.mrb[0].mxu0
      %v502 = vadd.f32 0.0, %v501
      %503 = vmatprep.mubr.f32.mxu0 0.0
      %504 = vmatmul.mubr.f32.gmra.mrb[0].mxu0 %v238
      %v505 = vpop.f32.mrb[0].mxu0
      %v506 = vadd.f32 0.0, %v505
      %v507 = vpop.f32.mrb[0].mxu0
      %v508 = vadd.f32 0.0, %v507
      %509 = vmatprep.mubr.f32.mxu0 0.0
      %510 = vmatmul.mubr.f32.gmra.mrb[0].mxu0 %v239
      %v511 = vpop.f32.mrb[0].mxu0
      %v512 = vadd.f32 0.0, %v511
      %v513 = vpop.f32.mrb[0].mxu0
      %v514 = vadd.f32 0.0, %v513
      %515 = vmatprep.mubr.f32.mxu0 0.0
      %516 = vmatmul.mubr.f32.gmra.mrb[0].mxu0 %v240
      %v517 = vpop.f32.mrb[0].mxu0
      %v518 = vadd.f32 0.0, %v517
      %v519 = vpop.f32.mrb[0].mxu0
      %v520 = vadd.f32 0.0, %v519
      %521 = vdwg.mxu0
      %522 = vmatprep.subr.mxu0 0.0
      %523 = vmatpush1.msra.mxu0 %v243
      %524 = vmatprep.subr.mxu0 0.0
      %525 = vmatpush1.msra.mxu0 %v246
      %526 = vmatprep.subr.mxu0 0.0
      %527 = vmatpush1.msra.mxu0 %v249
      %528 = vmatprep.subr.mxu0 0.0
      %529 = vmatpush1.msra.mxu0 %v252
      %530 = vmatprep.subr.mxu0 0.0
      %531 = vmatpush1.msra.mxu0 %v255
      %532 = vmatprep.subr.mxu0 0.0
      %533 = vmatpush1.msra.mxu0 %v258
      %534 = vmatprep.subr.mxu0 0.0
      %535 = vmatpush1.msra.mxu0 %v261
      %536 = vmatprep.subr.mxu0 0.0
      %537 = vmatpush1.msra.mxu0 %v264
      %538 = vmatprep.subr.mxu0 0.0
      %539 = vmatpush1.msra.mxu0 %v267
      %540 = vmatprep.subr.mxu0 0.0
      %541 = vmatpush1.msra.mxu0 %v270
      %542 = vmatprep.subr.mxu0 0.0
      %543 = vmatpush1.msra.mxu0 %v273
      %544 = vmatprep.subr.mxu0 0.0
      %545 = vmatpush1.msra.mxu0 %v276
      %546 = vmatprep.subr.mxu0 0.0
      %547 = vmatpush1.msra.mxu0 %v279
      %548 = vmatprep.subr.mxu0 0.0
      %549 = vmatpush1.msra.mxu0 %v282
      %550 = vmatprep.subr.mxu0 0.0
      %551 = vmatpush1.msra.mxu0 %v285
      %552 = vmatprep.subr.mxu0 0.0
      %553 = vmatpush1.msra.mxu0 %v288
      %554 = vmatprep.subr.mxu0 0.0
      %555 = vmatpush1.msra.mxu0 0.0
      %556 = vmatprep.subr.mxu0 0.0
      %557 = vmatpush1.msra.mxu0 0.0
      %558 = vmatprep.subr.mxu0 0.0
      %559 = vmatpush1.msra.mxu0 0.0
      %560 = vmatprep.subr.mxu0 0.0
      %561 = vmatpush1.msra.mxu0 0.0
      %562 = vmatprep.subr.mxu0 0.0
      %563 = vmatpush1.msra.mxu0 0.0
      %564 = vmatprep.subr.mxu0 0.0
      %565 = vmatpush1.msra.mxu0 0.0
      %566 = vmatprep.subr.mxu0 0.0
      %567 = vmatpush1.msra.mxu0 0.0
      %568 = vmatprep.subr.mxu0 0.0
      %569 = vmatpush1.msra.mxu0 0.0
      %570 = vmatprep.subr.mxu0 0.0
      %571 = vmatpush1.msra.mxu0 0.0
      %572 = vmatprep.subr.mxu0 0.0
      %573 = vmatpush1.msra.mxu0 0.0
      %574 = vmatprep.subr.mxu0 0.0
      %575 = vmatpush1.msra.mxu0 0.0
      %576 = vmatprep.subr.mxu0 0.0
      %577 = vmatpush1.msra.mxu0 0.0
      %578 = vmatprep.subr.mxu0 0.0
      %579 = vmatpush1.msra.mxu0 0.0
      %580 = vmatprep.subr.mxu0 0.0
      %581 = vmatpush1.msra.mxu0 0.0
      %582 = vmatprep.subr.mxu0 0.0
      %583 = vmatpush1.msra.mxu0 0.0
      %584 = vmatprep.subr.mxu0 0.0
      %585 = vmatpush1.msra.mxu0 0.0
      %586 = vmatprep.mubr.f32.mxu0 0.0
      %587 = vmatmul.mubr.f32.gmra.mrb[0].mxu0 %v213
      %v588 = vpop.f32.mrb[0].mxu0
      %v589 = vadd.f32 0.0, %v588
      %v590 = vpop.f32.mrb[0].mxu0
      %591 = vmatprep.mubr.f32.mxu0 0.0
      %592 = vmatmul.mubr.f32.gmra.mrb[0].mxu0 %v214
      %v593 = vpop.f32.mrb[0].mxu0
      %v594 = vadd.f32 0.0, %v593
      %v595 = vpop.f32.mrb[0].mxu0
      %596 = vmatprep.mubr.f32.mxu0 0.0
      %597 = vmatmul.mubr.f32.gmra.mrb[0].mxu0 %v215
      %v598 = vpop.f32.mrb[0].mxu0
      %v599 = vadd.f32 0.0, %v598
      %v600 = vpop.f32.mrb[0].mxu0
      %601 = vmatprep.mubr.f32.mxu0 0.0
      %602 = vmatmul.mubr.f32.gmra.mrb[0].mxu0 %v216
      %v603 = vpop.f32.mrb[0].mxu0
      %v604 = vadd.f32 0.0, %v603
      %v605 = vpop.f32.mrb[0].mxu0
      %606 = vmatprep.mubr.f32.mxu0 0.0
      %607 = vmatmul.mubr.f32.gmra.mrb[0].mxu0 %v217
      %v608 = vpop.f32.mrb[0].mxu0
      %v609 = vadd.f32 0.0, %v608
      %v610 = vpop.f32.mrb[0].mxu0
      %611 = vmatprep.mubr.f32.mxu0 0.0
      %612 = vmatmul.mubr.f32.gmra.mrb[0].mxu0 %v218
      %v613 = vpop.f32.mrb[0].mxu0
      %v614 = vadd.f32 0.0, %v613
      %v615 = vpop.f32.mrb[0].mxu0
      %616 = vmatprep.mubr.f32.mxu0 0.0
      %617 = vmatmul.mubr.f32.gmra.mrb[0].mxu0 %v219
      %v618 = vpop.f32.mrb[0].mxu0
      %v619 = vadd.f32 0.0, %v618
      %v620 = vpop.f32.mrb[0].mxu0
      %621 = vmatprep.mubr.f32.mxu0 0.0
      %622 = vmatmul.mubr.f32.gmra.mrb[0].mxu0 %v220
      %v623 = vpop.f32.mrb[0].mxu0
      %v624 = vadd.f32 0.0, %v623
      %v625 = vpop.f32.mrb[0].mxu0
      %626 = vmatprep.mubr.f32.mxu0 0.0
      %627 = vmatmul.mubr.f32.gmra.mrb[0].mxu0 %v221
      %v628 = vpop.f32.mrb[0].mxu0
      %v629 = vadd.f32 0.0, %v628
      %v630 = vpop.f32.mrb[0].mxu0
      %631 = vmatprep.mubr.f32.mxu0 0.0
      %632 = vmatmul.mubr.f32.gmra.mrb[0].mxu0 %v222
      %v633 = vpop.f32.mrb[0].mxu0
      %v634 = vadd.f32 0.0, %v633
      %v635 = vpop.f32.mrb[0].mxu0
      %636 = vmatprep.mubr.f32.mxu0 0.0
      %637 = vmatmul.mubr.f32.gmra.mrb[0].mxu0 %v223
      %v638 = vpop.f32.mrb[0].mxu0
      %v639 = vadd.f32 0.0, %v638
      %v640 = vpop.f32.mrb[0].mxu0
      %641 = vmatprep.mubr.f32.mxu0 0.0
      %642 = vmatmul.mubr.f32.gmra.mrb[0].mxu0 %v224
      %v643 = vpop.f32.mrb[0].mxu0
      %v644 = vadd.f32 0.0, %v643
      %v645 = vpop.f32.mrb[0].mxu0
      %646 = vmatprep.mubr.f32.mxu0 0.0
      %647 = vmatmul.mubr.f32.gmra.mrb[0].mxu0 %v225
      %v648 = vpop.f32.mrb[0].mxu0
      %v649 = vadd.f32 0.0, %v648
      %v650 = vpop.f32.mrb[0].mxu0
      %651 = vmatprep.mubr.f32.mxu0 0.0
      %652 = vmatmul.mubr.f32.gmra.mrb[0].mxu0 %v226
      %v653 = vpop.f32.mrb[0].mxu0
      %v654 = vadd.f32 0.0, %v653
      %v655 = vpop.f32.mrb[0].mxu0
      %656 = vmatprep.mubr.f32.mxu0 0.0
      %657 = vmatmul.mubr.f32.gmra.mrb[0].mxu0 %v227
      %v658 = vpop.f32.mrb[0].mxu0
      %v659 = vadd.f32 0.0, %v658
      %v660 = vpop.f32.mrb[0].mxu0
      %661 = vmatprep.mubr.f32.mxu0 0.0
      %662 = vmatmul.mubr.f32.gmra.mrb[0].mxu0 %v228
      %v663 = vpop.f32.mrb[0].mxu0
      %v664 = vadd.f32 0.0, %v663
      %v665 = vpop.f32.mrb[0].mxu0
      %666 = vmatprep.mubr.f32.mxu0 0.0
      %667 = vmatmul.mubr.f32.gmra.mrb[0].mxu0 %v229
      %v668 = vpop.f32.mrb[0].mxu0
      %v669 = vadd.f32 0.0, %v668
      %v670 = vpop.f32.mrb[0].mxu0
      %671 = vmatprep.mubr.f32.mxu0 0.0
      %672 = vmatmul.mubr.f32.gmra.mrb[0].mxu0 %v230
      %v673 = vpop.f32.mrb[0].mxu0
      %v674 = vadd.f32 0.0, %v673
      %v675 = vpop.f32.mrb[0].mxu0
      %676 = vmatprep.mubr.f32.mxu0 0.0
      %677 = vmatmul.mubr.f32.gmra.mrb[0].mxu0 %v231
      %v678 = vpop.f32.mrb[0].mxu0
      %v679 = vadd.f32 0.0, %v678
      %v680 = vpop.f32.mrb[0].mxu0
      %681 = vmatprep.mubr.f32.mxu0 0.0
      %682 = vmatmul.mubr.f32.gmra.mrb[0].mxu0 %v232
      %v683 = vpop.f32.mrb[0].mxu0
      %v684 = vadd.f32 0.0, %v683
      %v685 = vpop.f32.mrb[0].mxu0
      %686 = vmatprep.mubr.f32.mxu0 0.0
      %687 = vmatmul.mubr.f32.gmra.mrb[0].mxu0 %v233
      %v688 = vpop.f32.mrb[0].mxu0
      %v689 = vadd.f32 0.0, %v688
      %v690 = vpop.f32.mrb[0].mxu0
      %691 = vmatprep.mubr.f32.mxu0 0.0
      %692 = vmatmul.mubr.f32.gmra.mrb[0].mxu0 %v234
      %v693 = vpop.f32.mrb[0].mxu0
      %v694 = vadd.f32 0.0, %v693
      %v695 = vpop.f32.mrb[0].mxu0
      %696 = vmatprep.mubr.f32.mxu0 0.0
      %697 = vmatmul.mubr.f32.gmra.mrb[0].mxu0 %v235
      %v698 = vpop.f32.mrb[0].mxu0
      %v699 = vadd.f32 0.0, %v698
      %v700 = vpop.f32.mrb[0].mxu0
      %701 = vmatprep.mubr.f32.mxu0 0.0
      %702 = vmatmul.mubr.f32.gmra.mrb[0].mxu0 %v236
      %v703 = vpop.f32.mrb[0].mxu0
      %v704 = vadd.f32 0.0, %v703
      %v705 = vpop.f32.mrb[0].mxu0
      %706 = vmatprep.mubr.f32.mxu0 0.0
      %707 = vmatmul.mubr.f32.gmra.mrb[0].mxu0 %v237
      %v708 = vpop.f32.mrb[0].mxu0
      %v709 = vadd.f32 0.0, %v708
      %v710 = vpop.f32.mrb[0].mxu0
      %711 = vmatprep.mubr.f32.mxu0 0.0
      %712 = vmatmul.mubr.f32.gmra.mrb[0].mxu0 %v238
      %v713 = vpop.f32.mrb[0].mxu0
      %v714 = vadd.f32 0.0, %v713
      %v715 = vpop.f32.mrb[0].mxu0
      %716 = vmatprep.mubr.f32.mxu0 0.0
      %717 = vmatmul.mubr.f32.gmra.mrb[0].mxu0 %v239
      %v718 = vpop.f32.mrb[0].mxu0
      %v719 = vadd.f32 0.0, %v718
      %v720 = vpop.f32.mrb[0].mxu0
      %721 = vmatprep.mubr.f32.mxu0 0.0
      %722 = vmatmul.mubr.f32.gmra.mrb[0].mxu0 %v240
      %v723 = vpop.f32.mrb[0].mxu0
      %v724 = vadd.f32 0.0, %v723
      %v725 = vpop.f32.mrb[0].mxu0
      %726 = vdwg.mxu0
      %v727 = vld [vmem:[#allocation2 + $0x2] sm:$0xff]
      %v728 = vld [vmem:[#allocation2 + $0xa] sm:$0xff]
      %v729 = vld [vmem:[#allocation2 + $0x1a] sm:$0xff]
      %v730 = vld [vmem:[#allocation2 + $0x22] sm:$0xff]
      %v731 = vld [vmem:[#allocation2 + $0x32] sm:$0xff]
      %v732 = vld [vmem:[#allocation2 + $0x3a] sm:$0xff]
      %v733 = vld [vmem:[#allocation2 + $0x4a] sm:$0xff]
      %v734 = vld [vmem:[#allocation2 + $0x52] sm:$0xff]
      %v735 = vld [vmem:[#allocation2 + $0x62] sm:$0xff]
      %v736 = vld [vmem:[#allocation2 + $0x6a] sm:$0xff]
      %v737 = vld [vmem:[#allocation2 + $0x7a] sm:$0xff]
      %v738 = vld [vmem:[#allocation2 + $0x82] sm:$0xff]
      %v739 = vld [vmem:[#allocation2 + $0x92] sm:$0xff]
      %v740 = vld [vmem:[#allocation2 + $0x9a] sm:$0xff]
      %v741 = vld [vmem:[#allocation2 + $0xaa] sm:$0xff]
      %v742 = vld [vmem:[#allocation2 + $0xb2] sm:$0xff]
      %v743 = vld [vmem:[#allocation2 + $0xc2] sm:$0xff]
      %v744 = vld [vmem:[#allocation2 + $0xca] sm:$0xff]
      %v745 = vld [vmem:[#allocation2 + $0xda] sm:$0xff]
      %v746 = vld [vmem:[#allocation2 + $0xe2] sm:$0xff]
      %v747 = vld [vmem:[#allocation2 + $0xf2] sm:$0xff]
      %v748 = vld [vmem:[#allocation2 + $0xfa] sm:$0xff]
      %v749 = vld [vmem:[#allocation2 + $0x10a] sm:$0xff]
      %v750 = vld [vmem:[#allocation2 + $0x112] sm:$0xff]
      %v751 = vld [vmem:[#allocation2 + $0x122] sm:$0xff]
      %v752 = vld [vmem:[#allocation2 + $0x12a] sm:$0xff]
      %v753 = vld [vmem:[#allocation2 + $0x13a] sm:$0xff]
      %v754 = vld [vmem:[#allocation2 + $0x142] sm:$0xff]
      %v755 = vadd.f32 %v727, %v356
      %v756 = vadd.f32 %v728, %v362
      %v757 = vadd.f32 %v729, %v368
      %v758 = vadd.f32 %v730, %v374
      %v759 = vadd.f32 %v731, %v380
      %v760 = vadd.f32 %v732, %v386
      %v761 = vadd.f32 %v733, %v392
      %v762 = vadd.f32 %v734, %v398
      %v763 = vadd.f32 %v735, %v404
      %v764 = vadd.f32 %v736, %v410
      %v765 = vadd.f32 %v737, %v416
      %v766 = vadd.f32 %v738, %v422
      %v767 = vadd.f32 %v739, %v428
      %v768 = vadd.f32 %v740, %v434
      %v769 = vadd.f32 %v741, %v440
      %v770 = vadd.f32 %v742, %v446
      %v771 = vadd.f32 %v743, %v452
      %v772 = vadd.f32 %v744, %v458
      %v773 = vadd.f32 %v745, %v464
      %v774 = vadd.f32 %v746, %v470
      %v775 = vadd.f32 %v747, %v476
      %v776 = vadd.f32 %v748, %v482
      %v777 = vadd.f32 %v749, %v488
      %v778 = vadd.f32 %v750, %v494
      %v779 = vadd.f32 %v751, %v500
      %v780 = vadd.f32 %v752, %v506
      %v781 = vadd.f32 %v753, %v512
      %v782 = vadd.f32 %v754, %v518
      %783 = vst [vmem:[#allocation2 + $0x2] sm:$0xff] %v755
      %784 = vst [vmem:[#allocation2 + $0xa] sm:$0xff] %v756
      %785 = vst [vmem:[#allocation2 + $0x1a] sm:$0xff] %v757
      %786 = vst [vmem:[#allocation2 + $0x22] sm:$0xff] %v758
      %787 = vst [vmem:[#allocation2 + $0x32] sm:$0xff] %v759
      %788 = vst [vmem:[#allocation2 + $0x3a] sm:$0xff] %v760
      %789 = vst [vmem:[#allocation2 + $0x4a] sm:$0xff] %v761
      %790 = vst [vmem:[#allocation2 + $0x52] sm:$0xff] %v762
      %791 = vst [vmem:[#allocation2 + $0x62] sm:$0xff] %v763
      %792 = vst [vmem:[#allocation2 + $0x6a] sm:$0xff] %v764
      %793 = vst [vmem:[#allocation2 + $0x7a] sm:$0xff] %v765
      %794 = vst [vmem:[#allocation2 + $0x82] sm:$0xff] %v766
      %795 = vst [vmem:[#allocation2 + $0x92] sm:$0xff] %v767
      %796 = vst [vmem:[#allocation2 + $0x9a] sm:$0xff] %v768
      %797 = vst [vmem:[#allocation2 + $0xaa] sm:$0xff] %v769
      %798 = vst [vmem:[#allocation2 + $0xb2] sm:$0xff] %v770
      %799 = vst [vmem:[#allocation2 + $0xc2] sm:$0xff] %v771
      %800 = vst [vmem:[#allocation2 + $0xca] sm:$0xff] %v772
      %801 = vst [vmem:[#allocation2 + $0xda] sm:$0xff] %v773
      %802 = vst [vmem:[#allocation2 + $0xe2] sm:$0xff] %v774
      %803 = vst [vmem:[#allocation2 + $0xf2] sm:$0xff] %v775
      %804 = vst [vmem:[#allocation2 + $0xfa] sm:$0xff] %v776
      %805 = vst [vmem:[#allocation2 + $0x10a] sm:$0xff] %v777
      %806 = vst [vmem:[#allocation2 + $0x112] sm:$0xff] %v778
      %807 = vst [vmem:[#allocation2 + $0x122] sm:$0xff] %v779
      %808 = vst [vmem:[#allocation2 + $0x12a] sm:$0xff] %v780
      %809 = vst [vmem:[#allocation2 + $0x13a] sm:$0xff] %v781
      %810 = vst [vmem:[#allocation2 + $0x142] sm:$0xff] %v782
      %v811 = vld [vmem:[#allocation2 + $0x1] sm:$0xff]
      %v812 = vld [vmem:[#allocation2 + $0x9] sm:$0xff]
      %v813 = vld [vmem:[#allocation2 + $0x19] sm:$0xff]
      %v814 = vld [vmem:[#allocation2 + $0x21] sm:$0xff]
      %v815 = vld [vmem:[#allocation2 + $0x31] sm:$0xff]
      %v816 = vld [vmem:[#allocation2 + $0x39] sm:$0xff]
      %v817 = vld [vmem:[#allocation2 + $0x49] sm:$0xff]
      %v818 = vld [vmem:[#allocation2 + $0x51] sm:$0xff]
      %v819 = vld [vmem:[#allocation2 + $0x61] sm:$0xff]
      %v820 = vld [vmem:[#allocation2 + $0x69] sm:$0xff]
      %v821 = vld [vmem:[#allocation2 + $0x79] sm:$0xff]
      %v822 = vld [vmem:[#allocation2 + $0x81] sm:$0xff]
      %v823 = vld [vmem:[#allocation2 + $0x91] sm:$0xff]
      %v824 = vld [vmem:[#allocation2 + $0x99] sm:$0xff]
      %v825 = vld [vmem:[#allocation2 + $0xa9] sm:$0xff]
      %v826 = vld [vmem:[#allocation2 + $0xb1] sm:$0xff]
      %v827 = vld [vmem:[#allocation2 + $0xc1] sm:$0xff]
      %v828 = vld [vmem:[#allocation2 + $0xc9] sm:$0xff]
      %v829 = vld [vmem:[#allocation2 + $0xd9] sm:$0xff]
      %v830 = vld [vmem:[#allocation2 + $0xe1] sm:$0xff]
      %v831 = vld [vmem:[#allocation2 + $0xf1] sm:$0xff]
      %v832 = vld [vmem:[#allocation2 + $0xf9] sm:$0xff]
      %v833 = vld [vmem:[#allocation2 + $0x109] sm:$0xff]
      %v834 = vld [vmem:[#allocation2 + $0x111] sm:$0xff]
      %v835 = vld [vmem:[#allocation2 + $0x121] sm:$0xff]
      %v836 = vld [vmem:[#allocation2 + $0x129] sm:$0xff]
      %v837 = vld [vmem:[#allocation2 + $0x139] sm:$0xff]
      %v838 = vld [vmem:[#allocation2 + $0x141] sm:$0xff]
      %v839 = vadd.f32 %v811, %v358
      %v840 = vadd.f32 %v812, %v364
      %v841 = vadd.f32 %v813, %v370
      %v842 = vadd.f32 %v814, %v376
      %v843 = vadd.f32 %v815, %v382
      %v844 = vadd.f32 %v816, %v388
      %v845 = vadd.f32 %v817, %v394
      %v846 = vadd.f32 %v818, %v400
      %v847 = vadd.f32 %v819, %v406
      %v848 = vadd.f32 %v820, %v412
      %v849 = vadd.f32 %v821, %v418
      %v850 = vadd.f32 %v822, %v424
      %v851 = vadd.f32 %v823, %v430
      %v852 = vadd.f32 %v824, %v436
      %v853 = vadd.f32 %v825, %v442
      %v854 = vadd.f32 %v826, %v448
      %v855 = vadd.f32 %v827, %v454
      %v856 = vadd.f32 %v828, %v460
      %v857 = vadd.f32 %v829, %v466
      %v858 = vadd.f32 %v830, %v472
      %v859 = vadd.f32 %v831, %v478
      %v860 = vadd.f32 %v832, %v484
      %v861 = vadd.f32 %v833, %v490
      %v862 = vadd.f32 %v834, %v496
      %v863 = vadd.f32 %v835, %v502
      %v864 = vadd.f32 %v836, %v508
      %v865 = vadd.f32 %v837, %v514
      %v866 = vadd.f32 %v838, %v520
      %867 = vst [vmem:[#allocation2 + $0x1] sm:$0xff] %v839
      %868 = vst [vmem:[#allocation2 + $0x9] sm:$0xff] %v840
      %869 = vst [vmem:[#allocation2 + $0x19] sm:$0xff] %v841
      %870 = vst [vmem:[#allocation2 + $0x21] sm:$0xff] %v842
      %871 = vst [vmem:[#allocation2 + $0x31] sm:$0xff] %v843
      %872 = vst [vmem:[#allocation2 + $0x39] sm:$0xff] %v844
      %873 = vst [vmem:[#allocation2 + $0x49] sm:$0xff] %v845
      %874 = vst [vmem:[#allocation2 + $0x51] sm:$0xff] %v846
      %875 = vst [vmem:[#allocation2 + $0x61] sm:$0xff] %v847
      %876 = vst [vmem:[#allocation2 + $0x69] sm:$0xff] %v848
      %877 = vst [vmem:[#allocation2 + $0x79] sm:$0xff] %v849
      %878 = vst [vmem:[#allocation2 + $0x81] sm:$0xff] %v850
      %879 = vst [vmem:[#allocation2 + $0x91] sm:$0xff] %v851
      %880 = vst [vmem:[#allocation2 + $0x99] sm:$0xff] %v852
      %881 = vst [vmem:[#allocation2 + $0xa9] sm:$0xff] %v853
      %882 = vst [vmem:[#allocation2 + $0xb1] sm:$0xff] %v854
      %883 = vst [vmem:[#allocation2 + $0xc1] sm:$0xff] %v855
      %884 = vst [vmem:[#allocation2 + $0xc9] sm:$0xff] %v856
      %885 = vst [vmem:[#allocation2 + $0xd9] sm:$0xff] %v857
      %886 = vst [vmem:[#allocation2 + $0xe1] sm:$0xff] %v858
      %887 = vst [vmem:[#allocation2 + $0xf1] sm:$0xff] %v859
      %888 = vst [vmem:[#allocation2 + $0xf9] sm:$0xff] %v860
      %889 = vst [vmem:[#allocation2 + $0x109] sm:$0xff] %v861
      %890 = vst [vmem:[#allocation2 + $0x111] sm:$0xff] %v862
      %891 = vst [vmem:[#allocation2 + $0x121] sm:$0xff] %v863
      %892 = vst [vmem:[#allocation2 + $0x129] sm:$0xff] %v864
      %893 = vst [vmem:[#allocation2 + $0x139] sm:$0xff] %v865
      %894 = vst [vmem:[#allocation2 + $0x141] sm:$0xff] %v866
      %v895 = vld [vmem:[#allocation2] sm:$0xff]
      %v896 = vld [vmem:[#allocation2 + $0x8] sm:$0xff]
      %v897 = vld [vmem:[#allocation2 + $0x18] sm:$0xff]
      %v898 = vld [vmem:[#allocation2 + $0x20] sm:$0xff]
      %v899 = vld [vmem:[#allocation2 + $0x30] sm:$0xff]
      %v900 = vld [vmem:[#allocation2 + $0x38] sm:$0xff]
      %v901 = vld [vmem:[#allocation2 + $0x48] sm:$0xff]
      %v902 = vld [vmem:[#allocation2 + $0x50] sm:$0xff]
      %v903 = vld [vmem:[#allocation2 + $0x60] sm:$0xff]
      %v904 = vld [vmem:[#allocation2 + $0x68] sm:$0xff]
      %v905 = vld [vmem:[#allocation2 + $0x78] sm:$0xff]
      %v906 = vld [vmem:[#allocation2 + $0x80] sm:$0xff]
      %v907 = vld [vmem:[#allocation2 + $0x90] sm:$0xff]
      %v908 = vld [vmem:[#allocation2 + $0x98] sm:$0xff]
      %v909 = vld [vmem:[#allocation2 + $0xa8] sm:$0xff]
      %v910 = vld [vmem:[#allocation2 + $0xb0] sm:$0xff]
      %v911 = vld [vmem:[#allocation2 + $0xc0] sm:$0xff]
      %v912 = vld [vmem:[#allocation2 + $0xc8] sm:$0xff]
      %v913 = vld [vmem:[#allocation2 + $0xd8] sm:$0xff]
      %v914 = vld [vmem:[#allocation2 + $0xe0] sm:$0xff]
      %v915 = vld [vmem:[#allocation2 + $0xf0] sm:$0xff]
      %v916 = vld [vmem:[#allocation2 + $0xf8] sm:$0xff]
      %v917 = vld [vmem:[#allocation2 + $0x108] sm:$0xff]
      %v918 = vld [vmem:[#allocation2 + $0x110] sm:$0xff]
      %v919 = vld [vmem:[#allocation2 + $0x120] sm:$0xff]
      %v920 = vld [vmem:[#allocation2 + $0x128] sm:$0xff]
      %v921 = vld [vmem:[#allocation2 + $0x138] sm:$0xff]
      %v922 = vld [vmem:[#allocation2 + $0x140] sm:$0xff]
      %v923 = vadd.f32 %v895, %v589
      %v924 = vadd.f32 %v896, %v594
      %v925 = vadd.f32 %v897, %v599
      %v926 = vadd.f32 %v898, %v604
      %v927 = vadd.f32 %v899, %v609
      %v928 = vadd.f32 %v900, %v614
      %v929 = vadd.f32 %v901, %v619
      %v930 = vadd.f32 %v902, %v624
      %v931 = vadd.f32 %v903, %v629
      %v932 = vadd.f32 %v904, %v634
      %v933 = vadd.f32 %v905, %v639
      %v934 = vadd.f32 %v906, %v644
      %v935 = vadd.f32 %v907, %v649
      %v936 = vadd.f32 %v908, %v654
      %v937 = vadd.f32 %v909, %v659
      %v938 = vadd.f32 %v910, %v664
      %v939 = vadd.f32 %v911, %v669
      %v940 = vadd.f32 %v912, %v674
      %v941 = vadd.f32 %v913, %v679
      %v942 = vadd.f32 %v914, %v684
      %v943 = vadd.f32 %v915, %v689
      %v944 = vadd.f32 %v916, %v694
      %v945 = vadd.f32 %v917, %v699
      %v946 = vadd.f32 %v918, %v704
      %v947 = vadd.f32 %v919, %v709
      %v948 = vadd.f32 %v920, %v714
      %v949 = vadd.f32 %v921, %v719
      %v950 = vadd.f32 %v922, %v724
      %951 = vst [vmem:[#allocation2] sm:$0xff] %v923
      %952 = vst [vmem:[#allocation2 + $0x8] sm:$0xff] %v924
      %953 = vst [vmem:[#allocation2 + $0x18] sm:$0xff] %v925
      %954 = vst [vmem:[#allocation2 + $0x20] sm:$0xff] %v926
      %955 = vst [vmem:[#allocation2 + $0x30] sm:$0xff] %v927
      %956 = vst [vmem:[#allocation2 + $0x38] sm:$0xff] %v928
      %957 = vst [vmem:[#allocation2 + $0x48] sm:$0xff] %v929
      %958 = vst [vmem:[#allocation2 + $0x50] sm:$0xff] %v930
      %959 = vst [vmem:[#allocation2 + $0x60] sm:$0xff] %v931
      %960 = vst [vmem:[#allocation2 + $0x68] sm:$0xff] %v932
      %961 = vst [vmem:[#allocation2 + $0x78] sm:$0xff] %v933
      %962 = vst [vmem:[#allocation2 + $0x80] sm:$0xff] %v934
      %963 = vst [vmem:[#allocation2 + $0x90] sm:$0xff] %v935
      %964 = vst [vmem:[#allocation2 + $0x98] sm:$0xff] %v936
      %965 = vst [vmem:[#allocation2 + $0xa8] sm:$0xff] %v937
      %966 = vst [vmem:[#allocation2 + $0xb0] sm:$0xff] %v938
      %967 = vst [vmem:[#allocation2 + $0xc0] sm:$0xff] %v939
      %968 = vst [vmem:[#allocation2 + $0xc8] sm:$0xff] %v940
      %969 = vst [vmem:[#allocation2 + $0xd8] sm:$0xff] %v941
      %970 = vst [vmem:[#allocation2 + $0xe0] sm:$0xff] %v942
      %971 = vst [vmem:[#allocation2 + $0xf0] sm:$0xff] %v943
      %972 = vst [vmem:[#allocation2 + $0xf8] sm:$0xff] %v944
      %973 = vst [vmem:[#allocation2 + $0x108] sm:$0xff] %v945
      %974 = vst [vmem:[#allocation2 + $0x110] sm:$0xff] %v946
      %975 = vst [vmem:[#allocation2 + $0x120] sm:$0xff] %v947
      %976 = vst [vmem:[#allocation2 + $0x128] sm:$0xff] %v948
      %977 = vst [vmem:[#allocation2 + $0x138] sm:$0xff] %v949
      %978 = vst [vmem:[#allocation2 + $0x140] sm:$0xff] %v950
      %s979 = scalar_lea.vmem %s165, 16
      %v980 = vld [vmem:[%s979] sm:$0xff]
      %v981 = vld [vmem:[%s979 + $0x8] sm:$0xff]
      %v982 = vld [vmem:[%s979 + $0x10] sm:$0xff]
      %v983 = vld [vmem:[%s979 + $0x18] sm:$0xff]
      %v984 = vld [vmem:[%s979 + $0x20] sm:$0xff]
      %v985 = vld [vmem:[%s979 + $0x28] sm:$0xff]
      %v986 = vld [vmem:[%s979 + $0x30] sm:$0xff]
      %v987 = vld [vmem:[%s979 + $0x38] sm:$0xff]
      %v988 = vld [vmem:[%s979 + $0x40] sm:$0xff]
      %v989 = vld [vmem:[%s979 + $0x48] sm:$0xff]
      %v990 = vld [vmem:[%s979 + $0x50] sm:$0xff]
      %v991 = vld [vmem:[%s979 + $0x58] sm:$0xff]
      %v992 = vld [vmem:[%s979 + $0x60] sm:$0xff]
      %v993 = vld [vmem:[%s979 + $0x68] sm:$0xff]
      %v994 = vld [vmem:[%s979 + $0x70] sm:$0xff]
      %v995 = vld [vmem:[%s979 + $0x78] sm:$0xff]
      %v996 = vld [vmem:[%s979 + $0x80] sm:$0xff]
      %v997 = vld [vmem:[%s979 + $0x88] sm:$0xff]
      %v998 = vld [vmem:[%s979 + $0x90] sm:$0xff]
      %v999 = vld [vmem:[%s979 + $0x98] sm:$0xff]
      %v1000 = vld [vmem:[%s979 + $0xa0] sm:$0xff]
      %v1001 = vld [vmem:[%s979 + $0xa8] sm:$0xff]
      %v1002 = vld [vmem:[%s979 + $0xb0] sm:$0xff]
      %v1003 = vld [vmem:[%s979 + $0xb8] sm:$0xff]
      %v1004 = vld [vmem:[%s979 + $0xc0] sm:$0xff]
      %v1005 = vld [vmem:[%s979 + $0xc8] sm:$0xff]
      %v1006 = vld [vmem:[%s979 + $0xd0] sm:$0xff]
      %v1007 = vld [vmem:[%s979 + $0xd8] sm:$0xff]
      %s1008 = scalar_lea.vmem %s1, 384
      %v1009 = vld [vmem:[%s1008] sm:$0xff]
      %v1010 = vld [vmem:[%s1008 + $0x8] sm:$0xff]
      %v1011 = vld [vmem:[%s1008 + $0x10] sm:$0xff]
      %v1012 = vld [vmem:[%s1008 + $0x18] sm:$0xff]
      %v1013 = vld [vmem:[%s1008 + $0x20] sm:$0xff]
      %v1014 = vld [vmem:[%s1008 + $0x28] sm:$0xff]
      %v1015 = vld [vmem:[%s1008 + $0x30] sm:$0xff]
      %v1016 = vld [vmem:[%s1008 + $0x38] sm:$0xff]
      %v1017 = vld [vmem:[%s1008 + $0x40] sm:$0xff]
      %v1018 = vld [vmem:[%s1008 + $0x48] sm:$0xff]
      %v1019 = vld [vmem:[%s1008 + $0x50] sm:$0xff]
      %v1020 = vld [vmem:[%s1008 + $0x58] sm:$0xff]
      %v1021 = vld [vmem:[%s1008 + $0x60] sm:$0xff]
      %v1022 = vld [vmem:[%s1008 + $0x68] sm:$0xff]
      %v1023 = vld [vmem:[%s1008 + $0x70] sm:$0xff]
      %v1024 = vld [vmem:[%s1008 + $0x78] sm:$0xff]
      %v1025 = vld [vmem:[%s1008 + $0x80] sm:$0xff]
      %v1026 = vld [vmem:[%s1008 + $0x88] sm:$0xff]
      %v1027 = vld [vmem:[%s1008 + $0x90] sm:$0xff]
      %v1028 = vld [vmem:[%s1008 + $0x98] sm:$0xff]
      %v1029 = vld [vmem:[%s1008 + $0xa0] sm:$0xff]
      %v1030 = vld [vmem:[%s1008 + $0xa8] sm:$0xff]
      %v1031 = vld [vmem:[%s1008 + $0xb0] sm:$0xff]
      %v1032 = vld [vmem:[%s1008 + $0xb8] sm:$0xff]
      %v1033 = vld [vmem:[%s1008 + $0xc0] sm:$0xff]
      %v1034 = vld [vmem:[%s1008 + $0xc8] sm:$0xff]
      %v1035 = vld [vmem:[%s1008 + $0xd0] sm:$0xff]
      %v1036 = vld [vmem:[%s1008 + $0xd8] sm:$0xff]
      %v1037 = vld [vmem:[%s1008 + $0xe0] sm:$0xff]
      %v1038 = vld [vmem:[%s1008 + $0xe8] sm:$0xff]
      %v1039 = vld [vmem:[%s1008 + $0xf0] sm:$0xff]
      %v1040 = vld [vmem:[%s1008 + $0xf8] sm:$0xff]
      %v1041 = vld [vmem:[%s1008 + $0x100] sm:$0xff]
      %v1042 = vld [vmem:[%s1008 + $0x108] sm:$0xff]
      %v1043 = vld [vmem:[%s1008 + $0x110] sm:$0xff]
      %v1044 = vld [vmem:[%s1008 + $0x118] sm:$0xff]
      %v1045 = vld [vmem:[%s1008 + $0x120] sm:$0xff]
      %v1046 = vld [vmem:[%s1008 + $0x128] sm:$0xff]
      %v1047 = vld [vmem:[%s1008 + $0x130] sm:$0xff]
      %v1048 = vld [vmem:[%s1008 + $0x138] sm:$0xff]
      %v1049 = vld [vmem:[%s1008 + $0x140] sm:$0xff]
      %v1050 = vld [vmem:[%s1008 + $0x148] sm:$0xff]
      %v1051 = vld [vmem:[%s1008 + $0x150] sm:$0xff]
      %v1052 = vld [vmem:[%s1008 + $0x158] sm:$0xff]
      %v1053 = vld [vmem:[%s1008 + $0x160] sm:$0xff]
      %v1054 = vld [vmem:[%s1008 + $0x168] sm:$0xff]
      %v1055 = vld [vmem:[%s1008 + $0x170] sm:$0xff]
      %v1056 = vld [vmem:[%s1008 + $0x178] sm:$0xff]
      %1057 = vmatprep.subr.mxu0 %v1010
      %1058 = vmatpush1.msra.mxu0 %v1009
      %1059 = vmatprep.subr.mxu0 %v1013
      %1060 = vmatpush1.msra.mxu0 %v1012
      %1061 = vmatprep.subr.mxu0 %v1016
      %1062 = vmatpush1.msra.mxu0 %v1015
      %1063 = vmatprep.subr.mxu0 %v1019
      %1064 = vmatpush1.msra.mxu0 %v1018
      %1065 = vmatprep.subr.mxu0 %v1022
      %1066 = vmatpush1.msra.mxu0 %v1021
      %1067 = vmatprep.subr.mxu0 %v1025
      %1068 = vmatpush1.msra.mxu0 %v1024
      %1069 = vmatprep.subr.mxu0 %v1028
      %1070 = vmatpush1.msra.mxu0 %v1027
      %1071 = vmatprep.subr.mxu0 %v1031
      %1072 = vmatpush1.msra.mxu0 %v1030
      %1073 = vmatprep.subr.mxu0 %v1034
      %1074 = vmatpush1.msra.mxu0 %v1033
      %1075 = vmatprep.subr.mxu0 %v1037
      %1076 = vmatpush1.msra.mxu0 %v1036
      %1077 = vmatprep.subr.mxu0 %v1040
      %1078 = vmatpush1.msra.mxu0 %v1039
      %1079 = vmatprep.subr.mxu0 %v1043
      %1080 = vmatpush1.msra.mxu0 %v1042
      %1081 = vmatprep.subr.mxu0 %v1046
      %1082 = vmatpush1.msra.mxu0 %v1045
      %1083 = vmatprep.subr.mxu0 %v1049
      %1084 = vmatpush1.msra.mxu0 %v1048
      %1085 = vmatprep.subr.mxu0 %v1052
      %1086 = vmatpush1.msra.mxu0 %v1051
      %1087 = vmatprep.subr.mxu0 %v1055
      %1088 = vmatpush1.msra.mxu0 %v1054
      %1089 = vmatprep.subr.mxu0 0.0
      %1090 = vmatpush1.msra.mxu0 0.0
      %1091 = vmatprep.subr.mxu0 0.0
      %1092 = vmatpush1.msra.mxu0 0.0
      %1093 = vmatprep.subr.mxu0 0.0
      %1094 = vmatpush1.msra.mxu0 0.0
      %1095 = vmatprep.subr.mxu0 0.0
      %1096 = vmatpush1.msra.mxu0 0.0
      %1097 = vmatprep.subr.mxu0 0.0
      %1098 = vmatpush1.msra.mxu0 0.0
      %1099 = vmatprep.subr.mxu0 0.0
      %1100 = vmatpush1.msra.mxu0 0.0
      %1101 = vmatprep.subr.mxu0 0.0
      %1102 = vmatpush1.msra.mxu0 0.0
      %1103 = vmatprep.subr.mxu0 0.0
      %1104 = vmatpush1.msra.mxu0 0.0
      %1105 = vmatprep.subr.mxu0 0.0
      %1106 = vmatpush1.msra.mxu0 0.0
      %1107 = vmatprep.subr.mxu0 0.0
      %1108 = vmatpush1.msra.mxu0 0.0
      %1109 = vmatprep.subr.mxu0 0.0
      %1110 = vmatpush1.msra.mxu0 0.0
      %1111 = vmatprep.subr.mxu0 0.0
      %1112 = vmatpush1.msra.mxu0 0.0
      %1113 = vmatprep.subr.mxu0 0.0
      %1114 = vmatpush1.msra.mxu0 0.0
      %1115 = vmatprep.subr.mxu0 0.0
      %1116 = vmatpush1.msra.mxu0 0.0
      %1117 = vmatprep.subr.mxu0 0.0
      %1118 = vmatpush1.msra.mxu0 0.0
      %1119 = vmatprep.subr.mxu0 0.0
      %1120 = vmatpush1.msra.mxu0 0.0
      %1121 = vmatprep.mubr.f32.mxu0 0.0
      %1122 = vmatmul.mubr.f32.gmra.mrb[0].mxu0 %v980
      %v1123 = vpop.f32.mrb[0].mxu0
      %v1124 = vadd.f32 0.0, %v1123
      %v1125 = vpop.f32.mrb[0].mxu0
      %v1126 = vadd.f32 0.0, %v1125
      %1127 = vmatprep.mubr.f32.mxu0 0.0
      %1128 = vmatmul.mubr.f32.gmra.mrb[0].mxu0 %v981
      %v1129 = vpop.f32.mrb[0].mxu0
      %v1130 = vadd.f32 0.0, %v1129
      %v1131 = vpop.f32.mrb[0].mxu0
      %v1132 = vadd.f32 0.0, %v1131
      %1133 = vmatprep.mubr.f32.mxu0 0.0
      %1134 = vmatmul.mubr.f32.gmra.mrb[0].mxu0 %v982
      %v1135 = vpop.f32.mrb[0].mxu0
      %v1136 = vadd.f32 0.0, %v1135
      %v1137 = vpop.f32.mrb[0].mxu0
      %v1138 = vadd.f32 0.0, %v1137
      %1139 = vmatprep.mubr.f32.mxu0 0.0
      %1140 = vmatmul.mubr.f32.gmra.mrb[0].mxu0 %v983
      %v1141 = vpop.f32.mrb[0].mxu0
      %v1142 = vadd.f32 0.0, %v1141
      %v1143 = vpop.f32.mrb[0].mxu0
      %v1144 = vadd.f32 0.0, %v1143
      %1145 = vmatprep.mubr.f32.mxu0 0.0
      %1146 = vmatmul.mubr.f32.gmra.mrb[0].mxu0 %v984
      %v1147 = vpop.f32.mrb[0].mxu0
      %v1148 = vadd.f32 0.0, %v1147
      %v1149 = vpop.f32.mrb[0].mxu0
      %v1150 = vadd.f32 0.0, %v1149
      %1151 = vmatprep.mubr.f32.mxu0 0.0
      %1152 = vmatmul.mubr.f32.gmra.mrb[0].mxu0 %v985
      %v1153 = vpop.f32.mrb[0].mxu0
      %v1154 = vadd.f32 0.0, %v1153
      %v1155 = vpop.f32.mrb[0].mxu0
      %v1156 = vadd.f32 0.0, %v1155
      %1157 = vmatprep.mubr.f32.mxu0 0.0
      %1158 = vmatmul.mubr.f32.gmra.mrb[0].mxu0 %v986
      %v1159 = vpop.f32.mrb[0].mxu0
      %v1160 = vadd.f32 0.0, %v1159
      %v1161 = vpop.f32.mrb[0].mxu0
      %v1162 = vadd.f32 0.0, %v1161
      %1163 = vmatprep.mubr.f32.mxu0 0.0
      %1164 = vmatmul.mubr.f32.gmra.mrb[0].mxu0 %v987
      %v1165 = vpop.f32.mrb[0].mxu0
      %v1166 = vadd.f32 0.0, %v1165
      %v1167 = vpop.f32.mrb[0].mxu0
      %v1168 = vadd.f32 0.0, %v1167
      %1169 = vmatprep.mubr.f32.mxu0 0.0
      %1170 = vmatmul.mubr.f32.gmra.mrb[0].mxu0 %v988
      %v1171 = vpop.f32.mrb[0].mxu0
      %v1172 = vadd.f32 0.0, %v1171
      %v1173 = vpop.f32.mrb[0].mxu0
      %v1174 = vadd.f32 0.0, %v1173
      %1175 = vmatprep.mubr.f32.mxu0 0.0
      %1176 = vmatmul.mubr.f32.gmra.mrb[0].mxu0 %v989
      %v1177 = vpop.f32.mrb[0].mxu0
      %v1178 = vadd.f32 0.0, %v1177
      %v1179 = vpop.f32.mrb[0].mxu0
      %v1180 = vadd.f32 0.0, %v1179
      %1181 = vmatprep.mubr.f32.mxu0 0.0
      %1182 = vmatmul.mubr.f32.gmra.mrb[0].mxu0 %v990
      %v1183 = vpop.f32.mrb[0].mxu0
      %v1184 = vadd.f32 0.0, %v1183
      %v1185 = vpop.f32.mrb[0].mxu0
      %v1186 = vadd.f32 0.0, %v1185
      %1187 = vmatprep.mubr.f32.mxu0 0.0
      %1188 = vmatmul.mubr.f32.gmra.mrb[0].mxu0 %v991
      %v1189 = vpop.f32.mrb[0].mxu0
      %v1190 = vadd.f32 0.0, %v1189
      %v1191 = vpop.f32.mrb[0].mxu0
      %v1192 = vadd.f32 0.0, %v1191
      %1193 = vmatprep.mubr.f32.mxu0 0.0
      %1194 = vmatmul.mubr.f32.gmra.mrb[0].mxu0 %v992
      %v1195 = vpop.f32.mrb[0].mxu0
      %v1196 = vadd.f32 0.0, %v1195
      %v1197 = vpop.f32.mrb[0].mxu0
      %v1198 = vadd.f32 0.0, %v1197
      %1199 = vmatprep.mubr.f32.mxu0 0.0
      %1200 = vmatmul.mubr.f32.gmra.mrb[0].mxu0 %v993
      %v1201 = vpop.f32.mrb[0].mxu0
      %v1202 = vadd.f32 0.0, %v1201
      %v1203 = vpop.f32.mrb[0].mxu0
      %v1204 = vadd.f32 0.0, %v1203
      %1205 = vmatprep.mubr.f32.mxu0 0.0
      %1206 = vmatmul.mubr.f32.gmra.mrb[0].mxu0 %v994
      %v1207 = vpop.f32.mrb[0].mxu0
      %v1208 = vadd.f32 0.0, %v1207
      %v1209 = vpop.f32.mrb[0].mxu0
      %v1210 = vadd.f32 0.0, %v1209
      %1211 = vmatprep.mubr.f32.mxu0 0.0
      %1212 = vmatmul.mubr.f32.gmra.mrb[0].mxu0 %v995
      %v1213 = vpop.f32.mrb[0].mxu0
      %v1214 = vadd.f32 0.0, %v1213
      %v1215 = vpop.f32.mrb[0].mxu0
      %v1216 = vadd.f32 0.0, %v1215
      %1217 = vmatprep.mubr.f32.mxu0 0.0
      %1218 = vmatmul.mubr.f32.gmra.mrb[0].mxu0 %v996
      %v1219 = vpop.f32.mrb[0].mxu0
      %v1220 = vadd.f32 0.0, %v1219
      %v1221 = vpop.f32.mrb[0].mxu0
      %v1222 = vadd.f32 0.0, %v1221
      %1223 = vmatprep.mubr.f32.mxu0 0.0
      %1224 = vmatmul.mubr.f32.gmra.mrb[0].mxu0 %v997
      %v1225 = vpop.f32.mrb[0].mxu0
      %v1226 = vadd.f32 0.0, %v1225
      %v1227 = vpop.f32.mrb[0].mxu0
      %v1228 = vadd.f32 0.0, %v1227
      %1229 = vmatprep.mubr.f32.mxu0 0.0
      %1230 = vmatmul.mubr.f32.gmra.mrb[0].mxu0 %v998
      %v1231 = vpop.f32.mrb[0].mxu0
      %v1232 = vadd.f32 0.0, %v1231
      %v1233 = vpop.f32.mrb[0].mxu0
      %v1234 = vadd.f32 0.0, %v1233
      %1235 = vmatprep.mubr.f32.mxu0 0.0
      %1236 = vmatmul.mubr.f32.gmra.mrb[0].mxu0 %v999
      %v1237 = vpop.f32.mrb[0].mxu0
      %v1238 = vadd.f32 0.0, %v1237
      %v1239 = vpop.f32.mrb[0].mxu0
      %v1240 = vadd.f32 0.0, %v1239
      %1241 = vmatprep.mubr.f32.mxu0 0.0
      %1242 = vmatmul.mubr.f32.gmra.mrb[0].mxu0 %v1000
      %v1243 = vpop.f32.mrb[0].mxu0
      %v1244 = vadd.f32 0.0, %v1243
      %v1245 = vpop.f32.mrb[0].mxu0
      %v1246 = vadd.f32 0.0, %v1245
      %1247 = vmatprep.mubr.f32.mxu0 0.0
      %1248 = vmatmul.mubr.f32.gmra.mrb[0].mxu0 %v1001
      %v1249 = vpop.f32.mrb[0].mxu0
      %v1250 = vadd.f32 0.0, %v1249
      %v1251 = vpop.f32.mrb[0].mxu0
      %v1252 = vadd.f32 0.0, %v1251
      %1253 = vmatprep.mubr.f32.mxu0 0.0
      %1254 = vmatmul.mubr.f32.gmra.mrb[0].mxu0 %v1002
      %v1255 = vpop.f32.mrb[0].mxu0
      %v1256 = vadd.f32 0.0, %v1255
      %v1257 = vpop.f32.mrb[0].mxu0
      %v1258 = vadd.f32 0.0, %v1257
      %1259 = vmatprep.mubr.f32.mxu0 0.0
      %1260 = vmatmul.mubr.f32.gmra.mrb[0].mxu0 %v1003
      %v1261 = vpop.f32.mrb[0].mxu0
      %v1262 = vadd.f32 0.0, %v1261
      %v1263 = vpop.f32.mrb[0].mxu0
      %v1264 = vadd.f32 0.0, %v1263
      %1265 = vmatprep.mubr.f32.mxu0 0.0
      %1266 = vmatmul.mubr.f32.gmra.mrb[0].mxu0 %v1004
      %v1267 = vpop.f32.mrb[0].mxu0
      %v1268 = vadd.f32 0.0, %v1267
      %v1269 = vpop.f32.mrb[0].mxu0
      %v1270 = vadd.f32 0.0, %v1269
      %1271 = vmatprep.mubr.f32.mxu0 0.0
      %1272 = vmatmul.mubr.f32.gmra.mrb[0].mxu0 %v1005
      %v1273 = vpop.f32.mrb[0].mxu0
      %v1274 = vadd.f32 0.0, %v1273
      %v1275 = vpop.f32.mrb[0].mxu0
      %v1276 = vadd.f32 0.0, %v1275
      %1277 = vmatprep.mubr.f32.mxu0 0.0
      %1278 = vmatmul.mubr.f32.gmra.mrb[0].mxu0 %v1006
      %v1279 = vpop.f32.mrb[0].mxu0
      %v1280 = vadd.f32 0.0, %v1279
      %v1281 = vpop.f32.mrb[0].mxu0
      %v1282 = vadd.f32 0.0, %v1281
      %1283 = vmatprep.mubr.f32.mxu0 0.0
      %1284 = vmatmul.mubr.f32.gmra.mrb[0].mxu0 %v1007
      %v1285 = vpop.f32.mrb[0].mxu0
      %v1286 = vadd.f32 0.0, %v1285
      %v1287 = vpop.f32.mrb[0].mxu0
      %v1288 = vadd.f32 0.0, %v1287
      %1289 = vdwg.mxu0
      %1290 = vmatprep.subr.mxu0 0.0
      %1291 = vmatpush1.msra.mxu0 %v1011
      %1292 = vmatprep.subr.mxu0 0.0
      %1293 = vmatpush1.msra.mxu0 %v1014
      %1294 = vmatprep.subr.mxu0 0.0
      %1295 = vmatpush1.msra.mxu0 %v1017
      %1296 = vmatprep.subr.mxu0 0.0
      %1297 = vmatpush1.msra.mxu0 %v1020
      %1298 = vmatprep.subr.mxu0 0.0
      %1299 = vmatpush1.msra.mxu0 %v1023
      %1300 = vmatprep.subr.mxu0 0.0
      %1301 = vmatpush1.msra.mxu0 %v1026
      %1302 = vmatprep.subr.mxu0 0.0
      %1303 = vmatpush1.msra.mxu0 %v1029
      %1304 = vmatprep.subr.mxu0 0.0
      %1305 = vmatpush1.msra.mxu0 %v1032
      %1306 = vmatprep.subr.mxu0 0.0
      %1307 = vmatpush1.msra.mxu0 %v1035
      %1308 = vmatprep.subr.mxu0 0.0
      %1309 = vmatpush1.msra.mxu0 %v1038
      %1310 = vmatprep.subr.mxu0 0.0
      %1311 = vmatpush1.msra.mxu0 %v1041
      %1312 = vmatprep.subr.mxu0 0.0
      %1313 = vmatpush1.msra.mxu0 %v1044
      %1314 = vmatprep.subr.mxu0 0.0
      %1315 = vmatpush1.msra.mxu0 %v1047
      %1316 = vmatprep.subr.mxu0 0.0
      %1317 = vmatpush1.msra.mxu0 %v1050
      %1318 = vmatprep.subr.mxu0 0.0
      %1319 = vmatpush1.msra.mxu0 %v1053
      %1320 = vmatprep.subr.mxu0 0.0
      %1321 = vmatpush1.msra.mxu0 %v1056
      %1322 = vmatprep.subr.mxu0 0.0
      %1323 = vmatpush1.msra.mxu0 0.0
      %1324 = vmatprep.subr.mxu0 0.0
      %1325 = vmatpush1.msra.mxu0 0.0
      %1326 = vmatprep.subr.mxu0 0.0
      %1327 = vmatpush1.msra.mxu0 0.0
      %1328 = vmatprep.subr.mxu0 0.0
      %1329 = vmatpush1.msra.mxu0 0.0
      %1330 = vmatprep.subr.mxu0 0.0
      %1331 = vmatpush1.msra.mxu0 0.0
      %1332 = vmatprep.subr.mxu0 0.0
      %1333 = vmatpush1.msra.mxu0 0.0
      %1334 = vmatprep.subr.mxu0 0.0
      %1335 = vmatpush1.msra.mxu0 0.0
      %1336 = vmatprep.subr.mxu0 0.0
      %1337 = vmatpush1.msra.mxu0 0.0
      %1338 = vmatprep.subr.mxu0 0.0
      %1339 = vmatpush1.msra.mxu0 0.0
      %1340 = vmatprep.subr.mxu0 0.0
      %1341 = vmatpush1.msra.mxu0 0.0
      %1342 = vmatprep.subr.mxu0 0.0
      %1343 = vmatpush1.msra.mxu0 0.0
      %1344 = vmatprep.subr.mxu0 0.0
      %1345 = vmatpush1.msra.mxu0 0.0
      %1346 = vmatprep.subr.mxu0 0.0
      %1347 = vmatpush1.msra.mxu0 0.0
      %1348 = vmatprep.subr.mxu0 0.0
      %1349 = vmatpush1.msra.mxu0 0.0
      %1350 = vmatprep.subr.mxu0 0.0
      %1351 = vmatpush1.msra.mxu0 0.0
      %1352 = vmatprep.subr.mxu0 0.0
      %1353 = vmatpush1.msra.mxu0 0.0
      %1354 = vmatprep.mubr.f32.mxu0 0.0
      %1355 = vmatmul.mubr.f32.gmra.mrb[0].mxu0 %v980
      %v1356 = vpop.f32.mrb[0].mxu0
      %v1357 = vadd.f32 0.0, %v1356
      %v1358 = vpop.f32.mrb[0].mxu0
      %1359 = vmatprep.mubr.f32.mxu0 0.0
      %1360 = vmatmul.mubr.f32.gmra.mrb[0].mxu0 %v981
      %v1361 = vpop.f32.mrb[0].mxu0
      %v1362 = vadd.f32 0.0, %v1361
      %v1363 = vpop.f32.mrb[0].mxu0
      %1364 = vmatprep.mubr.f32.mxu0 0.0
      %1365 = vmatmul.mubr.f32.gmra.mrb[0].mxu0 %v982
      %v1366 = vpop.f32.mrb[0].mxu0
      %v1367 = vadd.f32 0.0, %v1366
      %v1368 = vpop.f32.mrb[0].mxu0
      %1369 = vmatprep.mubr.f32.mxu0 0.0
      %1370 = vmatmul.mubr.f32.gmra.mrb[0].mxu0 %v983
      %v1371 = vpop.f32.mrb[0].mxu0
      %v1372 = vadd.f32 0.0, %v1371
      %v1373 = vpop.f32.mrb[0].mxu0
      %1374 = vmatprep.mubr.f32.mxu0 0.0
      %1375 = vmatmul.mubr.f32.gmra.mrb[0].mxu0 %v984
      %v1376 = vpop.f32.mrb[0].mxu0
      %v1377 = vadd.f32 0.0, %v1376
      %v1378 = vpop.f32.mrb[0].mxu0
      %1379 = vmatprep.mubr.f32.mxu0 0.0
      %1380 = vmatmul.mubr.f32.gmra.mrb[0].mxu0 %v985
      %v1381 = vpop.f32.mrb[0].mxu0
      %v1382 = vadd.f32 0.0, %v1381
      %v1383 = vpop.f32.mrb[0].mxu0
      %1384 = vmatprep.mubr.f32.mxu0 0.0
      %1385 = vmatmul.mubr.f32.gmra.mrb[0].mxu0 %v986
      %v1386 = vpop.f32.mrb[0].mxu0
      %v1387 = vadd.f32 0.0, %v1386
      %v1388 = vpop.f32.mrb[0].mxu0
      %1389 = vmatprep.mubr.f32.mxu0 0.0
      %1390 = vmatmul.mubr.f32.gmra.mrb[0].mxu0 %v987
      %v1391 = vpop.f32.mrb[0].mxu0
      %v1392 = vadd.f32 0.0, %v1391
      %v1393 = vpop.f32.mrb[0].mxu0
      %1394 = vmatprep.mubr.f32.mxu0 0.0
      %1395 = vmatmul.mubr.f32.gmra.mrb[0].mxu0 %v988
      %v1396 = vpop.f32.mrb[0].mxu0
      %v1397 = vadd.f32 0.0, %v1396
      %v1398 = vpop.f32.mrb[0].mxu0
      %1399 = vmatprep.mubr.f32.mxu0 0.0
      %1400 = vmatmul.mubr.f32.gmra.mrb[0].mxu0 %v989
      %v1401 = vpop.f32.mrb[0].mxu0
      %v1402 = vadd.f32 0.0, %v1401
      %v1403 = vpop.f32.mrb[0].mxu0
      %1404 = vmatprep.mubr.f32.mxu0 0.0
      %1405 = vmatmul.mubr.f32.gmra.mrb[0].mxu0 %v990
      %v1406 = vpop.f32.mrb[0].mxu0
      %v1407 = vadd.f32 0.0, %v1406
      %v1408 = vpop.f32.mrb[0].mxu0
      %1409 = vmatprep.mubr.f32.mxu0 0.0
      %1410 = vmatmul.mubr.f32.gmra.mrb[0].mxu0 %v991
      %v1411 = vpop.f32.mrb[0].mxu0
      %v1412 = vadd.f32 0.0, %v1411
      %v1413 = vpop.f32.mrb[0].mxu0
      %1414 = vmatprep.mubr.f32.mxu0 0.0
      %1415 = vmatmul.mubr.f32.gmra.mrb[0].mxu0 %v992
      %v1416 = vpop.f32.mrb[0].mxu0
      %v1417 = vadd.f32 0.0, %v1416
      %v1418 = vpop.f32.mrb[0].mxu0
      %1419 = vmatprep.mubr.f32.mxu0 0.0
      %1420 = vmatmul.mubr.f32.gmra.mrb[0].mxu0 %v993
      %v1421 = vpop.f32.mrb[0].mxu0
      %v1422 = vadd.f32 0.0, %v1421
      %v1423 = vpop.f32.mrb[0].mxu0
      %1424 = vmatprep.mubr.f32.mxu0 0.0
      %1425 = vmatmul.mubr.f32.gmra.mrb[0].mxu0 %v994
      %v1426 = vpop.f32.mrb[0].mxu0
      %v1427 = vadd.f32 0.0, %v1426
      %v1428 = vpop.f32.mrb[0].mxu0
      %1429 = vmatprep.mubr.f32.mxu0 0.0
      %1430 = vmatmul.mubr.f32.gmra.mrb[0].mxu0 %v995
      %v1431 = vpop.f32.mrb[0].mxu0
      %v1432 = vadd.f32 0.0, %v1431
      %v1433 = vpop.f32.mrb[0].mxu0
      %1434 = vmatprep.mubr.f32.mxu0 0.0
      %1435 = vmatmul.mubr.f32.gmra.mrb[0].mxu0 %v996
      %v1436 = vpop.f32.mrb[0].mxu0
      %v1437 = vadd.f32 0.0, %v1436
      %v1438 = vpop.f32.mrb[0].mxu0
      %1439 = vmatprep.mubr.f32.mxu0 0.0
      %1440 = vmatmul.mubr.f32.gmra.mrb[0].mxu0 %v997
      %v1441 = vpop.f32.mrb[0].mxu0
      %v1442 = vadd.f32 0.0, %v1441
      %v1443 = vpop.f32.mrb[0].mxu0
      %1444 = vmatprep.mubr.f32.mxu0 0.0
      %1445 = vmatmul.mubr.f32.gmra.mrb[0].mxu0 %v998
      %v1446 = vpop.f32.mrb[0].mxu0
      %v1447 = vadd.f32 0.0, %v1446
      %v1448 = vpop.f32.mrb[0].mxu0
      %1449 = vmatprep.mubr.f32.mxu0 0.0
      %1450 = vmatmul.mubr.f32.gmra.mrb[0].mxu0 %v999
      %v1451 = vpop.f32.mrb[0].mxu0
      %v1452 = vadd.f32 0.0, %v1451
      %v1453 = vpop.f32.mrb[0].mxu0
      %1454 = vmatprep.mubr.f32.mxu0 0.0
      %1455 = vmatmul.mubr.f32.gmra.mrb[0].mxu0 %v1000
      %v1456 = vpop.f32.mrb[0].mxu0
      %v1457 = vadd.f32 0.0, %v1456
      %v1458 = vpop.f32.mrb[0].mxu0
      %1459 = vmatprep.mubr.f32.mxu0 0.0
      %1460 = vmatmul.mubr.f32.gmra.mrb[0].mxu0 %v1001
      %v1461 = vpop.f32.mrb[0].mxu0
      %v1462 = vadd.f32 0.0, %v1461
      %v1463 = vpop.f32.mrb[0].mxu0
      %1464 = vmatprep.mubr.f32.mxu0 0.0
      %1465 = vmatmul.mubr.f32.gmra.mrb[0].mxu0 %v1002
      %v1466 = vpop.f32.mrb[0].mxu0
      %v1467 = vadd.f32 0.0, %v1466
      %v1468 = vpop.f32.mrb[0].mxu0
      %1469 = vmatprep.mubr.f32.mxu0 0.0
      %1470 = vmatmul.mubr.f32.gmra.mrb[0].mxu0 %v1003
      %v1471 = vpop.f32.mrb[0].mxu0
      %v1472 = vadd.f32 0.0, %v1471
      %v1473 = vpop.f32.mrb[0].mxu0
      %1474 = vmatprep.mubr.f32.mxu0 0.0
      %1475 = vmatmul.mubr.f32.gmra.mrb[0].mxu0 %v1004
      %v1476 = vpop.f32.mrb[0].mxu0
      %v1477 = vadd.f32 0.0, %v1476
      %v1478 = vpop.f32.mrb[0].mxu0
      %1479 = vmatprep.mubr.f32.mxu0 0.0
      %1480 = vmatmul.mubr.f32.gmra.mrb[0].mxu0 %v1005
      %v1481 = vpop.f32.mrb[0].mxu0
      %v1482 = vadd.f32 0.0, %v1481
      %v1483 = vpop.f32.mrb[0].mxu0
      %1484 = vmatprep.mubr.f32.mxu0 0.0
      %1485 = vmatmul.mubr.f32.gmra.mrb[0].mxu0 %v1006
      %v1486 = vpop.f32.mrb[0].mxu0
      %v1487 = vadd.f32 0.0, %v1486
      %v1488 = vpop.f32.mrb[0].mxu0
      %1489 = vmatprep.mubr.f32.mxu0 0.0
      %1490 = vmatmul.mubr.f32.gmra.mrb[0].mxu0 %v1007
      %v1491 = vpop.f32.mrb[0].mxu0
      %v1492 = vadd.f32 0.0, %v1491
      %v1493 = vpop.f32.mrb[0].mxu0
      %1494 = vdwg.mxu0
      %v1495 = vld [vmem:[#allocation2 + $0x2] sm:$0xff]
      %v1496 = vld [vmem:[#allocation2 + $0xa] sm:$0xff]
      %v1497 = vld [vmem:[#allocation2 + $0x1a] sm:$0xff]
      %v1498 = vld [vmem:[#allocation2 + $0x22] sm:$0xff]
      %v1499 = vld [vmem:[#allocation2 + $0x32] sm:$0xff]
      %v1500 = vld [vmem:[#allocation2 + $0x3a] sm:$0xff]
      %v1501 = vld [vmem:[#allocation2 + $0x4a] sm:$0xff]
      %v1502 = vld [vmem:[#allocation2 + $0x52] sm:$0xff]
      %v1503 = vld [vmem:[#allocation2 + $0x62] sm:$0xff]
      %v1504 = vld [vmem:[#allocation2 + $0x6a] sm:$0xff]
      %v1505 = vld [vmem:[#allocation2 + $0x7a] sm:$0xff]
      %v1506 = vld [vmem:[#allocation2 + $0x82] sm:$0xff]
      %v1507 = vld [vmem:[#allocation2 + $0x92] sm:$0xff]
      %v1508 = vld [vmem:[#allocation2 + $0x9a] sm:$0xff]
      %v1509 = vld [vmem:[#allocation2 + $0xaa] sm:$0xff]
      %v1510 = vld [vmem:[#allocation2 + $0xb2] sm:$0xff]
      %v1511 = vld [vmem:[#allocation2 + $0xc2] sm:$0xff]
      %v1512 = vld [vmem:[#allocation2 + $0xca] sm:$0xff]
      %v1513 = vld [vmem:[#allocation2 + $0xda] sm:$0xff]
      %v1514 = vld [vmem:[#allocation2 + $0xe2] sm:$0xff]
      %v1515 = vld [vmem:[#allocation2 + $0xf2] sm:$0xff]
      %v1516 = vld [vmem:[#allocation2 + $0xfa] sm:$0xff]
      %v1517 = vld [vmem:[#allocation2 + $0x10a] sm:$0xff]
      %v1518 = vld [vmem:[#allocation2 + $0x112] sm:$0xff]
      %v1519 = vld [vmem:[#allocation2 + $0x122] sm:$0xff]
      %v1520 = vld [vmem:[#allocation2 + $0x12a] sm:$0xff]
      %v1521 = vld [vmem:[#allocation2 + $0x13a] sm:$0xff]
      %v1522 = vld [vmem:[#allocation2 + $0x142] sm:$0xff]
      %v1523 = vadd.f32 %v1495, %v1124
      %v1524 = vadd.f32 %v1496, %v1130
      %v1525 = vadd.f32 %v1497, %v1136
      %v1526 = vadd.f32 %v1498, %v1142
      %v1527 = vadd.f32 %v1499, %v1148
      %v1528 = vadd.f32 %v1500, %v1154
      %v1529 = vadd.f32 %v1501, %v1160
      %v1530 = vadd.f32 %v1502, %v1166
      %v1531 = vadd.f32 %v1503, %v1172
      %v1532 = vadd.f32 %v1504, %v1178
      %v1533 = vadd.f32 %v1505, %v1184
      %v1534 = vadd.f32 %v1506, %v1190
      %v1535 = vadd.f32 %v1507, %v1196
      %v1536 = vadd.f32 %v1508, %v1202
      %v1537 = vadd.f32 %v1509, %v1208
      %v1538 = vadd.f32 %v1510, %v1214
      %v1539 = vadd.f32 %v1511, %v1220
      %v1540 = vadd.f32 %v1512, %v1226
      %v1541 = vadd.f32 %v1513, %v1232
      %v1542 = vadd.f32 %v1514, %v1238
      %v1543 = vadd.f32 %v1515, %v1244
      %v1544 = vadd.f32 %v1516, %v1250
      %v1545 = vadd.f32 %v1517, %v1256
      %v1546 = vadd.f32 %v1518, %v1262
      %v1547 = vadd.f32 %v1519, %v1268
      %v1548 = vadd.f32 %v1520, %v1274
      %v1549 = vadd.f32 %v1521, %v1280
      %v1550 = vadd.f32 %v1522, %v1286
      %1551 = vst [vmem:[#allocation2 + $0x2] sm:$0xff] %v1523
      %1552 = vst [vmem:[#allocation2 + $0xa] sm:$0xff] %v1524
      %1553 = vst [vmem:[#allocation2 + $0x1a] sm:$0xff] %v1525
      %1554 = vst [vmem:[#allocation2 + $0x22] sm:$0xff] %v1526
      %1555 = vst [vmem:[#allocation2 + $0x32] sm:$0xff] %v1527
      %1556 = vst [vmem:[#allocation2 + $0x3a] sm:$0xff] %v1528
      %1557 = vst [vmem:[#allocation2 + $0x4a] sm:$0xff] %v1529
      %1558 = vst [vmem:[#allocation2 + $0x52] sm:$0xff] %v1530
      %1559 = vst [vmem:[#allocation2 + $0x62] sm:$0xff] %v1531
      %1560 = vst [vmem:[#allocation2 + $0x6a] sm:$0xff] %v1532
      %1561 = vst [vmem:[#allocation2 + $0x7a] sm:$0xff] %v1533
      %1562 = vst [vmem:[#allocation2 + $0x82] sm:$0xff] %v1534
      %1563 = vst [vmem:[#allocation2 + $0x92] sm:$0xff] %v1535
      %1564 = vst [vmem:[#allocation2 + $0x9a] sm:$0xff] %v1536
      %1565 = vst [vmem:[#allocation2 + $0xaa] sm:$0xff] %v1537
      %1566 = vst [vmem:[#allocation2 + $0xb2] sm:$0xff] %v1538
      %1567 = vst [vmem:[#allocation2 + $0xc2] sm:$0xff] %v1539
      %1568 = vst [vmem:[#allocation2 + $0xca] sm:$0xff] %v1540
      %1569 = vst [vmem:[#allocation2 + $0xda] sm:$0xff] %v1541
      %1570 = vst [vmem:[#allocation2 + $0xe2] sm:$0xff] %v1542
      %1571 = vst [vmem:[#allocation2 + $0xf2] sm:$0xff] %v1543
      %1572 = vst [vmem:[#allocation2 + $0xfa] sm:$0xff] %v1544
      %1573 = vst [vmem:[#allocation2 + $0x10a] sm:$0xff] %v1545
      %1574 = vst [vmem:[#allocation2 + $0x112] sm:$0xff] %v1546
      %1575 = vst [vmem:[#allocation2 + $0x122] sm:$0xff] %v1547
      %1576 = vst [vmem:[#allocation2 + $0x12a] sm:$0xff] %v1548
      %1577 = vst [vmem:[#allocation2 + $0x13a] sm:$0xff] %v1549
      %1578 = vst [vmem:[#allocation2 + $0x142] sm:$0xff] %v1550
      %v1579 = vld [vmem:[#allocation2 + $0x1] sm:$0xff]
      %v1580 = vld [vmem:[#allocation2 + $0x9] sm:$0xff]
      %v1581 = vld [vmem:[#allocation2 + $0x19] sm:$0xff]
      %v1582 = vld [vmem:[#allocation2 + $0x21] sm:$0xff]
      %v1583 = vld [vmem:[#allocation2 + $0x31] sm:$0xff]
      %v1584 = vld [vmem:[#allocation2 + $0x39] sm:$0xff]
      %v1585 = vld [vmem:[#allocation2 + $0x49] sm:$0xff]
      %v1586 = vld [vmem:[#allocation2 + $0x51] sm:$0xff]
      %v1587 = vld [vmem:[#allocation2 + $0x61] sm:$0xff]
      %v1588 = vld [vmem:[#allocation2 + $0x69] sm:$0xff]
      %v1589 = vld [vmem:[#allocation2 + $0x79] sm:$0xff]
      %v1590 = vld [vmem:[#allocation2 + $0x81] sm:$0xff]
      %v1591 = vld [vmem:[#allocation2 + $0x91] sm:$0xff]
      %v1592 = vld [vmem:[#allocation2 + $0x99] sm:$0xff]
      %v1593 = vld [vmem:[#allocation2 + $0xa9] sm:$0xff]
      %v1594 = vld [vmem:[#allocation2 + $0xb1] sm:$0xff]
      %v1595 = vld [vmem:[#allocation2 + $0xc1] sm:$0xff]
      %v1596 = vld [vmem:[#allocation2 + $0xc9] sm:$0xff]
      %v1597 = vld [vmem:[#allocation2 + $0xd9] sm:$0xff]
      %v1598 = vld [vmem:[#allocation2 + $0xe1] sm:$0xff]
      %v1599 = vld [vmem:[#allocation2 + $0xf1] sm:$0xff]
      %v1600 = vld [vmem:[#allocation2 + $0xf9] sm:$0xff]
      %v1601 = vld [vmem:[#allocation2 + $0x109] sm:$0xff]
      %v1602 = vld [vmem:[#allocation2 + $0x111] sm:$0xff]
      %v1603 = vld [vmem:[#allocation2 + $0x121] sm:$0xff]
      %v1604 = vld [vmem:[#allocation2 + $0x129] sm:$0xff]
      %v1605 = vld [vmem:[#allocation2 + $0x139] sm:$0xff]
      %v1606 = vld [vmem:[#allocation2 + $0x141] sm:$0xff]
      %v1607 = vadd.f32 %v1579, %v1126
      %v1608 = vadd.f32 %v1580, %v1132
      %v1609 = vadd.f32 %v1581, %v1138
      %v1610 = vadd.f32 %v1582, %v1144
      %v1611 = vadd.f32 %v1583, %v1150
      %v1612 = vadd.f32 %v1584, %v1156
      %v1613 = vadd.f32 %v1585, %v1162
      %v1614 = vadd.f32 %v1586, %v1168
      %v1615 = vadd.f32 %v1587, %v1174
      %v1616 = vadd.f32 %v1588, %v1180
      %v1617 = vadd.f32 %v1589, %v1186
      %v1618 = vadd.f32 %v1590, %v1192
      %v1619 = vadd.f32 %v1591, %v1198
      %v1620 = vadd.f32 %v1592, %v1204
      %v1621 = vadd.f32 %v1593, %v1210
      %v1622 = vadd.f32 %v1594, %v1216
      %v1623 = vadd.f32 %v1595, %v1222
      %v1624 = vadd.f32 %v1596, %v1228
      %v1625 = vadd.f32 %v1597, %v1234
      %v1626 = vadd.f32 %v1598, %v1240
      %v1627 = vadd.f32 %v1599, %v1246
      %v1628 = vadd.f32 %v1600, %v1252
      %v1629 = vadd.f32 %v1601, %v1258
      %v1630 = vadd.f32 %v1602, %v1264
      %v1631 = vadd.f32 %v1603, %v1270
      %v1632 = vadd.f32 %v1604, %v1276
      %v1633 = vadd.f32 %v1605, %v1282
      %v1634 = vadd.f32 %v1606, %v1288
      %1635 = vst [vmem:[#allocation2 + $0x1] sm:$0xff] %v1607
      %1636 = vst [vmem:[#allocation2 + $0x9] sm:$0xff] %v1608
      %1637 = vst [vmem:[#allocation2 + $0x19] sm:$0xff] %v1609
      %1638 = vst [vmem:[#allocation2 + $0x21] sm:$0xff] %v1610
      %1639 = vst [vmem:[#allocation2 + $0x31] sm:$0xff] %v1611
      %1640 = vst [vmem:[#allocation2 + $0x39] sm:$0xff] %v1612
      %1641 = vst [vmem:[#allocation2 + $0x49] sm:$0xff] %v1613
      %1642 = vst [vmem:[#allocation2 + $0x51] sm:$0xff] %v1614
      %1643 = vst [vmem:[#allocation2 + $0x61] sm:$0xff] %v1615
      %1644 = vst [vmem:[#allocation2 + $0x69] sm:$0xff] %v1616
      %1645 = vst [vmem:[#allocation2 + $0x79] sm:$0xff] %v1617
      %1646 = vst [vmem:[#allocation2 + $0x81] sm:$0xff] %v1618
      %1647 = vst [vmem:[#allocation2 + $0x91] sm:$0xff] %v1619
      %1648 = vst [vmem:[#allocation2 + $0x99] sm:$0xff] %v1620
      %1649 = vst [vmem:[#allocation2 + $0xa9] sm:$0xff] %v1621
      %1650 = vst [vmem:[#allocation2 + $0xb1] sm:$0xff] %v1622
      %1651 = vst [vmem:[#allocation2 + $0xc1] sm:$0xff] %v1623
      %1652 = vst [vmem:[#allocation2 + $0xc9] sm:$0xff] %v1624
      %1653 = vst [vmem:[#allocation2 + $0xd9] sm:$0xff] %v1625
      %1654 = vst [vmem:[#allocation2 + $0xe1] sm:$0xff] %v1626
      %1655 = vst [vmem:[#allocation2 + $0xf1] sm:$0xff] %v1627
      %1656 = vst [vmem:[#allocation2 + $0xf9] sm:$0xff] %v1628
      %1657 = vst [vmem:[#allocation2 + $0x109] sm:$0xff] %v1629
      %1658 = vst [vmem:[#allocation2 + $0x111] sm:$0xff] %v1630
      %1659 = vst [vmem:[#allocation2 + $0x121] sm:$0xff] %v1631
      %1660 = vst [vmem:[#allocation2 + $0x129] sm:$0xff] %v1632
      %1661 = vst [vmem:[#allocation2 + $0x139] sm:$0xff] %v1633
      %1662 = vst [vmem:[#allocation2 + $0x141] sm:$0xff] %v1634
      %v1663 = vld [vmem:[#allocation2] sm:$0xff]
      %v1664 = vld [vmem:[#allocation2 + $0x8] sm:$0xff]
      %v1665 = vld [vmem:[#allocation2 + $0x18] sm:$0xff]
      %v1666 = vld [vmem:[#allocation2 + $0x20] sm:$0xff]
      %v1667 = vld [vmem:[#allocation2 + $0x30] sm:$0xff]
      %v1668 = vld [vmem:[#allocation2 + $0x38] sm:$0xff]
      %v1669 = vld [vmem:[#allocation2 + $0x48] sm:$0xff]
      %v1670 = vld [vmem:[#allocation2 + $0x50] sm:$0xff]
      %v1671 = vld [vmem:[#allocation2 + $0x60] sm:$0xff]
      %v1672 = vld [vmem:[#allocation2 + $0x68] sm:$0xff]
      %v1673 = vld [vmem:[#allocation2 + $0x78] sm:$0xff]
      %v1674 = vld [vmem:[#allocation2 + $0x80] sm:$0xff]
      %v1675 = vld [vmem:[#allocation2 + $0x90] sm:$0xff]
      %v1676 = vld [vmem:[#allocation2 + $0x98] sm:$0xff]
      %v1677 = vld [vmem:[#allocation2 + $0xa8] sm:$0xff]
      %v1678 = vld [vmem:[#allocation2 + $0xb0] sm:$0xff]
      %v1679 = vld [vmem:[#allocation2 + $0xc0] sm:$0xff]
      %v1680 = vld [vmem:[#allocation2 + $0xc8] sm:$0xff]
      %v1681 = vld [vmem:[#allocation2 + $0xd8] sm:$0xff]
      %v1682 = vld [vmem:[#allocation2 + $0xe0] sm:$0xff]
      %v1683 = vld [vmem:[#allocation2 + $0xf0] sm:$0xff]
      %v1684 = vld [vmem:[#allocation2 + $0xf8] sm:$0xff]
      %v1685 = vld [vmem:[#allocation2 + $0x108] sm:$0xff]
      %v1686 = vld [vmem:[#allocation2 + $0x110] sm:$0xff]
      %v1687 = vld [vmem:[#allocation2 + $0x120] sm:$0xff]
      %v1688 = vld [vmem:[#allocation2 + $0x128] sm:$0xff]
      %v1689 = vld [vmem:[#allocation2 + $0x138] sm:$0xff]
      %v1690 = vld [vmem:[#allocation2 + $0x140] sm:$0xff]
      %v1691 = vadd.f32 %v1663, %v1357
      %v1692 = vadd.f32 %v1664, %v1362
      %v1693 = vadd.f32 %v1665, %v1367
      %v1694 = vadd.f32 %v1666, %v1372
      %v1695 = vadd.f32 %v1667, %v1377
      %v1696 = vadd.f32 %v1668, %v1382
      %v1697 = vadd.f32 %v1669, %v1387
      %v1698 = vadd.f32 %v1670, %v1392
      %v1699 = vadd.f32 %v1671, %v1397
      %v1700 = vadd.f32 %v1672, %v1402
      %v1701 = vadd.f32 %v1673, %v1407
      %v1702 = vadd.f32 %v1674, %v1412
      %v1703 = vadd.f32 %v1675, %v1417
      %v1704 = vadd.f32 %v1676, %v1422
      %v1705 = vadd.f32 %v1677, %v1427
      %v1706 = vadd.f32 %v1678, %v1432
      %v1707 = vadd.f32 %v1679, %v1437
      %v1708 = vadd.f32 %v1680, %v1442
      %v1709 = vadd.f32 %v1681, %v1447
      %v1710 = vadd.f32 %v1682, %v1452
      %v1711 = vadd.f32 %v1683, %v1457
      %v1712 = vadd.f32 %v1684, %v1462
      %v1713 = vadd.f32 %v1685, %v1467
      %v1714 = vadd.f32 %v1686, %v1472
      %v1715 = vadd.f32 %v1687, %v1477
      %v1716 = vadd.f32 %v1688, %v1482
      %v1717 = vadd.f32 %v1689, %v1487
      %v1718 = vadd.f32 %v1690, %v1492
      %1719 = vst [vmem:[#allocation2] sm:$0xff] %v1691
      %1720 = vst [vmem:[#allocation2 + $0x8] sm:$0xff] %v1692
      %1721 = vst [vmem:[#allocation2 + $0x18] sm:$0xff] %v1693
      %1722 = vst [vmem:[#allocation2 + $0x20] sm:$0xff] %v1694
      %1723 = vst [vmem:[#allocation2 + $0x30] sm:$0xff] %v1695
      %1724 = vst [vmem:[#allocation2 + $0x38] sm:$0xff] %v1696
      %1725 = vst [vmem:[#allocation2 + $0x48] sm:$0xff] %v1697
      %1726 = vst [vmem:[#allocation2 + $0x50] sm:$0xff] %v1698
      %1727 = vst [vmem:[#allocation2 + $0x60] sm:$0xff] %v1699
      %1728 = vst [vmem:[#allocation2 + $0x68] sm:$0xff] %v1700
      %1729 = vst [vmem:[#allocation2 + $0x78] sm:$0xff] %v1701
      %1730 = vst [vmem:[#allocation2 + $0x80] sm:$0xff] %v1702
      %1731 = vst [vmem:[#allocation2 + $0x90] sm:$0xff] %v1703
      %1732 = vst [vmem:[#allocation2 + $0x98] sm:$0xff] %v1704
      %1733 = vst [vmem:[#allocation2 + $0xa8] sm:$0xff] %v1705
      %1734 = vst [vmem:[#allocation2 + $0xb0] sm:$0xff] %v1706
      %1735 = vst [vmem:[#allocation2 + $0xc0] sm:$0xff] %v1707
      %1736 = vst [vmem:[#allocation2 + $0xc8] sm:$0xff] %v1708
      %1737 = vst [vmem:[#allocation2 + $0xd8] sm:$0xff] %v1709
      %1738 = vst [vmem:[#allocation2 + $0xe0] sm:$0xff] %v1710
      %1739 = vst [vmem:[#allocation2 + $0xf0] sm:$0xff] %v1711
      %1740 = vst [vmem:[#allocation2 + $0xf8] sm:$0xff] %v1712
      %1741 = vst [vmem:[#allocation2 + $0x108] sm:$0xff] %v1713
      %1742 = vst [vmem:[#allocation2 + $0x110] sm:$0xff] %v1714
      %1743 = vst [vmem:[#allocation2 + $0x120] sm:$0xff] %v1715
      %1744 = vst [vmem:[#allocation2 + $0x128] sm:$0xff] %v1716
      %1745 = vst [vmem:[#allocation2 + $0x138] sm:$0xff] %v1717
      %1746 = vst [vmem:[#allocation2 + $0x140] sm:$0xff] %v1718
      %s1747 = scalar_lea.vmem %s165, 32
      %v1748 = vld [vmem:[%s1747] sm:$0xff]
      %v1749 = vld [vmem:[%s1747 + $0x8] sm:$0xff]
      %v1750 = vld [vmem:[%s1747 + $0x10] sm:$0xff]
      %v1751 = vld [vmem:[%s1747 + $0x18] sm:$0xff]
      %v1752 = vld [vmem:[%s1747 + $0x20] sm:$0xff]
      %v1753 = vld [vmem:[%s1747 + $0x28] sm:$0xff]
      %v1754 = vld [vmem:[%s1747 + $0x30] sm:$0xff]
      %v1755 = vld [vmem:[%s1747 + $0x38] sm:$0xff]
      %v1756 = vld [vmem:[%s1747 + $0x40] sm:$0xff]
      %v1757 = vld [vmem:[%s1747 + $0x48] sm:$0xff]
      %v1758 = vld [vmem:[%s1747 + $0x50] sm:$0xff]
      %v1759 = vld [vmem:[%s1747 + $0x58] sm:$0xff]
      %v1760 = vld [vmem:[%s1747 + $0x60] sm:$0xff]
      %v1761 = vld [vmem:[%s1747 + $0x68] sm:$0xff]
      %v1762 = vld [vmem:[%s1747 + $0x70] sm:$0xff]
      %v1763 = vld [vmem:[%s1747 + $0x78] sm:$0xff]
      %v1764 = vld [vmem:[%s1747 + $0x80] sm:$0xff]
      %v1765 = vld [vmem:[%s1747 + $0x88] sm:$0xff]
      %v1766 = vld [vmem:[%s1747 + $0x90] sm:$0xff]
      %v1767 = vld [vmem:[%s1747 + $0x98] sm:$0xff]
      %v1768 = vld [vmem:[%s1747 + $0xa0] sm:$0xff]
      %v1769 = vld [vmem:[%s1747 + $0xa8] sm:$0xff]
      %v1770 = vld [vmem:[%s1747 + $0xb0] sm:$0xff]
      %v1771 = vld [vmem:[%s1747 + $0xb8] sm:$0xff]
      %v1772 = vld [vmem:[%s1747 + $0xc0] sm:$0xff]
      %v1773 = vld [vmem:[%s1747 + $0xc8] sm:$0xff]
      %v1774 = vld [vmem:[%s1747 + $0xd0] sm:$0xff]
      %v1775 = vld [vmem:[%s1747 + $0xd8] sm:$0xff]
      %s1776 = scalar_lea.vmem %s1, 768
      %v1777 = vld [vmem:[%s1776] sm:$0xff]
      %v1778 = vld [vmem:[%s1776 + $0x8] sm:$0xff]
      %v1779 = vld [vmem:[%s1776 + $0x10] sm:$0xff]
      %v1780 = vld [vmem:[%s1776 + $0x18] sm:$0xff]
      %v1781 = vld [vmem:[%s1776 + $0x20] sm:$0xff]
      %v1782 = vld [vmem:[%s1776 + $0x28] sm:$0xff]
      %v1783 = vld [vmem:[%s1776 + $0x30] sm:$0xff]
      %v1784 = vld [vmem:[%s1776 + $0x38] sm:$0xff]
      %v1785 = vld [vmem:[%s1776 + $0x40] sm:$0xff]
      %v1786 = vld [vmem:[%s1776 + $0x48] sm:$0xff]
      %v1787 = vld [vmem:[%s1776 + $0x50] sm:$0xff]
      %v1788 = vld [vmem:[%s1776 + $0x58] sm:$0xff]
      %v1789 = vld [vmem:[%s1776 + $0x60] sm:$0xff]
      %v1790 = vld [vmem:[%s1776 + $0x68] sm:$0xff]
      %v1791 = vld [vmem:[%s1776 + $0x70] sm:$0xff]
      %v1792 = vld [vmem:[%s1776 + $0x78] sm:$0xff]
      %v1793 = vld [vmem:[%s1776 + $0x80] sm:$0xff]
      %v1794 = vld [vmem:[%s1776 + $0x88] sm:$0xff]
      %v1795 = vld [vmem:[%s1776 + $0x90] sm:$0xff]
      %v1796 = vld [vmem:[%s1776 + $0x98] sm:$0xff]
      %v1797 = vld [vmem:[%s1776 + $0xa0] sm:$0xff]
      %v1798 = vld [vmem:[%s1776 + $0xa8] sm:$0xff]
      %v1799 = vld [vmem:[%s1776 + $0xb0] sm:$0xff]
      %v1800 = vld [vmem:[%s1776 + $0xb8] sm:$0xff]
      %v1801 = vld [vmem:[%s1776 + $0xc0] sm:$0xff]
      %v1802 = vld [vmem:[%s1776 + $0xc8] sm:$0xff]
      %v1803 = vld [vmem:[%s1776 + $0xd0] sm:$0xff]
      %v1804 = vld [vmem:[%s1776 + $0xd8] sm:$0xff]
      %v1805 = vld [vmem:[%s1776 + $0xe0] sm:$0xff]
      %v1806 = vld [vmem:[%s1776 + $0xe8] sm:$0xff]
      %v1807 = vld [vmem:[%s1776 + $0xf0] sm:$0xff]
      %v1808 = vld [vmem:[%s1776 + $0xf8] sm:$0xff]
      %v1809 = vld [vmem:[%s1776 + $0x100] sm:$0xff]
      %v1810 = vld [vmem:[%s1776 + $0x108] sm:$0xff]
      %v1811 = vld [vmem:[%s1776 + $0x110] sm:$0xff]
      %v1812 = vld [vmem:[%s1776 + $0x118] sm:$0xff]
      %v1813 = vld [vmem:[%s1776 + $0x120] sm:$0xff]
      %v1814 = vld [vmem:[%s1776 + $0x128] sm:$0xff]
      %v1815 = vld [vmem:[%s1776 + $0x130] sm:$0xff]
      %v1816 = vld [vmem:[%s1776 + $0x138] sm:$0xff]
      %v1817 = vld [vmem:[%s1776 + $0x140] sm:$0xff]
      %v1818 = vld [vmem:[%s1776 + $0x148] sm:$0xff]
      %v1819 = vld [vmem:[%s1776 + $0x150] sm:$0xff]
      %v1820 = vld [vmem:[%s1776 + $0x158] sm:$0xff]
      %v1821 = vld [vmem:[%s1776 + $0x160] sm:$0xff]
      %v1822 = vld [vmem:[%s1776 + $0x168] sm:$0xff]
      %v1823 = vld [vmem:[%s1776 + $0x170] sm:$0xff]
      %v1824 = vld [vmem:[%s1776 + $0x178] sm:$0xff]
      %1825 = vmatprep.subr.mxu0 %v1778
      %1826 = vmatpush1.msra.mxu0 %v1777
      %1827 = vmatprep.subr.mxu0 %v1781
      %1828 = vmatpush1.msra.mxu0 %v1780
      %1829 = vmatprep.subr.mxu0 %v1784
      %1830 = vmatpush1.msra.mxu0 %v1783
      %1831 = vmatprep.subr.mxu0 %v1787
      %1832 = vmatpush1.msra.mxu0 %v1786
      %1833 = vmatprep.subr.mxu0 %v1790
      %1834 = vmatpush1.msra.mxu0 %v1789
      %1835 = vmatprep.subr.mxu0 %v1793
      %1836 = vmatpush1.msra.mxu0 %v1792
      %1837 = vmatprep.subr.mxu0 %v1796
      %1838 = vmatpush1.msra.mxu0 %v1795
      %1839 = vmatprep.subr.mxu0 %v1799
      %1840 = vmatpush1.msra.mxu0 %v1798
      %1841 = vmatprep.subr.mxu0 %v1802
      %1842 = vmatpush1.msra.mxu0 %v1801
      %1843 = vmatprep.subr.mxu0 %v1805
      %1844 = vmatpush1.msra.mxu0 %v1804
      %1845 = vmatprep.subr.mxu0 %v1808
      %1846 = vmatpush1.msra.mxu0 %v1807
      %1847 = vmatprep.subr.mxu0 %v1811
      %1848 = vmatpush1.msra.mxu0 %v1810
      %1849 = vmatprep.subr.mxu0 %v1814
      %1850 = vmatpush1.msra.mxu0 %v1813
      %1851 = vmatprep.subr.mxu0 %v1817
      %1852 = vmatpush1.msra.mxu0 %v1816
      %1853 = vmatprep.subr.mxu0 %v1820
      %1854 = vmatpush1.msra.mxu0 %v1819
      %1855 = vmatprep.subr.mxu0 %v1823
      %1856 = vmatpush1.msra.mxu0 %v1822
      %1857 = vmatprep.subr.mxu0 0.0
      %1858 = vmatpush1.msra.mxu0 0.0
      %1859 = vmatprep.subr.mxu0 0.0
      %1860 = vmatpush1.msra.mxu0 0.0
      %1861 = vmatprep.subr.mxu0 0.0
      %1862 = vmatpush1.msra.mxu0 0.0
      %1863 = vmatprep.subr.mxu0 0.0
      %1864 = vmatpush1.msra.mxu0 0.0
      %1865 = vmatprep.subr.mxu0 0.0
      %1866 = vmatpush1.msra.mxu0 0.0
      %1867 = vmatprep.subr.mxu0 0.0
      %1868 = vmatpush1.msra.mxu0 0.0
      %1869 = vmatprep.subr.mxu0 0.0
      %1870 = vmatpush1.msra.mxu0 0.0
      %1871 = vmatprep.subr.mxu0 0.0
      %1872 = vmatpush1.msra.mxu0 0.0
      %1873 = vmatprep.subr.mxu0 0.0
      %1874 = vmatpush1.msra.mxu0 0.0
      %1875 = vmatprep.subr.mxu0 0.0
      %1876 = vmatpush1.msra.mxu0 0.0
      %1877 = vmatprep.subr.mxu0 0.0
      %1878 = vmatpush1.msra.mxu0 0.0
      %1879 = vmatprep.subr.mxu0 0.0
      %1880 = vmatpush1.msra.mxu0 0.0
      %1881 = vmatprep.subr.mxu0 0.0
      %1882 = vmatpush1.msra.mxu0 0.0
      %1883 = vmatprep.subr.mxu0 0.0
      %1884 = vmatpush1.msra.mxu0 0.0
      %1885 = vmatprep.subr.mxu0 0.0
      %1886 = vmatpush1.msra.mxu0 0.0
      %1887 = vmatprep.subr.mxu0 0.0
      %1888 = vmatpush1.msra.mxu0 0.0
      %1889 = vmatprep.mubr.f32.mxu0 0.0
      %1890 = vmatmul.mubr.f32.gmra.mrb[0].mxu0 %v1748
      %v1891 = vpop.f32.mrb[0].mxu0
      %v1892 = vadd.f32 0.0, %v1891
      %v1893 = vpop.f32.mrb[0].mxu0
      %v1894 = vadd.f32 0.0, %v1893
      %1895 = vmatprep.mubr.f32.mxu0 0.0
      %1896 = vmatmul.mubr.f32.gmra.mrb[0].mxu0 %v1749
      %v1897 = vpop.f32.mrb[0].mxu0
      %v1898 = vadd.f32 0.0, %v1897
      %v1899 = vpop.f32.mrb[0].mxu0
      %v1900 = vadd.f32 0.0, %v1899
      %1901 = vmatprep.mubr.f32.mxu0 0.0
      %1902 = vmatmul.mubr.f32.gmra.mrb[0].mxu0 %v1750
      %v1903 = vpop.f32.mrb[0].mxu0
      %v1904 = vadd.f32 0.0, %v1903
      %v1905 = vpop.f32.mrb[0].mxu0
      %v1906 = vadd.f32 0.0, %v1905
      %1907 = vmatprep.mubr.f32.mxu0 0.0
      %1908 = vmatmul.mubr.f32.gmra.mrb[0].mxu0 %v1751
      %v1909 = vpop.f32.mrb[0].mxu0
      %v1910 = vadd.f32 0.0, %v1909
      %v1911 = vpop.f32.mrb[0].mxu0
      %v1912 = vadd.f32 0.0, %v1911
      %1913 = vmatprep.mubr.f32.mxu0 0.0
      %1914 = vmatmul.mubr.f32.gmra.mrb[0].mxu0 %v1752
      %v1915 = vpop.f32.mrb[0].mxu0
      %v1916 = vadd.f32 0.0, %v1915
      %v1917 = vpop.f32.mrb[0].mxu0
      %v1918 = vadd.f32 0.0, %v1917
      %1919 = vmatprep.mubr.f32.mxu0 0.0
      %1920 = vmatmul.mubr.f32.gmra.mrb[0].mxu0 %v1753
      %v1921 = vpop.f32.mrb[0].mxu0
      %v1922 = vadd.f32 0.0, %v1921
      %v1923 = vpop.f32.mrb[0].mxu0
      %v1924 = vadd.f32 0.0, %v1923
      %1925 = vmatprep.mubr.f32.mxu0 0.0
      %1926 = vmatmul.mubr.f32.gmra.mrb[0].mxu0 %v1754
      %v1927 = vpop.f32.mrb[0].mxu0
      %v1928 = vadd.f32 0.0, %v1927
      %v1929 = vpop.f32.mrb[0].mxu0
      %v1930 = vadd.f32 0.0, %v1929
      %1931 = vmatprep.mubr.f32.mxu0 0.0
      %1932 = vmatmul.mubr.f32.gmra.mrb[0].mxu0 %v1755
      %v1933 = vpop.f32.mrb[0].mxu0
      %v1934 = vadd.f32 0.0, %v1933
      %v1935 = vpop.f32.mrb[0].mxu0
      %v1936 = vadd.f32 0.0, %v1935
      %1937 = vmatprep.mubr.f32.mxu0 0.0
      %1938 = vmatmul.mubr.f32.gmra.mrb[0].mxu0 %v1756
      %v1939 = vpop.f32.mrb[0].mxu0
      %v1940 = vadd.f32 0.0, %v1939
      %v1941 = vpop.f32.mrb[0].mxu0
      %v1942 = vadd.f32 0.0, %v1941
      %1943 = vmatprep.mubr.f32.mxu0 0.0
      %1944 = vmatmul.mubr.f32.gmra.mrb[0].mxu0 %v1757
      %v1945 = vpop.f32.mrb[0].mxu0
      %v1946 = vadd.f32 0.0, %v1945
      %v1947 = vpop.f32.mrb[0].mxu0
      %v1948 = vadd.f32 0.0, %v1947
      %1949 = vmatprep.mubr.f32.mxu0 0.0
      %1950 = vmatmul.mubr.f32.gmra.mrb[0].mxu0 %v1758
      %v1951 = vpop.f32.mrb[0].mxu0
      %v1952 = vadd.f32 0.0, %v1951
      %v1953 = vpop.f32.mrb[0].mxu0
      %v1954 = vadd.f32 0.0, %v1953
      %1955 = vmatprep.mubr.f32.mxu0 0.0
      %1956 = vmatmul.mubr.f32.gmra.mrb[0].mxu0 %v1759
      %v1957 = vpop.f32.mrb[0].mxu0
      %v1958 = vadd.f32 0.0, %v1957
      %v1959 = vpop.f32.mrb[0].mxu0
      %v1960 = vadd.f32 0.0, %v1959
      %1961 = vmatprep.mubr.f32.mxu0 0.0
      %1962 = vmatmul.mubr.f32.gmra.mrb[0].mxu0 %v1760
      %v1963 = vpop.f32.mrb[0].mxu0
      %v1964 = vadd.f32 0.0, %v1963
      %v1965 = vpop.f32.mrb[0].mxu0
      %v1966 = vadd.f32 0.0, %v1965
      %1967 = vmatprep.mubr.f32.mxu0 0.0
      %1968 = vmatmul.mubr.f32.gmra.mrb[0].mxu0 %v1761
      %v1969 = vpop.f32.mrb[0].mxu0
      %v1970 = vadd.f32 0.0, %v1969
      %v1971 = vpop.f32.mrb[0].mxu0
      %v1972 = vadd.f32 0.0, %v1971
      %1973 = vmatprep.mubr.f32.mxu0 0.0
      %1974 = vmatmul.mubr.f32.gmra.mrb[0].mxu0 %v1762
      %v1975 = vpop.f32.mrb[0].mxu0
      %v1976 = vadd.f32 0.0, %v1975
      %v1977 = vpop.f32.mrb[0].mxu0
      %v1978 = vadd.f32 0.0, %v1977
      %1979 = vmatprep.mubr.f32.mxu0 0.0
      %1980 = vmatmul.mubr.f32.gmra.mrb[0].mxu0 %v1763
      %v1981 = vpop.f32.mrb[0].mxu0
      %v1982 = vadd.f32 0.0, %v1981
      %v1983 = vpop.f32.mrb[0].mxu0
      %v1984 = vadd.f32 0.0, %v1983
      %1985 = vmatprep.mubr.f32.mxu0 0.0
      %1986 = vmatmul.mubr.f32.gmra.mrb[0].mxu0 %v1764
      %v1987 = vpop.f32.mrb[0].mxu0
      %v1988 = vadd.f32 0.0, %v1987
      %v1989 = vpop.f32.mrb[0].mxu0
      %v1990 = vadd.f32 0.0, %v1989
      %1991 = vmatprep.mubr.f32.mxu0 0.0
      %1992 = vmatmul.mubr.f32.gmra.mrb[0].mxu0 %v1765
      %v1993 = vpop.f32.mrb[0].mxu0
      %v1994 = vadd.f32 0.0, %v1993
      %v1995 = vpop.f32.mrb[0].mxu0
      %v1996 = vadd.f32 0.0, %v1995
      %1997 = vmatprep.mubr.f32.mxu0 0.0
      %1998 = vmatmul.mubr.f32.gmra.mrb[0].mxu0 %v1766
      %v1999 = vpop.f32.mrb[0].mxu0
      %v2000 = vadd.f32 0.0, %v1999
      %v2001 = vpop.f32.mrb[0].mxu0
      %v2002 = vadd.f32 0.0, %v2001
      %2003 = vmatprep.mubr.f32.mxu0 0.0
      %2004 = vmatmul.mubr.f32.gmra.mrb[0].mxu0 %v1767
      %v2005 = vpop.f32.mrb[0].mxu0
      %v2006 = vadd.f32 0.0, %v2005
      %v2007 = vpop.f32.mrb[0].mxu0
      %v2008 = vadd.f32 0.0, %v2007
      %2009 = vmatprep.mubr.f32.mxu0 0.0
      %2010 = vmatmul.mubr.f32.gmra.mrb[0].mxu0 %v1768
      %v2011 = vpop.f32.mrb[0].mxu0
      %v2012 = vadd.f32 0.0, %v2011
      %v2013 = vpop.f32.mrb[0].mxu0
      %v2014 = vadd.f32 0.0, %v2013
      %2015 = vmatprep.mubr.f32.mxu0 0.0
      %2016 = vmatmul.mubr.f32.gmra.mrb[0].mxu0 %v1769
      %v2017 = vpop.f32.mrb[0].mxu0
      %v2018 = vadd.f32 0.0, %v2017
      %v2019 = vpop.f32.mrb[0].mxu0
      %v2020 = vadd.f32 0.0, %v2019
      %2021 = vmatprep.mubr.f32.mxu0 0.0
      %2022 = vmatmul.mubr.f32.gmra.mrb[0].mxu0 %v1770
      %v2023 = vpop.f32.mrb[0].mxu0
      %v2024 = vadd.f32 0.0, %v2023
      %v2025 = vpop.f32.mrb[0].mxu0
      %v2026 = vadd.f32 0.0, %v2025
      %2027 = vmatprep.mubr.f32.mxu0 0.0
      %2028 = vmatmul.mubr.f32.gmra.mrb[0].mxu0 %v1771
      %v2029 = vpop.f32.mrb[0].mxu0
      %v2030 = vadd.f32 0.0, %v2029
      %v2031 = vpop.f32.mrb[0].mxu0
      %v2032 = vadd.f32 0.0, %v2031
      %2033 = vmatprep.mubr.f32.mxu0 0.0
      %2034 = vmatmul.mubr.f32.gmra.mrb[0].mxu0 %v1772
      %v2035 = vpop.f32.mrb[0].mxu0
      %v2036 = vadd.f32 0.0, %v2035
      %v2037 = vpop.f32.mrb[0].mxu0
      %v2038 = vadd.f32 0.0, %v2037
      %2039 = vmatprep.mubr.f32.mxu0 0.0
      %2040 = vmatmul.mubr.f32.gmra.mrb[0].mxu0 %v1773
      %v2041 = vpop.f32.mrb[0].mxu0
      %v2042 = vadd.f32 0.0, %v2041
      %v2043 = vpop.f32.mrb[0].mxu0
      %v2044 = vadd.f32 0.0, %v2043
      %2045 = vmatprep.mubr.f32.mxu0 0.0
      %2046 = vmatmul.mubr.f32.gmra.mrb[0].mxu0 %v1774
      %v2047 = vpop.f32.mrb[0].mxu0
      %v2048 = vadd.f32 0.0, %v2047
      %v2049 = vpop.f32.mrb[0].mxu0
      %v2050 = vadd.f32 0.0, %v2049
      %2051 = vmatprep.mubr.f32.mxu0 0.0
      %2052 = vmatmul.mubr.f32.gmra.mrb[0].mxu0 %v1775
      %v2053 = vpop.f32.mrb[0].mxu0
      %v2054 = vadd.f32 0.0, %v2053
      %v2055 = vpop.f32.mrb[0].mxu0
      %v2056 = vadd.f32 0.0, %v2055
      %2057 = vdwg.mxu0
      %2058 = vmatprep.subr.mxu0 0.0
      %2059 = vmatpush1.msra.mxu0 %v1779
      %2060 = vmatprep.subr.mxu0 0.0
      %2061 = vmatpush1.msra.mxu0 %v1782
      %2062 = vmatprep.subr.mxu0 0.0
      %2063 = vmatpush1.msra.mxu0 %v1785
      %2064 = vmatprep.subr.mxu0 0.0
      %2065 = vmatpush1.msra.mxu0 %v1788
      %2066 = vmatprep.subr.mxu0 0.0
      %2067 = vmatpush1.msra.mxu0 %v1791
      %2068 = vmatprep.subr.mxu0 0.0
      %2069 = vmatpush1.msra.mxu0 %v1794
      %2070 = vmatprep.subr.mxu0 0.0
      %2071 = vmatpush1.msra.mxu0 %v1797
      %2072 = vmatprep.subr.mxu0 0.0
      %2073 = vmatpush1.msra.mxu0 %v1800
      %2074 = vmatprep.subr.mxu0 0.0
      %2075 = vmatpush1.msra.mxu0 %v1803
      %2076 = vmatprep.subr.mxu0 0.0
      %2077 = vmatpush1.msra.mxu0 %v1806
      %2078 = vmatprep.subr.mxu0 0.0
      %2079 = vmatpush1.msra.mxu0 %v1809
      %2080 = vmatprep.subr.mxu0 0.0
      %2081 = vmatpush1.msra.mxu0 %v1812
      %2082 = vmatprep.subr.mxu0 0.0
      %2083 = vmatpush1.msra.mxu0 %v1815
      %2084 = vmatprep.subr.mxu0 0.0
      %2085 = vmatpush1.msra.mxu0 %v1818
      %2086 = vmatprep.subr.mxu0 0.0
      %2087 = vmatpush1.msra.mxu0 %v1821
      %2088 = vmatprep.subr.mxu0 0.0
      %2089 = vmatpush1.msra.mxu0 %v1824
      %2090 = vmatprep.subr.mxu0 0.0
      %2091 = vmatpush1.msra.mxu0 0.0
      %2092 = vmatprep.subr.mxu0 0.0
      %2093 = vmatpush1.msra.mxu0 0.0
      %2094 = vmatprep.subr.mxu0 0.0
      %2095 = vmatpush1.msra.mxu0 0.0
      %2096 = vmatprep.subr.mxu0 0.0
      %2097 = vmatpush1.msra.mxu0 0.0
      %2098 = vmatprep.subr.mxu0 0.0
      %2099 = vmatpush1.msra.mxu0 0.0
      %2100 = vmatprep.subr.mxu0 0.0
      %2101 = vmatpush1.msra.mxu0 0.0
      %2102 = vmatprep.subr.mxu0 0.0
      %2103 = vmatpush1.msra.mxu0 0.0
      %2104 = vmatprep.subr.mxu0 0.0
      %2105 = vmatpush1.msra.mxu0 0.0
      %2106 = vmatprep.subr.mxu0 0.0
      %2107 = vmatpush1.msra.mxu0 0.0
      %2108 = vmatprep.subr.mxu0 0.0
      %2109 = vmatpush1.msra.mxu0 0.0
      %2110 = vmatprep.subr.mxu0 0.0
      %2111 = vmatpush1.msra.mxu0 0.0
      %2112 = vmatprep.subr.mxu0 0.0
      %2113 = vmatpush1.msra.mxu0 0.0
      %2114 = vmatprep.subr.mxu0 0.0
      %2115 = vmatpush1.msra.mxu0 0.0
      %2116 = vmatprep.subr.mxu0 0.0
      %2117 = vmatpush1.msra.mxu0 0.0
      %2118 = vmatprep.subr.mxu0 0.0
      %2119 = vmatpush1.msra.mxu0 0.0
      %2120 = vmatprep.subr.mxu0 0.0
      %2121 = vmatpush1.msra.mxu0 0.0
      %2122 = vmatprep.mubr.f32.mxu0 0.0
      %2123 = vmatmul.mubr.f32.gmra.mrb[0].mxu0 %v1748
      %v2124 = vpop.f32.mrb[0].mxu0
      %v2125 = vadd.f32 0.0, %v2124
      %v2126 = vpop.f32.mrb[0].mxu0
      %2127 = vmatprep.mubr.f32.mxu0 0.0
      %2128 = vmatmul.mubr.f32.gmra.mrb[0].mxu0 %v1749
      %v2129 = vpop.f32.mrb[0].mxu0
      %v2130 = vadd.f32 0.0, %v2129
      %v2131 = vpop.f32.mrb[0].mxu0
      %2132 = vmatprep.mubr.f32.mxu0 0.0
      %2133 = vmatmul.mubr.f32.gmra.mrb[0].mxu0 %v1750
      %v2134 = vpop.f32.mrb[0].mxu0
      %v2135 = vadd.f32 0.0, %v2134
      %v2136 = vpop.f32.mrb[0].mxu0
      %2137 = vmatprep.mubr.f32.mxu0 0.0
      %2138 = vmatmul.mubr.f32.gmra.mrb[0].mxu0 %v1751
      %v2139 = vpop.f32.mrb[0].mxu0
      %v2140 = vadd.f32 0.0, %v2139
      %v2141 = vpop.f32.mrb[0].mxu0
      %2142 = vmatprep.mubr.f32.mxu0 0.0
      %2143 = vmatmul.mubr.f32.gmra.mrb[0].mxu0 %v1752
      %v2144 = vpop.f32.mrb[0].mxu0
      %v2145 = vadd.f32 0.0, %v2144
      %v2146 = vpop.f32.mrb[0].mxu0
      %2147 = vmatprep.mubr.f32.mxu0 0.0
      %2148 = vmatmul.mubr.f32.gmra.mrb[0].mxu0 %v1753
      %v2149 = vpop.f32.mrb[0].mxu0
      %v2150 = vadd.f32 0.0, %v2149
      %v2151 = vpop.f32.mrb[0].mxu0
      %2152 = vmatprep.mubr.f32.mxu0 0.0
      %2153 = vmatmul.mubr.f32.gmra.mrb[0].mxu0 %v1754
      %v2154 = vpop.f32.mrb[0].mxu0
      %v2155 = vadd.f32 0.0, %v2154
      %v2156 = vpop.f32.mrb[0].mxu0
      %2157 = vmatprep.mubr.f32.mxu0 0.0
      %2158 = vmatmul.mubr.f32.gmra.mrb[0].mxu0 %v1755
      %v2159 = vpop.f32.mrb[0].mxu0
      %v2160 = vadd.f32 0.0, %v2159
      %v2161 = vpop.f32.mrb[0].mxu0
      %2162 = vmatprep.mubr.f32.mxu0 0.0
      %2163 = vmatmul.mubr.f32.gmra.mrb[0].mxu0 %v1756
      %v2164 = vpop.f32.mrb[0].mxu0
      %v2165 = vadd.f32 0.0, %v2164
      %v2166 = vpop.f32.mrb[0].mxu0
      %2167 = vmatprep.mubr.f32.mxu0 0.0
      %2168 = vmatmul.mubr.f32.gmra.mrb[0].mxu0 %v1757
      %v2169 = vpop.f32.mrb[0].mxu0
      %v2170 = vadd.f32 0.0, %v2169
      %v2171 = vpop.f32.mrb[0].mxu0
      %2172 = vmatprep.mubr.f32.mxu0 0.0
      %2173 = vmatmul.mubr.f32.gmra.mrb[0].mxu0 %v1758
      %v2174 = vpop.f32.mrb[0].mxu0
      %v2175 = vadd.f32 0.0, %v2174
      %v2176 = vpop.f32.mrb[0].mxu0
      %2177 = vmatprep.mubr.f32.mxu0 0.0
      %2178 = vmatmul.mubr.f32.gmra.mrb[0].mxu0 %v1759
      %v2179 = vpop.f32.mrb[0].mxu0
      %v2180 = vadd.f32 0.0, %v2179
      %v2181 = vpop.f32.mrb[0].mxu0
      %2182 = vmatprep.mubr.f32.mxu0 0.0
      %2183 = vmatmul.mubr.f32.gmra.mrb[0].mxu0 %v1760
      %v2184 = vpop.f32.mrb[0].mxu0
      %v2185 = vadd.f32 0.0, %v2184
      %v2186 = vpop.f32.mrb[0].mxu0
      %2187 = vmatprep.mubr.f32.mxu0 0.0
      %2188 = vmatmul.mubr.f32.gmra.mrb[0].mxu0 %v1761
      %v2189 = vpop.f32.mrb[0].mxu0
      %v2190 = vadd.f32 0.0, %v2189
      %v2191 = vpop.f32.mrb[0].mxu0
      %2192 = vmatprep.mubr.f32.mxu0 0.0
      %2193 = vmatmul.mubr.f32.gmra.mrb[0].mxu0 %v1762
      %v2194 = vpop.f32.mrb[0].mxu0
      %v2195 = vadd.f32 0.0, %v2194
      %v2196 = vpop.f32.mrb[0].mxu0
      %2197 = vmatprep.mubr.f32.mxu0 0.0
      %2198 = vmatmul.mubr.f32.gmra.mrb[0].mxu0 %v1763
      %v2199 = vpop.f32.mrb[0].mxu0
      %v2200 = vadd.f32 0.0, %v2199
      %v2201 = vpop.f32.mrb[0].mxu0
      %2202 = vmatprep.mubr.f32.mxu0 0.0
      %2203 = vmatmul.mubr.f32.gmra.mrb[0].mxu0 %v1764
      %v2204 = vpop.f32.mrb[0].mxu0
      %v2205 = vadd.f32 0.0, %v2204
      %v2206 = vpop.f32.mrb[0].mxu0
      %2207 = vmatprep.mubr.f32.mxu0 0.0
      %2208 = vmatmul.mubr.f32.gmra.mrb[0].mxu0 %v1765
      %v2209 = vpop.f32.mrb[0].mxu0
      %v2210 = vadd.f32 0.0, %v2209
      %v2211 = vpop.f32.mrb[0].mxu0
      %2212 = vmatprep.mubr.f32.mxu0 0.0
      %2213 = vmatmul.mubr.f32.gmra.mrb[0].mxu0 %v1766
      %v2214 = vpop.f32.mrb[0].mxu0
      %v2215 = vadd.f32 0.0, %v2214
      %v2216 = vpop.f32.mrb[0].mxu0
      %2217 = vmatprep.mubr.f32.mxu0 0.0
      %2218 = vmatmul.mubr.f32.gmra.mrb[0].mxu0 %v1767
      %v2219 = vpop.f32.mrb[0].mxu0
      %v2220 = vadd.f32 0.0, %v2219
      %v2221 = vpop.f32.mrb[0].mxu0
      %2222 = vmatprep.mubr.f32.mxu0 0.0
      %2223 = vmatmul.mubr.f32.gmra.mrb[0].mxu0 %v1768
      %v2224 = vpop.f32.mrb[0].mxu0
      %v2225 = vadd.f32 0.0, %v2224
      %v2226 = vpop.f32.mrb[0].mxu0
      %2227 = vmatprep.mubr.f32.mxu0 0.0
      %2228 = vmatmul.mubr.f32.gmra.mrb[0].mxu0 %v1769
      %v2229 = vpop.f32.mrb[0].mxu0
      %v2230 = vadd.f32 0.0, %v2229
      %v2231 = vpop.f32.mrb[0].mxu0
      %2232 = vmatprep.mubr.f32.mxu0 0.0
      %2233 = vmatmul.mubr.f32.gmra.mrb[0].mxu0 %v1770
      %v2234 = vpop.f32.mrb[0].mxu0
      %v2235 = vadd.f32 0.0, %v2234
      %v2236 = vpop.f32.mrb[0].mxu0
      %2237 = vmatprep.mubr.f32.mxu0 0.0
      %2238 = vmatmul.mubr.f32.gmra.mrb[0].mxu0 %v1771
      %v2239 = vpop.f32.mrb[0].mxu0
      %v2240 = vadd.f32 0.0, %v2239
      %v2241 = vpop.f32.mrb[0].mxu0
      %2242 = vmatprep.mubr.f32.mxu0 0.0
      %2243 = vmatmul.mubr.f32.gmra.mrb[0].mxu0 %v1772
      %v2244 = vpop.f32.mrb[0].mxu0
      %v2245 = vadd.f32 0.0, %v2244
      %v2246 = vpop.f32.mrb[0].mxu0
      %2247 = vmatprep.mubr.f32.mxu0 0.0
      %2248 = vmatmul.mubr.f32.gmra.mrb[0].mxu0 %v1773
      %v2249 = vpop.f32.mrb[0].mxu0
      %v2250 = vadd.f32 0.0, %v2249
      %v2251 = vpop.f32.mrb[0].mxu0
      %2252 = vmatprep.mubr.f32.mxu0 0.0
      %2253 = vmatmul.mubr.f32.gmra.mrb[0].mxu0 %v1774
      %v2254 = vpop.f32.mrb[0].mxu0
      %v2255 = vadd.f32 0.0, %v2254
      %v2256 = vpop.f32.mrb[0].mxu0
      %2257 = vmatprep.mubr.f32.mxu0 0.0
      %2258 = vmatmul.mubr.f32.gmra.mrb[0].mxu0 %v1775
      %v2259 = vpop.f32.mrb[0].mxu0
      %v2260 = vadd.f32 0.0, %v2259
      %v2261 = vpop.f32.mrb[0].mxu0
      %2262 = vdwg.mxu0
      %v2263 = vld [vmem:[#allocation2 + $0x2] sm:$0xff]
      %v2264 = vld [vmem:[#allocation2 + $0xa] sm:$0xff]
      %v2265 = vld [vmem:[#allocation2 + $0x1a] sm:$0xff]
      %v2266 = vld [vmem:[#allocation2 + $0x22] sm:$0xff]
      %v2267 = vld [vmem:[#allocation2 + $0x32] sm:$0xff]
      %v2268 = vld [vmem:[#allocation2 + $0x3a] sm:$0xff]
      %v2269 = vld [vmem:[#allocation2 + $0x4a] sm:$0xff]
      %v2270 = vld [vmem:[#allocation2 + $0x52] sm:$0xff]
      %v2271 = vld [vmem:[#allocation2 + $0x62] sm:$0xff]
      %v2272 = vld [vmem:[#allocation2 + $0x6a] sm:$0xff]
      %v2273 = vld [vmem:[#allocation2 + $0x7a] sm:$0xff]
      %v2274 = vld [vmem:[#allocation2 + $0x82] sm:$0xff]
      %v2275 = vld [vmem:[#allocation2 + $0x92] sm:$0xff]
      %v2276 = vld [vmem:[#allocation2 + $0x9a] sm:$0xff]
      %v2277 = vld [vmem:[#allocation2 + $0xaa] sm:$0xff]
      %v2278 = vld [vmem:[#allocation2 + $0xb2] sm:$0xff]
      %v2279 = vld [vmem:[#allocation2 + $0xc2] sm:$0xff]
      %v2280 = vld [vmem:[#allocation2 + $0xca] sm:$0xff]
      %v2281 = vld [vmem:[#allocation2 + $0xda] sm:$0xff]
      %v2282 = vld [vmem:[#allocation2 + $0xe2] sm:$0xff]
      %v2283 = vld [vmem:[#allocation2 + $0xf2] sm:$0xff]
      %v2284 = vld [vmem:[#allocation2 + $0xfa] sm:$0xff]
      %v2285 = vld [vmem:[#allocation2 + $0x10a] sm:$0xff]
      %v2286 = vld [vmem:[#allocation2 + $0x112] sm:$0xff]
      %v2287 = vld [vmem:[#allocation2 + $0x122] sm:$0xff]
      %v2288 = vld [vmem:[#allocation2 + $0x12a] sm:$0xff]
      %v2289 = vld [vmem:[#allocation2 + $0x13a] sm:$0xff]
      %v2290 = vld [vmem:[#allocation2 + $0x142] sm:$0xff]
      %v2291 = vadd.f32 %v2263, %v1892
      %v2292 = vadd.f32 %v2264, %v1898
      %v2293 = vadd.f32 %v2265, %v1904
      %v2294 = vadd.f32 %v2266, %v1910
      %v2295 = vadd.f32 %v2267, %v1916
      %v2296 = vadd.f32 %v2268, %v1922
      %v2297 = vadd.f32 %v2269, %v1928
      %v2298 = vadd.f32 %v2270, %v1934
      %v2299 = vadd.f32 %v2271, %v1940
      %v2300 = vadd.f32 %v2272, %v1946
      %v2301 = vadd.f32 %v2273, %v1952
      %v2302 = vadd.f32 %v2274, %v1958
      %v2303 = vadd.f32 %v2275, %v1964
      %v2304 = vadd.f32 %v2276, %v1970
      %v2305 = vadd.f32 %v2277, %v1976
      %v2306 = vadd.f32 %v2278, %v1982
      %v2307 = vadd.f32 %v2279, %v1988
      %v2308 = vadd.f32 %v2280, %v1994
      %v2309 = vadd.f32 %v2281, %v2000
      %v2310 = vadd.f32 %v2282, %v2006
      %v2311 = vadd.f32 %v2283, %v2012
      %v2312 = vadd.f32 %v2284, %v2018
      %v2313 = vadd.f32 %v2285, %v2024
      %v2314 = vadd.f32 %v2286, %v2030
      %v2315 = vadd.f32 %v2287, %v2036
      %v2316 = vadd.f32 %v2288, %v2042
      %v2317 = vadd.f32 %v2289, %v2048
      %v2318 = vadd.f32 %v2290, %v2054
      %2319 = vst [vmem:[#allocation2 + $0x2] sm:$0xff] %v2291
      %2320 = vst [vmem:[#allocation2 + $0xa] sm:$0xff] %v2292
      %2321 = vst [vmem:[#allocation2 + $0x1a] sm:$0xff] %v2293
      %2322 = vst [vmem:[#allocation2 + $0x22] sm:$0xff] %v2294
      %2323 = vst [vmem:[#allocation2 + $0x32] sm:$0xff] %v2295
      %2324 = vst [vmem:[#allocation2 + $0x3a] sm:$0xff] %v2296
      %2325 = vst [vmem:[#allocation2 + $0x4a] sm:$0xff] %v2297
      %2326 = vst [vmem:[#allocation2 + $0x52] sm:$0xff] %v2298
      %2327 = vst [vmem:[#allocation2 + $0x62] sm:$0xff] %v2299
      %2328 = vst [vmem:[#allocation2 + $0x6a] sm:$0xff] %v2300
      %2329 = vst [vmem:[#allocation2 + $0x7a] sm:$0xff] %v2301
      %2330 = vst [vmem:[#allocation2 + $0x82] sm:$0xff] %v2302
      %2331 = vst [vmem:[#allocation2 + $0x92] sm:$0xff] %v2303
      %2332 = vst [vmem:[#allocation2 + $0x9a] sm:$0xff] %v2304
      %2333 = vst [vmem:[#allocation2 + $0xaa] sm:$0xff] %v2305
      %2334 = vst [vmem:[#allocation2 + $0xb2] sm:$0xff] %v2306
      %2335 = vst [vmem:[#allocation2 + $0xc2] sm:$0xff] %v2307
      %2336 = vst [vmem:[#allocation2 + $0xca] sm:$0xff] %v2308
      %2337 = vst [vmem:[#allocation2 + $0xda] sm:$0xff] %v2309
      %2338 = vst [vmem:[#allocation2 + $0xe2] sm:$0xff] %v2310
      %2339 = vst [vmem:[#allocation2 + $0xf2] sm:$0xff] %v2311
      %2340 = vst [vmem:[#allocation2 + $0xfa] sm:$0xff] %v2312
      %2341 = vst [vmem:[#allocation2 + $0x10a] sm:$0xff] %v2313
      %2342 = vst [vmem:[#allocation2 + $0x112] sm:$0xff] %v2314
      %2343 = vst [vmem:[#allocation2 + $0x122] sm:$0xff] %v2315
      %2344 = vst [vmem:[#allocation2 + $0x12a] sm:$0xff] %v2316
      %2345 = vst [vmem:[#allocation2 + $0x13a] sm:$0xff] %v2317
      %2346 = vst [vmem:[#allocation2 + $0x142] sm:$0xff] %v2318
      %v2347 = vld [vmem:[#allocation2 + $0x1] sm:$0xff]
      %v2348 = vld [vmem:[#allocation2 + $0x9] sm:$0xff]
      %v2349 = vld [vmem:[#allocation2 + $0x19] sm:$0xff]
      %v2350 = vld [vmem:[#allocation2 + $0x21] sm:$0xff]
      %v2351 = vld [vmem:[#allocation2 + $0x31] sm:$0xff]
      %v2352 = vld [vmem:[#allocation2 + $0x39] sm:$0xff]
      %v2353 = vld [vmem:[#allocation2 + $0x49] sm:$0xff]
      %v2354 = vld [vmem:[#allocation2 + $0x51] sm:$0xff]
      %v2355 = vld [vmem:[#allocation2 + $0x61] sm:$0xff]
      %v2356 = vld [vmem:[#allocation2 + $0x69] sm:$0xff]
      %v2357 = vld [vmem:[#allocation2 + $0x79] sm:$0xff]
      %v2358 = vld [vmem:[#allocation2 + $0x81] sm:$0xff]
      %v2359 = vld [vmem:[#allocation2 + $0x91] sm:$0xff]
      %v2360 = vld [vmem:[#allocation2 + $0x99] sm:$0xff]
      %v2361 = vld [vmem:[#allocation2 + $0xa9] sm:$0xff]
      %v2362 = vld [vmem:[#allocation2 + $0xb1] sm:$0xff]
      %v2363 = vld [vmem:[#allocation2 + $0xc1] sm:$0xff]
      %v2364 = vld [vmem:[#allocation2 + $0xc9] sm:$0xff]
      %v2365 = vld [vmem:[#allocation2 + $0xd9] sm:$0xff]
      %v2366 = vld [vmem:[#allocation2 + $0xe1] sm:$0xff]
      %v2367 = vld [vmem:[#allocation2 + $0xf1] sm:$0xff]
      %v2368 = vld [vmem:[#allocation2 + $0xf9] sm:$0xff]
      %v2369 = vld [vmem:[#allocation2 + $0x109] sm:$0xff]
      %v2370 = vld [vmem:[#allocation2 + $0x111] sm:$0xff]
      %v2371 = vld [vmem:[#allocation2 + $0x121] sm:$0xff]
      %v2372 = vld [vmem:[#allocation2 + $0x129] sm:$0xff]
      %v2373 = vld [vmem:[#allocation2 + $0x139] sm:$0xff]
      %v2374 = vld [vmem:[#allocation2 + $0x141] sm:$0xff]
      %v2375 = vadd.f32 %v2347, %v1894
      %v2376 = vadd.f32 %v2348, %v1900
      %v2377 = vadd.f32 %v2349, %v1906
      %v2378 = vadd.f32 %v2350, %v1912
      %v2379 = vadd.f32 %v2351, %v1918
      %v2380 = vadd.f32 %v2352, %v1924
      %v2381 = vadd.f32 %v2353, %v1930
      %v2382 = vadd.f32 %v2354, %v1936
      %v2383 = vadd.f32 %v2355, %v1942
      %v2384 = vadd.f32 %v2356, %v1948
      %v2385 = vadd.f32 %v2357, %v1954
      %v2386 = vadd.f32 %v2358, %v1960
      %v2387 = vadd.f32 %v2359, %v1966
      %v2388 = vadd.f32 %v2360, %v1972
      %v2389 = vadd.f32 %v2361, %v1978
      %v2390 = vadd.f32 %v2362, %v1984
      %v2391 = vadd.f32 %v2363, %v1990
      %v2392 = vadd.f32 %v2364, %v1996
      %v2393 = vadd.f32 %v2365, %v2002
      %v2394 = vadd.f32 %v2366, %v2008
      %v2395 = vadd.f32 %v2367, %v2014
      %v2396 = vadd.f32 %v2368, %v2020
      %v2397 = vadd.f32 %v2369, %v2026
      %v2398 = vadd.f32 %v2370, %v2032
      %v2399 = vadd.f32 %v2371, %v2038
      %v2400 = vadd.f32 %v2372, %v2044
      %v2401 = vadd.f32 %v2373, %v2050
      %v2402 = vadd.f32 %v2374, %v2056
      %2403 = vst [vmem:[#allocation2 + $0x1] sm:$0xff] %v2375
      %2404 = vst [vmem:[#allocation2 + $0x9] sm:$0xff] %v2376
      %2405 = vst [vmem:[#allocation2 + $0x19] sm:$0xff] %v2377
      %2406 = vst [vmem:[#allocation2 + $0x21] sm:$0xff] %v2378
      %2407 = vst [vmem:[#allocation2 + $0x31] sm:$0xff] %v2379
      %2408 = vst [vmem:[#allocation2 + $0x39] sm:$0xff] %v2380
      %2409 = vst [vmem:[#allocation2 + $0x49] sm:$0xff] %v2381
      %2410 = vst [vmem:[#allocation2 + $0x51] sm:$0xff] %v2382
      %2411 = vst [vmem:[#allocation2 + $0x61] sm:$0xff] %v2383
      %2412 = vst [vmem:[#allocation2 + $0x69] sm:$0xff] %v2384
      %2413 = vst [vmem:[#allocation2 + $0x79] sm:$0xff] %v2385
      %2414 = vst [vmem:[#allocation2 + $0x81] sm:$0xff] %v2386
      %2415 = vst [vmem:[#allocation2 + $0x91] sm:$0xff] %v2387
      %2416 = vst [vmem:[#allocation2 + $0x99] sm:$0xff] %v2388
      %2417 = vst [vmem:[#allocation2 + $0xa9] sm:$0xff] %v2389
      %2418 = vst [vmem:[#allocation2 + $0xb1] sm:$0xff] %v2390
      %2419 = vst [vmem:[#allocation2 + $0xc1] sm:$0xff] %v2391
      %2420 = vst [vmem:[#allocation2 + $0xc9] sm:$0xff] %v2392
      %2421 = vst [vmem:[#allocation2 + $0xd9] sm:$0xff] %v2393
      %2422 = vst [vmem:[#allocation2 + $0xe1] sm:$0xff] %v2394
      %2423 = vst [vmem:[#allocation2 + $0xf1] sm:$0xff] %v2395
      %2424 = vst [vmem:[#allocation2 + $0xf9] sm:$0xff] %v2396
      %2425 = vst [vmem:[#allocation2 + $0x109] sm:$0xff] %v2397
      %2426 = vst [vmem:[#allocation2 + $0x111] sm:$0xff] %v2398
      %2427 = vst [vmem:[#allocation2 + $0x121] sm:$0xff] %v2399
      %2428 = vst [vmem:[#allocation2 + $0x129] sm:$0xff] %v2400
      %2429 = vst [vmem:[#allocation2 + $0x139] sm:$0xff] %v2401
      %2430 = vst [vmem:[#allocation2 + $0x141] sm:$0xff] %v2402
      %v2431 = vld [vmem:[#allocation2] sm:$0xff]
      %v2432 = vld [vmem:[#allocation2 + $0x8] sm:$0xff]
      %v2433 = vld [vmem:[#allocation2 + $0x18] sm:$0xff]
      %v2434 = vld [vmem:[#allocation2 + $0x20] sm:$0xff]
      %v2435 = vld [vmem:[#allocation2 + $0x30] sm:$0xff]
      %v2436 = vld [vmem:[#allocation2 + $0x38] sm:$0xff]
      %v2437 = vld [vmem:[#allocation2 + $0x48] sm:$0xff]
      %v2438 = vld [vmem:[#allocation2 + $0x50] sm:$0xff]
      %v2439 = vld [vmem:[#allocation2 + $0x60] sm:$0xff]
      %v2440 = vld [vmem:[#allocation2 + $0x68] sm:$0xff]
      %v2441 = vld [vmem:[#allocation2 + $0x78] sm:$0xff]
      %v2442 = vld [vmem:[#allocation2 + $0x80] sm:$0xff]
      %v2443 = vld [vmem:[#allocation2 + $0x90] sm:$0xff]
      %v2444 = vld [vmem:[#allocation2 + $0x98] sm:$0xff]
      %v2445 = vld [vmem:[#allocation2 + $0xa8] sm:$0xff]
      %v2446 = vld [vmem:[#allocation2 + $0xb0] sm:$0xff]
      %v2447 = vld [vmem:[#allocation2 + $0xc0] sm:$0xff]
      %v2448 = vld [vmem:[#allocation2 + $0xc8] sm:$0xff]
      %v2449 = vld [vmem:[#allocation2 + $0xd8] sm:$0xff]
      %v2450 = vld [vmem:[#allocation2 + $0xe0] sm:$0xff]
      %v2451 = vld [vmem:[#allocation2 + $0xf0] sm:$0xff]
      %v2452 = vld [vmem:[#allocation2 + $0xf8] sm:$0xff]
      %v2453 = vld [vmem:[#allocation2 + $0x108] sm:$0xff]
      %v2454 = vld [vmem:[#allocation2 + $0x110] sm:$0xff]
      %v2455 = vld [vmem:[#allocation2 + $0x120] sm:$0xff]
      %v2456 = vld [vmem:[#allocation2 + $0x128] sm:$0xff]
      %v2457 = vld [vmem:[#allocation2 + $0x138] sm:$0xff]
      %v2458 = vld [vmem:[#allocation2 + $0x140] sm:$0xff]
      %v2459 = vadd.f32 %v2431, %v2125
      %v2460 = vadd.f32 %v2432, %v2130
      %v2461 = vadd.f32 %v2433, %v2135
      %v2462 = vadd.f32 %v2434, %v2140
      %v2463 = vadd.f32 %v2435, %v2145
      %v2464 = vadd.f32 %v2436, %v2150
      %v2465 = vadd.f32 %v2437, %v2155
      %v2466 = vadd.f32 %v2438, %v2160
      %v2467 = vadd.f32 %v2439, %v2165
      %v2468 = vadd.f32 %v2440, %v2170
      %v2469 = vadd.f32 %v2441, %v2175
      %v2470 = vadd.f32 %v2442, %v2180
      %v2471 = vadd.f32 %v2443, %v2185
      %v2472 = vadd.f32 %v2444, %v2190
      %v2473 = vadd.f32 %v2445, %v2195
      %v2474 = vadd.f32 %v2446, %v2200
      %v2475 = vadd.f32 %v2447, %v2205
      %v2476 = vadd.f32 %v2448, %v2210
      %v2477 = vadd.f32 %v2449, %v2215
      %v2478 = vadd.f32 %v2450, %v2220
      %v2479 = vadd.f32 %v2451, %v2225
      %v2480 = vadd.f32 %v2452, %v2230
      %v2481 = vadd.f32 %v2453, %v2235
      %v2482 = vadd.f32 %v2454, %v2240
      %v2483 = vadd.f32 %v2455, %v2245
      %v2484 = vadd.f32 %v2456, %v2250
      %v2485 = vadd.f32 %v2457, %v2255
      %v2486 = vadd.f32 %v2458, %v2260
      %2487 = vst [vmem:[#allocation2] sm:$0xff] %v2459
      %2488 = vst [vmem:[#allocation2 + $0x8] sm:$0xff] %v2460
      %2489 = vst [vmem:[#allocation2 + $0x18] sm:$0xff] %v2461
      %2490 = vst [vmem:[#allocation2 + $0x20] sm:$0xff] %v2462
      %2491 = vst [vmem:[#allocation2 + $0x30] sm:$0xff] %v2463
      %2492 = vst [vmem:[#allocation2 + $0x38] sm:$0xff] %v2464
      %2493 = vst [vmem:[#allocation2 + $0x48] sm:$0xff] %v2465
      %2494 = vst [vmem:[#allocation2 + $0x50] sm:$0xff] %v2466
      %2495 = vst [vmem:[#allocation2 + $0x60] sm:$0xff] %v2467
      %2496 = vst [vmem:[#allocation2 + $0x68] sm:$0xff] %v2468
      %2497 = vst [vmem:[#allocation2 + $0x78] sm:$0xff] %v2469
      %2498 = vst [vmem:[#allocation2 + $0x80] sm:$0xff] %v2470
      %2499 = vst [vmem:[#allocation2 + $0x90] sm:$0xff] %v2471
      %2500 = vst [vmem:[#allocation2 + $0x98] sm:$0xff] %v2472
      %2501 = vst [vmem:[#allocation2 + $0xa8] sm:$0xff] %v2473
      %2502 = vst [vmem:[#allocation2 + $0xb0] sm:$0xff] %v2474
      %2503 = vst [vmem:[#allocation2 + $0xc0] sm:$0xff] %v2475
      %2504 = vst [vmem:[#allocation2 + $0xc8] sm:$0xff] %v2476
      %2505 = vst [vmem:[#allocation2 + $0xd8] sm:$0xff] %v2477
      %2506 = vst [vmem:[#allocation2 + $0xe0] sm:$0xff] %v2478
      %2507 = vst [vmem:[#allocation2 + $0xf0] sm:$0xff] %v2479
      %2508 = vst [vmem:[#allocation2 + $0xf8] sm:$0xff] %v2480
      %2509 = vst [vmem:[#allocation2 + $0x108] sm:$0xff] %v2481
      %2510 = vst [vmem:[#allocation2 + $0x110] sm:$0xff] %v2482
      %2511 = vst [vmem:[#allocation2 + $0x120] sm:$0xff] %v2483
      %2512 = vst [vmem:[#allocation2 + $0x128] sm:$0xff] %v2484
      %2513 = vst [vmem:[#allocation2 + $0x138] sm:$0xff] %v2485
      %2514 = vst [vmem:[#allocation2 + $0x140] sm:$0xff] %v2486
      %v2515 = vld [vmem:[#allocation2 + $0x2] sm:$0xff]
      %v2516 = vld [vmem:[#allocation2 + $0xa] sm:$0xff]
      %v2517 = vld [vmem:[#allocation2 + $0x1a] sm:$0xff]
      %v2518 = vld [vmem:[#allocation2 + $0x22] sm:$0xff]
      %v2519 = vld [vmem:[#allocation2 + $0x32] sm:$0xff]
      %v2520 = vld [vmem:[#allocation2 + $0x3a] sm:$0xff]
      %v2521 = vld [vmem:[#allocation2 + $0x4a] sm:$0xff]
      %v2522 = vld [vmem:[#allocation2 + $0x52] sm:$0xff]
      %v2523 = vld [vmem:[#allocation2 + $0x62] sm:$0xff]
      %v2524 = vld [vmem:[#allocation2 + $0x6a] sm:$0xff]
      %v2525 = vld [vmem:[#allocation2 + $0x7a] sm:$0xff]
      %v2526 = vld [vmem:[#allocation2 + $0x82] sm:$0xff]
      %v2527 = vld [vmem:[#allocation2 + $0x92] sm:$0xff]
      %v2528 = vld [vmem:[#allocation2 + $0x9a] sm:$0xff]
      %v2529 = vld [vmem:[#allocation2 + $0xaa] sm:$0xff]
      %v2530 = vld [vmem:[#allocation2 + $0xb2] sm:$0xff]
      %v2531 = vld [vmem:[#allocation2 + $0xc2] sm:$0xff]
      %v2532 = vld [vmem:[#allocation2 + $0xca] sm:$0xff]
      %v2533 = vld [vmem:[#allocation2 + $0xda] sm:$0xff]
      %v2534 = vld [vmem:[#allocation2 + $0xe2] sm:$0xff]
      %v2535 = vld [vmem:[#allocation2 + $0xf2] sm:$0xff]
      %v2536 = vld [vmem:[#allocation2 + $0xfa] sm:$0xff]
      %v2537 = vld [vmem:[#allocation2 + $0x10a] sm:$0xff]
      %v2538 = vld [vmem:[#allocation2 + $0x112] sm:$0xff]
      %v2539 = vld [vmem:[#allocation2 + $0x122] sm:$0xff]
      %v2540 = vld [vmem:[#allocation2 + $0x12a] sm:$0xff]
      %v2541 = vld [vmem:[#allocation2 + $0x13a] sm:$0xff]
      %v2542 = vld [vmem:[#allocation2 + $0x142] sm:$0xff]
      %v2543 = vmax.f32 %v2515, 0.0
      %v2544 = vmax.f32 %v2516, 0.0
      %v2545 = vmax.f32 %v2517, 0.0
      %v2546 = vmax.f32 %v2518, 0.0
      %v2547 = vmax.f32 %v2519, 0.0
      %v2548 = vmax.f32 %v2520, 0.0
      %v2549 = vmax.f32 %v2521, 0.0
      %v2550 = vmax.f32 %v2522, 0.0
      %v2551 = vmax.f32 %v2523, 0.0
      %v2552 = vmax.f32 %v2524, 0.0
      %v2553 = vmax.f32 %v2525, 0.0
      %v2554 = vmax.f32 %v2526, 0.0
      %v2555 = vmax.f32 %v2527, 0.0
      %v2556 = vmax.f32 %v2528, 0.0
      %v2557 = vmax.f32 %v2529, 0.0
      %v2558 = vmax.f32 %v2530, 0.0
      %v2559 = vmax.f32 %v2531, 0.0
      %v2560 = vmax.f32 %v2532, 0.0
      %v2561 = vmax.f32 %v2533, 0.0
      %v2562 = vmax.f32 %v2534, 0.0
      %v2563 = vmax.f32 %v2535, 0.0
      %v2564 = vmax.f32 %v2536, 0.0
      %v2565 = vmax.f32 %v2537, 0.0
      %v2566 = vmax.f32 %v2538, 0.0
      %v2567 = vmax.f32 %v2539, 0.0
      %v2568 = vmax.f32 %v2540, 0.0
      %v2569 = vmax.f32 %v2541, 0.0
      %v2570 = vmax.f32 %v2542, 0.0
      %2571 = vst [vmem:[#allocation3] sm:$0xff] %v2543
      %2572 = vst [vmem:[#allocation3 + $0x8] sm:$0xff] %v2544
      %2573 = vst [vmem:[#allocation3 + $0x10] sm:$0xff] %v2545
      %2574 = vst [vmem:[#allocation3 + $0x18] sm:$0xff] %v2546
      %2575 = vst [vmem:[#allocation3 + $0x20] sm:$0xff] %v2547
      %2576 = vst [vmem:[#allocation3 + $0x28] sm:$0xff] %v2548
      %2577 = vst [vmem:[#allocation3 + $0x30] sm:$0xff] %v2549
      %2578 = vst [vmem:[#allocation3 + $0x38] sm:$0xff] %v2550
      %2579 = vst [vmem:[#allocation3 + $0x40] sm:$0xff] %v2551
      %2580 = vst [vmem:[#allocation3 + $0x48] sm:$0xff] %v2552
      %2581 = vst [vmem:[#allocation3 + $0x50] sm:$0xff] %v2553
      %2582 = vst [vmem:[#allocation3 + $0x58] sm:$0xff] %v2554
      %2583 = vst [vmem:[#allocation3 + $0x60] sm:$0xff] %v2555
      %2584 = vst [vmem:[#allocation3 + $0x68] sm:$0xff] %v2556
      %2585 = vst [vmem:[#allocation3 + $0x70] sm:$0xff] %v2557
      %2586 = vst [vmem:[#allocation3 + $0x78] sm:$0xff] %v2558
      %2587 = vst [vmem:[#allocation3 + $0x80] sm:$0xff] %v2559
      %2588 = vst [vmem:[#allocation3 + $0x88] sm:$0xff] %v2560
      %2589 = vst [vmem:[#allocation3 + $0x90] sm:$0xff] %v2561
      %2590 = vst [vmem:[#allocation3 + $0x98] sm:$0xff] %v2562
      %2591 = vst [vmem:[#allocation3 + $0xa0] sm:$0xff] %v2563
      %2592 = vst [vmem:[#allocation3 + $0xa8] sm:$0xff] %v2564
      %2593 = vst [vmem:[#allocation3 + $0xb0] sm:$0xff] %v2565
      %2594 = vst [vmem:[#allocation3 + $0xb8] sm:$0xff] %v2566
      %2595 = vst [vmem:[#allocation3 + $0xc0] sm:$0xff] %v2567
      %2596 = vst [vmem:[#allocation3 + $0xc8] sm:$0xff] %v2568
      %2597 = vst [vmem:[#allocation3 + $0xd0] sm:$0xff] %v2569
      %2598 = vst [vmem:[#allocation3 + $0xd8] sm:$0xff] %v2570
      %2599 = vst [vmem:[#allocation4] sm:$0xff] 0.0
      %2600 = vst [vmem:[#allocation4 + $0x8] sm:$0xff] 0.0
      %2601 = vst [vmem:[#allocation4 + $0x10] sm:$0x3] 0.0
      %2602 = vst [vmem:[#allocation4 + $0x18] sm:$0xff] 0.0
      %2603 = vst [vmem:[#allocation4 + $0x20] sm:$0xff] 0.0
      %2604 = vst [vmem:[#allocation4 + $0x28] sm:$0x3] 0.0
      %2605 = vst [vmem:[#allocation4 + $0x30] sm:$0xff] 0.0
      %2606 = vst [vmem:[#allocation4 + $0x38] sm:$0xff] 0.0
      %2607 = vst [vmem:[#allocation4 + $0x40] sm:$0x3] 0.0
      %2608 = vst [vmem:[#allocation4 + $0x48] sm:$0xff] 0.0
      %2609 = vst [vmem:[#allocation4 + $0x50] sm:$0xff] 0.0
      %2610 = vst [vmem:[#allocation4 + $0x58] sm:$0x3] 0.0
      %2611 = vst [vmem:[#allocation4 + $0x60] sm:$0xff] 0.0
      %2612 = vst [vmem:[#allocation4 + $0x68] sm:$0xff] 0.0
      %2613 = vst [vmem:[#allocation4 + $0x70] sm:$0x3] 0.0
      %2614 = vst [vmem:[#allocation4 + $0x78] sm:$0xff] 0.0
      %2615 = vst [vmem:[#allocation4 + $0x80] sm:$0xff] 0.0
      %2616 = vst [vmem:[#allocation4 + $0x88] sm:$0x3] 0.0
      %2617 = vst [vmem:[#allocation4 + $0x90] sm:$0xff] 0.0
      %2618 = vst [vmem:[#allocation4 + $0x98] sm:$0xff] 0.0
      %2619 = vst [vmem:[#allocation4 + $0xa0] sm:$0x3] 0.0
      %2620 = vst [vmem:[#allocation4 + $0xa8] sm:$0xff] 0.0
      %2621 = vst [vmem:[#allocation4 + $0xb0] sm:$0xff] 0.0
      %2622 = vst [vmem:[#allocation4 + $0xb8] sm:$0x3] 0.0
      %2623 = vst [vmem:[#allocation4 + $0xc0] sm:$0xff] 0.0
      %2624 = vst [vmem:[#allocation4 + $0xc8] sm:$0xff] 0.0
      %2625 = vst [vmem:[#allocation4 + $0xd0] sm:$0x3] 0.0
      %2626 = vst [vmem:[#allocation4 + $0xd8] sm:$0xff] 0.0
      %2627 = vst [vmem:[#allocation4 + $0xe0] sm:$0xff] 0.0
      %2628 = vst [vmem:[#allocation4 + $0xe8] sm:$0x3] 0.0
      %2629 = vst [vmem:[#allocation4 + $0xf0] sm:$0xff] 0.0
      %2630 = vst [vmem:[#allocation4 + $0xf8] sm:$0xff] 0.0
      %2631 = vst [vmem:[#allocation4 + $0x100] sm:$0x3] 0.0
      %2632 = vst [vmem:[#allocation4 + $0x108] sm:$0xff] 0.0
      %2633 = vst [vmem:[#allocation4 + $0x110] sm:$0xff] 0.0
      %2634 = vst [vmem:[#allocation4 + $0x118] sm:$0x3] 0.0
      %v2635 = vld [vmem:[#allocation3] sm:$0xff]
      %v2636 = vld [vmem:[#allocation3 + $0x8] sm:$0xff]
      %v2637 = vld [vmem:[#allocation3 + $0x10] sm:$0xff]
      %v2638 = vld [vmem:[#allocation3 + $0x18] sm:$0xff]
      %v2639 = vld [vmem:[#allocation3 + $0x20] sm:$0xff]
      %v2640 = vld [vmem:[#allocation3 + $0x28] sm:$0xff]
      %v2641 = vld [vmem:[#allocation3 + $0x30] sm:$0xff]
      %v2642 = vld [vmem:[#allocation3 + $0x38] sm:$0xff]
      %v2643 = vld [vmem:[#allocation3 + $0x40] sm:$0xff]
      %v2644 = vld [vmem:[#allocation3 + $0x48] sm:$0xff]
      %v2645 = vld [vmem:[#allocation3 + $0x50] sm:$0xff]
      %v2646 = vld [vmem:[#allocation3 + $0x58] sm:$0xff]
      %v2647 = vld [vmem:[#allocation3 + $0x60] sm:$0xff]
      %v2648 = vld [vmem:[#allocation3 + $0x68] sm:$0xff]
      %v2649 = vld [vmem:[#allocation3 + $0x70] sm:$0xff]
      %v2650 = vld [vmem:[#allocation3 + $0x78] sm:$0xff]
      %v2651 = vld [vmem:[#allocation3 + $0x80] sm:$0xff]
      %v2652 = vld [vmem:[#allocation3 + $0x88] sm:$0xff]
      %v2653 = vld [vmem:[#allocation3 + $0x90] sm:$0xff]
      %v2654 = vld [vmem:[#allocation3 + $0x98] sm:$0xff]
      %v2655 = vld [vmem:[#allocation3 + $0xa0] sm:$0xff]
      %v2656 = vld [vmem:[#allocation3 + $0xa8] sm:$0xff]
      %v2657 = vld [vmem:[#allocation3 + $0xb0] sm:$0xff]
      %v2658 = vld [vmem:[#allocation3 + $0xb8] sm:$0xff]
      %v2659 = vld [vmem:[%s2] sm:$0xff]
      %v2660 = vld [vmem:[%s2 + $0x8] sm:$0xff]
      %v2661 = vld [vmem:[%s2 + $0x10] sm:$0xff]
      %v2662 = vld [vmem:[%s2 + $0x18] sm:$0xff]
      %v2663 = vld [vmem:[%s2 + $0x20] sm:$0xff]
      %v2664 = vld [vmem:[%s2 + $0x28] sm:$0xff]
      %v2665 = vld [vmem:[%s2 + $0x30] sm:$0xff]
      %v2666 = vld [vmem:[%s2 + $0x38] sm:$0xff]
      %v2667 = vld [vmem:[%s2 + $0x40] sm:$0xff]
      %v2668 = vld [vmem:[%s2 + $0x48] sm:$0xff]
      %v2669 = vld [vmem:[%s2 + $0x50] sm:$0xff]
      %v2670 = vld [vmem:[%s2 + $0x58] sm:$0xff]
      %v2671 = vld [vmem:[%s2 + $0x60] sm:$0xff]
      %v2672 = vld [vmem:[%s2 + $0x68] sm:$0xff]
      %v2673 = vld [vmem:[%s2 + $0x70] sm:$0xff]
      %v2674 = vld [vmem:[%s2 + $0x78] sm:$0xff]
      %v2675 = vld [vmem:[%s2 + $0x80] sm:$0xff]
      %v2676 = vld [vmem:[%s2 + $0x88] sm:$0xff]
      %v2677 = vld [vmem:[%s2 + $0x90] sm:$0xff]
      %v2678 = vld [vmem:[%s2 + $0x98] sm:$0xff]
      %v2679 = vld [vmem:[%s2 + $0xa0] sm:$0xff]
      %v2680 = vld [vmem:[%s2 + $0xa8] sm:$0xff]
      %v2681 = vld [vmem:[%s2 + $0xb0] sm:$0xff]
      %v2682 = vld [vmem:[%s2 + $0xb8] sm:$0xff]
      %v2683 = vld [vmem:[%s2 + $0xc0] sm:$0xff]
      %v2684 = vld [vmem:[%s2 + $0xc8] sm:$0xff]
      %v2685 = vld [vmem:[%s2 + $0xd0] sm:$0xff]
      %v2686 = vld [vmem:[%s2 + $0xd8] sm:$0xff]
      %v2687 = vld [vmem:[%s2 + $0xe0] sm:$0xff]
      %v2688 = vld [vmem:[%s2 + $0xe8] sm:$0xff]
      %v2689 = vld [vmem:[%s2 + $0xf0] sm:$0xff]
      %v2690 = vld [vmem:[%s2 + $0xf8] sm:$0xff]
      %v2691 = vld [vmem:[%s2 + $0x100] sm:$0xff]
      %v2692 = vld [vmem:[%s2 + $0x108] sm:$0xff]
      %v2693 = vld [vmem:[%s2 + $0x110] sm:$0xff]
      %v2694 = vld [vmem:[%s2 + $0x118] sm:$0xff]
      %v2695 = vld [vmem:[%s2 + $0x120] sm:$0xff]
      %v2696 = vld [vmem:[%s2 + $0x128] sm:$0xff]
      %v2697 = vld [vmem:[%s2 + $0x130] sm:$0xff]
      %v2698 = vld [vmem:[%s2 + $0x138] sm:$0xff]
      %v2699 = vld [vmem:[%s2 + $0x140] sm:$0xff]
      %v2700 = vld [vmem:[%s2 + $0x148] sm:$0xff]
      %v2701 = vld [vmem:[%s2 + $0x150] sm:$0xff]
      %v2702 = vld [vmem:[%s2 + $0x158] sm:$0xff]
      %v2703 = vld [vmem:[%s2 + $0x160] sm:$0xff]
      %v2704 = vld [vmem:[%s2 + $0x168] sm:$0xff]
      %v2705 = vld [vmem:[%s2 + $0x170] sm:$0xff]
      %v2706 = vld [vmem:[%s2 + $0x178] sm:$0xff]
      %2707 = vmatprep.subr.mxu0 %v2660
      %2708 = vmatpush1.msra.mxu0 %v2659
      %2709 = vmatprep.subr.mxu0 %v2663
      %2710 = vmatpush1.msra.mxu0 %v2662
      %2711 = vmatprep.subr.mxu0 %v2666
      %2712 = vmatpush1.msra.mxu0 %v2665
      %2713 = vmatprep.subr.mxu0 %v2669
      %2714 = vmatpush1.msra.mxu0 %v2668
      %2715 = vmatprep.subr.mxu0 %v2672
      %2716 = vmatpush1.msra.mxu0 %v2671
      %2717 = vmatprep.subr.mxu0 %v2675
      %2718 = vmatpush1.msra.mxu0 %v2674
      %2719 = vmatprep.subr.mxu0 %v2678
      %2720 = vmatpush1.msra.mxu0 %v2677
      %2721 = vmatprep.subr.mxu0 %v2681
      %2722 = vmatpush1.msra.mxu0 %v2680
      %2723 = vmatprep.subr.mxu0 %v2684
      %2724 = vmatpush1.msra.mxu0 %v2683
      %2725 = vmatprep.subr.mxu0 %v2687
      %2726 = vmatpush1.msra.mxu0 %v2686
      %2727 = vmatprep.subr.mxu0 %v2690
      %2728 = vmatpush1.msra.mxu0 %v2689
      %2729 = vmatprep.subr.mxu0 %v2693
      %2730 = vmatpush1.msra.mxu0 %v2692
      %2731 = vmatprep.subr.mxu0 %v2696
      %2732 = vmatpush1.msra.mxu0 %v2695
      %2733 = vmatprep.subr.mxu0 %v2699
      %2734 = vmatpush1.msra.mxu0 %v2698
      %2735 = vmatprep.subr.mxu0 %v2702
      %2736 = vmatpush1.msra.mxu0 %v2701
      %2737 = vmatprep.subr.mxu0 %v2705
      %2738 = vmatpush1.msra.mxu0 %v2704
      %2739 = vmatprep.subr.mxu0 0.0
      %2740 = vmatpush1.msra.mxu0 0.0
      %2741 = vmatprep.subr.mxu0 0.0
      %2742 = vmatpush1.msra.mxu0 0.0
      %2743 = vmatprep.subr.mxu0 0.0
      %2744 = vmatpush1.msra.mxu0 0.0
      %2745 = vmatprep.subr.mxu0 0.0
      %2746 = vmatpush1.msra.mxu0 0.0
      %2747 = vmatprep.subr.mxu0 0.0
      %2748 = vmatpush1.msra.mxu0 0.0
      %2749 = vmatprep.subr.mxu0 0.0
      %2750 = vmatpush1.msra.mxu0 0.0
      %2751 = vmatprep.subr.mxu0 0.0
      %2752 = vmatpush1.msra.mxu0 0.0
      %2753 = vmatprep.subr.mxu0 0.0
      %2754 = vmatpush1.msra.mxu0 0.0
      %2755 = vmatprep.subr.mxu0 0.0
      %2756 = vmatpush1.msra.mxu0 0.0
      %2757 = vmatprep.subr.mxu0 0.0
      %2758 = vmatpush1.msra.mxu0 0.0
      %2759 = vmatprep.subr.mxu0 0.0
      %2760 = vmatpush1.msra.mxu0 0.0
      %2761 = vmatprep.subr.mxu0 0.0
      %2762 = vmatpush1.msra.mxu0 0.0
      %2763 = vmatprep.subr.mxu0 0.0
      %2764 = vmatpush1.msra.mxu0 0.0
      %2765 = vmatprep.subr.mxu0 0.0
      %2766 = vmatpush1.msra.mxu0 0.0
      %2767 = vmatprep.subr.mxu0 0.0
      %2768 = vmatpush1.msra.mxu0 0.0
      %2769 = vmatprep.subr.mxu0 0.0
      %2770 = vmatpush1.msra.mxu0 0.0
      %2771 = vmatprep.mubr.f32.mxu0 0.0
      %2772 = vmatmul.mubr.f32.gmra.mrb[0].mxu0 %v2635
      %v2773 = vpop.f32.mrb[0].mxu0
      %v2774 = vadd.f32 0.0, %v2773
      %v2775 = vpop.f32.mrb[0].mxu0
      %v2776 = vadd.f32 0.0, %v2775
      %2777 = vmatprep.mubr.f32.mxu0 0.0
      %2778 = vmatmul.mubr.f32.gmra.mrb[0].mxu0 %v2636
      %v2779 = vpop.f32.mrb[0].mxu0
      %v2780 = vadd.f32 0.0, %v2779
      %v2781 = vpop.f32.mrb[0].mxu0
      %v2782 = vadd.f32 0.0, %v2781
      %2783 = vmatprep.mubr.f32.mxu0 0.0
      %2784 = vmatmul.mubr.f32.gmra.mrb[0].mxu0 %v2637
      %v2785 = vpop.f32.mrb[0].mxu0
      %v2786 = vadd.f32 0.0, %v2785
      %v2787 = vpop.f32.mrb[0].mxu0
      %v2788 = vadd.f32 0.0, %v2787
      %2789 = vmatprep.mubr.f32.mxu0 0.0
      %2790 = vmatmul.mubr.f32.gmra.mrb[0].mxu0 %v2638
      %v2791 = vpop.f32.mrb[0].mxu0
      %v2792 = vadd.f32 0.0, %v2791
      %v2793 = vpop.f32.mrb[0].mxu0
      %v2794 = vadd.f32 0.0, %v2793
      %2795 = vmatprep.mubr.f32.mxu0 0.0
      %2796 = vmatmul.mubr.f32.gmra.mrb[0].mxu0 %v2639
      %v2797 = vpop.f32.mrb[0].mxu0
      %v2798 = vadd.f32 0.0, %v2797
      %v2799 = vpop.f32.mrb[0].mxu0
      %v2800 = vadd.f32 0.0, %v2799
      %2801 = vmatprep.mubr.f32.mxu0 0.0
      %2802 = vmatmul.mubr.f32.gmra.mrb[0].mxu0 %v2640
      %v2803 = vpop.f32.mrb[0].mxu0
      %v2804 = vadd.f32 0.0, %v2803
      %v2805 = vpop.f32.mrb[0].mxu0
      %v2806 = vadd.f32 0.0, %v2805
      %2807 = vmatprep.mubr.f32.mxu0 0.0
      %2808 = vmatmul.mubr.f32.gmra.mrb[0].mxu0 %v2641
      %v2809 = vpop.f32.mrb[0].mxu0
      %v2810 = vadd.f32 0.0, %v2809
      %v2811 = vpop.f32.mrb[0].mxu0
      %v2812 = vadd.f32 0.0, %v2811
      %2813 = vmatprep.mubr.f32.mxu0 0.0
      %2814 = vmatmul.mubr.f32.gmra.mrb[0].mxu0 %v2642
      %v2815 = vpop.f32.mrb[0].mxu0
      %v2816 = vadd.f32 0.0, %v2815
      %v2817 = vpop.f32.mrb[0].mxu0
      %v2818 = vadd.f32 0.0, %v2817
      %2819 = vmatprep.mubr.f32.mxu0 0.0
      %2820 = vmatmul.mubr.f32.gmra.mrb[0].mxu0 %v2643
      %v2821 = vpop.f32.mrb[0].mxu0
      %v2822 = vadd.f32 0.0, %v2821
      %v2823 = vpop.f32.mrb[0].mxu0
      %v2824 = vadd.f32 0.0, %v2823
      %2825 = vmatprep.mubr.f32.mxu0 0.0
      %2826 = vmatmul.mubr.f32.gmra.mrb[0].mxu0 %v2644
      %v2827 = vpop.f32.mrb[0].mxu0
      %v2828 = vadd.f32 0.0, %v2827
      %v2829 = vpop.f32.mrb[0].mxu0
      %v2830 = vadd.f32 0.0, %v2829
      %2831 = vmatprep.mubr.f32.mxu0 0.0
      %2832 = vmatmul.mubr.f32.gmra.mrb[0].mxu0 %v2645
      %v2833 = vpop.f32.mrb[0].mxu0
      %v2834 = vadd.f32 0.0, %v2833
      %v2835 = vpop.f32.mrb[0].mxu0
      %v2836 = vadd.f32 0.0, %v2835
      %2837 = vmatprep.mubr.f32.mxu0 0.0
      %2838 = vmatmul.mubr.f32.gmra.mrb[0].mxu0 %v2646
      %v2839 = vpop.f32.mrb[0].mxu0
      %v2840 = vadd.f32 0.0, %v2839
      %v2841 = vpop.f32.mrb[0].mxu0
      %v2842 = vadd.f32 0.0, %v2841
      %2843 = vmatprep.mubr.f32.mxu0 0.0
      %2844 = vmatmul.mubr.f32.gmra.mrb[0].mxu0 %v2647
      %v2845 = vpop.f32.mrb[0].mxu0
      %v2846 = vadd.f32 0.0, %v2845
      %v2847 = vpop.f32.mrb[0].mxu0
      %v2848 = vadd.f32 0.0, %v2847
      %2849 = vmatprep.mubr.f32.mxu0 0.0
      %2850 = vmatmul.mubr.f32.gmra.mrb[0].mxu0 %v2648
      %v2851 = vpop.f32.mrb[0].mxu0
      %v2852 = vadd.f32 0.0, %v2851
      %v2853 = vpop.f32.mrb[0].mxu0
      %v2854 = vadd.f32 0.0, %v2853
      %2855 = vmatprep.mubr.f32.mxu0 0.0
      %2856 = vmatmul.mubr.f32.gmra.mrb[0].mxu0 %v2649
      %v2857 = vpop.f32.mrb[0].mxu0
      %v2858 = vadd.f32 0.0, %v2857
      %v2859 = vpop.f32.mrb[0].mxu0
      %v2860 = vadd.f32 0.0, %v2859
      %2861 = vmatprep.mubr.f32.mxu0 0.0
      %2862 = vmatmul.mubr.f32.gmra.mrb[0].mxu0 %v2650
      %v2863 = vpop.f32.mrb[0].mxu0
      %v2864 = vadd.f32 0.0, %v2863
      %v2865 = vpop.f32.mrb[0].mxu0
      %v2866 = vadd.f32 0.0, %v2865
      %2867 = vmatprep.mubr.f32.mxu0 0.0
      %2868 = vmatmul.mubr.f32.gmra.mrb[0].mxu0 %v2651
      %v2869 = vpop.f32.mrb[0].mxu0
      %v2870 = vadd.f32 0.0, %v2869
      %v2871 = vpop.f32.mrb[0].mxu0
      %v2872 = vadd.f32 0.0, %v2871
      %2873 = vmatprep.mubr.f32.mxu0 0.0
      %2874 = vmatmul.mubr.f32.gmra.mrb[0].mxu0 %v2652
      %v2875 = vpop.f32.mrb[0].mxu0
      %v2876 = vadd.f32 0.0, %v2875
      %v2877 = vpop.f32.mrb[0].mxu0
      %v2878 = vadd.f32 0.0, %v2877
      %2879 = vmatprep.mubr.f32.mxu0 0.0
      %2880 = vmatmul.mubr.f32.gmra.mrb[0].mxu0 %v2653
      %v2881 = vpop.f32.mrb[0].mxu0
      %v2882 = vadd.f32 0.0, %v2881
      %v2883 = vpop.f32.mrb[0].mxu0
      %v2884 = vadd.f32 0.0, %v2883
      %2885 = vmatprep.mubr.f32.mxu0 0.0
      %2886 = vmatmul.mubr.f32.gmra.mrb[0].mxu0 %v2654
      %v2887 = vpop.f32.mrb[0].mxu0
      %v2888 = vadd.f32 0.0, %v2887
      %v2889 = vpop.f32.mrb[0].mxu0
      %v2890 = vadd.f32 0.0, %v2889
      %2891 = vmatprep.mubr.f32.mxu0 0.0
      %2892 = vmatmul.mubr.f32.gmra.mrb[0].mxu0 %v2655
      %v2893 = vpop.f32.mrb[0].mxu0
      %v2894 = vadd.f32 0.0, %v2893
      %v2895 = vpop.f32.mrb[0].mxu0
      %v2896 = vadd.f32 0.0, %v2895
      %2897 = vmatprep.mubr.f32.mxu0 0.0
      %2898 = vmatmul.mubr.f32.gmra.mrb[0].mxu0 %v2656
      %v2899 = vpop.f32.mrb[0].mxu0
      %v2900 = vadd.f32 0.0, %v2899
      %v2901 = vpop.f32.mrb[0].mxu0
      %v2902 = vadd.f32 0.0, %v2901
      %2903 = vmatprep.mubr.f32.mxu0 0.0
      %2904 = vmatmul.mubr.f32.gmra.mrb[0].mxu0 %v2657
      %v2905 = vpop.f32.mrb[0].mxu0
      %v2906 = vadd.f32 0.0, %v2905
      %v2907 = vpop.f32.mrb[0].mxu0
      %v2908 = vadd.f32 0.0, %v2907
      %2909 = vmatprep.mubr.f32.mxu0 0.0
      %2910 = vmatmul.mubr.f32.gmra.mrb[0].mxu0 %v2658
      %v2911 = vpop.f32.mrb[0].mxu0
      %v2912 = vadd.f32 0.0, %v2911
      %v2913 = vpop.f32.mrb[0].mxu0
      %v2914 = vadd.f32 0.0, %v2913
      %2915 = vdwg.mxu0
      %2916 = vmatprep.subr.mxu0 0.0
      %2917 = vmatpush1.msra.mxu0 %v2661
      %2918 = vmatprep.subr.mxu0 0.0
      %2919 = vmatpush1.msra.mxu0 %v2664
      %2920 = vmatprep.subr.mxu0 0.0
      %2921 = vmatpush1.msra.mxu0 %v2667
      %2922 = vmatprep.subr.mxu0 0.0
      %2923 = vmatpush1.msra.mxu0 %v2670
      %2924 = vmatprep.subr.mxu0 0.0
      %2925 = vmatpush1.msra.mxu0 %v2673
      %2926 = vmatprep.subr.mxu0 0.0
      %2927 = vmatpush1.msra.mxu0 %v2676
      %2928 = vmatprep.subr.mxu0 0.0
      %2929 = vmatpush1.msra.mxu0 %v2679
      %2930 = vmatprep.subr.mxu0 0.0
      %2931 = vmatpush1.msra.mxu0 %v2682
      %2932 = vmatprep.subr.mxu0 0.0
      %2933 = vmatpush1.msra.mxu0 %v2685
      %2934 = vmatprep.subr.mxu0 0.0
      %2935 = vmatpush1.msra.mxu0 %v2688
      %2936 = vmatprep.subr.mxu0 0.0
      %2937 = vmatpush1.msra.mxu0 %v2691
      %2938 = vmatprep.subr.mxu0 0.0
      %2939 = vmatpush1.msra.mxu0 %v2694
      %2940 = vmatprep.subr.mxu0 0.0
      %2941 = vmatpush1.msra.mxu0 %v2697
      %2942 = vmatprep.subr.mxu0 0.0
      %2943 = vmatpush1.msra.mxu0 %v2700
      %2944 = vmatprep.subr.mxu0 0.0
      %2945 = vmatpush1.msra.mxu0 %v2703
      %2946 = vmatprep.subr.mxu0 0.0
      %2947 = vmatpush1.msra.mxu0 %v2706
      %2948 = vmatprep.subr.mxu0 0.0
      %2949 = vmatpush1.msra.mxu0 0.0
      %2950 = vmatprep.subr.mxu0 0.0
      %2951 = vmatpush1.msra.mxu0 0.0
      %2952 = vmatprep.subr.mxu0 0.0
      %2953 = vmatpush1.msra.mxu0 0.0
      %2954 = vmatprep.subr.mxu0 0.0
      %2955 = vmatpush1.msra.mxu0 0.0
      %2956 = vmatprep.subr.mxu0 0.0
      %2957 = vmatpush1.msra.mxu0 0.0
      %2958 = vmatprep.subr.mxu0 0.0
      %2959 = vmatpush1.msra.mxu0 0.0
      %2960 = vmatprep.subr.mxu0 0.0
      %2961 = vmatpush1.msra.mxu0 0.0
      %2962 = vmatprep.subr.mxu0 0.0
      %2963 = vmatpush1.msra.mxu0 0.0
      %2964 = vmatprep.subr.mxu0 0.0
      %2965 = vmatpush1.msra.mxu0 0.0
      %2966 = vmatprep.subr.mxu0 0.0
      %2967 = vmatpush1.msra.mxu0 0.0
      %2968 = vmatprep.subr.mxu0 0.0
      %2969 = vmatpush1.msra.mxu0 0.0
      %2970 = vmatprep.subr.mxu0 0.0
      %2971 = vmatpush1.msra.mxu0 0.0
      %2972 = vmatprep.subr.mxu0 0.0
      %2973 = vmatpush1.msra.mxu0 0.0
      %2974 = vmatprep.subr.mxu0 0.0
      %2975 = vmatpush1.msra.mxu0 0.0
      %2976 = vmatprep.subr.mxu0 0.0
      %2977 = vmatpush1.msra.mxu0 0.0
      %2978 = vmatprep.subr.mxu0 0.0
      %2979 = vmatpush1.msra.mxu0 0.0
      %2980 = vmatprep.mubr.f32.mxu0 0.0
      %2981 = vmatmul.mubr.f32.gmra.mrb[0].mxu0 %v2635
      %v2982 = vpop.f32.mrb[0].mxu0
      %v2983 = vadd.f32 0.0, %v2982
      %v2984 = vpop.f32.mrb[0].mxu0
      %2985 = vmatprep.mubr.f32.mxu0 0.0
      %2986 = vmatmul.mubr.f32.gmra.mrb[0].mxu0 %v2636
      %v2987 = vpop.f32.mrb[0].mxu0
      %v2988 = vadd.f32 0.0, %v2987
      %v2989 = vpop.f32.mrb[0].mxu0
      %2990 = vmatprep.mubr.f32.mxu0 0.0
      %2991 = vmatmul.mubr.f32.gmra.mrb[0].mxu0 %v2637
      %v2992 = vpop.f32.mrb[0].mxu0
      %v2993 = vadd.f32 0.0, %v2992
      %v2994 = vpop.f32.mrb[0].mxu0
      %2995 = vmatprep.mubr.f32.mxu0 0.0
      %2996 = vmatmul.mubr.f32.gmra.mrb[0].mxu0 %v2638
      %v2997 = vpop.f32.mrb[0].mxu0
      %v2998 = vadd.f32 0.0, %v2997
      %v2999 = vpop.f32.mrb[0].mxu0
      %3000 = vmatprep.mubr.f32.mxu0 0.0
      %3001 = vmatmul.mubr.f32.gmra.mrb[0].mxu0 %v2639
      %v3002 = vpop.f32.mrb[0].mxu0
      %v3003 = vadd.f32 0.0, %v3002
      %v3004 = vpop.f32.mrb[0].mxu0
      %3005 = vmatprep.mubr.f32.mxu0 0.0
      %3006 = vmatmul.mubr.f32.gmra.mrb[0].mxu0 %v2640
      %v3007 = vpop.f32.mrb[0].mxu0
      %v3008 = vadd.f32 0.0, %v3007
      %v3009 = vpop.f32.mrb[0].mxu0
      %3010 = vmatprep.mubr.f32.mxu0 0.0
      %3011 = vmatmul.mubr.f32.gmra.mrb[0].mxu0 %v2641
      %v3012 = vpop.f32.mrb[0].mxu0
      %v3013 = vadd.f32 0.0, %v3012
      %v3014 = vpop.f32.mrb[0].mxu0
      %3015 = vmatprep.mubr.f32.mxu0 0.0
      %3016 = vmatmul.mubr.f32.gmra.mrb[0].mxu0 %v2642
      %v3017 = vpop.f32.mrb[0].mxu0
      %v3018 = vadd.f32 0.0, %v3017
      %v3019 = vpop.f32.mrb[0].mxu0
      %3020 = vmatprep.mubr.f32.mxu0 0.0
      %3021 = vmatmul.mubr.f32.gmra.mrb[0].mxu0 %v2643
      %v3022 = vpop.f32.mrb[0].mxu0
      %v3023 = vadd.f32 0.0, %v3022
      %v3024 = vpop.f32.mrb[0].mxu0
      %3025 = vmatprep.mubr.f32.mxu0 0.0
      %3026 = vmatmul.mubr.f32.gmra.mrb[0].mxu0 %v2644
      %v3027 = vpop.f32.mrb[0].mxu0
      %v3028 = vadd.f32 0.0, %v3027
      %v3029 = vpop.f32.mrb[0].mxu0
      %3030 = vmatprep.mubr.f32.mxu0 0.0
      %3031 = vmatmul.mubr.f32.gmra.mrb[0].mxu0 %v2645
      %v3032 = vpop.f32.mrb[0].mxu0
      %v3033 = vadd.f32 0.0, %v3032
      %v3034 = vpop.f32.mrb[0].mxu0
      %3035 = vmatprep.mubr.f32.mxu0 0.0
      %3036 = vmatmul.mubr.f32.gmra.mrb[0].mxu0 %v2646
      %v3037 = vpop.f32.mrb[0].mxu0
      %v3038 = vadd.f32 0.0, %v3037
      %v3039 = vpop.f32.mrb[0].mxu0
      %3040 = vmatprep.mubr.f32.mxu0 0.0
      %3041 = vmatmul.mubr.f32.gmra.mrb[0].mxu0 %v2647
      %v3042 = vpop.f32.mrb[0].mxu0
      %v3043 = vadd.f32 0.0, %v3042
      %v3044 = vpop.f32.mrb[0].mxu0
      %3045 = vmatprep.mubr.f32.mxu0 0.0
      %3046 = vmatmul.mubr.f32.gmra.mrb[0].mxu0 %v2648
      %v3047 = vpop.f32.mrb[0].mxu0
      %v3048 = vadd.f32 0.0, %v3047
      %v3049 = vpop.f32.mrb[0].mxu0
      %3050 = vmatprep.mubr.f32.mxu0 0.0
      %3051 = vmatmul.mubr.f32.gmra.mrb[0].mxu0 %v2649
      %v3052 = vpop.f32.mrb[0].mxu0
      %v3053 = vadd.f32 0.0, %v3052
      %v3054 = vpop.f32.mrb[0].mxu0
      %3055 = vmatprep.mubr.f32.mxu0 0.0
      %3056 = vmatmul.mubr.f32.gmra.mrb[0].mxu0 %v2650
      %v3057 = vpop.f32.mrb[0].mxu0
      %v3058 = vadd.f32 0.0, %v3057
      %v3059 = vpop.f32.mrb[0].mxu0
      %3060 = vmatprep.mubr.f32.mxu0 0.0
      %3061 = vmatmul.mubr.f32.gmra.mrb[0].mxu0 %v2651
      %v3062 = vpop.f32.mrb[0].mxu0
      %v3063 = vadd.f32 0.0, %v3062
      %v3064 = vpop.f32.mrb[0].mxu0
      %3065 = vmatprep.mubr.f32.mxu0 0.0
      %3066 = vmatmul.mubr.f32.gmra.mrb[0].mxu0 %v2652
      %v3067 = vpop.f32.mrb[0].mxu0
      %v3068 = vadd.f32 0.0, %v3067
      %v3069 = vpop.f32.mrb[0].mxu0
      %3070 = vmatprep.mubr.f32.mxu0 0.0
      %3071 = vmatmul.mubr.f32.gmra.mrb[0].mxu0 %v2653
      %v3072 = vpop.f32.mrb[0].mxu0
      %v3073 = vadd.f32 0.0, %v3072
      %v3074 = vpop.f32.mrb[0].mxu0
      %3075 = vmatprep.mubr.f32.mxu0 0.0
      %3076 = vmatmul.mubr.f32.gmra.mrb[0].mxu0 %v2654
      %v3077 = vpop.f32.mrb[0].mxu0
      %v3078 = vadd.f32 0.0, %v3077
      %v3079 = vpop.f32.mrb[0].mxu0
      %3080 = vmatprep.mubr.f32.mxu0 0.0
      %3081 = vmatmul.mubr.f32.gmra.mrb[0].mxu0 %v2655
      %v3082 = vpop.f32.mrb[0].mxu0
      %v3083 = vadd.f32 0.0, %v3082
      %v3084 = vpop.f32.mrb[0].mxu0
      %3085 = vmatprep.mubr.f32.mxu0 0.0
      %3086 = vmatmul.mubr.f32.gmra.mrb[0].mxu0 %v2656
      %v3087 = vpop.f32.mrb[0].mxu0
      %v3088 = vadd.f32 0.0, %v3087
      %v3089 = vpop.f32.mrb[0].mxu0
      %3090 = vmatprep.mubr.f32.mxu0 0.0
      %3091 = vmatmul.mubr.f32.gmra.mrb[0].mxu0 %v2657
      %v3092 = vpop.f32.mrb[0].mxu0
      %v3093 = vadd.f32 0.0, %v3092
      %v3094 = vpop.f32.mrb[0].mxu0
      %3095 = vmatprep.mubr.f32.mxu0 0.0
      %3096 = vmatmul.mubr.f32.gmra.mrb[0].mxu0 %v2658
      %v3097 = vpop.f32.mrb[0].mxu0
      %v3098 = vadd.f32 0.0, %v3097
      %v3099 = vpop.f32.mrb[0].mxu0
      %3100 = vdwg.mxu0
      %v3101 = vld [vmem:[#allocation4 + $0x2] sm:$0xff]
      %v3102 = vld [vmem:[#allocation4 + $0xa] sm:$0xff]
      %v3103 = vld [vmem:[#allocation4 + $0x1a] sm:$0xff]
      %v3104 = vld [vmem:[#allocation4 + $0x22] sm:$0xff]
      %v3105 = vld [vmem:[#allocation4 + $0x32] sm:$0xff]
      %v3106 = vld [vmem:[#allocation4 + $0x3a] sm:$0xff]
      %v3107 = vld [vmem:[#allocation4 + $0x4a] sm:$0xff]
      %v3108 = vld [vmem:[#allocation4 + $0x52] sm:$0xff]
      %v3109 = vld [vmem:[#allocation4 + $0x62] sm:$0xff]
      %v3110 = vld [vmem:[#allocation4 + $0x6a] sm:$0xff]
      %v3111 = vld [vmem:[#allocation4 + $0x7a] sm:$0xff]
      %v3112 = vld [vmem:[#allocation4 + $0x82] sm:$0xff]
      %v3113 = vld [vmem:[#allocation4 + $0x92] sm:$0xff]
      %v3114 = vld [vmem:[#allocation4 + $0x9a] sm:$0xff]
      %v3115 = vld [vmem:[#allocation4 + $0xaa] sm:$0xff]
      %v3116 = vld [vmem:[#allocation4 + $0xb2] sm:$0xff]
      %v3117 = vld [vmem:[#allocation4 + $0xc2] sm:$0xff]
      %v3118 = vld [vmem:[#allocation4 + $0xca] sm:$0xff]
      %v3119 = vld [vmem:[#allocation4 + $0xda] sm:$0xff]
      %v3120 = vld [vmem:[#allocation4 + $0xe2] sm:$0xff]
      %v3121 = vld [vmem:[#allocation4 + $0xf2] sm:$0xff]
      %v3122 = vld [vmem:[#allocation4 + $0xfa] sm:$0xff]
      %v3123 = vld [vmem:[#allocation4 + $0x10a] sm:$0xff]
      %v3124 = vld [vmem:[#allocation4 + $0x112] sm:$0xff]
      %v3125 = vadd.f32 %v3101, %v2774
      %v3126 = vadd.f32 %v3102, %v2780
      %v3127 = vadd.f32 %v3103, %v2786
      %v3128 = vadd.f32 %v3104, %v2792
      %v3129 = vadd.f32 %v3105, %v2798
      %v3130 = vadd.f32 %v3106, %v2804
      %v3131 = vadd.f32 %v3107, %v2810
      %v3132 = vadd.f32 %v3108, %v2816
      %v3133 = vadd.f32 %v3109, %v2822
      %v3134 = vadd.f32 %v3110, %v2828
      %v3135 = vadd.f32 %v3111, %v2834
      %v3136 = vadd.f32 %v3112, %v2840
      %v3137 = vadd.f32 %v3113, %v2846
      %v3138 = vadd.f32 %v3114, %v2852
      %v3139 = vadd.f32 %v3115, %v2858
      %v3140 = vadd.f32 %v3116, %v2864
      %v3141 = vadd.f32 %v3117, %v2870
      %v3142 = vadd.f32 %v3118, %v2876
      %v3143 = vadd.f32 %v3119, %v2882
      %v3144 = vadd.f32 %v3120, %v2888
      %v3145 = vadd.f32 %v3121, %v2894
      %v3146 = vadd.f32 %v3122, %v2900
      %v3147 = vadd.f32 %v3123, %v2906
      %v3148 = vadd.f32 %v3124, %v2912
      %3149 = vst [vmem:[#allocation4 + $0x2] sm:$0xff] %v3125
      %3150 = vst [vmem:[#allocation4 + $0xa] sm:$0xff] %v3126
      %3151 = vst [vmem:[#allocation4 + $0x1a] sm:$0xff] %v3127
      %3152 = vst [vmem:[#allocation4 + $0x22] sm:$0xff] %v3128
      %3153 = vst [vmem:[#allocation4 + $0x32] sm:$0xff] %v3129
      %3154 = vst [vmem:[#allocation4 + $0x3a] sm:$0xff] %v3130
      %3155 = vst [vmem:[#allocation4 + $0x4a] sm:$0xff] %v3131
      %3156 = vst [vmem:[#allocation4 + $0x52] sm:$0xff] %v3132
      %3157 = vst [vmem:[#allocation4 + $0x62] sm:$0xff] %v3133
      %3158 = vst [vmem:[#allocation4 + $0x6a] sm:$0xff] %v3134
      %3159 = vst [vmem:[#allocation4 + $0x7a] sm:$0xff] %v3135
      %3160 = vst [vmem:[#allocation4 + $0x82] sm:$0xff] %v3136
      %3161 = vst [vmem:[#allocation4 + $0x92] sm:$0xff] %v3137
      %3162 = vst [vmem:[#allocation4 + $0x9a] sm:$0xff] %v3138
      %3163 = vst [vmem:[#allocation4 + $0xaa] sm:$0xff] %v3139
      %3164 = vst [vmem:[#allocation4 + $0xb2] sm:$0xff] %v3140
      %3165 = vst [vmem:[#allocation4 + $0xc2] sm:$0xff] %v3141
      %3166 = vst [vmem:[#allocation4 + $0xca] sm:$0xff] %v3142
      %3167 = vst [vmem:[#allocation4 + $0xda] sm:$0xff] %v3143
      %3168 = vst [vmem:[#allocation4 + $0xe2] sm:$0xff] %v3144
      %3169 = vst [vmem:[#allocation4 + $0xf2] sm:$0xff] %v3145
      %3170 = vst [vmem:[#allocation4 + $0xfa] sm:$0xff] %v3146
      %3171 = vst [vmem:[#allocation4 + $0x10a] sm:$0xff] %v3147
      %3172 = vst [vmem:[#allocation4 + $0x112] sm:$0xff] %v3148
      %v3173 = vld [vmem:[#allocation4 + $0x1] sm:$0xff]
      %v3174 = vld [vmem:[#allocation4 + $0x9] sm:$0xff]
      %v3175 = vld [vmem:[#allocation4 + $0x19] sm:$0xff]
      %v3176 = vld [vmem:[#allocation4 + $0x21] sm:$0xff]
      %v3177 = vld [vmem:[#allocation4 + $0x31] sm:$0xff]
      %v3178 = vld [vmem:[#allocation4 + $0x39] sm:$0xff]
      %v3179 = vld [vmem:[#allocation4 + $0x49] sm:$0xff]
      %v3180 = vld [vmem:[#allocation4 + $0x51] sm:$0xff]
      %v3181 = vld [vmem:[#allocation4 + $0x61] sm:$0xff]
      %v3182 = vld [vmem:[#allocation4 + $0x69] sm:$0xff]
      %v3183 = vld [vmem:[#allocation4 + $0x79] sm:$0xff]
      %v3184 = vld [vmem:[#allocation4 + $0x81] sm:$0xff]
      %v3185 = vld [vmem:[#allocation4 + $0x91] sm:$0xff]
      %v3186 = vld [vmem:[#allocation4 + $0x99] sm:$0xff]
      %v3187 = vld [vmem:[#allocation4 + $0xa9] sm:$0xff]
      %v3188 = vld [vmem:[#allocation4 + $0xb1] sm:$0xff]
      %v3189 = vld [vmem:[#allocation4 + $0xc1] sm:$0xff]
      %v3190 = vld [vmem:[#allocation4 + $0xc9] sm:$0xff]
      %v3191 = vld [vmem:[#allocation4 + $0xd9] sm:$0xff]
      %v3192 = vld [vmem:[#allocation4 + $0xe1] sm:$0xff]
      %v3193 = vld [vmem:[#allocation4 + $0xf1] sm:$0xff]
      %v3194 = vld [vmem:[#allocation4 + $0xf9] sm:$0xff]
      %v3195 = vld [vmem:[#allocation4 + $0x109] sm:$0xff]
      %v3196 = vld [vmem:[#allocation4 + $0x111] sm:$0xff]
      %v3197 = vadd.f32 %v3173, %v2776
      %v3198 = vadd.f32 %v3174, %v2782
      %v3199 = vadd.f32 %v3175, %v2788
      %v3200 = vadd.f32 %v3176, %v2794
      %v3201 = vadd.f32 %v3177, %v2800
      %v3202 = vadd.f32 %v3178, %v2806
      %v3203 = vadd.f32 %v3179, %v2812
      %v3204 = vadd.f32 %v3180, %v2818
      %v3205 = vadd.f32 %v3181, %v2824
      %v3206 = vadd.f32 %v3182, %v2830
      %v3207 = vadd.f32 %v3183, %v2836
      %v3208 = vadd.f32 %v3184, %v2842
      %v3209 = vadd.f32 %v3185, %v2848
      %v3210 = vadd.f32 %v3186, %v2854
      %v3211 = vadd.f32 %v3187, %v2860
      %v3212 = vadd.f32 %v3188, %v2866
      %v3213 = vadd.f32 %v3189, %v2872
      %v3214 = vadd.f32 %v3190, %v2878
      %v3215 = vadd.f32 %v3191, %v2884
      %v3216 = vadd.f32 %v3192, %v2890
      %v3217 = vadd.f32 %v3193, %v2896
      %v3218 = vadd.f32 %v3194, %v2902
      %v3219 = vadd.f32 %v3195, %v2908
      %v3220 = vadd.f32 %v3196, %v2914
      %3221 = vst [vmem:[#allocation4 + $0x1] sm:$0xff] %v3197
      %3222 = vst [vmem:[#allocation4 + $0x9] sm:$0xff] %v3198
      %3223 = vst [vmem:[#allocation4 + $0x19] sm:$0xff] %v3199
      %3224 = vst [vmem:[#allocation4 + $0x21] sm:$0xff] %v3200
      %3225 = vst [vmem:[#allocation4 + $0x31] sm:$0xff] %v3201
      %3226 = vst [vmem:[#allocation4 + $0x39] sm:$0xff] %v3202
      %3227 = vst [vmem:[#allocation4 + $0x49] sm:$0xff] %v3203
      %3228 = vst [vmem:[#allocation4 + $0x51] sm:$0xff] %v3204
      %3229 = vst [vmem:[#allocation4 + $0x61] sm:$0xff] %v3205
      %3230 = vst [vmem:[#allocation4 + $0x69] sm:$0xff] %v3206
      %3231 = vst [vmem:[#allocation4 + $0x79] sm:$0xff] %v3207
      %3232 = vst [vmem:[#allocation4 + $0x81] sm:$0xff] %v3208
      %3233 = vst [vmem:[#allocation4 + $0x91] sm:$0xff] %v3209
      %3234 = vst [vmem:[#allocation4 + $0x99] sm:$0xff] %v3210
      %3235 = vst [vmem:[#allocation4 + $0xa9] sm:$0xff] %v3211
      %3236 = vst [vmem:[#allocation4 + $0xb1] sm:$0xff] %v3212
      %3237 = vst [vmem:[#allocation4 + $0xc1] sm:$0xff] %v3213
      %3238 = vst [vmem:[#allocation4 + $0xc9] sm:$0xff] %v3214
      %3239 = vst [vmem:[#allocation4 + $0xd9] sm:$0xff] %v3215
      %3240 = vst [vmem:[#allocation4 + $0xe1] sm:$0xff] %v3216
      %3241 = vst [vmem:[#allocation4 + $0xf1] sm:$0xff] %v3217
      %3242 = vst [vmem:[#allocation4 + $0xf9] sm:$0xff] %v3218
      %3243 = vst [vmem:[#allocation4 + $0x109] sm:$0xff] %v3219
      %3244 = vst [vmem:[#allocation4 + $0x111] sm:$0xff] %v3220
      %v3245 = vld [vmem:[#allocation4] sm:$0xff]
      %v3246 = vld [vmem:[#allocation4 + $0x8] sm:$0xff]
      %v3247 = vld [vmem:[#allocation4 + $0x18] sm:$0xff]
      %v3248 = vld [vmem:[#allocation4 + $0x20] sm:$0xff]
      %v3249 = vld [vmem:[#allocation4 + $0x30] sm:$0xff]
      %v3250 = vld [vmem:[#allocation4 + $0x38] sm:$0xff]
      %v3251 = vld [vmem:[#allocation4 + $0x48] sm:$0xff]
      %v3252 = vld [vmem:[#allocation4 + $0x50] sm:$0xff]
      %v3253 = vld [vmem:[#allocation4 + $0x60] sm:$0xff]
      %v3254 = vld [vmem:[#allocation4 + $0x68] sm:$0xff]
      %v3255 = vld [vmem:[#allocation4 + $0x78] sm:$0xff]
      %v3256 = vld [vmem:[#allocation4 + $0x80] sm:$0xff]
      %v3257 = vld [vmem:[#allocation4 + $0x90] sm:$0xff]
      %v3258 = vld [vmem:[#allocation4 + $0x98] sm:$0xff]
      %v3259 = vld [vmem:[#allocation4 + $0xa8] sm:$0xff]
      %v3260 = vld [vmem:[#allocation4 + $0xb0] sm:$0xff]
      %v3261 = vld [vmem:[#allocation4 + $0xc0] sm:$0xff]
      %v3262 = vld [vmem:[#allocation4 + $0xc8] sm:$0xff]
      %v3263 = vld [vmem:[#allocation4 + $0xd8] sm:$0xff]
      %v3264 = vld [vmem:[#allocation4 + $0xe0] sm:$0xff]
      %v3265 = vld [vmem:[#allocation4 + $0xf0] sm:$0xff]
      %v3266 = vld [vmem:[#allocation4 + $0xf8] sm:$0xff]
      %v3267 = vld [vmem:[#allocation4 + $0x108] sm:$0xff]
      %v3268 = vld [vmem:[#allocation4 + $0x110] sm:$0xff]
      %v3269 = vadd.f32 %v3245, %v2983
      %v3270 = vadd.f32 %v3246, %v2988
      %v3271 = vadd.f32 %v3247, %v2993
      %v3272 = vadd.f32 %v3248, %v2998
      %v3273 = vadd.f32 %v3249, %v3003
      %v3274 = vadd.f32 %v3250, %v3008
      %v3275 = vadd.f32 %v3251, %v3013
      %v3276 = vadd.f32 %v3252, %v3018
      %v3277 = vadd.f32 %v3253, %v3023
      %v3278 = vadd.f32 %v3254, %v3028
      %v3279 = vadd.f32 %v3255, %v3033
      %v3280 = vadd.f32 %v3256, %v3038
      %v3281 = vadd.f32 %v3257, %v3043
      %v3282 = vadd.f32 %v3258, %v3048
      %v3283 = vadd.f32 %v3259, %v3053
      %v3284 = vadd.f32 %v3260, %v3058
      %v3285 = vadd.f32 %v3261, %v3063
      %v3286 = vadd.f32 %v3262, %v3068
      %v3287 = vadd.f32 %v3263, %v3073
      %v3288 = vadd.f32 %v3264, %v3078
      %v3289 = vadd.f32 %v3265, %v3083
      %v3290 = vadd.f32 %v3266, %v3088
      %v3291 = vadd.f32 %v3267, %v3093
      %v3292 = vadd.f32 %v3268, %v3098
      %3293 = vst [vmem:[#allocation4] sm:$0xff] %v3269
      %3294 = vst [vmem:[#allocation4 + $0x8] sm:$0xff] %v3270
      %3295 = vst [vmem:[#allocation4 + $0x18] sm:$0xff] %v3271
      %3296 = vst [vmem:[#allocation4 + $0x20] sm:$0xff] %v3272
      %3297 = vst [vmem:[#allocation4 + $0x30] sm:$0xff] %v3273
      %3298 = vst [vmem:[#allocation4 + $0x38] sm:$0xff] %v3274
      %3299 = vst [vmem:[#allocation4 + $0x48] sm:$0xff] %v3275
      %3300 = vst [vmem:[#allocation4 + $0x50] sm:$0xff] %v3276
      %3301 = vst [vmem:[#allocation4 + $0x60] sm:$0xff] %v3277
      %3302 = vst [vmem:[#allocation4 + $0x68] sm:$0xff] %v3278
      %3303 = vst [vmem:[#allocation4 + $0x78] sm:$0xff] %v3279
      %3304 = vst [vmem:[#allocation4 + $0x80] sm:$0xff] %v3280
      %3305 = vst [vmem:[#allocation4 + $0x90] sm:$0xff] %v3281
      %3306 = vst [vmem:[#allocation4 + $0x98] sm:$0xff] %v3282
      %3307 = vst [vmem:[#allocation4 + $0xa8] sm:$0xff] %v3283
      %3308 = vst [vmem:[#allocation4 + $0xb0] sm:$0xff] %v3284
      %3309 = vst [vmem:[#allocation4 + $0xc0] sm:$0xff] %v3285
      %3310 = vst [vmem:[#allocation4 + $0xc8] sm:$0xff] %v3286
      %3311 = vst [vmem:[#allocation4 + $0xd8] sm:$0xff] %v3287
      %3312 = vst [vmem:[#allocation4 + $0xe0] sm:$0xff] %v3288
      %3313 = vst [vmem:[#allocation4 + $0xf0] sm:$0xff] %v3289
      %3314 = vst [vmem:[#allocation4 + $0xf8] sm:$0xff] %v3290
      %3315 = vst [vmem:[#allocation4 + $0x108] sm:$0xff] %v3291
      %3316 = vst [vmem:[#allocation4 + $0x110] sm:$0xff] %v3292
      %s3317 = scalar_lea.vmem [#allocation3], 16
      %v3318 = vld [vmem:[%s3317] sm:$0xff]
      %v3319 = vld [vmem:[%s3317 + $0x8] sm:$0xff]
      %v3320 = vld [vmem:[%s3317 + $0x10] sm:$0xff]
      %v3321 = vld [vmem:[%s3317 + $0x18] sm:$0xff]
      %v3322 = vld [vmem:[%s3317 + $0x20] sm:$0xff]
      %v3323 = vld [vmem:[%s3317 + $0x28] sm:$0xff]
      %v3324 = vld [vmem:[%s3317 + $0x30] sm:$0xff]
      %v3325 = vld [vmem:[%s3317 + $0x38] sm:$0xff]
      %v3326 = vld [vmem:[%s3317 + $0x40] sm:$0xff]
      %v3327 = vld [vmem:[%s3317 + $0x48] sm:$0xff]
      %v3328 = vld [vmem:[%s3317 + $0x50] sm:$0xff]
      %v3329 = vld [vmem:[%s3317 + $0x58] sm:$0xff]
      %v3330 = vld [vmem:[%s3317 + $0x60] sm:$0xff]
      %v3331 = vld [vmem:[%s3317 + $0x68] sm:$0xff]
      %v3332 = vld [vmem:[%s3317 + $0x70] sm:$0xff]
      %v3333 = vld [vmem:[%s3317 + $0x78] sm:$0xff]
      %v3334 = vld [vmem:[%s3317 + $0x80] sm:$0xff]
      %v3335 = vld [vmem:[%s3317 + $0x88] sm:$0xff]
      %v3336 = vld [vmem:[%s3317 + $0x90] sm:$0xff]
      %v3337 = vld [vmem:[%s3317 + $0x98] sm:$0xff]
      %v3338 = vld [vmem:[%s3317 + $0xa0] sm:$0xff]
      %v3339 = vld [vmem:[%s3317 + $0xa8] sm:$0xff]
      %v3340 = vld [vmem:[%s3317 + $0xb0] sm:$0xff]
      %v3341 = vld [vmem:[%s3317 + $0xb8] sm:$0xff]
      %s3342 = scalar_lea.vmem %s2, 384
      %v3343 = vld [vmem:[%s3342] sm:$0xff]
      %v3344 = vld [vmem:[%s3342 + $0x8] sm:$0xff]
      %v3345 = vld [vmem:[%s3342 + $0x10] sm:$0xff]
      %v3346 = vld [vmem:[%s3342 + $0x18] sm:$0xff]
      %v3347 = vld [vmem:[%s3342 + $0x20] sm:$0xff]
      %v3348 = vld [vmem:[%s3342 + $0x28] sm:$0xff]
      %v3349 = vld [vmem:[%s3342 + $0x30] sm:$0xff]
      %v3350 = vld [vmem:[%s3342 + $0x38] sm:$0xff]
      %v3351 = vld [vmem:[%s3342 + $0x40] sm:$0xff]
      %v3352 = vld [vmem:[%s3342 + $0x48] sm:$0xff]
      %v3353 = vld [vmem:[%s3342 + $0x50] sm:$0xff]
      %v3354 = vld [vmem:[%s3342 + $0x58] sm:$0xff]
      %v3355 = vld [vmem:[%s3342 + $0x60] sm:$0xff]
      %v3356 = vld [vmem:[%s3342 + $0x68] sm:$0xff]
      %v3357 = vld [vmem:[%s3342 + $0x70] sm:$0xff]
      %v3358 = vld [vmem:[%s3342 + $0x78] sm:$0xff]
      %v3359 = vld [vmem:[%s3342 + $0x80] sm:$0xff]
      %v3360 = vld [vmem:[%s3342 + $0x88] sm:$0xff]
      %v3361 = vld [vmem:[%s3342 + $0x90] sm:$0xff]
      %v3362 = vld [vmem:[%s3342 + $0x98] sm:$0xff]
      %v3363 = vld [vmem:[%s3342 + $0xa0] sm:$0xff]
      %v3364 = vld [vmem:[%s3342 + $0xa8] sm:$0xff]
      %v3365 = vld [vmem:[%s3342 + $0xb0] sm:$0xff]
      %v3366 = vld [vmem:[%s3342 + $0xb8] sm:$0xff]
      %v3367 = vld [vmem:[%s3342 + $0xc0] sm:$0xff]
      %v3368 = vld [vmem:[%s3342 + $0xc8] sm:$0xff]
      %v3369 = vld [vmem:[%s3342 + $0xd0] sm:$0xff]
      %v3370 = vld [vmem:[%s3342 + $0xd8] sm:$0xff]
      %v3371 = vld [vmem:[%s3342 + $0xe0] sm:$0xff]
      %v3372 = vld [vmem:[%s3342 + $0xe8] sm:$0xff]
      %v3373 = vld [vmem:[%s3342 + $0xf0] sm:$0xff]
      %v3374 = vld [vmem:[%s3342 + $0xf8] sm:$0xff]
      %v3375 = vld [vmem:[%s3342 + $0x100] sm:$0xff]
      %v3376 = vld [vmem:[%s3342 + $0x108] sm:$0xff]
      %v3377 = vld [vmem:[%s3342 + $0x110] sm:$0xff]
      %v3378 = vld [vmem:[%s3342 + $0x118] sm:$0xff]
      %v3379 = vld [vmem:[%s3342 + $0x120] sm:$0xff]
      %v3380 = vld [vmem:[%s3342 + $0x128] sm:$0xff]
      %v3381 = vld [vmem:[%s3342 + $0x130] sm:$0xff]
      %v3382 = vld [vmem:[%s3342 + $0x138] sm:$0xff]
      %v3383 = vld [vmem:[%s3342 + $0x140] sm:$0xff]
      %v3384 = vld [vmem:[%s3342 + $0x148] sm:$0xff]
      %v3385 = vld [vmem:[%s3342 + $0x150] sm:$0xff]
      %v3386 = vld [vmem:[%s3342 + $0x158] sm:$0xff]
      %v3387 = vld [vmem:[%s3342 + $0x160] sm:$0xff]
      %v3388 = vld [vmem:[%s3342 + $0x168] sm:$0xff]
      %v3389 = vld [vmem:[%s3342 + $0x170] sm:$0xff]
      %v3390 = vld [vmem:[%s3342 + $0x178] sm:$0xff]
      %3391 = vmatprep.subr.mxu0 %v3344
      %3392 = vmatpush1.msra.mxu0 %v3343
      %3393 = vmatprep.subr.mxu0 %v3347
      %3394 = vmatpush1.msra.mxu0 %v3346
      %3395 = vmatprep.subr.mxu0 %v3350
      %3396 = vmatpush1.msra.mxu0 %v3349
      %3397 = vmatprep.subr.mxu0 %v3353
      %3398 = vmatpush1.msra.mxu0 %v3352
      %3399 = vmatprep.subr.mxu0 %v3356
      %3400 = vmatpush1.msra.mxu0 %v3355
      %3401 = vmatprep.subr.mxu0 %v3359
      %3402 = vmatpush1.msra.mxu0 %v3358
      %3403 = vmatprep.subr.mxu0 %v3362
      %3404 = vmatpush1.msra.mxu0 %v3361
      %3405 = vmatprep.subr.mxu0 %v3365
      %3406 = vmatpush1.msra.mxu0 %v3364
      %3407 = vmatprep.subr.mxu0 %v3368
      %3408 = vmatpush1.msra.mxu0 %v3367
      %3409 = vmatprep.subr.mxu0 %v3371
      %3410 = vmatpush1.msra.mxu0 %v3370
      %3411 = vmatprep.subr.mxu0 %v3374
      %3412 = vmatpush1.msra.mxu0 %v3373
      %3413 = vmatprep.subr.mxu0 %v3377
      %3414 = vmatpush1.msra.mxu0 %v3376
      %3415 = vmatprep.subr.mxu0 %v3380
      %3416 = vmatpush1.msra.mxu0 %v3379
      %3417 = vmatprep.subr.mxu0 %v3383
      %3418 = vmatpush1.msra.mxu0 %v3382
      %3419 = vmatprep.subr.mxu0 %v3386
      %3420 = vmatpush1.msra.mxu0 %v3385
      %3421 = vmatprep.subr.mxu0 %v3389
      %3422 = vmatpush1.msra.mxu0 %v3388
      %3423 = vmatprep.subr.mxu0 0.0
      %3424 = vmatpush1.msra.mxu0 0.0
      %3425 = vmatprep.subr.mxu0 0.0
      %3426 = vmatpush1.msra.mxu0 0.0
      %3427 = vmatprep.subr.mxu0 0.0
      %3428 = vmatpush1.msra.mxu0 0.0
      %3429 = vmatprep.subr.mxu0 0.0
      %3430 = vmatpush1.msra.mxu0 0.0
      %3431 = vmatprep.subr.mxu0 0.0
      %3432 = vmatpush1.msra.mxu0 0.0
      %3433 = vmatprep.subr.mxu0 0.0
      %3434 = vmatpush1.msra.mxu0 0.0
      %3435 = vmatprep.subr.mxu0 0.0
      %3436 = vmatpush1.msra.mxu0 0.0
      %3437 = vmatprep.subr.mxu0 0.0
      %3438 = vmatpush1.msra.mxu0 0.0
      %3439 = vmatprep.subr.mxu0 0.0
      %3440 = vmatpush1.msra.mxu0 0.0
      %3441 = vmatprep.subr.mxu0 0.0
      %3442 = vmatpush1.msra.mxu0 0.0
      %3443 = vmatprep.subr.mxu0 0.0
      %3444 = vmatpush1.msra.mxu0 0.0
      %3445 = vmatprep.subr.mxu0 0.0
      %3446 = vmatpush1.msra.mxu0 0.0
      %3447 = vmatprep.subr.mxu0 0.0
      %3448 = vmatpush1.msra.mxu0 0.0
      %3449 = vmatprep.subr.mxu0 0.0
      %3450 = vmatpush1.msra.mxu0 0.0
      %3451 = vmatprep.subr.mxu0 0.0
      %3452 = vmatpush1.msra.mxu0 0.0
      %3453 = vmatprep.subr.mxu0 0.0
      %3454 = vmatpush1.msra.mxu0 0.0
      %3455 = vmatprep.mubr.f32.mxu0 0.0
      %3456 = vmatmul.mubr.f32.gmra.mrb[0].mxu0 %v3318
      %v3457 = vpop.f32.mrb[0].mxu0
      %v3458 = vadd.f32 0.0, %v3457
      %v3459 = vpop.f32.mrb[0].mxu0
      %v3460 = vadd.f32 0.0, %v3459
      %3461 = vmatprep.mubr.f32.mxu0 0.0
      %3462 = vmatmul.mubr.f32.gmra.mrb[0].mxu0 %v3319
      %v3463 = vpop.f32.mrb[0].mxu0
      %v3464 = vadd.f32 0.0, %v3463
      %v3465 = vpop.f32.mrb[0].mxu0
      %v3466 = vadd.f32 0.0, %v3465
      %3467 = vmatprep.mubr.f32.mxu0 0.0
      %3468 = vmatmul.mubr.f32.gmra.mrb[0].mxu0 %v3320
      %v3469 = vpop.f32.mrb[0].mxu0
      %v3470 = vadd.f32 0.0, %v3469
      %v3471 = vpop.f32.mrb[0].mxu0
      %v3472 = vadd.f32 0.0, %v3471
      %3473 = vmatprep.mubr.f32.mxu0 0.0
      %3474 = vmatmul.mubr.f32.gmra.mrb[0].mxu0 %v3321
      %v3475 = vpop.f32.mrb[0].mxu0
      %v3476 = vadd.f32 0.0, %v3475
      %v3477 = vpop.f32.mrb[0].mxu0
      %v3478 = vadd.f32 0.0, %v3477
      %3479 = vmatprep.mubr.f32.mxu0 0.0
      %3480 = vmatmul.mubr.f32.gmra.mrb[0].mxu0 %v3322
      %v3481 = vpop.f32.mrb[0].mxu0
      %v3482 = vadd.f32 0.0, %v3481
      %v3483 = vpop.f32.mrb[0].mxu0
      %v3484 = vadd.f32 0.0, %v3483
      %3485 = vmatprep.mubr.f32.mxu0 0.0
      %3486 = vmatmul.mubr.f32.gmra.mrb[0].mxu0 %v3323
      %v3487 = vpop.f32.mrb[0].mxu0
      %v3488 = vadd.f32 0.0, %v3487
      %v3489 = vpop.f32.mrb[0].mxu0
      %v3490 = vadd.f32 0.0, %v3489
      %3491 = vmatprep.mubr.f32.mxu0 0.0
      %3492 = vmatmul.mubr.f32.gmra.mrb[0].mxu0 %v3324
      %v3493 = vpop.f32.mrb[0].mxu0
      %v3494 = vadd.f32 0.0, %v3493
      %v3495 = vpop.f32.mrb[0].mxu0
      %v3496 = vadd.f32 0.0, %v3495
      %3497 = vmatprep.mubr.f32.mxu0 0.0
      %3498 = vmatmul.mubr.f32.gmra.mrb[0].mxu0 %v3325
      %v3499 = vpop.f32.mrb[0].mxu0
      %v3500 = vadd.f32 0.0, %v3499
      %v3501 = vpop.f32.mrb[0].mxu0
      %v3502 = vadd.f32 0.0, %v3501
      %3503 = vmatprep.mubr.f32.mxu0 0.0
      %3504 = vmatmul.mubr.f32.gmra.mrb[0].mxu0 %v3326
      %v3505 = vpop.f32.mrb[0].mxu0
      %v3506 = vadd.f32 0.0, %v3505
      %v3507 = vpop.f32.mrb[0].mxu0
      %v3508 = vadd.f32 0.0, %v3507
      %3509 = vmatprep.mubr.f32.mxu0 0.0
      %3510 = vmatmul.mubr.f32.gmra.mrb[0].mxu0 %v3327
      %v3511 = vpop.f32.mrb[0].mxu0
      %v3512 = vadd.f32 0.0, %v3511
      %v3513 = vpop.f32.mrb[0].mxu0
      %v3514 = vadd.f32 0.0, %v3513
      %3515 = vmatprep.mubr.f32.mxu0 0.0
      %3516 = vmatmul.mubr.f32.gmra.mrb[0].mxu0 %v3328
      %v3517 = vpop.f32.mrb[0].mxu0
      %v3518 = vadd.f32 0.0, %v3517
      %v3519 = vpop.f32.mrb[0].mxu0
      %v3520 = vadd.f32 0.0, %v3519
      %3521 = vmatprep.mubr.f32.mxu0 0.0
      %3522 = vmatmul.mubr.f32.gmra.mrb[0].mxu0 %v3329
      %v3523 = vpop.f32.mrb[0].mxu0
      %v3524 = vadd.f32 0.0, %v3523
      %v3525 = vpop.f32.mrb[0].mxu0
      %v3526 = vadd.f32 0.0, %v3525
      %3527 = vmatprep.mubr.f32.mxu0 0.0
      %3528 = vmatmul.mubr.f32.gmra.mrb[0].mxu0 %v3330
      %v3529 = vpop.f32.mrb[0].mxu0
      %v3530 = vadd.f32 0.0, %v3529
      %v3531 = vpop.f32.mrb[0].mxu0
      %v3532 = vadd.f32 0.0, %v3531
      %3533 = vmatprep.mubr.f32.mxu0 0.0
      %3534 = vmatmul.mubr.f32.gmra.mrb[0].mxu0 %v3331
      %v3535 = vpop.f32.mrb[0].mxu0
      %v3536 = vadd.f32 0.0, %v3535
      %v3537 = vpop.f32.mrb[0].mxu0
      %v3538 = vadd.f32 0.0, %v3537
      %3539 = vmatprep.mubr.f32.mxu0 0.0
      %3540 = vmatmul.mubr.f32.gmra.mrb[0].mxu0 %v3332
      %v3541 = vpop.f32.mrb[0].mxu0
      %v3542 = vadd.f32 0.0, %v3541
      %v3543 = vpop.f32.mrb[0].mxu0
      %v3544 = vadd.f32 0.0, %v3543
      %3545 = vmatprep.mubr.f32.mxu0 0.0
      %3546 = vmatmul.mubr.f32.gmra.mrb[0].mxu0 %v3333
      %v3547 = vpop.f32.mrb[0].mxu0
      %v3548 = vadd.f32 0.0, %v3547
      %v3549 = vpop.f32.mrb[0].mxu0
      %v3550 = vadd.f32 0.0, %v3549
      %3551 = vmatprep.mubr.f32.mxu0 0.0
      %3552 = vmatmul.mubr.f32.gmra.mrb[0].mxu0 %v3334
      %v3553 = vpop.f32.mrb[0].mxu0
      %v3554 = vadd.f32 0.0, %v3553
      %v3555 = vpop.f32.mrb[0].mxu0
      %v3556 = vadd.f32 0.0, %v3555
      %3557 = vmatprep.mubr.f32.mxu0 0.0
      %3558 = vmatmul.mubr.f32.gmra.mrb[0].mxu0 %v3335
      %v3559 = vpop.f32.mrb[0].mxu0
      %v3560 = vadd.f32 0.0, %v3559
      %v3561 = vpop.f32.mrb[0].mxu0
      %v3562 = vadd.f32 0.0, %v3561
      %3563 = vmatprep.mubr.f32.mxu0 0.0
      %3564 = vmatmul.mubr.f32.gmra.mrb[0].mxu0 %v3336
      %v3565 = vpop.f32.mrb[0].mxu0
      %v3566 = vadd.f32 0.0, %v3565
      %v3567 = vpop.f32.mrb[0].mxu0
      %v3568 = vadd.f32 0.0, %v3567
      %3569 = vmatprep.mubr.f32.mxu0 0.0
      %3570 = vmatmul.mubr.f32.gmra.mrb[0].mxu0 %v3337
      %v3571 = vpop.f32.mrb[0].mxu0
      %v3572 = vadd.f32 0.0, %v3571
      %v3573 = vpop.f32.mrb[0].mxu0
      %v3574 = vadd.f32 0.0, %v3573
      %3575 = vmatprep.mubr.f32.mxu0 0.0
      %3576 = vmatmul.mubr.f32.gmra.mrb[0].mxu0 %v3338
      %v3577 = vpop.f32.mrb[0].mxu0
      %v3578 = vadd.f32 0.0, %v3577
      %v3579 = vpop.f32.mrb[0].mxu0
      %v3580 = vadd.f32 0.0, %v3579
      %3581 = vmatprep.mubr.f32.mxu0 0.0
      %3582 = vmatmul.mubr.f32.gmra.mrb[0].mxu0 %v3339
      %v3583 = vpop.f32.mrb[0].mxu0
      %v3584 = vadd.f32 0.0, %v3583
      %v3585 = vpop.f32.mrb[0].mxu0
      %v3586 = vadd.f32 0.0, %v3585
      %3587 = vmatprep.mubr.f32.mxu0 0.0
      %3588 = vmatmul.mubr.f32.gmra.mrb[0].mxu0 %v3340
      %v3589 = vpop.f32.mrb[0].mxu0
      %v3590 = vadd.f32 0.0, %v3589
      %v3591 = vpop.f32.mrb[0].mxu0
      %v3592 = vadd.f32 0.0, %v3591
      %3593 = vmatprep.mubr.f32.mxu0 0.0
      %3594 = vmatmul.mubr.f32.gmra.mrb[0].mxu0 %v3341
      %v3595 = vpop.f32.mrb[0].mxu0
      %v3596 = vadd.f32 0.0, %v3595
      %v3597 = vpop.f32.mrb[0].mxu0
      %v3598 = vadd.f32 0.0, %v3597
      %3599 = vdwg.mxu0
      %3600 = vmatprep.subr.mxu0 0.0
      %3601 = vmatpush1.msra.mxu0 %v3345
      %3602 = vmatprep.subr.mxu0 0.0
      %3603 = vmatpush1.msra.mxu0 %v3348
      %3604 = vmatprep.subr.mxu0 0.0
      %3605 = vmatpush1.msra.mxu0 %v3351
      %3606 = vmatprep.subr.mxu0 0.0
      %3607 = vmatpush1.msra.mxu0 %v3354
      %3608 = vmatprep.subr.mxu0 0.0
      %3609 = vmatpush1.msra.mxu0 %v3357
      %3610 = vmatprep.subr.mxu0 0.0
      %3611 = vmatpush1.msra.mxu0 %v3360
      %3612 = vmatprep.subr.mxu0 0.0
      %3613 = vmatpush1.msra.mxu0 %v3363
      %3614 = vmatprep.subr.mxu0 0.0
      %3615 = vmatpush1.msra.mxu0 %v3366
      %3616 = vmatprep.subr.mxu0 0.0
      %3617 = vmatpush1.msra.mxu0 %v3369
      %3618 = vmatprep.subr.mxu0 0.0
      %3619 = vmatpush1.msra.mxu0 %v3372
      %3620 = vmatprep.subr.mxu0 0.0
      %3621 = vmatpush1.msra.mxu0 %v3375
      %3622 = vmatprep.subr.mxu0 0.0
      %3623 = vmatpush1.msra.mxu0 %v3378
      %3624 = vmatprep.subr.mxu0 0.0
      %3625 = vmatpush1.msra.mxu0 %v3381
      %3626 = vmatprep.subr.mxu0 0.0
      %3627 = vmatpush1.msra.mxu0 %v3384
      %3628 = vmatprep.subr.mxu0 0.0
      %3629 = vmatpush1.msra.mxu0 %v3387
      %3630 = vmatprep.subr.mxu0 0.0
      %3631 = vmatpush1.msra.mxu0 %v3390
      %3632 = vmatprep.subr.mxu0 0.0
      %3633 = vmatpush1.msra.mxu0 0.0
      %3634 = vmatprep.subr.mxu0 0.0
      %3635 = vmatpush1.msra.mxu0 0.0
      %3636 = vmatprep.subr.mxu0 0.0
      %3637 = vmatpush1.msra.mxu0 0.0
      %3638 = vmatprep.subr.mxu0 0.0
      %3639 = vmatpush1.msra.mxu0 0.0
      %3640 = vmatprep.subr.mxu0 0.0
      %3641 = vmatpush1.msra.mxu0 0.0
      %3642 = vmatprep.subr.mxu0 0.0
      %3643 = vmatpush1.msra.mxu0 0.0
      %3644 = vmatprep.subr.mxu0 0.0
      %3645 = vmatpush1.msra.mxu0 0.0
      %3646 = vmatprep.subr.mxu0 0.0
      %3647 = vmatpush1.msra.mxu0 0.0
      %3648 = vmatprep.subr.mxu0 0.0
      %3649 = vmatpush1.msra.mxu0 0.0
      %3650 = vmatprep.subr.mxu0 0.0
      %3651 = vmatpush1.msra.mxu0 0.0
      %3652 = vmatprep.subr.mxu0 0.0
      %3653 = vmatpush1.msra.mxu0 0.0
      %3654 = vmatprep.subr.mxu0 0.0
      %3655 = vmatpush1.msra.mxu0 0.0
      %3656 = vmatprep.subr.mxu0 0.0
      %3657 = vmatpush1.msra.mxu0 0.0
      %3658 = vmatprep.subr.mxu0 0.0
      %3659 = vmatpush1.msra.mxu0 0.0
      %3660 = vmatprep.subr.mxu0 0.0
      %3661 = vmatpush1.msra.mxu0 0.0
      %3662 = vmatprep.subr.mxu0 0.0
      %3663 = vmatpush1.msra.mxu0 0.0
      %3664 = vmatprep.mubr.f32.mxu0 0.0
      %3665 = vmatmul.mubr.f32.gmra.mrb[0].mxu0 %v3318
      %v3666 = vpop.f32.mrb[0].mxu0
      %v3667 = vadd.f32 0.0, %v3666
      %v3668 = vpop.f32.mrb[0].mxu0
      %3669 = vmatprep.mubr.f32.mxu0 0.0
      %3670 = vmatmul.mubr.f32.gmra.mrb[0].mxu0 %v3319
      %v3671 = vpop.f32.mrb[0].mxu0
      %v3672 = vadd.f32 0.0, %v3671
      %v3673 = vpop.f32.mrb[0].mxu0
      %3674 = vmatprep.mubr.f32.mxu0 0.0
      %3675 = vmatmul.mubr.f32.gmra.mrb[0].mxu0 %v3320
      %v3676 = vpop.f32.mrb[0].mxu0
      %v3677 = vadd.f32 0.0, %v3676
      %v3678 = vpop.f32.mrb[0].mxu0
      %3679 = vmatprep.mubr.f32.mxu0 0.0
      %3680 = vmatmul.mubr.f32.gmra.mrb[0].mxu0 %v3321
      %v3681 = vpop.f32.mrb[0].mxu0
      %v3682 = vadd.f32 0.0, %v3681
      %v3683 = vpop.f32.mrb[0].mxu0
      %3684 = vmatprep.mubr.f32.mxu0 0.0
      %3685 = vmatmul.mubr.f32.gmra.mrb[0].mxu0 %v3322
      %v3686 = vpop.f32.mrb[0].mxu0
      %v3687 = vadd.f32 0.0, %v3686
      %v3688 = vpop.f32.mrb[0].mxu0
      %3689 = vmatprep.mubr.f32.mxu0 0.0
      %3690 = vmatmul.mubr.f32.gmra.mrb[0].mxu0 %v3323
      %v3691 = vpop.f32.mrb[0].mxu0
      %v3692 = vadd.f32 0.0, %v3691
      %v3693 = vpop.f32.mrb[0].mxu0
      %3694 = vmatprep.mubr.f32.mxu0 0.0
      %3695 = vmatmul.mubr.f32.gmra.mrb[0].mxu0 %v3324
      %v3696 = vpop.f32.mrb[0].mxu0
      %v3697 = vadd.f32 0.0, %v3696
      %v3698 = vpop.f32.mrb[0].mxu0
      %3699 = vmatprep.mubr.f32.mxu0 0.0
      %3700 = vmatmul.mubr.f32.gmra.mrb[0].mxu0 %v3325
      %v3701 = vpop.f32.mrb[0].mxu0
      %v3702 = vadd.f32 0.0, %v3701
      %v3703 = vpop.f32.mrb[0].mxu0
      %3704 = vmatprep.mubr.f32.mxu0 0.0
      %3705 = vmatmul.mubr.f32.gmra.mrb[0].mxu0 %v3326
      %v3706 = vpop.f32.mrb[0].mxu0
      %v3707 = vadd.f32 0.0, %v3706
      %v3708 = vpop.f32.mrb[0].mxu0
      %3709 = vmatprep.mubr.f32.mxu0 0.0
      %3710 = vmatmul.mubr.f32.gmra.mrb[0].mxu0 %v3327
      %v3711 = vpop.f32.mrb[0].mxu0
      %v3712 = vadd.f32 0.0, %v3711
      %v3713 = vpop.f32.mrb[0].mxu0
      %3714 = vmatprep.mubr.f32.mxu0 0.0
      %3715 = vmatmul.mubr.f32.gmra.mrb[0].mxu0 %v3328
      %v3716 = vpop.f32.mrb[0].mxu0
      %v3717 = vadd.f32 0.0, %v3716
      %v3718 = vpop.f32.mrb[0].mxu0
      %3719 = vmatprep.mubr.f32.mxu0 0.0
      %3720 = vmatmul.mubr.f32.gmra.mrb[0].mxu0 %v3329
      %v3721 = vpop.f32.mrb[0].mxu0
      %v3722 = vadd.f32 0.0, %v3721
      %v3723 = vpop.f32.mrb[0].mxu0
      %3724 = vmatprep.mubr.f32.mxu0 0.0
      %3725 = vmatmul.mubr.f32.gmra.mrb[0].mxu0 %v3330
      %v3726 = vpop.f32.mrb[0].mxu0
      %v3727 = vadd.f32 0.0, %v3726
      %v3728 = vpop.f32.mrb[0].mxu0
      %3729 = vmatprep.mubr.f32.mxu0 0.0
      %3730 = vmatmul.mubr.f32.gmra.mrb[0].mxu0 %v3331
      %v3731 = vpop.f32.mrb[0].mxu0
      %v3732 = vadd.f32 0.0, %v3731
      %v3733 = vpop.f32.mrb[0].mxu0
      %3734 = vmatprep.mubr.f32.mxu0 0.0
      %3735 = vmatmul.mubr.f32.gmra.mrb[0].mxu0 %v3332
      %v3736 = vpop.f32.mrb[0].mxu0
      %v3737 = vadd.f32 0.0, %v3736
      %v3738 = vpop.f32.mrb[0].mxu0
      %3739 = vmatprep.mubr.f32.mxu0 0.0
      %3740 = vmatmul.mubr.f32.gmra.mrb[0].mxu0 %v3333
      %v3741 = vpop.f32.mrb[0].mxu0
      %v3742 = vadd.f32 0.0, %v3741
      %v3743 = vpop.f32.mrb[0].mxu0
      %3744 = vmatprep.mubr.f32.mxu0 0.0
      %3745 = vmatmul.mubr.f32.gmra.mrb[0].mxu0 %v3334
      %v3746 = vpop.f32.mrb[0].mxu0
      %v3747 = vadd.f32 0.0, %v3746
      %v3748 = vpop.f32.mrb[0].mxu0
      %3749 = vmatprep.mubr.f32.mxu0 0.0
      %3750 = vmatmul.mubr.f32.gmra.mrb[0].mxu0 %v3335
      %v3751 = vpop.f32.mrb[0].mxu0
      %v3752 = vadd.f32 0.0, %v3751
      %v3753 = vpop.f32.mrb[0].mxu0
      %3754 = vmatprep.mubr.f32.mxu0 0.0
      %3755 = vmatmul.mubr.f32.gmra.mrb[0].mxu0 %v3336
      %v3756 = vpop.f32.mrb[0].mxu0
      %v3757 = vadd.f32 0.0, %v3756
      %v3758 = vpop.f32.mrb[0].mxu0
      %3759 = vmatprep.mubr.f32.mxu0 0.0
      %3760 = vmatmul.mubr.f32.gmra.mrb[0].mxu0 %v3337
      %v3761 = vpop.f32.mrb[0].mxu0
      %v3762 = vadd.f32 0.0, %v3761
      %v3763 = vpop.f32.mrb[0].mxu0
      %3764 = vmatprep.mubr.f32.mxu0 0.0
      %3765 = vmatmul.mubr.f32.gmra.mrb[0].mxu0 %v3338
      %v3766 = vpop.f32.mrb[0].mxu0
      %v3767 = vadd.f32 0.0, %v3766
      %v3768 = vpop.f32.mrb[0].mxu0
      %3769 = vmatprep.mubr.f32.mxu0 0.0
      %3770 = vmatmul.mubr.f32.gmra.mrb[0].mxu0 %v3339
      %v3771 = vpop.f32.mrb[0].mxu0
      %v3772 = vadd.f32 0.0, %v3771
      %v3773 = vpop.f32.mrb[0].mxu0
      %3774 = vmatprep.mubr.f32.mxu0 0.0
      %3775 = vmatmul.mubr.f32.gmra.mrb[0].mxu0 %v3340
      %v3776 = vpop.f32.mrb[0].mxu0
      %v3777 = vadd.f32 0.0, %v3776
      %v3778 = vpop.f32.mrb[0].mxu0
      %3779 = vmatprep.mubr.f32.mxu0 0.0
      %3780 = vmatmul.mubr.f32.gmra.mrb[0].mxu0 %v3341
      %v3781 = vpop.f32.mrb[0].mxu0
      %v3782 = vadd.f32 0.0, %v3781
      %v3783 = vpop.f32.mrb[0].mxu0
      %3784 = vdwg.mxu0
      %v3785 = vld [vmem:[#allocation4 + $0x2] sm:$0xff]
      %v3786 = vld [vmem:[#allocation4 + $0xa] sm:$0xff]
      %v3787 = vld [vmem:[#allocation4 + $0x1a] sm:$0xff]
      %v3788 = vld [vmem:[#allocation4 + $0x22] sm:$0xff]
      %v3789 = vld [vmem:[#allocation4 + $0x32] sm:$0xff]
      %v3790 = vld [vmem:[#allocation4 + $0x3a] sm:$0xff]
      %v3791 = vld [vmem:[#allocation4 + $0x4a] sm:$0xff]
      %v3792 = vld [vmem:[#allocation4 + $0x52] sm:$0xff]
      %v3793 = vld [vmem:[#allocation4 + $0x62] sm:$0xff]
      %v3794 = vld [vmem:[#allocation4 + $0x6a] sm:$0xff]
      %v3795 = vld [vmem:[#allocation4 + $0x7a] sm:$0xff]
      %v3796 = vld [vmem:[#allocation4 + $0x82] sm:$0xff]
      %v3797 = vld [vmem:[#allocation4 + $0x92] sm:$0xff]
      %v3798 = vld [vmem:[#allocation4 + $0x9a] sm:$0xff]
      %v3799 = vld [vmem:[#allocation4 + $0xaa] sm:$0xff]
      %v3800 = vld [vmem:[#allocation4 + $0xb2] sm:$0xff]
      %v3801 = vld [vmem:[#allocation4 + $0xc2] sm:$0xff]
      %v3802 = vld [vmem:[#allocation4 + $0xca] sm:$0xff]
      %v3803 = vld [vmem:[#allocation4 + $0xda] sm:$0xff]
      %v3804 = vld [vmem:[#allocation4 + $0xe2] sm:$0xff]
      %v3805 = vld [vmem:[#allocation4 + $0xf2] sm:$0xff]
      %v3806 = vld [vmem:[#allocation4 + $0xfa] sm:$0xff]
      %v3807 = vld [vmem:[#allocation4 + $0x10a] sm:$0xff]
      %v3808 = vld [vmem:[#allocation4 + $0x112] sm:$0xff]
      %v3809 = vadd.f32 %v3785, %v3458
      %v3810 = vadd.f32 %v3786, %v3464
      %v3811 = vadd.f32 %v3787, %v3470
      %v3812 = vadd.f32 %v3788, %v3476
      %v3813 = vadd.f32 %v3789, %v3482
      %v3814 = vadd.f32 %v3790, %v3488
      %v3815 = vadd.f32 %v3791, %v3494
      %v3816 = vadd.f32 %v3792, %v3500
      %v3817 = vadd.f32 %v3793, %v3506
      %v3818 = vadd.f32 %v3794, %v3512
      %v3819 = vadd.f32 %v3795, %v3518
      %v3820 = vadd.f32 %v3796, %v3524
      %v3821 = vadd.f32 %v3797, %v3530
      %v3822 = vadd.f32 %v3798, %v3536
      %v3823 = vadd.f32 %v3799, %v3542
      %v3824 = vadd.f32 %v3800, %v3548
      %v3825 = vadd.f32 %v3801, %v3554
      %v3826 = vadd.f32 %v3802, %v3560
      %v3827 = vadd.f32 %v3803, %v3566
      %v3828 = vadd.f32 %v3804, %v3572
      %v3829 = vadd.f32 %v3805, %v3578
      %v3830 = vadd.f32 %v3806, %v3584
      %v3831 = vadd.f32 %v3807, %v3590
      %v3832 = vadd.f32 %v3808, %v3596
      %3833 = vst [vmem:[#allocation4 + $0x2] sm:$0xff] %v3809
      %3834 = vst [vmem:[#allocation4 + $0xa] sm:$0xff] %v3810
      %3835 = vst [vmem:[#allocation4 + $0x1a] sm:$0xff] %v3811
      %3836 = vst [vmem:[#allocation4 + $0x22] sm:$0xff] %v3812
      %3837 = vst [vmem:[#allocation4 + $0x32] sm:$0xff] %v3813
      %3838 = vst [vmem:[#allocation4 + $0x3a] sm:$0xff] %v3814
      %3839 = vst [vmem:[#allocation4 + $0x4a] sm:$0xff] %v3815
      %3840 = vst [vmem:[#allocation4 + $0x52] sm:$0xff] %v3816
      %3841 = vst [vmem:[#allocation4 + $0x62] sm:$0xff] %v3817
      %3842 = vst [vmem:[#allocation4 + $0x6a] sm:$0xff] %v3818
      %3843 = vst [vmem:[#allocation4 + $0x7a] sm:$0xff] %v3819
      %3844 = vst [vmem:[#allocation4 + $0x82] sm:$0xff] %v3820
      %3845 = vst [vmem:[#allocation4 + $0x92] sm:$0xff] %v3821
      %3846 = vst [vmem:[#allocation4 + $0x9a] sm:$0xff] %v3822
      %3847 = vst [vmem:[#allocation4 + $0xaa] sm:$0xff] %v3823
      %3848 = vst [vmem:[#allocation4 + $0xb2] sm:$0xff] %v3824
      %3849 = vst [vmem:[#allocation4 + $0xc2] sm:$0xff] %v3825
      %3850 = vst [vmem:[#allocation4 + $0xca] sm:$0xff] %v3826
      %3851 = vst [vmem:[#allocation4 + $0xda] sm:$0xff] %v3827
      %3852 = vst [vmem:[#allocation4 + $0xe2] sm:$0xff] %v3828
      %3853 = vst [vmem:[#allocation4 + $0xf2] sm:$0xff] %v3829
      %3854 = vst [vmem:[#allocation4 + $0xfa] sm:$0xff] %v3830
      %3855 = vst [vmem:[#allocation4 + $0x10a] sm:$0xff] %v3831
      %3856 = vst [vmem:[#allocation4 + $0x112] sm:$0xff] %v3832
      %v3857 = vld [vmem:[#allocation4 + $0x1] sm:$0xff]
      %v3858 = vld [vmem:[#allocation4 + $0x9] sm:$0xff]
      %v3859 = vld [vmem:[#allocation4 + $0x19] sm:$0xff]
      %v3860 = vld [vmem:[#allocation4 + $0x21] sm:$0xff]
      %v3861 = vld [vmem:[#allocation4 + $0x31] sm:$0xff]
      %v3862 = vld [vmem:[#allocation4 + $0x39] sm:$0xff]
      %v3863 = vld [vmem:[#allocation4 + $0x49] sm:$0xff]
      %v3864 = vld [vmem:[#allocation4 + $0x51] sm:$0xff]
      %v3865 = vld [vmem:[#allocation4 + $0x61] sm:$0xff]
      %v3866 = vld [vmem:[#allocation4 + $0x69] sm:$0xff]
      %v3867 = vld [vmem:[#allocation4 + $0x79] sm:$0xff]
      %v3868 = vld [vmem:[#allocation4 + $0x81] sm:$0xff]
      %v3869 = vld [vmem:[#allocation4 + $0x91] sm:$0xff]
      %v3870 = vld [vmem:[#allocation4 + $0x99] sm:$0xff]
      %v3871 = vld [vmem:[#allocation4 + $0xa9] sm:$0xff]
      %v3872 = vld [vmem:[#allocation4 + $0xb1] sm:$0xff]
      %v3873 = vld [vmem:[#allocation4 + $0xc1] sm:$0xff]
      %v3874 = vld [vmem:[#allocation4 + $0xc9] sm:$0xff]
      %v3875 = vld [vmem:[#allocation4 + $0xd9] sm:$0xff]
      %v3876 = vld [vmem:[#allocation4 + $0xe1] sm:$0xff]
      %v3877 = vld [vmem:[#allocation4 + $0xf1] sm:$0xff]
      %v3878 = vld [vmem:[#allocation4 + $0xf9] sm:$0xff]
      %v3879 = vld [vmem:[#allocation4 + $0x109] sm:$0xff]
      %v3880 = vld [vmem:[#allocation4 + $0x111] sm:$0xff]
      %v3881 = vadd.f32 %v3857, %v3460
      %v3882 = vadd.f32 %v3858, %v3466
      %v3883 = vadd.f32 %v3859, %v3472
      %v3884 = vadd.f32 %v3860, %v3478
      %v3885 = vadd.f32 %v3861, %v3484
      %v3886 = vadd.f32 %v3862, %v3490
      %v3887 = vadd.f32 %v3863, %v3496
      %v3888 = vadd.f32 %v3864, %v3502
      %v3889 = vadd.f32 %v3865, %v3508
      %v3890 = vadd.f32 %v3866, %v3514
      %v3891 = vadd.f32 %v3867, %v3520
      %v3892 = vadd.f32 %v3868, %v3526
      %v3893 = vadd.f32 %v3869, %v3532
      %v3894 = vadd.f32 %v3870, %v3538
      %v3895 = vadd.f32 %v3871, %v3544
      %v3896 = vadd.f32 %v3872, %v3550
      %v3897 = vadd.f32 %v3873, %v3556
      %v3898 = vadd.f32 %v3874, %v3562
      %v3899 = vadd.f32 %v3875, %v3568
      %v3900 = vadd.f32 %v3876, %v3574
      %v3901 = vadd.f32 %v3877, %v3580
      %v3902 = vadd.f32 %v3878, %v3586
      %v3903 = vadd.f32 %v3879, %v3592
      %v3904 = vadd.f32 %v3880, %v3598
      %3905 = vst [vmem:[#allocation4 + $0x1] sm:$0xff] %v3881
      %3906 = vst [vmem:[#allocation4 + $0x9] sm:$0xff] %v3882
      %3907 = vst [vmem:[#allocation4 + $0x19] sm:$0xff] %v3883
      %3908 = vst [vmem:[#allocation4 + $0x21] sm:$0xff] %v3884
      %3909 = vst [vmem:[#allocation4 + $0x31] sm:$0xff] %v3885
      %3910 = vst [vmem:[#allocation4 + $0x39] sm:$0xff] %v3886
      %3911 = vst [vmem:[#allocation4 + $0x49] sm:$0xff] %v3887
      %3912 = vst [vmem:[#allocation4 + $0x51] sm:$0xff] %v3888
      %3913 = vst [vmem:[#allocation4 + $0x61] sm:$0xff] %v3889
      %3914 = vst [vmem:[#allocation4 + $0x69] sm:$0xff] %v3890
      %3915 = vst [vmem:[#allocation4 + $0x79] sm:$0xff] %v3891
      %3916 = vst [vmem:[#allocation4 + $0x81] sm:$0xff] %v3892
      %3917 = vst [vmem:[#allocation4 + $0x91] sm:$0xff] %v3893
      %3918 = vst [vmem:[#allocation4 + $0x99] sm:$0xff] %v3894
      %3919 = vst [vmem:[#allocation4 + $0xa9] sm:$0xff] %v3895
      %3920 = vst [vmem:[#allocation4 + $0xb1] sm:$0xff] %v3896
      %3921 = vst [vmem:[#allocation4 + $0xc1] sm:$0xff] %v3897
      %3922 = vst [vmem:[#allocation4 + $0xc9] sm:$0xff] %v3898
      %3923 = vst [vmem:[#allocation4 + $0xd9] sm:$0xff] %v3899
      %3924 = vst [vmem:[#allocation4 + $0xe1] sm:$0xff] %v3900
      %3925 = vst [vmem:[#allocation4 + $0xf1] sm:$0xff] %v3901
      %3926 = vst [vmem:[#allocation4 + $0xf9] sm:$0xff] %v3902
      %3927 = vst [vmem:[#allocation4 + $0x109] sm:$0xff] %v3903
      %3928 = vst [vmem:[#allocation4 + $0x111] sm:$0xff] %v3904
      %v3929 = vld [vmem:[#allocation4] sm:$0xff]
      %v3930 = vld [vmem:[#allocation4 + $0x8] sm:$0xff]
      %v3931 = vld [vmem:[#allocation4 + $0x18] sm:$0xff]
      %v3932 = vld [vmem:[#allocation4 + $0x20] sm:$0xff]
      %v3933 = vld [vmem:[#allocation4 + $0x30] sm:$0xff]
      %v3934 = vld [vmem:[#allocation4 + $0x38] sm:$0xff]
      %v3935 = vld [vmem:[#allocation4 + $0x48] sm:$0xff]
      %v3936 = vld [vmem:[#allocation4 + $0x50] sm:$0xff]
      %v3937 = vld [vmem:[#allocation4 + $0x60] sm:$0xff]
      %v3938 = vld [vmem:[#allocation4 + $0x68] sm:$0xff]
      %v3939 = vld [vmem:[#allocation4 + $0x78] sm:$0xff]
      %v3940 = vld [vmem:[#allocation4 + $0x80] sm:$0xff]
      %v3941 = vld [vmem:[#allocation4 + $0x90] sm:$0xff]
      %v3942 = vld [vmem:[#allocation4 + $0x98] sm:$0xff]
      %v3943 = vld [vmem:[#allocation4 + $0xa8] sm:$0xff]
      %v3944 = vld [vmem:[#allocation4 + $0xb0] sm:$0xff]
      %v3945 = vld [vmem:[#allocation4 + $0xc0] sm:$0xff]
      %v3946 = vld [vmem:[#allocation4 + $0xc8] sm:$0xff]
      %v3947 = vld [vmem:[#allocation4 + $0xd8] sm:$0xff]
      %v3948 = vld [vmem:[#allocation4 + $0xe0] sm:$0xff]
      %v3949 = vld [vmem:[#allocation4 + $0xf0] sm:$0xff]
      %v3950 = vld [vmem:[#allocation4 + $0xf8] sm:$0xff]
      %v3951 = vld [vmem:[#allocation4 + $0x108] sm:$0xff]
      %v3952 = vld [vmem:[#allocation4 + $0x110] sm:$0xff]
      %v3953 = vadd.f32 %v3929, %v3667
      %v3954 = vadd.f32 %v3930, %v3672
      %v3955 = vadd.f32 %v3931, %v3677
      %v3956 = vadd.f32 %v3932, %v3682
      %v3957 = vadd.f32 %v3933, %v3687
      %v3958 = vadd.f32 %v3934, %v3692
      %v3959 = vadd.f32 %v3935, %v3697
      %v3960 = vadd.f32 %v3936, %v3702
      %v3961 = vadd.f32 %v3937, %v3707
      %v3962 = vadd.f32 %v3938, %v3712
      %v3963 = vadd.f32 %v3939, %v3717
      %v3964 = vadd.f32 %v3940, %v3722
      %v3965 = vadd.f32 %v3941, %v3727
      %v3966 = vadd.f32 %v3942, %v3732
      %v3967 = vadd.f32 %v3943, %v3737
      %v3968 = vadd.f32 %v3944, %v3742
      %v3969 = vadd.f32 %v3945, %v3747
      %v3970 = vadd.f32 %v3946, %v3752
      %v3971 = vadd.f32 %v3947, %v3757
      %v3972 = vadd.f32 %v3948, %v3762
      %v3973 = vadd.f32 %v3949, %v3767
      %v3974 = vadd.f32 %v3950, %v3772
      %v3975 = vadd.f32 %v3951, %v3777
      %v3976 = vadd.f32 %v3952, %v3782
      %3977 = vst [vmem:[#allocation4] sm:$0xff] %v3953
      %3978 = vst [vmem:[#allocation4 + $0x8] sm:$0xff] %v3954
      %3979 = vst [vmem:[#allocation4 + $0x18] sm:$0xff] %v3955
      %3980 = vst [vmem:[#allocation4 + $0x20] sm:$0xff] %v3956
      %3981 = vst [vmem:[#allocation4 + $0x30] sm:$0xff] %v3957
      %3982 = vst [vmem:[#allocation4 + $0x38] sm:$0xff] %v3958
      %3983 = vst [vmem:[#allocation4 + $0x48] sm:$0xff] %v3959
      %3984 = vst [vmem:[#allocation4 + $0x50] sm:$0xff] %v3960
      %3985 = vst [vmem:[#allocation4 + $0x60] sm:$0xff] %v3961
      %3986 = vst [vmem:[#allocation4 + $0x68] sm:$0xff] %v3962
      %3987 = vst [vmem:[#allocation4 + $0x78] sm:$0xff] %v3963
      %3988 = vst [vmem:[#allocation4 + $0x80] sm:$0xff] %v3964
      %3989 = vst [vmem:[#allocation4 + $0x90] sm:$0xff] %v3965
      %3990 = vst [vmem:[#allocation4 + $0x98] sm:$0xff] %v3966
      %3991 = vst [vmem:[#allocation4 + $0xa8] sm:$0xff] %v3967
      %3992 = vst [vmem:[#allocation4 + $0xb0] sm:$0xff] %v3968
      %3993 = vst [vmem:[#allocation4 + $0xc0] sm:$0xff] %v3969
      %3994 = vst [vmem:[#allocation4 + $0xc8] sm:$0xff] %v3970
      %3995 = vst [vmem:[#allocation4 + $0xd8] sm:$0xff] %v3971
      %3996 = vst [vmem:[#allocation4 + $0xe0] sm:$0xff] %v3972
      %3997 = vst [vmem:[#allocation4 + $0xf0] sm:$0xff] %v3973
      %3998 = vst [vmem:[#allocation4 + $0xf8] sm:$0xff] %v3974
      %3999 = vst [vmem:[#allocation4 + $0x108] sm:$0xff] %v3975
      %4000 = vst [vmem:[#allocation4 + $0x110] sm:$0xff] %v3976
      %s4001 = scalar_lea.vmem [#allocation3], 32
      %v4002 = vld [vmem:[%s4001] sm:$0xff]
      %v4003 = vld [vmem:[%s4001 + $0x8] sm:$0xff]
      %v4004 = vld [vmem:[%s4001 + $0x10] sm:$0xff]
      %v4005 = vld [vmem:[%s4001 + $0x18] sm:$0xff]
      %v4006 = vld [vmem:[%s4001 + $0x20] sm:$0xff]
      %v4007 = vld [vmem:[%s4001 + $0x28] sm:$0xff]
      %v4008 = vld [vmem:[%s4001 + $0x30] sm:$0xff]
      %v4009 = vld [vmem:[%s4001 + $0x38] sm:$0xff]
      %v4010 = vld [vmem:[%s4001 + $0x40] sm:$0xff]
      %v4011 = vld [vmem:[%s4001 + $0x48] sm:$0xff]
      %v4012 = vld [vmem:[%s4001 + $0x50] sm:$0xff]
      %v4013 = vld [vmem:[%s4001 + $0x58] sm:$0xff]
      %v4014 = vld [vmem:[%s4001 + $0x60] sm:$0xff]
      %v4015 = vld [vmem:[%s4001 + $0x68] sm:$0xff]
      %v4016 = vld [vmem:[%s4001 + $0x70] sm:$0xff]
      %v4017 = vld [vmem:[%s4001 + $0x78] sm:$0xff]
      %v4018 = vld [vmem:[%s4001 + $0x80] sm:$0xff]
      %v4019 = vld [vmem:[%s4001 + $0x88] sm:$0xff]
      %v4020 = vld [vmem:[%s4001 + $0x90] sm:$0xff]
      %v4021 = vld [vmem:[%s4001 + $0x98] sm:$0xff]
      %v4022 = vld [vmem:[%s4001 + $0xa0] sm:$0xff]
      %v4023 = vld [vmem:[%s4001 + $0xa8] sm:$0xff]
      %v4024 = vld [vmem:[%s4001 + $0xb0] sm:$0xff]
      %v4025 = vld [vmem:[%s4001 + $0xb8] sm:$0xff]
      %s4026 = scalar_lea.vmem %s2, 768
      %v4027 = vld [vmem:[%s4026] sm:$0xff]
      %v4028 = vld [vmem:[%s4026 + $0x8] sm:$0xff]
      %v4029 = vld [vmem:[%s4026 + $0x10] sm:$0xff]
      %v4030 = vld [vmem:[%s4026 + $0x18] sm:$0xff]
      %v4031 = vld [vmem:[%s4026 + $0x20] sm:$0xff]
      %v4032 = vld [vmem:[%s4026 + $0x28] sm:$0xff]
      %v4033 = vld [vmem:[%s4026 + $0x30] sm:$0xff]
      %v4034 = vld [vmem:[%s4026 + $0x38] sm:$0xff]
      %v4035 = vld [vmem:[%s4026 + $0x40] sm:$0xff]
      %v4036 = vld [vmem:[%s4026 + $0x48] sm:$0xff]
      %v4037 = vld [vmem:[%s4026 + $0x50] sm:$0xff]
      %v4038 = vld [vmem:[%s4026 + $0x58] sm:$0xff]
      %v4039 = vld [vmem:[%s4026 + $0x60] sm:$0xff]
      %v4040 = vld [vmem:[%s4026 + $0x68] sm:$0xff]
      %v4041 = vld [vmem:[%s4026 + $0x70] sm:$0xff]
      %v4042 = vld [vmem:[%s4026 + $0x78] sm:$0xff]
      %v4043 = vld [vmem:[%s4026 + $0x80] sm:$0xff]
      %v4044 = vld [vmem:[%s4026 + $0x88] sm:$0xff]
      %v4045 = vld [vmem:[%s4026 + $0x90] sm:$0xff]
      %v4046 = vld [vmem:[%s4026 + $0x98] sm:$0xff]
      %v4047 = vld [vmem:[%s4026 + $0xa0] sm:$0xff]
      %v4048 = vld [vmem:[%s4026 + $0xa8] sm:$0xff]
      %v4049 = vld [vmem:[%s4026 + $0xb0] sm:$0xff]
      %v4050 = vld [vmem:[%s4026 + $0xb8] sm:$0xff]
      %v4051 = vld [vmem:[%s4026 + $0xc0] sm:$0xff]
      %v4052 = vld [vmem:[%s4026 + $0xc8] sm:$0xff]
      %v4053 = vld [vmem:[%s4026 + $0xd0] sm:$0xff]
      %v4054 = vld [vmem:[%s4026 + $0xd8] sm:$0xff]
      %v4055 = vld [vmem:[%s4026 + $0xe0] sm:$0xff]
      %v4056 = vld [vmem:[%s4026 + $0xe8] sm:$0xff]
      %v4057 = vld [vmem:[%s4026 + $0xf0] sm:$0xff]
      %v4058 = vld [vmem:[%s4026 + $0xf8] sm:$0xff]
      %v4059 = vld [vmem:[%s4026 + $0x100] sm:$0xff]
      %v4060 = vld [vmem:[%s4026 + $0x108] sm:$0xff]
      %v4061 = vld [vmem:[%s4026 + $0x110] sm:$0xff]
      %v4062 = vld [vmem:[%s4026 + $0x118] sm:$0xff]
      %v4063 = vld [vmem:[%s4026 + $0x120] sm:$0xff]
      %v4064 = vld [vmem:[%s4026 + $0x128] sm:$0xff]
      %v4065 = vld [vmem:[%s4026 + $0x130] sm:$0xff]
      %v4066 = vld [vmem:[%s4026 + $0x138] sm:$0xff]
      %v4067 = vld [vmem:[%s4026 + $0x140] sm:$0xff]
      %v4068 = vld [vmem:[%s4026 + $0x148] sm:$0xff]
      %v4069 = vld [vmem:[%s4026 + $0x150] sm:$0xff]
      %v4070 = vld [vmem:[%s4026 + $0x158] sm:$0xff]
      %v4071 = vld [vmem:[%s4026 + $0x160] sm:$0xff]
      %v4072 = vld [vmem:[%s4026 + $0x168] sm:$0xff]
      %v4073 = vld [vmem:[%s4026 + $0x170] sm:$0xff]
      %v4074 = vld [vmem:[%s4026 + $0x178] sm:$0xff]
      %4075 = vmatprep.subr.mxu0 %v4028
      %4076 = vmatpush1.msra.mxu0 %v4027
      %4077 = vmatprep.subr.mxu0 %v4031
      %4078 = vmatpush1.msra.mxu0 %v4030
      %4079 = vmatprep.subr.mxu0 %v4034
      %4080 = vmatpush1.msra.mxu0 %v4033
      %4081 = vmatprep.subr.mxu0 %v4037
      %4082 = vmatpush1.msra.mxu0 %v4036
      %4083 = vmatprep.subr.mxu0 %v4040
      %4084 = vmatpush1.msra.mxu0 %v4039
      %4085 = vmatprep.subr.mxu0 %v4043
      %4086 = vmatpush1.msra.mxu0 %v4042
      %4087 = vmatprep.subr.mxu0 %v4046
      %4088 = vmatpush1.msra.mxu0 %v4045
      %4089 = vmatprep.subr.mxu0 %v4049
      %4090 = vmatpush1.msra.mxu0 %v4048
      %4091 = vmatprep.subr.mxu0 %v4052
      %4092 = vmatpush1.msra.mxu0 %v4051
      %4093 = vmatprep.subr.mxu0 %v4055
      %4094 = vmatpush1.msra.mxu0 %v4054
      %4095 = vmatprep.subr.mxu0 %v4058
      %4096 = vmatpush1.msra.mxu0 %v4057
      %4097 = vmatprep.subr.mxu0 %v4061
      %4098 = vmatpush1.msra.mxu0 %v4060
      %4099 = vmatprep.subr.mxu0 %v4064
      %4100 = vmatpush1.msra.mxu0 %v4063
      %4101 = vmatprep.subr.mxu0 %v4067
      %4102 = vmatpush1.msra.mxu0 %v4066
      %4103 = vmatprep.subr.mxu0 %v4070
      %4104 = vmatpush1.msra.mxu0 %v4069
      %4105 = vmatprep.subr.mxu0 %v4073
      %4106 = vmatpush1.msra.mxu0 %v4072
      %4107 = vmatprep.subr.mxu0 0.0
      %4108 = vmatpush1.msra.mxu0 0.0
      %4109 = vmatprep.subr.mxu0 0.0
      %4110 = vmatpush1.msra.mxu0 0.0
      %4111 = vmatprep.subr.mxu0 0.0
      %4112 = vmatpush1.msra.mxu0 0.0
      %4113 = vmatprep.subr.mxu0 0.0
      %4114 = vmatpush1.msra.mxu0 0.0
      %4115 = vmatprep.subr.mxu0 0.0
      %4116 = vmatpush1.msra.mxu0 0.0
      %4117 = vmatprep.subr.mxu0 0.0
      %4118 = vmatpush1.msra.mxu0 0.0
      %4119 = vmatprep.subr.mxu0 0.0
      %4120 = vmatpush1.msra.mxu0 0.0
      %4121 = vmatprep.subr.mxu0 0.0
      %4122 = vmatpush1.msra.mxu0 0.0
      %4123 = vmatprep.subr.mxu0 0.0
      %4124 = vmatpush1.msra.mxu0 0.0
      %4125 = vmatprep.subr.mxu0 0.0
      %4126 = vmatpush1.msra.mxu0 0.0
      %4127 = vmatprep.subr.mxu0 0.0
      %4128 = vmatpush1.msra.mxu0 0.0
      %4129 = vmatprep.subr.mxu0 0.0
      %4130 = vmatpush1.msra.mxu0 0.0
      %4131 = vmatprep.subr.mxu0 0.0
      %4132 = vmatpush1.msra.mxu0 0.0
      %4133 = vmatprep.subr.mxu0 0.0
      %4134 = vmatpush1.msra.mxu0 0.0
      %4135 = vmatprep.subr.mxu0 0.0
      %4136 = vmatpush1.msra.mxu0 0.0
      %4137 = vmatprep.subr.mxu0 0.0
      %4138 = vmatpush1.msra.mxu0 0.0
      %4139 = vmatprep.mubr.f32.mxu0 0.0
      %4140 = vmatmul.mubr.f32.gmra.mrb[0].mxu0 %v4002
      %v4141 = vpop.f32.mrb[0].mxu0
      %v4142 = vadd.f32 0.0, %v4141
      %v4143 = vpop.f32.mrb[0].mxu0
      %v4144 = vadd.f32 0.0, %v4143
      %4145 = vmatprep.mubr.f32.mxu0 0.0
      %4146 = vmatmul.mubr.f32.gmra.mrb[0].mxu0 %v4003
      %v4147 = vpop.f32.mrb[0].mxu0
      %v4148 = vadd.f32 0.0, %v4147
      %v4149 = vpop.f32.mrb[0].mxu0
      %v4150 = vadd.f32 0.0, %v4149
      %4151 = vmatprep.mubr.f32.mxu0 0.0
      %4152 = vmatmul.mubr.f32.gmra.mrb[0].mxu0 %v4004
      %v4153 = vpop.f32.mrb[0].mxu0
      %v4154 = vadd.f32 0.0, %v4153
      %v4155 = vpop.f32.mrb[0].mxu0
      %v4156 = vadd.f32 0.0, %v4155
      %4157 = vmatprep.mubr.f32.mxu0 0.0
      %4158 = vmatmul.mubr.f32.gmra.mrb[0].mxu0 %v4005
      %v4159 = vpop.f32.mrb[0].mxu0
      %v4160 = vadd.f32 0.0, %v4159
      %v4161 = vpop.f32.mrb[0].mxu0
      %v4162 = vadd.f32 0.0, %v4161
      %4163 = vmatprep.mubr.f32.mxu0 0.0
      %4164 = vmatmul.mubr.f32.gmra.mrb[0].mxu0 %v4006
      %v4165 = vpop.f32.mrb[0].mxu0
      %v4166 = vadd.f32 0.0, %v4165
      %v4167 = vpop.f32.mrb[0].mxu0
      %v4168 = vadd.f32 0.0, %v4167
      %4169 = vmatprep.mubr.f32.mxu0 0.0
      %4170 = vmatmul.mubr.f32.gmra.mrb[0].mxu0 %v4007
      %v4171 = vpop.f32.mrb[0].mxu0
      %v4172 = vadd.f32 0.0, %v4171
      %v4173 = vpop.f32.mrb[0].mxu0
      %v4174 = vadd.f32 0.0, %v4173
      %4175 = vmatprep.mubr.f32.mxu0 0.0
      %4176 = vmatmul.mubr.f32.gmra.mrb[0].mxu0 %v4008
      %v4177 = vpop.f32.mrb[0].mxu0
      %v4178 = vadd.f32 0.0, %v4177
      %v4179 = vpop.f32.mrb[0].mxu0
      %v4180 = vadd.f32 0.0, %v4179
      %4181 = vmatprep.mubr.f32.mxu0 0.0
      %4182 = vmatmul.mubr.f32.gmra.mrb[0].mxu0 %v4009
      %v4183 = vpop.f32.mrb[0].mxu0
      %v4184 = vadd.f32 0.0, %v4183
      %v4185 = vpop.f32.mrb[0].mxu0
      %v4186 = vadd.f32 0.0, %v4185
      %4187 = vmatprep.mubr.f32.mxu0 0.0
      %4188 = vmatmul.mubr.f32.gmra.mrb[0].mxu0 %v4010
      %v4189 = vpop.f32.mrb[0].mxu0
      %v4190 = vadd.f32 0.0, %v4189
      %v4191 = vpop.f32.mrb[0].mxu0
      %v4192 = vadd.f32 0.0, %v4191
      %4193 = vmatprep.mubr.f32.mxu0 0.0
      %4194 = vmatmul.mubr.f32.gmra.mrb[0].mxu0 %v4011
      %v4195 = vpop.f32.mrb[0].mxu0
      %v4196 = vadd.f32 0.0, %v4195
      %v4197 = vpop.f32.mrb[0].mxu0
      %v4198 = vadd.f32 0.0, %v4197
      %4199 = vmatprep.mubr.f32.mxu0 0.0
      %4200 = vmatmul.mubr.f32.gmra.mrb[0].mxu0 %v4012
      %v4201 = vpop.f32.mrb[0].mxu0
      %v4202 = vadd.f32 0.0, %v4201
      %v4203 = vpop.f32.mrb[0].mxu0
      %v4204 = vadd.f32 0.0, %v4203
      %4205 = vmatprep.mubr.f32.mxu0 0.0
      %4206 = vmatmul.mubr.f32.gmra.mrb[0].mxu0 %v4013
      %v4207 = vpop.f32.mrb[0].mxu0
      %v4208 = vadd.f32 0.0, %v4207
      %v4209 = vpop.f32.mrb[0].mxu0
      %v4210 = vadd.f32 0.0, %v4209
      %4211 = vmatprep.mubr.f32.mxu0 0.0
      %4212 = vmatmul.mubr.f32.gmra.mrb[0].mxu0 %v4014
      %v4213 = vpop.f32.mrb[0].mxu0
      %v4214 = vadd.f32 0.0, %v4213
      %v4215 = vpop.f32.mrb[0].mxu0
      %v4216 = vadd.f32 0.0, %v4215
      %4217 = vmatprep.mubr.f32.mxu0 0.0
      %4218 = vmatmul.mubr.f32.gmra.mrb[0].mxu0 %v4015
      %v4219 = vpop.f32.mrb[0].mxu0
      %v4220 = vadd.f32 0.0, %v4219
      %v4221 = vpop.f32.mrb[0].mxu0
      %v4222 = vadd.f32 0.0, %v4221
      %4223 = vmatprep.mubr.f32.mxu0 0.0
      %4224 = vmatmul.mubr.f32.gmra.mrb[0].mxu0 %v4016
      %v4225 = vpop.f32.mrb[0].mxu0
      %v4226 = vadd.f32 0.0, %v4225
      %v4227 = vpop.f32.mrb[0].mxu0
      %v4228 = vadd.f32 0.0, %v4227
      %4229 = vmatprep.mubr.f32.mxu0 0.0
      %4230 = vmatmul.mubr.f32.gmra.mrb[0].mxu0 %v4017
      %v4231 = vpop.f32.mrb[0].mxu0
      %v4232 = vadd.f32 0.0, %v4231
      %v4233 = vpop.f32.mrb[0].mxu0
      %v4234 = vadd.f32 0.0, %v4233
      %4235 = vmatprep.mubr.f32.mxu0 0.0
      %4236 = vmatmul.mubr.f32.gmra.mrb[0].mxu0 %v4018
      %v4237 = vpop.f32.mrb[0].mxu0
      %v4238 = vadd.f32 0.0, %v4237
      %v4239 = vpop.f32.mrb[0].mxu0
      %v4240 = vadd.f32 0.0, %v4239
      %4241 = vmatprep.mubr.f32.mxu0 0.0
      %4242 = vmatmul.mubr.f32.gmra.mrb[0].mxu0 %v4019
      %v4243 = vpop.f32.mrb[0].mxu0
      %v4244 = vadd.f32 0.0, %v4243
      %v4245 = vpop.f32.mrb[0].mxu0
      %v4246 = vadd.f32 0.0, %v4245
      %4247 = vmatprep.mubr.f32.mxu0 0.0
      %4248 = vmatmul.mubr.f32.gmra.mrb[0].mxu0 %v4020
      %v4249 = vpop.f32.mrb[0].mxu0
      %v4250 = vadd.f32 0.0, %v4249
      %v4251 = vpop.f32.mrb[0].mxu0
      %v4252 = vadd.f32 0.0, %v4251
      %4253 = vmatprep.mubr.f32.mxu0 0.0
      %4254 = vmatmul.mubr.f32.gmra.mrb[0].mxu0 %v4021
      %v4255 = vpop.f32.mrb[0].mxu0
      %v4256 = vadd.f32 0.0, %v4255
      %v4257 = vpop.f32.mrb[0].mxu0
      %v4258 = vadd.f32 0.0, %v4257
      %4259 = vmatprep.mubr.f32.mxu0 0.0
      %4260 = vmatmul.mubr.f32.gmra.mrb[0].mxu0 %v4022
      %v4261 = vpop.f32.mrb[0].mxu0
      %v4262 = vadd.f32 0.0, %v4261
      %v4263 = vpop.f32.mrb[0].mxu0
      %v4264 = vadd.f32 0.0, %v4263
      %4265 = vmatprep.mubr.f32.mxu0 0.0
      %4266 = vmatmul.mubr.f32.gmra.mrb[0].mxu0 %v4023
      %v4267 = vpop.f32.mrb[0].mxu0
      %v4268 = vadd.f32 0.0, %v4267
      %v4269 = vpop.f32.mrb[0].mxu0
      %v4270 = vadd.f32 0.0, %v4269
      %4271 = vmatprep.mubr.f32.mxu0 0.0
      %4272 = vmatmul.mubr.f32.gmra.mrb[0].mxu0 %v4024
      %v4273 = vpop.f32.mrb[0].mxu0
      %v4274 = vadd.f32 0.0, %v4273
      %v4275 = vpop.f32.mrb[0].mxu0
      %v4276 = vadd.f32 0.0, %v4275
      %4277 = vmatprep.mubr.f32.mxu0 0.0
      %4278 = vmatmul.mubr.f32.gmra.mrb[0].mxu0 %v4025
      %v4279 = vpop.f32.mrb[0].mxu0
      %v4280 = vadd.f32 0.0, %v4279
      %v4281 = vpop.f32.mrb[0].mxu0
      %v4282 = vadd.f32 0.0, %v4281
      %4283 = vdwg.mxu0
      %4284 = vmatprep.subr.mxu0 0.0
      %4285 = vmatpush1.msra.mxu0 %v4029
      %4286 = vmatprep.subr.mxu0 0.0
      %4287 = vmatpush1.msra.mxu0 %v4032
      %4288 = vmatprep.subr.mxu0 0.0
      %4289 = vmatpush1.msra.mxu0 %v4035
      %4290 = vmatprep.subr.mxu0 0.0
      %4291 = vmatpush1.msra.mxu0 %v4038
      %4292 = vmatprep.subr.mxu0 0.0
      %4293 = vmatpush1.msra.mxu0 %v4041
      %4294 = vmatprep.subr.mxu0 0.0
      %4295 = vmatpush1.msra.mxu0 %v4044
      %4296 = vmatprep.subr.mxu0 0.0
      %4297 = vmatpush1.msra.mxu0 %v4047
      %4298 = vmatprep.subr.mxu0 0.0
      %4299 = vmatpush1.msra.mxu0 %v4050
      %4300 = vmatprep.subr.mxu0 0.0
      %4301 = vmatpush1.msra.mxu0 %v4053
      %4302 = vmatprep.subr.mxu0 0.0
      %4303 = vmatpush1.msra.mxu0 %v4056
      %4304 = vmatprep.subr.mxu0 0.0
      %4305 = vmatpush1.msra.mxu0 %v4059
      %4306 = vmatprep.subr.mxu0 0.0
      %4307 = vmatpush1.msra.mxu0 %v4062
      %4308 = vmatprep.subr.mxu0 0.0
      %4309 = vmatpush1.msra.mxu0 %v4065
      %4310 = vmatprep.subr.mxu0 0.0
      %4311 = vmatpush1.msra.mxu0 %v4068
      %4312 = vmatprep.subr.mxu0 0.0
      %4313 = vmatpush1.msra.mxu0 %v4071
      %4314 = vmatprep.subr.mxu0 0.0
      %4315 = vmatpush1.msra.mxu0 %v4074
      %4316 = vmatprep.subr.mxu0 0.0
      %4317 = vmatpush1.msra.mxu0 0.0
      %4318 = vmatprep.subr.mxu0 0.0
      %4319 = vmatpush1.msra.mxu0 0.0
      %4320 = vmatprep.subr.mxu0 0.0
      %4321 = vmatpush1.msra.mxu0 0.0
      %4322 = vmatprep.subr.mxu0 0.0
      %4323 = vmatpush1.msra.mxu0 0.0
      %4324 = vmatprep.subr.mxu0 0.0
      %4325 = vmatpush1.msra.mxu0 0.0
      %4326 = vmatprep.subr.mxu0 0.0
      %4327 = vmatpush1.msra.mxu0 0.0
      %4328 = vmatprep.subr.mxu0 0.0
      %4329 = vmatpush1.msra.mxu0 0.0
      %4330 = vmatprep.subr.mxu0 0.0
      %4331 = vmatpush1.msra.mxu0 0.0
      %4332 = vmatprep.subr.mxu0 0.0
      %4333 = vmatpush1.msra.mxu0 0.0
      %4334 = vmatprep.subr.mxu0 0.0
      %4335 = vmatpush1.msra.mxu0 0.0
      %4336 = vmatprep.subr.mxu0 0.0
      %4337 = vmatpush1.msra.mxu0 0.0
      %4338 = vmatprep.subr.mxu0 0.0
      %4339 = vmatpush1.msra.mxu0 0.0
      %4340 = vmatprep.subr.mxu0 0.0
      %4341 = vmatpush1.msra.mxu0 0.0
      %4342 = vmatprep.subr.mxu0 0.0
      %4343 = vmatpush1.msra.mxu0 0.0
      %4344 = vmatprep.subr.mxu0 0.0
      %4345 = vmatpush1.msra.mxu0 0.0
      %4346 = vmatprep.subr.mxu0 0.0
      %4347 = vmatpush1.msra.mxu0 0.0
      %4348 = vmatprep.mubr.f32.mxu0 0.0
      %4349 = vmatmul.mubr.f32.gmra.mrb[0].mxu0 %v4002
      %v4350 = vpop.f32.mrb[0].mxu0
      %v4351 = vadd.f32 0.0, %v4350
      %v4352 = vpop.f32.mrb[0].mxu0
      %4353 = vmatprep.mubr.f32.mxu0 0.0
      %4354 = vmatmul.mubr.f32.gmra.mrb[0].mxu0 %v4003
      %v4355 = vpop.f32.mrb[0].mxu0
      %v4356 = vadd.f32 0.0, %v4355
      %v4357 = vpop.f32.mrb[0].mxu0
      %4358 = vmatprep.mubr.f32.mxu0 0.0
      %4359 = vmatmul.mubr.f32.gmra.mrb[0].mxu0 %v4004
      %v4360 = vpop.f32.mrb[0].mxu0
      %v4361 = vadd.f32 0.0, %v4360
      %v4362 = vpop.f32.mrb[0].mxu0
      %4363 = vmatprep.mubr.f32.mxu0 0.0
      %4364 = vmatmul.mubr.f32.gmra.mrb[0].mxu0 %v4005
      %v4365 = vpop.f32.mrb[0].mxu0
      %v4366 = vadd.f32 0.0, %v4365
      %v4367 = vpop.f32.mrb[0].mxu0
      %4368 = vmatprep.mubr.f32.mxu0 0.0
      %4369 = vmatmul.mubr.f32.gmra.mrb[0].mxu0 %v4006
      %v4370 = vpop.f32.mrb[0].mxu0
      %v4371 = vadd.f32 0.0, %v4370
      %v4372 = vpop.f32.mrb[0].mxu0
      %4373 = vmatprep.mubr.f32.mxu0 0.0
      %4374 = vmatmul.mubr.f32.gmra.mrb[0].mxu0 %v4007
      %v4375 = vpop.f32.mrb[0].mxu0
      %v4376 = vadd.f32 0.0, %v4375
      %v4377 = vpop.f32.mrb[0].mxu0
      %4378 = vmatprep.mubr.f32.mxu0 0.0
      %4379 = vmatmul.mubr.f32.gmra.mrb[0].mxu0 %v4008
      %v4380 = vpop.f32.mrb[0].mxu0
      %v4381 = vadd.f32 0.0, %v4380
      %v4382 = vpop.f32.mrb[0].mxu0
      %4383 = vmatprep.mubr.f32.mxu0 0.0
      %4384 = vmatmul.mubr.f32.gmra.mrb[0].mxu0 %v4009
      %v4385 = vpop.f32.mrb[0].mxu0
      %v4386 = vadd.f32 0.0, %v4385
      %v4387 = vpop.f32.mrb[0].mxu0
      %4388 = vmatprep.mubr.f32.mxu0 0.0
      %4389 = vmatmul.mubr.f32.gmra.mrb[0].mxu0 %v4010
      %v4390 = vpop.f32.mrb[0].mxu0
      %v4391 = vadd.f32 0.0, %v4390
      %v4392 = vpop.f32.mrb[0].mxu0
      %4393 = vmatprep.mubr.f32.mxu0 0.0
      %4394 = vmatmul.mubr.f32.gmra.mrb[0].mxu0 %v4011
      %v4395 = vpop.f32.mrb[0].mxu0
      %v4396 = vadd.f32 0.0, %v4395
      %v4397 = vpop.f32.mrb[0].mxu0
      %4398 = vmatprep.mubr.f32.mxu0 0.0
      %4399 = vmatmul.mubr.f32.gmra.mrb[0].mxu0 %v4012
      %v4400 = vpop.f32.mrb[0].mxu0
      %v4401 = vadd.f32 0.0, %v4400
      %v4402 = vpop.f32.mrb[0].mxu0
      %4403 = vmatprep.mubr.f32.mxu0 0.0
      %4404 = vmatmul.mubr.f32.gmra.mrb[0].mxu0 %v4013
      %v4405 = vpop.f32.mrb[0].mxu0
      %v4406 = vadd.f32 0.0, %v4405
      %v4407 = vpop.f32.mrb[0].mxu0
      %4408 = vmatprep.mubr.f32.mxu0 0.0
      %4409 = vmatmul.mubr.f32.gmra.mrb[0].mxu0 %v4014
      %v4410 = vpop.f32.mrb[0].mxu0
      %v4411 = vadd.f32 0.0, %v4410
      %v4412 = vpop.f32.mrb[0].mxu0
      %4413 = vmatprep.mubr.f32.mxu0 0.0
      %4414 = vmatmul.mubr.f32.gmra.mrb[0].mxu0 %v4015
      %v4415 = vpop.f32.mrb[0].mxu0
      %v4416 = vadd.f32 0.0, %v4415
      %v4417 = vpop.f32.mrb[0].mxu0
      %4418 = vmatprep.mubr.f32.mxu0 0.0
      %4419 = vmatmul.mubr.f32.gmra.mrb[0].mxu0 %v4016
      %v4420 = vpop.f32.mrb[0].mxu0
      %v4421 = vadd.f32 0.0, %v4420
      %v4422 = vpop.f32.mrb[0].mxu0
      %4423 = vmatprep.mubr.f32.mxu0 0.0
      %4424 = vmatmul.mubr.f32.gmra.mrb[0].mxu0 %v4017
      %v4425 = vpop.f32.mrb[0].mxu0
      %v4426 = vadd.f32 0.0, %v4425
      %v4427 = vpop.f32.mrb[0].mxu0
      %4428 = vmatprep.mubr.f32.mxu0 0.0
      %4429 = vmatmul.mubr.f32.gmra.mrb[0].mxu0 %v4018
      %v4430 = vpop.f32.mrb[0].mxu0
      %v4431 = vadd.f32 0.0, %v4430
      %v4432 = vpop.f32.mrb[0].mxu0
      %4433 = vmatprep.mubr.f32.mxu0 0.0
      %4434 = vmatmul.mubr.f32.gmra.mrb[0].mxu0 %v4019
      %v4435 = vpop.f32.mrb[0].mxu0
      %v4436 = vadd.f32 0.0, %v4435
      %v4437 = vpop.f32.mrb[0].mxu0
      %4438 = vmatprep.mubr.f32.mxu0 0.0
      %4439 = vmatmul.mubr.f32.gmra.mrb[0].mxu0 %v4020
      %v4440 = vpop.f32.mrb[0].mxu0
      %v4441 = vadd.f32 0.0, %v4440
      %v4442 = vpop.f32.mrb[0].mxu0
      %4443 = vmatprep.mubr.f32.mxu0 0.0
      %4444 = vmatmul.mubr.f32.gmra.mrb[0].mxu0 %v4021
      %v4445 = vpop.f32.mrb[0].mxu0
      %v4446 = vadd.f32 0.0, %v4445
      %v4447 = vpop.f32.mrb[0].mxu0
      %4448 = vmatprep.mubr.f32.mxu0 0.0
      %4449 = vmatmul.mubr.f32.gmra.mrb[0].mxu0 %v4022
      %v4450 = vpop.f32.mrb[0].mxu0
      %v4451 = vadd.f32 0.0, %v4450
      %v4452 = vpop.f32.mrb[0].mxu0
      %4453 = vmatprep.mubr.f32.mxu0 0.0
      %4454 = vmatmul.mubr.f32.gmra.mrb[0].mxu0 %v4023
      %v4455 = vpop.f32.mrb[0].mxu0
      %v4456 = vadd.f32 0.0, %v4455
      %v4457 = vpop.f32.mrb[0].mxu0
      %4458 = vmatprep.mubr.f32.mxu0 0.0
      %4459 = vmatmul.mubr.f32.gmra.mrb[0].mxu0 %v4024
      %v4460 = vpop.f32.mrb[0].mxu0
      %v4461 = vadd.f32 0.0, %v4460
      %v4462 = vpop.f32.mrb[0].mxu0
      %4463 = vmatprep.mubr.f32.mxu0 0.0
      %4464 = vmatmul.mubr.f32.gmra.mrb[0].mxu0 %v4025
      %v4465 = vpop.f32.mrb[0].mxu0
      %v4466 = vadd.f32 0.0, %v4465
      %v4467 = vpop.f32.mrb[0].mxu0
      %4468 = vdwg.mxu0
      %v4469 = vld [vmem:[#allocation4 + $0x2] sm:$0xff]
      %v4470 = vld [vmem:[#allocation4 + $0xa] sm:$0xff]
      %v4471 = vld [vmem:[#allocation4 + $0x1a] sm:$0xff]
      %v4472 = vld [vmem:[#allocation4 + $0x22] sm:$0xff]
      %v4473 = vld [vmem:[#allocation4 + $0x32] sm:$0xff]
      %v4474 = vld [vmem:[#allocation4 + $0x3a] sm:$0xff]
      %v4475 = vld [vmem:[#allocation4 + $0x4a] sm:$0xff]
      %v4476 = vld [vmem:[#allocation4 + $0x52] sm:$0xff]
      %v4477 = vld [vmem:[#allocation4 + $0x62] sm:$0xff]
      %v4478 = vld [vmem:[#allocation4 + $0x6a] sm:$0xff]
      %v4479 = vld [vmem:[#allocation4 + $0x7a] sm:$0xff]
      %v4480 = vld [vmem:[#allocation4 + $0x82] sm:$0xff]
      %v4481 = vld [vmem:[#allocation4 + $0x92] sm:$0xff]
      %v4482 = vld [vmem:[#allocation4 + $0x9a] sm:$0xff]
      %v4483 = vld [vmem:[#allocation4 + $0xaa] sm:$0xff]
      %v4484 = vld [vmem:[#allocation4 + $0xb2] sm:$0xff]
      %v4485 = vld [vmem:[#allocation4 + $0xc2] sm:$0xff]
      %v4486 = vld [vmem:[#allocation4 + $0xca] sm:$0xff]
      %v4487 = vld [vmem:[#allocation4 + $0xda] sm:$0xff]
      %v4488 = vld [vmem:[#allocation4 + $0xe2] sm:$0xff]
      %v4489 = vld [vmem:[#allocation4 + $0xf2] sm:$0xff]
      %v4490 = vld [vmem:[#allocation4 + $0xfa] sm:$0xff]
      %v4491 = vld [vmem:[#allocation4 + $0x10a] sm:$0xff]
      %v4492 = vld [vmem:[#allocation4 + $0x112] sm:$0xff]
      %v4493 = vadd.f32 %v4469, %v4142
      %v4494 = vadd.f32 %v4470, %v4148
      %v4495 = vadd.f32 %v4471, %v4154
      %v4496 = vadd.f32 %v4472, %v4160
      %v4497 = vadd.f32 %v4473, %v4166
      %v4498 = vadd.f32 %v4474, %v4172
      %v4499 = vadd.f32 %v4475, %v4178
      %v4500 = vadd.f32 %v4476, %v4184
      %v4501 = vadd.f32 %v4477, %v4190
      %v4502 = vadd.f32 %v4478, %v4196
      %v4503 = vadd.f32 %v4479, %v4202
      %v4504 = vadd.f32 %v4480, %v4208
      %v4505 = vadd.f32 %v4481, %v4214
      %v4506 = vadd.f32 %v4482, %v4220
      %v4507 = vadd.f32 %v4483, %v4226
      %v4508 = vadd.f32 %v4484, %v4232
      %v4509 = vadd.f32 %v4485, %v4238
      %v4510 = vadd.f32 %v4486, %v4244
      %v4511 = vadd.f32 %v4487, %v4250
      %v4512 = vadd.f32 %v4488, %v4256
      %v4513 = vadd.f32 %v4489, %v4262
      %v4514 = vadd.f32 %v4490, %v4268
      %v4515 = vadd.f32 %v4491, %v4274
      %v4516 = vadd.f32 %v4492, %v4280
      %4517 = vst [vmem:[#allocation4 + $0x2] sm:$0xff] %v4493
      %4518 = vst [vmem:[#allocation4 + $0xa] sm:$0xff] %v4494
      %4519 = vst [vmem:[#allocation4 + $0x1a] sm:$0xff] %v4495
      %4520 = vst [vmem:[#allocation4 + $0x22] sm:$0xff] %v4496
      %4521 = vst [vmem:[#allocation4 + $0x32] sm:$0xff] %v4497
      %4522 = vst [vmem:[#allocation4 + $0x3a] sm:$0xff] %v4498
      %4523 = vst [vmem:[#allocation4 + $0x4a] sm:$0xff] %v4499
      %4524 = vst [vmem:[#allocation4 + $0x52] sm:$0xff] %v4500
      %4525 = vst [vmem:[#allocation4 + $0x62] sm:$0xff] %v4501
      %4526 = vst [vmem:[#allocation4 + $0x6a] sm:$0xff] %v4502
      %4527 = vst [vmem:[#allocation4 + $0x7a] sm:$0xff] %v4503
      %4528 = vst [vmem:[#allocation4 + $0x82] sm:$0xff] %v4504
      %4529 = vst [vmem:[#allocation4 + $0x92] sm:$0xff] %v4505
      %4530 = vst [vmem:[#allocation4 + $0x9a] sm:$0xff] %v4506
      %4531 = vst [vmem:[#allocation4 + $0xaa] sm:$0xff] %v4507
      %4532 = vst [vmem:[#allocation4 + $0xb2] sm:$0xff] %v4508
      %4533 = vst [vmem:[#allocation4 + $0xc2] sm:$0xff] %v4509
      %4534 = vst [vmem:[#allocation4 + $0xca] sm:$0xff] %v4510
      %4535 = vst [vmem:[#allocation4 + $0xda] sm:$0xff] %v4511
      %4536 = vst [vmem:[#allocation4 + $0xe2] sm:$0xff] %v4512
      %4537 = vst [vmem:[#allocation4 + $0xf2] sm:$0xff] %v4513
      %4538 = vst [vmem:[#allocation4 + $0xfa] sm:$0xff] %v4514
      %4539 = vst [vmem:[#allocation4 + $0x10a] sm:$0xff] %v4515
      %4540 = vst [vmem:[#allocation4 + $0x112] sm:$0xff] %v4516
      %v4541 = vld [vmem:[#allocation4 + $0x1] sm:$0xff]
      %v4542 = vld [vmem:[#allocation4 + $0x9] sm:$0xff]
      %v4543 = vld [vmem:[#allocation4 + $0x19] sm:$0xff]
      %v4544 = vld [vmem:[#allocation4 + $0x21] sm:$0xff]
      %v4545 = vld [vmem:[#allocation4 + $0x31] sm:$0xff]
      %v4546 = vld [vmem:[#allocation4 + $0x39] sm:$0xff]
      %v4547 = vld [vmem:[#allocation4 + $0x49] sm:$0xff]
      %v4548 = vld [vmem:[#allocation4 + $0x51] sm:$0xff]
      %v4549 = vld [vmem:[#allocation4 + $0x61] sm:$0xff]
      %v4550 = vld [vmem:[#allocation4 + $0x69] sm:$0xff]
      %v4551 = vld [vmem:[#allocation4 + $0x79] sm:$0xff]
      %v4552 = vld [vmem:[#allocation4 + $0x81] sm:$0xff]
      %v4553 = vld [vmem:[#allocation4 + $0x91] sm:$0xff]
      %v4554 = vld [vmem:[#allocation4 + $0x99] sm:$0xff]
      %v4555 = vld [vmem:[#allocation4 + $0xa9] sm:$0xff]
      %v4556 = vld [vmem:[#allocation4 + $0xb1] sm:$0xff]
      %v4557 = vld [vmem:[#allocation4 + $0xc1] sm:$0xff]
      %v4558 = vld [vmem:[#allocation4 + $0xc9] sm:$0xff]
      %v4559 = vld [vmem:[#allocation4 + $0xd9] sm:$0xff]
      %v4560 = vld [vmem:[#allocation4 + $0xe1] sm:$0xff]
      %v4561 = vld [vmem:[#allocation4 + $0xf1] sm:$0xff]
      %v4562 = vld [vmem:[#allocation4 + $0xf9] sm:$0xff]
      %v4563 = vld [vmem:[#allocation4 + $0x109] sm:$0xff]
      %v4564 = vld [vmem:[#allocation4 + $0x111] sm:$0xff]
      %v4565 = vadd.f32 %v4541, %v4144
      %v4566 = vadd.f32 %v4542, %v4150
      %v4567 = vadd.f32 %v4543, %v4156
      %v4568 = vadd.f32 %v4544, %v4162
      %v4569 = vadd.f32 %v4545, %v4168
      %v4570 = vadd.f32 %v4546, %v4174
      %v4571 = vadd.f32 %v4547, %v4180
      %v4572 = vadd.f32 %v4548, %v4186
      %v4573 = vadd.f32 %v4549, %v4192
      %v4574 = vadd.f32 %v4550, %v4198
      %v4575 = vadd.f32 %v4551, %v4204
      %v4576 = vadd.f32 %v4552, %v4210
      %v4577 = vadd.f32 %v4553, %v4216
      %v4578 = vadd.f32 %v4554, %v4222
      %v4579 = vadd.f32 %v4555, %v4228
      %v4580 = vadd.f32 %v4556, %v4234
      %v4581 = vadd.f32 %v4557, %v4240
      %v4582 = vadd.f32 %v4558, %v4246
      %v4583 = vadd.f32 %v4559, %v4252
      %v4584 = vadd.f32 %v4560, %v4258
      %v4585 = vadd.f32 %v4561, %v4264
      %v4586 = vadd.f32 %v4562, %v4270
      %v4587 = vadd.f32 %v4563, %v4276
      %v4588 = vadd.f32 %v4564, %v4282
      %4589 = vst [vmem:[#allocation4 + $0x1] sm:$0xff] %v4565
      %4590 = vst [vmem:[#allocation4 + $0x9] sm:$0xff] %v4566
      %4591 = vst [vmem:[#allocation4 + $0x19] sm:$0xff] %v4567
      %4592 = vst [vmem:[#allocation4 + $0x21] sm:$0xff] %v4568
      %4593 = vst [vmem:[#allocation4 + $0x31] sm:$0xff] %v4569
      %4594 = vst [vmem:[#allocation4 + $0x39] sm:$0xff] %v4570
      %4595 = vst [vmem:[#allocation4 + $0x49] sm:$0xff] %v4571
      %4596 = vst [vmem:[#allocation4 + $0x51] sm:$0xff] %v4572
      %4597 = vst [vmem:[#allocation4 + $0x61] sm:$0xff] %v4573
      %4598 = vst [vmem:[#allocation4 + $0x69] sm:$0xff] %v4574
      %4599 = vst [vmem:[#allocation4 + $0x79] sm:$0xff] %v4575
      %4600 = vst [vmem:[#allocation4 + $0x81] sm:$0xff] %v4576
      %4601 = vst [vmem:[#allocation4 + $0x91] sm:$0xff] %v4577
      %4602 = vst [vmem:[#allocation4 + $0x99] sm:$0xff] %v4578
      %4603 = vst [vmem:[#allocation4 + $0xa9] sm:$0xff] %v4579
      %4604 = vst [vmem:[#allocation4 + $0xb1] sm:$0xff] %v4580
      %4605 = vst [vmem:[#allocation4 + $0xc1] sm:$0xff] %v4581
      %4606 = vst [vmem:[#allocation4 + $0xc9] sm:$0xff] %v4582
      %4607 = vst [vmem:[#allocation4 + $0xd9] sm:$0xff] %v4583
      %4608 = vst [vmem:[#allocation4 + $0xe1] sm:$0xff] %v4584
      %4609 = vst [vmem:[#allocation4 + $0xf1] sm:$0xff] %v4585
      %4610 = vst [vmem:[#allocation4 + $0xf9] sm:$0xff] %v4586
      %4611 = vst [vmem:[#allocation4 + $0x109] sm:$0xff] %v4587
      %4612 = vst [vmem:[#allocation4 + $0x111] sm:$0xff] %v4588
      %v4613 = vld [vmem:[#allocation4] sm:$0xff]
      %v4614 = vld [vmem:[#allocation4 + $0x8] sm:$0xff]
      %v4615 = vld [vmem:[#allocation4 + $0x18] sm:$0xff]
      %v4616 = vld [vmem:[#allocation4 + $0x20] sm:$0xff]
      %v4617 = vld [vmem:[#allocation4 + $0x30] sm:$0xff]
      %v4618 = vld [vmem:[#allocation4 + $0x38] sm:$0xff]
      %v4619 = vld [vmem:[#allocation4 + $0x48] sm:$0xff]
      %v4620 = vld [vmem:[#allocation4 + $0x50] sm:$0xff]
      %v4621 = vld [vmem:[#allocation4 + $0x60] sm:$0xff]
      %v4622 = vld [vmem:[#allocation4 + $0x68] sm:$0xff]
      %v4623 = vld [vmem:[#allocation4 + $0x78] sm:$0xff]
      %v4624 = vld [vmem:[#allocation4 + $0x80] sm:$0xff]
      %v4625 = vld [vmem:[#allocation4 + $0x90] sm:$0xff]
      %v4626 = vld [vmem:[#allocation4 + $0x98] sm:$0xff]
      %v4627 = vld [vmem:[#allocation4 + $0xa8] sm:$0xff]
      %v4628 = vld [vmem:[#allocation4 + $0xb0] sm:$0xff]
      %v4629 = vld [vmem:[#allocation4 + $0xc0] sm:$0xff]
      %v4630 = vld [vmem:[#allocation4 + $0xc8] sm:$0xff]
      %v4631 = vld [vmem:[#allocation4 + $0xd8] sm:$0xff]
      %v4632 = vld [vmem:[#allocation4 + $0xe0] sm:$0xff]
      %v4633 = vld [vmem:[#allocation4 + $0xf0] sm:$0xff]
      %v4634 = vld [vmem:[#allocation4 + $0xf8] sm:$0xff]
      %v4635 = vld [vmem:[#allocation4 + $0x108] sm:$0xff]
      %v4636 = vld [vmem:[#allocation4 + $0x110] sm:$0xff]
      %v4637 = vadd.f32 %v4613, %v4351
      %v4638 = vadd.f32 %v4614, %v4356
      %v4639 = vadd.f32 %v4615, %v4361
      %v4640 = vadd.f32 %v4616, %v4366
      %v4641 = vadd.f32 %v4617, %v4371
      %v4642 = vadd.f32 %v4618, %v4376
      %v4643 = vadd.f32 %v4619, %v4381
      %v4644 = vadd.f32 %v4620, %v4386
      %v4645 = vadd.f32 %v4621, %v4391
      %v4646 = vadd.f32 %v4622, %v4396
      %v4647 = vadd.f32 %v4623, %v4401
      %v4648 = vadd.f32 %v4624, %v4406
      %v4649 = vadd.f32 %v4625, %v4411
      %v4650 = vadd.f32 %v4626, %v4416
      %v4651 = vadd.f32 %v4627, %v4421
      %v4652 = vadd.f32 %v4628, %v4426
      %v4653 = vadd.f32 %v4629, %v4431
      %v4654 = vadd.f32 %v4630, %v4436
      %v4655 = vadd.f32 %v4631, %v4441
      %v4656 = vadd.f32 %v4632, %v4446
      %v4657 = vadd.f32 %v4633, %v4451
      %v4658 = vadd.f32 %v4634, %v4456
      %v4659 = vadd.f32 %v4635, %v4461
      %v4660 = vadd.f32 %v4636, %v4466
      %4661 = vst [vmem:[#allocation4] sm:$0xff] %v4637
      %4662 = vst [vmem:[#allocation4 + $0x8] sm:$0xff] %v4638
      %4663 = vst [vmem:[#allocation4 + $0x18] sm:$0xff] %v4639
      %4664 = vst [vmem:[#allocation4 + $0x20] sm:$0xff] %v4640
      %4665 = vst [vmem:[#allocation4 + $0x30] sm:$0xff] %v4641
      %4666 = vst [vmem:[#allocation4 + $0x38] sm:$0xff] %v4642
      %4667 = vst [vmem:[#allocation4 + $0x48] sm:$0xff] %v4643
      %4668 = vst [vmem:[#allocation4 + $0x50] sm:$0xff] %v4644
      %4669 = vst [vmem:[#allocation4 + $0x60] sm:$0xff] %v4645
      %4670 = vst [vmem:[#allocation4 + $0x68] sm:$0xff] %v4646
      %4671 = vst [vmem:[#allocation4 + $0x78] sm:$0xff] %v4647
      %4672 = vst [vmem:[#allocation4 + $0x80] sm:$0xff] %v4648
      %4673 = vst [vmem:[#allocation4 + $0x90] sm:$0xff] %v4649
      %4674 = vst [vmem:[#allocation4 + $0x98] sm:$0xff] %v4650
      %4675 = vst [vmem:[#allocation4 + $0xa8] sm:$0xff] %v4651
      %4676 = vst [vmem:[#allocation4 + $0xb0] sm:$0xff] %v4652
      %4677 = vst [vmem:[#allocation4 + $0xc0] sm:$0xff] %v4653
      %4678 = vst [vmem:[#allocation4 + $0xc8] sm:$0xff] %v4654
      %4679 = vst [vmem:[#allocation4 + $0xd8] sm:$0xff] %v4655
      %4680 = vst [vmem:[#allocation4 + $0xe0] sm:$0xff] %v4656
      %4681 = vst [vmem:[#allocation4 + $0xf0] sm:$0xff] %v4657
      %4682 = vst [vmem:[#allocation4 + $0xf8] sm:$0xff] %v4658
      %4683 = vst [vmem:[#allocation4 + $0x108] sm:$0xff] %v4659
      %4684 = vst [vmem:[#allocation4 + $0x110] sm:$0xff] %v4660
      %v4685 = vld [vmem:[#allocation4 + $0x2] sm:$0x1]
      %v4686 = vld [vmem:[#allocation4 + $0x1a] sm:$0x1]
      %v4687 = vld [vmem:[#allocation4 + $0x32] sm:$0x1]
      %v4688 = vld [vmem:[#allocation4 + $0x4a] sm:$0x1]
      %v4689 = vld [vmem:[#allocation4 + $0x62] sm:$0x1]
      %v4690 = vld [vmem:[#allocation4 + $0x7a] sm:$0x1]
      %v4691 = vld [vmem:[#allocation4 + $0x92] sm:$0x1]
      %v4692 = vld [vmem:[#allocation4 + $0xaa] sm:$0x1]
      %v4693 = vld [vmem:[#allocation4 + $0xc2] sm:$0x1]
      %v4694 = vld [vmem:[#allocation4 + $0xda] sm:$0x1]
      %v4695 = vld [vmem:[#allocation4 + $0xf2] sm:$0x1]
      %v4696 = vld [vmem:[#allocation4 + $0x10a] sm:$0x1]
      %v4697 = vmax.f32 %v4685, 0.0
      %v4698 = vmax.f32 %v4686, 0.0
      %v4699 = vmax.f32 %v4687, 0.0
      %v4700 = vmax.f32 %v4688, 0.0
      %v4701 = vmax.f32 %v4689, 0.0
      %v4702 = vmax.f32 %v4690, 0.0
      %v4703 = vmax.f32 %v4691, 0.0
      %v4704 = vmax.f32 %v4692, 0.0
      %v4705 = vmax.f32 %v4693, 0.0
      %v4706 = vmax.f32 %v4694, 0.0
      %v4707 = vmax.f32 %v4695, 0.0
      %v4708 = vmax.f32 %v4696, 0.0
      %v4709 = vld [vmem:[#allocation4 + $0x3] sm:$0x1]
      %v4710 = vld [vmem:[#allocation4 + $0x1b] sm:$0x1]
      %v4711 = vld [vmem:[#allocation4 + $0x33] sm:$0x1]
      %v4712 = vld [vmem:[#allocation4 + $0x4b] sm:$0x1]
      %v4713 = vld [vmem:[#allocation4 + $0x63] sm:$0x1]
      %v4714 = vld [vmem:[#allocation4 + $0x7b] sm:$0x1]
      %v4715 = vld [vmem:[#allocation4 + $0x93] sm:$0x1]
      %v4716 = vld [vmem:[#allocation4 + $0xab] sm:$0x1]
      %v4717 = vld [vmem:[#allocation4 + $0xc3] sm:$0x1]
      %v4718 = vld [vmem:[#allocation4 + $0xdb] sm:$0x1]
      %v4719 = vld [vmem:[#allocation4 + $0xf3] sm:$0x1]
      %v4720 = vld [vmem:[#allocation4 + $0x10b] sm:$0x1]
      %v4721 = vmax.f32 %v4709, 0.0
      %v4722 = vmax.f32 %v4710, 0.0
      %v4723 = vmax.f32 %v4711, 0.0
      %v4724 = vmax.f32 %v4712, 0.0
      %v4725 = vmax.f32 %v4713, 0.0
      %v4726 = vmax.f32 %v4714, 0.0
      %v4727 = vmax.f32 %v4715, 0.0
      %v4728 = vmax.f32 %v4716, 0.0
      %v4729 = vmax.f32 %v4717, 0.0
      %v4730 = vmax.f32 %v4718, 0.0
      %v4731 = vmax.f32 %v4719, 0.0
      %v4732 = vmax.f32 %v4720, 0.0
      %v4733 = vmax.f32 %v4697, %v4721
      %v4734 = vmax.f32 %v4698, %v4722
      %v4735 = vmax.f32 %v4699, %v4723
      %v4736 = vmax.f32 %v4700, %v4724
      %v4737 = vmax.f32 %v4701, %v4725
      %v4738 = vmax.f32 %v4702, %v4726
      %v4739 = vmax.f32 %v4703, %v4727
      %v4740 = vmax.f32 %v4704, %v4728
      %v4741 = vmax.f32 %v4705, %v4729
      %v4742 = vmax.f32 %v4706, %v4730
      %v4743 = vmax.f32 %v4707, %v4731
      %v4744 = vmax.f32 %v4708, %v4732
      %v4757 = vrot.slane %v4734, 7
      %vm4758 = vcmask 1041409
      %v4759 = vsel %vm4758, %v4757, %v4733
      %v4760 = vrot.slane %v4735, 6
      %vm4761 = vcmask 1042434
      %v4762 = vsel %vm4761, %v4760, %v4759
      %v4763 = vrot.slane %v4736, 5
      %vm4764 = vcmask 1043459
      %v4765 = vsel %vm4764, %v4763, %v4762
      %v4766 = vrot.slane %v4737, 4
      %vm4767 = vcmask 1044484
      %v4768 = vsel %vm4767, %v4766, %v4765
      %v4769 = vrot.slane %v4738, 3
      %vm4770 = vcmask 1045509
      %v4771 = vsel %vm4770, %v4769, %v4768
      %v4772 = vrot.slane %v4739, 2
      %vm4773 = vcmask 1046534
      %v4774 = vsel %vm4773, %v4772, %v4771
      %v4775 = vrot.slane %v4740, 1
      %vm4776 = vcmask 1047559
      %v4777 = vsel %vm4776, %v4775, %v4774
      %v4778 = vrot.slane %v4742, 7
      %v4779 = vsel %vm4758, %v4778, %v4741
      %v4780 = vrot.slane %v4743, 6
      %v4781 = vsel %vm4761, %v4780, %v4779
      %v4782 = vrot.slane %v4744, 5
      %v4783 = vsel %vm4764, %v4782, %v4781
      %4786 = vst [vmem:[#allocation5] sm:$0xff] %v4777
      %4787 = vst [vmem:[#allocation5 + $0x8] sm:$0xf] %v4783
      %v4788 = vld [vmem:[#allocation4 + $0x4] sm:$0x1]
      %v4789 = vld [vmem:[#allocation4 + $0x1c] sm:$0x1]
      %v4790 = vld [vmem:[#allocation4 + $0x34] sm:$0x1]
      %v4791 = vld [vmem:[#allocation4 + $0x4c] sm:$0x1]
      %v4792 = vld [vmem:[#allocation4 + $0x64] sm:$0x1]
      %v4793 = vld [vmem:[#allocation4 + $0x7c] sm:$0x1]
      %v4794 = vld [vmem:[#allocation4 + $0x94] sm:$0x1]
      %v4795 = vld [vmem:[#allocation4 + $0xac] sm:$0x1]
      %v4796 = vld [vmem:[#allocation4 + $0xc4] sm:$0x1]
      %v4797 = vld [vmem:[#allocation4 + $0xdc] sm:$0x1]
      %v4798 = vld [vmem:[#allocation4 + $0xf4] sm:$0x1]
      %v4799 = vld [vmem:[#allocation4 + $0x10c] sm:$0x1]
      %v4800 = vmax.f32 %v4788, 0.0
      %v4801 = vmax.f32 %v4789, 0.0
      %v4802 = vmax.f32 %v4790, 0.0
      %v4803 = vmax.f32 %v4791, 0.0
      %v4804 = vmax.f32 %v4792, 0.0
      %v4805 = vmax.f32 %v4793, 0.0
      %v4806 = vmax.f32 %v4794, 0.0
      %v4807 = vmax.f32 %v4795, 0.0
      %v4808 = vmax.f32 %v4796, 0.0
      %v4809 = vmax.f32 %v4797, 0.0
      %v4810 = vmax.f32 %v4798, 0.0
      %v4811 = vmax.f32 %v4799, 0.0
      %v4812 = vld [vmem:[#allocation4 + $0x5] sm:$0x1]
      %v4813 = vld [vmem:[#allocation4 + $0x1d] sm:$0x1]
      %v4814 = vld [vmem:[#allocation4 + $0x35] sm:$0x1]
      %v4815 = vld [vmem:[#allocation4 + $0x4d] sm:$0x1]
      %v4816 = vld [vmem:[#allocation4 + $0x65] sm:$0x1]
      %v4817 = vld [vmem:[#allocation4 + $0x7d] sm:$0x1]
      %v4818 = vld [vmem:[#allocation4 + $0x95] sm:$0x1]
      %v4819 = vld [vmem:[#allocation4 + $0xad] sm:$0x1]
      %v4820 = vld [vmem:[#allocation4 + $0xc5] sm:$0x1]
      %v4821 = vld [vmem:[#allocation4 + $0xdd] sm:$0x1]
      %v4822 = vld [vmem:[#allocation4 + $0xf5] sm:$0x1]
      %v4823 = vld [vmem:[#allocation4 + $0x10d] sm:$0x1]
      %v4824 = vmax.f32 %v4812, 0.0
      %v4825 = vmax.f32 %v4813, 0.0
      %v4826 = vmax.f32 %v4814, 0.0
      %v4827 = vmax.f32 %v4815, 0.0
      %v4828 = vmax.f32 %v4816, 0.0
      %v4829 = vmax.f32 %v4817, 0.0
      %v4830 = vmax.f32 %v4818, 0.0
      %v4831 = vmax.f32 %v4819, 0.0
      %v4832 = vmax.f32 %v4820, 0.0
      %v4833 = vmax.f32 %v4821, 0.0
      %v4834 = vmax.f32 %v4822, 0.0
      %v4835 = vmax.f32 %v4823, 0.0
      %v4836 = vmax.f32 %v4800, %v4824
      %v4837 = vmax.f32 %v4801, %v4825
      %v4838 = vmax.f32 %v4802, %v4826
      %v4839 = vmax.f32 %v4803, %v4827
      %v4840 = vmax.f32 %v4804, %v4828
      %v4841 = vmax.f32 %v4805, %v4829
      %v4842 = vmax.f32 %v4806, %v4830
      %v4843 = vmax.f32 %v4807, %v4831
      %v4844 = vmax.f32 %v4808, %v4832
      %v4845 = vmax.f32 %v4809, %v4833
      %v4846 = vmax.f32 %v4810, %v4834
      %v4847 = vmax.f32 %v4811, %v4835
      %v4860 = vrot.slane %v4837, 7
      %v4861 = vsel %vm4758, %v4860, %v4836
      %v4862 = vrot.slane %v4838, 6
      %v4863 = vsel %vm4761, %v4862, %v4861
      %v4864 = vrot.slane %v4839, 5
      %v4865 = vsel %vm4764, %v4864, %v4863
      %v4866 = vrot.slane %v4840, 4
      %v4867 = vsel %vm4767, %v4866, %v4865
      %v4868 = vrot.slane %v4841, 3
      %v4869 = vsel %vm4770, %v4868, %v4867
      %v4870 = vrot.slane %v4842, 2
      %v4871 = vsel %vm4773, %v4870, %v4869
      %v4872 = vrot.slane %v4843, 1
      %v4873 = vsel %vm4776, %v4872, %v4871
      %v4874 = vrot.slane %v4845, 7
      %v4875 = vsel %vm4758, %v4874, %v4844
      %v4876 = vrot.slane %v4846, 6
      %v4877 = vsel %vm4761, %v4876, %v4875
      %v4878 = vrot.slane %v4847, 5
      %v4879 = vsel %vm4764, %v4878, %v4877
      %s4882 = scalar_lea.vmem [#allocation5], 16
      %4883 = vst [vmem:[%s4882] sm:$0xff] %v4873
      %4884 = vst [vmem:[%s4882 + $0x8] sm:$0xf] %v4879
      %v4885 = vld [vmem:[#allocation4 + $0x6] sm:$0x1]
      %v4886 = vld [vmem:[#allocation4 + $0x1e] sm:$0x1]
      %v4887 = vld [vmem:[#allocation4 + $0x36] sm:$0x1]
      %v4888 = vld [vmem:[#allocation4 + $0x4e] sm:$0x1]
      %v4889 = vld [vmem:[#allocation4 + $0x66] sm:$0x1]
      %v4890 = vld [vmem:[#allocation4 + $0x7e] sm:$0x1]
      %v4891 = vld [vmem:[#allocation4 + $0x96] sm:$0x1]
      %v4892 = vld [vmem:[#allocation4 + $0xae] sm:$0x1]
      %v4893 = vld [vmem:[#allocation4 + $0xc6] sm:$0x1]
      %v4894 = vld [vmem:[#allocation4 + $0xde] sm:$0x1]
      %v4895 = vld [vmem:[#allocation4 + $0xf6] sm:$0x1]
      %v4896 = vld [vmem:[#allocation4 + $0x10e] sm:$0x1]
      %v4897 = vmax.f32 %v4885, 0.0
      %v4898 = vmax.f32 %v4886, 0.0
      %v4899 = vmax.f32 %v4887, 0.0
      %v4900 = vmax.f32 %v4888, 0.0
      %v4901 = vmax.f32 %v4889, 0.0
      %v4902 = vmax.f32 %v4890, 0.0
      %v4903 = vmax.f32 %v4891, 0.0
      %v4904 = vmax.f32 %v4892, 0.0
      %v4905 = vmax.f32 %v4893, 0.0
      %v4906 = vmax.f32 %v4894, 0.0
      %v4907 = vmax.f32 %v4895, 0.0
      %v4908 = vmax.f32 %v4896, 0.0
      %v4909 = vld [vmem:[#allocation4 + $0x7] sm:$0x1]
      %v4910 = vld [vmem:[#allocation4 + $0x1f] sm:$0x1]
      %v4911 = vld [vmem:[#allocation4 + $0x37] sm:$0x1]
      %v4912 = vld [vmem:[#allocation4 + $0x4f] sm:$0x1]
      %v4913 = vld [vmem:[#allocation4 + $0x67] sm:$0x1]
      %v4914 = vld [vmem:[#allocation4 + $0x7f] sm:$0x1]
      %v4915 = vld [vmem:[#allocation4 + $0x97] sm:$0x1]
      %v4916 = vld [vmem:[#allocation4 + $0xaf] sm:$0x1]
      %v4917 = vld [vmem:[#allocation4 + $0xc7] sm:$0x1]
      %v4918 = vld [vmem:[#allocation4 + $0xdf] sm:$0x1]
      %v4919 = vld [vmem:[#allocation4 + $0xf7] sm:$0x1]
      %v4920 = vld [vmem:[#allocation4 + $0x10f] sm:$0x1]
      %v4921 = vmax.f32 %v4909, 0.0
      %v4922 = vmax.f32 %v4910, 0.0
      %v4923 = vmax.f32 %v4911, 0.0
      %v4924 = vmax.f32 %v4912, 0.0
      %v4925 = vmax.f32 %v4913, 0.0
      %v4926 = vmax.f32 %v4914, 0.0
      %v4927 = vmax.f32 %v4915, 0.0
      %v4928 = vmax.f32 %v4916, 0.0
      %v4929 = vmax.f32 %v4917, 0.0
      %v4930 = vmax.f32 %v4918, 0.0
      %v4931 = vmax.f32 %v4919, 0.0
      %v4932 = vmax.f32 %v4920, 0.0
      %v4933 = vmax.f32 %v4897, %v4921
      %v4934 = vmax.f32 %v4898, %v4922
      %v4935 = vmax.f32 %v4899, %v4923
      %v4936 = vmax.f32 %v4900, %v4924
      %v4937 = vmax.f32 %v4901, %v4925
      %v4938 = vmax.f32 %v4902, %v4926
      %v4939 = vmax.f32 %v4903, %v4927
      %v4940 = vmax.f32 %v4904, %v4928
      %v4941 = vmax.f32 %v4905, %v4929
      %v4942 = vmax.f32 %v4906, %v4930
      %v4943 = vmax.f32 %v4907, %v4931
      %v4944 = vmax.f32 %v4908, %v4932
      %v4957 = vrot.slane %v4934, 7
      %v4958 = vsel %vm4758, %v4957, %v4933
      %v4959 = vrot.slane %v4935, 6
      %v4960 = vsel %vm4761, %v4959, %v4958
      %v4961 = vrot.slane %v4936, 5
      %v4962 = vsel %vm4764, %v4961, %v4960
      %v4963 = vrot.slane %v4937, 4
      %v4964 = vsel %vm4767, %v4963, %v4962
      %v4965 = vrot.slane %v4938, 3
      %v4966 = vsel %vm4770, %v4965, %v4964
      %v4967 = vrot.slane %v4939, 2
      %v4968 = vsel %vm4773, %v4967, %v4966
      %v4969 = vrot.slane %v4940, 1
      %v4970 = vsel %vm4776, %v4969, %v4968
      %v4971 = vrot.slane %v4942, 7
      %v4972 = vsel %vm4758, %v4971, %v4941
      %v4973 = vrot.slane %v4943, 6
      %v4974 = vsel %vm4761, %v4973, %v4972
      %v4975 = vrot.slane %v4944, 5
      %v4976 = vsel %vm4764, %v4975, %v4974
      %s4979 = scalar_lea.vmem [#allocation5], 32
      %4980 = vst [vmem:[%s4979] sm:$0xff] %v4970
      %4981 = vst [vmem:[%s4979 + $0x8] sm:$0xf] %v4976
      %v4982 = vld [vmem:[#allocation4 + $0x8] sm:$0x1]
      %v4983 = vld [vmem:[#allocation4 + $0x20] sm:$0x1]
      %v4984 = vld [vmem:[#allocation4 + $0x38] sm:$0x1]
      %v4985 = vld [vmem:[#allocation4 + $0x50] sm:$0x1]
      %v4986 = vld [vmem:[#allocation4 + $0x68] sm:$0x1]
      %v4987 = vld [vmem:[#allocation4 + $0x80] sm:$0x1]
      %v4988 = vld [vmem:[#allocation4 + $0x98] sm:$0x1]
      %v4989 = vld [vmem:[#allocation4 + $0xb0] sm:$0x1]
      %v4990 = vld [vmem:[#allocation4 + $0xc8] sm:$0x1]
      %v4991 = vld [vmem:[#allocation4 + $0xe0] sm:$0x1]
      %v4992 = vld [vmem:[#allocation4 + $0xf8] sm:$0x1]
      %v4993 = vld [vmem:[#allocation4 + $0x110] sm:$0x1]
      %v4994 = vmax.f32 %v4982, 0.0
      %v4995 = vmax.f32 %v4983, 0.0
      %v4996 = vmax.f32 %v4984, 0.0
      %v4997 = vmax.f32 %v4985, 0.0
      %v4998 = vmax.f32 %v4986, 0.0
      %v4999 = vmax.f32 %v4987, 0.0
      %v5000 = vmax.f32 %v4988, 0.0
      %v5001 = vmax.f32 %v4989, 0.0
      %v5002 = vmax.f32 %v4990, 0.0
      %v5003 = vmax.f32 %v4991, 0.0
      %v5004 = vmax.f32 %v4992, 0.0
      %v5005 = vmax.f32 %v4993, 0.0
      %v5006 = vld [vmem:[#allocation4 + $0x9] sm:$0x1]
      %v5007 = vld [vmem:[#allocation4 + $0x21] sm:$0x1]
      %v5008 = vld [vmem:[#allocation4 + $0x39] sm:$0x1]
      %v5009 = vld [vmem:[#allocation4 + $0x51] sm:$0x1]
      %v5010 = vld [vmem:[#allocation4 + $0x69] sm:$0x1]
      %v5011 = vld [vmem:[#allocation4 + $0x81] sm:$0x1]
      %v5012 = vld [vmem:[#allocation4 + $0x99] sm:$0x1]
      %v5013 = vld [vmem:[#allocation4 + $0xb1] sm:$0x1]
      %v5014 = vld [vmem:[#allocation4 + $0xc9] sm:$0x1]
      %v5015 = vld [vmem:[#allocation4 + $0xe1] sm:$0x1]
      %v5016 = vld [vmem:[#allocation4 + $0xf9] sm:$0x1]
      %v5017 = vld [vmem:[#allocation4 + $0x111] sm:$0x1]
      %v5018 = vmax.f32 %v5006, 0.0
      %v5019 = vmax.f32 %v5007, 0.0
      %v5020 = vmax.f32 %v5008, 0.0
      %v5021 = vmax.f32 %v5009, 0.0
      %v5022 = vmax.f32 %v5010, 0.0
      %v5023 = vmax.f32 %v5011, 0.0
      %v5024 = vmax.f32 %v5012, 0.0
      %v5025 = vmax.f32 %v5013, 0.0
      %v5026 = vmax.f32 %v5014, 0.0
      %v5027 = vmax.f32 %v5015, 0.0
      %v5028 = vmax.f32 %v5016, 0.0
      %v5029 = vmax.f32 %v5017, 0.0
      %v5030 = vmax.f32 %v4994, %v5018
      %v5031 = vmax.f32 %v4995, %v5019
      %v5032 = vmax.f32 %v4996, %v5020
      %v5033 = vmax.f32 %v4997, %v5021
      %v5034 = vmax.f32 %v4998, %v5022
      %v5035 = vmax.f32 %v4999, %v5023
      %v5036 = vmax.f32 %v5000, %v5024
      %v5037 = vmax.f32 %v5001, %v5025
      %v5038 = vmax.f32 %v5002, %v5026
      %v5039 = vmax.f32 %v5003, %v5027
      %v5040 = vmax.f32 %v5004, %v5028
      %v5041 = vmax.f32 %v5005, %v5029
      %v5054 = vrot.slane %v5031, 7
      %v5055 = vsel %vm4758, %v5054, %v5030
      %v5056 = vrot.slane %v5032, 6
      %v5057 = vsel %vm4761, %v5056, %v5055
      %v5058 = vrot.slane %v5033, 5
      %v5059 = vsel %vm4764, %v5058, %v5057
      %v5060 = vrot.slane %v5034, 4
      %v5061 = vsel %vm4767, %v5060, %v5059
      %v5062 = vrot.slane %v5035, 3
      %v5063 = vsel %vm4770, %v5062, %v5061
      %v5064 = vrot.slane %v5036, 2
      %v5065 = vsel %vm4773, %v5064, %v5063
      %v5066 = vrot.slane %v5037, 1
      %v5067 = vsel %vm4776, %v5066, %v5065
      %v5068 = vrot.slane %v5039, 7
      %v5069 = vsel %vm4758, %v5068, %v5038
      %v5070 = vrot.slane %v5040, 6
      %v5071 = vsel %vm4761, %v5070, %v5069
      %v5072 = vrot.slane %v5041, 5
      %v5073 = vsel %vm4764, %v5072, %v5071
      %s5076 = scalar_lea.vmem [#allocation5], 48
      %5077 = vst [vmem:[%s5076] sm:$0xff] %v5067
      %5078 = vst [vmem:[%s5076 + $0x8] sm:$0xf] %v5073
      %v5079 = vld [vmem:[#allocation4 + $0xa] sm:$0x1]
      %v5080 = vld [vmem:[#allocation4 + $0x22] sm:$0x1]
      %v5081 = vld [vmem:[#allocation4 + $0x3a] sm:$0x1]
      %v5082 = vld [vmem:[#allocation4 + $0x52] sm:$0x1]
      %v5083 = vld [vmem:[#allocation4 + $0x6a] sm:$0x1]
      %v5084 = vld [vmem:[#allocation4 + $0x82] sm:$0x1]
      %v5085 = vld [vmem:[#allocation4 + $0x9a] sm:$0x1]
      %v5086 = vld [vmem:[#allocation4 + $0xb2] sm:$0x1]
      %v5087 = vld [vmem:[#allocation4 + $0xca] sm:$0x1]
      %v5088 = vld [vmem:[#allocation4 + $0xe2] sm:$0x1]
      %v5089 = vld [vmem:[#allocation4 + $0xfa] sm:$0x1]
      %v5090 = vld [vmem:[#allocation4 + $0x112] sm:$0x1]
      %v5091 = vmax.f32 %v5079, 0.0
      %v5092 = vmax.f32 %v5080, 0.0
      %v5093 = vmax.f32 %v5081, 0.0
      %v5094 = vmax.f32 %v5082, 0.0
      %v5095 = vmax.f32 %v5083, 0.0
      %v5096 = vmax.f32 %v5084, 0.0
      %v5097 = vmax.f32 %v5085, 0.0
      %v5098 = vmax.f32 %v5086, 0.0
      %v5099 = vmax.f32 %v5087, 0.0
      %v5100 = vmax.f32 %v5088, 0.0
      %v5101 = vmax.f32 %v5089, 0.0
      %v5102 = vmax.f32 %v5090, 0.0
      %v5103 = vld [vmem:[#allocation4 + $0xb] sm:$0x1]
      %v5104 = vld [vmem:[#allocation4 + $0x23] sm:$0x1]
      %v5105 = vld [vmem:[#allocation4 + $0x3b] sm:$0x1]
      %v5106 = vld [vmem:[#allocation4 + $0x53] sm:$0x1]
      %v5107 = vld [vmem:[#allocation4 + $0x6b] sm:$0x1]
      %v5108 = vld [vmem:[#allocation4 + $0x83] sm:$0x1]
      %v5109 = vld [vmem:[#allocation4 + $0x9b] sm:$0x1]
      %v5110 = vld [vmem:[#allocation4 + $0xb3] sm:$0x1]
      %v5111 = vld [vmem:[#allocation4 + $0xcb] sm:$0x1]
      %v5112 = vld [vmem:[#allocation4 + $0xe3] sm:$0x1]
      %v5113 = vld [vmem:[#allocation4 + $0xfb] sm:$0x1]
      %v5114 = vld [vmem:[#allocation4 + $0x113] sm:$0x1]
      %v5115 = vmax.f32 %v5103, 0.0
      %v5116 = vmax.f32 %v5104, 0.0
      %v5117 = vmax.f32 %v5105, 0.0
      %v5118 = vmax.f32 %v5106, 0.0
      %v5119 = vmax.f32 %v5107, 0.0
      %v5120 = vmax.f32 %v5108, 0.0
      %v5121 = vmax.f32 %v5109, 0.0
      %v5122 = vmax.f32 %v5110, 0.0
      %v5123 = vmax.f32 %v5111, 0.0
      %v5124 = vmax.f32 %v5112, 0.0
      %v5125 = vmax.f32 %v5113, 0.0
      %v5126 = vmax.f32 %v5114, 0.0
      %v5127 = vmax.f32 %v5091, %v5115
      %v5128 = vmax.f32 %v5092, %v5116
      %v5129 = vmax.f32 %v5093, %v5117
      %v5130 = vmax.f32 %v5094, %v5118
      %v5131 = vmax.f32 %v5095, %v5119
      %v5132 = vmax.f32 %v5096, %v5120
      %v5133 = vmax.f32 %v5097, %v5121
      %v5134 = vmax.f32 %v5098, %v5122
      %v5135 = vmax.f32 %v5099, %v5123
      %v5136 = vmax.f32 %v5100, %v5124
      %v5137 = vmax.f32 %v5101, %v5125
      %v5138 = vmax.f32 %v5102, %v5126
      %v5151 = vrot.slane %v5128, 7
      %v5152 = vsel %vm4758, %v5151, %v5127
      %v5153 = vrot.slane %v5129, 6
      %v5154 = vsel %vm4761, %v5153, %v5152
      %v5155 = vrot.slane %v5130, 5
      %v5156 = vsel %vm4764, %v5155, %v5154
      %v5157 = vrot.slane %v5131, 4
      %v5158 = vsel %vm4767, %v5157, %v5156
      %v5159 = vrot.slane %v5132, 3
      %v5160 = vsel %vm4770, %v5159, %v5158
      %v5161 = vrot.slane %v5133, 2
      %v5162 = vsel %vm4773, %v5161, %v5160
      %v5163 = vrot.slane %v5134, 1
      %v5164 = vsel %vm4776, %v5163, %v5162
      %v5165 = vrot.slane %v5136, 7
      %v5166 = vsel %vm4758, %v5165, %v5135
      %v5167 = vrot.slane %v5137, 6
      %v5168 = vsel %vm4761, %v5167, %v5166
      %v5169 = vrot.slane %v5138, 5
      %v5170 = vsel %vm4764, %v5169, %v5168
      %s5173 = scalar_lea.vmem [#allocation5], 64
      %5174 = vst [vmem:[%s5173] sm:$0xff] %v5164
      %5175 = vst [vmem:[%s5173 + $0x8] sm:$0xf] %v5170
      %v5176 = vld [vmem:[#allocation4 + $0xc] sm:$0x1]
      %v5177 = vld [vmem:[#allocation4 + $0x24] sm:$0x1]
      %v5178 = vld [vmem:[#allocation4 + $0x3c] sm:$0x1]
      %v5179 = vld [vmem:[#allocation4 + $0x54] sm:$0x1]
      %v5180 = vld [vmem:[#allocation4 + $0x6c] sm:$0x1]
      %v5181 = vld [vmem:[#allocation4 + $0x84] sm:$0x1]
      %v5182 = vld [vmem:[#allocation4 + $0x9c] sm:$0x1]
      %v5183 = vld [vmem:[#allocation4 + $0xb4] sm:$0x1]
      %v5184 = vld [vmem:[#allocation4 + $0xcc] sm:$0x1]
      %v5185 = vld [vmem:[#allocation4 + $0xe4] sm:$0x1]
      %v5186 = vld [vmem:[#allocation4 + $0xfc] sm:$0x1]
      %v5187 = vld [vmem:[#allocation4 + $0x114] sm:$0x1]
      %v5188 = vmax.f32 %v5176, 0.0
      %v5189 = vmax.f32 %v5177, 0.0
      %v5190 = vmax.f32 %v5178, 0.0
      %v5191 = vmax.f32 %v5179, 0.0
      %v5192 = vmax.f32 %v5180, 0.0
      %v5193 = vmax.f32 %v5181, 0.0
      %v5194 = vmax.f32 %v5182, 0.0
      %v5195 = vmax.f32 %v5183, 0.0
      %v5196 = vmax.f32 %v5184, 0.0
      %v5197 = vmax.f32 %v5185, 0.0
      %v5198 = vmax.f32 %v5186, 0.0
      %v5199 = vmax.f32 %v5187, 0.0
      %v5200 = vld [vmem:[#allocation4 + $0xd] sm:$0x1]
      %v5201 = vld [vmem:[#allocation4 + $0x25] sm:$0x1]
      %v5202 = vld [vmem:[#allocation4 + $0x3d] sm:$0x1]
      %v5203 = vld [vmem:[#allocation4 + $0x55] sm:$0x1]
      %v5204 = vld [vmem:[#allocation4 + $0x6d] sm:$0x1]
      %v5205 = vld [vmem:[#allocation4 + $0x85] sm:$0x1]
      %v5206 = vld [vmem:[#allocation4 + $0x9d] sm:$0x1]
      %v5207 = vld [vmem:[#allocation4 + $0xb5] sm:$0x1]
      %v5208 = vld [vmem:[#allocation4 + $0xcd] sm:$0x1]
      %v5209 = vld [vmem:[#allocation4 + $0xe5] sm:$0x1]
      %v5210 = vld [vmem:[#allocation4 + $0xfd] sm:$0x1]
      %v5211 = vld [vmem:[#allocation4 + $0x115] sm:$0x1]
      %v5212 = vmax.f32 %v5200, 0.0
      %v5213 = vmax.f32 %v5201, 0.0
      %v5214 = vmax.f32 %v5202, 0.0
      %v5215 = vmax.f32 %v5203, 0.0
      %v5216 = vmax.f32 %v5204, 0.0
      %v5217 = vmax.f32 %v5205, 0.0
      %v5218 = vmax.f32 %v5206, 0.0
      %v5219 = vmax.f32 %v5207, 0.0
      %v5220 = vmax.f32 %v5208, 0.0
      %v5221 = vmax.f32 %v5209, 0.0
      %v5222 = vmax.f32 %v5210, 0.0
      %v5223 = vmax.f32 %v5211, 0.0
      %v5224 = vmax.f32 %v5188, %v5212
      %v5225 = vmax.f32 %v5189, %v5213
      %v5226 = vmax.f32 %v5190, %v5214
      %v5227 = vmax.f32 %v5191, %v5215
      %v5228 = vmax.f32 %v5192, %v5216
      %v5229 = vmax.f32 %v5193, %v5217
      %v5230 = vmax.f32 %v5194, %v5218
      %v5231 = vmax.f32 %v5195, %v5219
      %v5232 = vmax.f32 %v5196, %v5220
      %v5233 = vmax.f32 %v5197, %v5221
      %v5234 = vmax.f32 %v5198, %v5222
      %v5235 = vmax.f32 %v5199, %v5223
      %v5248 = vrot.slane %v5225, 7
      %v5249 = vsel %vm4758, %v5248, %v5224
      %v5250 = vrot.slane %v5226, 6
      %v5251 = vsel %vm4761, %v5250, %v5249
      %v5252 = vrot.slane %v5227, 5
      %v5253 = vsel %vm4764, %v5252, %v5251
      %v5254 = vrot.slane %v5228, 4
      %v5255 = vsel %vm4767, %v5254, %v5253
      %v5256 = vrot.slane %v5229, 3
      %v5257 = vsel %vm4770, %v5256, %v5255
      %v5258 = vrot.slane %v5230, 2
      %v5259 = vsel %vm4773, %v5258, %v5257
      %v5260 = vrot.slane %v5231, 1
      %v5261 = vsel %vm4776, %v5260, %v5259
      %v5262 = vrot.slane %v5233, 7
      %v5263 = vsel %vm4758, %v5262, %v5232
      %v5264 = vrot.slane %v5234, 6
      %v5265 = vsel %vm4761, %v5264, %v5263
      %v5266 = vrot.slane %v5235, 5
      %v5267 = vsel %vm4764, %v5266, %v5265
      %s5270 = scalar_lea.vmem [#allocation5], 80
      %5271 = vst [vmem:[%s5270] sm:$0xff] %v5261
      %5272 = vst [vmem:[%s5270 + $0x8] sm:$0xf] %v5267
      %v5273 = vld [vmem:[#allocation5] sm:$0x1]
      %v5274 = vld [vmem:[#allocation5 + $0x10] sm:$0x1]
      %v5275 = vld [vmem:[#allocation5 + $0x20] sm:$0x1]
      %v5276 = vld [vmem:[#allocation5 + $0x30] sm:$0x1]
      %v5277 = vld [vmem:[#allocation5 + $0x40] sm:$0x1]
      %v5278 = vld [vmem:[#allocation5 + $0x50] sm:$0x1]
      %v5279 = vld [vmem:[#allocation5 + $0x1] sm:$0x1]
      %v5280 = vld [vmem:[#allocation5 + $0x11] sm:$0x1]
      %v5281 = vld [vmem:[#allocation5 + $0x21] sm:$0x1]
      %v5282 = vld [vmem:[#allocation5 + $0x31] sm:$0x1]
      %v5283 = vld [vmem:[#allocation5 + $0x41] sm:$0x1]
      %v5284 = vld [vmem:[#allocation5 + $0x51] sm:$0x1]
      %v5285 = vmax.f32 %v5273, %v5279
      %v5286 = vmax.f32 %v5274, %v5280
      %v5287 = vmax.f32 %v5275, %v5281
      %v5288 = vmax.f32 %v5276, %v5282
      %v5289 = vmax.f32 %v5277, %v5283
      %v5290 = vmax.f32 %v5278, %v5284
      %v5297 = vrot.slane %v5286, 7
      %v5298 = vsel %vm4758, %v5297, %v5285
      %v5299 = vrot.slane %v5287, 6
      %v5300 = vsel %vm4761, %v5299, %v5298
      %v5301 = vrot.slane %v5288, 5
      %v5302 = vsel %vm4764, %v5301, %v5300
      %v5303 = vrot.slane %v5289, 4
      %v5304 = vsel %vm4767, %v5303, %v5302
      %v5305 = vrot.slane %v5290, 3
      %v5306 = vsel %vm4770, %v5305, %v5304
      %5308 = vst [vmem:[%s170] sm:$0x3f] %v5306
      %v5309 = vld [vmem:[#allocation5 + $0x2] sm:$0x1]
      %v5310 = vld [vmem:[#allocation5 + $0x12] sm:$0x1]
      %v5311 = vld [vmem:[#allocation5 + $0x22] sm:$0x1]
      %v5312 = vld [vmem:[#allocation5 + $0x32] sm:$0x1]
      %v5313 = vld [vmem:[#allocation5 + $0x42] sm:$0x1]
      %v5314 = vld [vmem:[#allocation5 + $0x52] sm:$0x1]
      %v5315 = vld [vmem:[#allocation5 + $0x3] sm:$0x1]
      %v5316 = vld [vmem:[#allocation5 + $0x13] sm:$0x1]
      %v5317 = vld [vmem:[#allocation5 + $0x23] sm:$0x1]
      %v5318 = vld [vmem:[#allocation5 + $0x33] sm:$0x1]
      %v5319 = vld [vmem:[#allocation5 + $0x43] sm:$0x1]
      %v5320 = vld [vmem:[#allocation5 + $0x53] sm:$0x1]
      %v5321 = vmax.f32 %v5309, %v5315
      %v5322 = vmax.f32 %v5310, %v5316
      %v5323 = vmax.f32 %v5311, %v5317
      %v5324 = vmax.f32 %v5312, %v5318
      %v5325 = vmax.f32 %v5313, %v5319
      %v5326 = vmax.f32 %v5314, %v5320
      %v5333 = vrot.slane %v5322, 7
      %v5334 = vsel %vm4758, %v5333, %v5321
      %v5335 = vrot.slane %v5323, 6
      %v5336 = vsel %vm4761, %v5335, %v5334
      %v5337 = vrot.slane %v5324, 5
      %v5338 = vsel %vm4764, %v5337, %v5336
      %v5339 = vrot.slane %v5325, 4
      %v5340 = vsel %vm4767, %v5339, %v5338
      %v5341 = vrot.slane %v5326, 3
      %v5342 = vsel %vm4770, %v5341, %v5340
      %s5344 = scalar_lea.vmem %s170, 8
      %5345 = vst [vmem:[%s5344] sm:$0x3f] %v5342
      %v5346 = vld [vmem:[#allocation5 + $0x4] sm:$0x1]
      %v5347 = vld [vmem:[#allocation5 + $0x14] sm:$0x1]
      %v5348 = vld [vmem:[#allocation5 + $0x24] sm:$0x1]
      %v5349 = vld [vmem:[#allocation5 + $0x34] sm:$0x1]
      %v5350 = vld [vmem:[#allocation5 + $0x44] sm:$0x1]
      %v5351 = vld [vmem:[#allocation5 + $0x54] sm:$0x1]
      %v5352 = vld [vmem:[#allocation5 + $0x5] sm:$0x1]
      %v5353 = vld [vmem:[#allocation5 + $0x15] sm:$0x1]
      %v5354 = vld [vmem:[#allocation5 + $0x25] sm:$0x1]
      %v5355 = vld [vmem:[#allocation5 + $0x35] sm:$0x1]
      %v5356 = vld [vmem:[#allocation5 + $0x45] sm:$0x1]
      %v5357 = vld [vmem:[#allocation5 + $0x55] sm:$0x1]
      %v5358 = vmax.f32 %v5346, %v5352
      %v5359 = vmax.f32 %v5347, %v5353
      %v5360 = vmax.f32 %v5348, %v5354
      %v5361 = vmax.f32 %v5349, %v5355
      %v5362 = vmax.f32 %v5350, %v5356
      %v5363 = vmax.f32 %v5351, %v5357
      %v5370 = vrot.slane %v5359, 7
      %v5371 = vsel %vm4758, %v5370, %v5358
      %v5372 = vrot.slane %v5360, 6
      %v5373 = vsel %vm4761, %v5372, %v5371
      %v5374 = vrot.slane %v5361, 5
      %v5375 = vsel %vm4764, %v5374, %v5373
      %v5376 = vrot.slane %v5362, 4
      %v5377 = vsel %vm4767, %v5376, %v5375
      %v5378 = vrot.slane %v5363, 3
      %v5379 = vsel %vm4770, %v5378, %v5377
      %s5381 = scalar_lea.vmem %s170, 16
      %5382 = vst [vmem:[%s5381] sm:$0x3f] %v5379
      %v5383 = vld [vmem:[#allocation5 + $0x6] sm:$0x1]
      %v5384 = vld [vmem:[#allocation5 + $0x16] sm:$0x1]
      %v5385 = vld [vmem:[#allocation5 + $0x26] sm:$0x1]
      %v5386 = vld [vmem:[#allocation5 + $0x36] sm:$0x1]
      %v5387 = vld [vmem:[#allocation5 + $0x46] sm:$0x1]
      %v5388 = vld [vmem:[#allocation5 + $0x56] sm:$0x1]
      %v5389 = vld [vmem:[#allocation5 + $0x7] sm:$0x1]
      %v5390 = vld [vmem:[#allocation5 + $0x17] sm:$0x1]
      %v5391 = vld [vmem:[#allocation5 + $0x27] sm:$0x1]
      %v5392 = vld [vmem:[#allocation5 + $0x37] sm:$0x1]
      %v5393 = vld [vmem:[#allocation5 + $0x47] sm:$0x1]
      %v5394 = vld [vmem:[#allocation5 + $0x57] sm:$0x1]
      %v5395 = vmax.f32 %v5383, %v5389
      %v5396 = vmax.f32 %v5384, %v5390
      %v5397 = vmax.f32 %v5385, %v5391
      %v5398 = vmax.f32 %v5386, %v5392
      %v5399 = vmax.f32 %v5387, %v5393
      %v5400 = vmax.f32 %v5388, %v5394
      %v5407 = vrot.slane %v5396, 7
      %v5408 = vsel %vm4758, %v5407, %v5395
      %v5409 = vrot.slane %v5397, 6
      %v5410 = vsel %vm4761, %v5409, %v5408
      %v5411 = vrot.slane %v5398, 5
      %v5412 = vsel %vm4764, %v5411, %v5410
      %v5413 = vrot.slane %v5399, 4
      %v5414 = vsel %vm4767, %v5413, %v5412
      %v5415 = vrot.slane %v5400, 3
      %v5416 = vsel %vm4770, %v5415, %v5414
      %s5418 = scalar_lea.vmem %s170, 24
      %5419 = vst [vmem:[%s5418] sm:$0x3f] %v5416
      %v5420 = vld [vmem:[#allocation5 + $0x8] sm:$0x1]
      %v5421 = vld [vmem:[#allocation5 + $0x18] sm:$0x1]
      %v5422 = vld [vmem:[#allocation5 + $0x28] sm:$0x1]
      %v5423 = vld [vmem:[#allocation5 + $0x38] sm:$0x1]
      %v5424 = vld [vmem:[#allocation5 + $0x48] sm:$0x1]
      %v5425 = vld [vmem:[#allocation5 + $0x58] sm:$0x1]
      %v5426 = vld [vmem:[#allocation5 + $0x9] sm:$0x1]
      %v5427 = vld [vmem:[#allocation5 + $0x19] sm:$0x1]
      %v5428 = vld [vmem:[#allocation5 + $0x29] sm:$0x1]
      %v5429 = vld [vmem:[#allocation5 + $0x39] sm:$0x1]
      %v5430 = vld [vmem:[#allocation5 + $0x49] sm:$0x1]
      %v5431 = vld [vmem:[#allocation5 + $0x59] sm:$0x1]
      %v5432 = vmax.f32 %v5420, %v5426
      %v5433 = vmax.f32 %v5421, %v5427
      %v5434 = vmax.f32 %v5422, %v5428
      %v5435 = vmax.f32 %v5423, %v5429
      %v5436 = vmax.f32 %v5424, %v5430
      %v5437 = vmax.f32 %v5425, %v5431
      %v5444 = vrot.slane %v5433, 7
      %v5445 = vsel %vm4758, %v5444, %v5432
      %v5446 = vrot.slane %v5434, 6
      %v5447 = vsel %vm4761, %v5446, %v5445
      %v5448 = vrot.slane %v5435, 5
      %v5449 = vsel %vm4764, %v5448, %v5447
      %v5450 = vrot.slane %v5436, 4
      %v5451 = vsel %vm4767, %v5450, %v5449
      %v5452 = vrot.slane %v5437, 3
      %v5453 = vsel %vm4770, %v5452, %v5451
      %s5455 = scalar_lea.vmem %s170, 32
      %5456 = vst [vmem:[%s5455] sm:$0x3f] %v5453
      %v5457 = vld [vmem:[#allocation5 + $0xa] sm:$0x1]
      %v5458 = vld [vmem:[#allocation5 + $0x1a] sm:$0x1]
      %v5459 = vld [vmem:[#allocation5 + $0x2a] sm:$0x1]
      %v5460 = vld [vmem:[#allocation5 + $0x3a] sm:$0x1]
      %v5461 = vld [vmem:[#allocation5 + $0x4a] sm:$0x1]
      %v5462 = vld [vmem:[#allocation5 + $0x5a] sm:$0x1]
      %v5463 = vld [vmem:[#allocation5 + $0xb] sm:$0x1]
      %v5464 = vld [vmem:[#allocation5 + $0x1b] sm:$0x1]
      %v5465 = vld [vmem:[#allocation5 + $0x2b] sm:$0x1]
      %v5466 = vld [vmem:[#allocation5 + $0x3b] sm:$0x1]
      %v5467 = vld [vmem:[#allocation5 + $0x4b] sm:$0x1]
      %v5468 = vld [vmem:[#allocation5 + $0x5b] sm:$0x1]
      %v5469 = vmax.f32 %v5457, %v5463
      %v5470 = vmax.f32 %v5458, %v5464
      %v5471 = vmax.f32 %v5459, %v5465
      %v5472 = vmax.f32 %v5460, %v5466
      %v5473 = vmax.f32 %v5461, %v5467
      %v5474 = vmax.f32 %v5462, %v5468
      %v5481 = vrot.slane %v5470, 7
      %v5482 = vsel %vm4758, %v5481, %v5469
      %v5483 = vrot.slane %v5471, 6
      %v5484 = vsel %vm4761, %v5483, %v5482
      %v5485 = vrot.slane %v5472, 5
      %v5486 = vsel %vm4764, %v5485, %v5484
      %v5487 = vrot.slane %v5473, 4
      %v5488 = vsel %vm4767, %v5487, %v5486
      %v5489 = vrot.slane %v5474, 3
      %v5490 = vsel %vm4770, %v5489, %v5488
      %s5492 = scalar_lea.vmem %s170, 40
      %5493 = vst [vmem:[%s5492] sm:$0x3f] %v5490
      %p5494 = scmp.lt.s32.totalorder %s14, 1
      %s5495 = scalar_select %p5494, %s14, 1
      %s5496 = smul.addr %s5495, 6
      %s5497 = smul.addr %s5496, 8
      %s5498 = scalar_lea.vmem %s3, %s5497
      // Predicated region
      $region33: #{conv_block_forward.1} parent=31 // pred_check
        %p5499 = pneg %p100
      $region34: #{conv_block_forward.1} parent=31 // pred_check_branch
        %5501 = sbr.rel (%p5499) target = $region36
      $region35: #{conv_block_forward.1} parent=31 // pred_region
        _
      $region36: #{conv_block_forward.1} parent=31 // pred_fallthru
        _
    $region32: #{conv_block_forward.1} parent=5 // pred_fallthru
      _
    %p5502 = scmp.le.s32.totalorder 2, %s9
    // Predicated region
    $region37: #{conv_block_forward.1} parent=5 // pred_check
      %p5503 = pneg %p5502
    $region38: #{conv_block_forward.1} parent=5 // pred_check_branch
      %5505 = sbr.rel (%p5503) target = $region40
    $region39: #{conv_block_forward.1} parent=5 // pred_region
      %s5506 = ssub.s32 %s9, 2
      // Predicated region
      $region41: #{conv_block_forward.1} parent=39 // pred_check
        %p5507 = pneg %p106
      $region42: #{conv_block_forward.1} parent=39 // pred_check_branch
        %5509 = sbr.rel (%p5507) target = $region44
      $region43: #{conv_block_forward.1} parent=39 // pred_region
        %p5510 = scmp.lt.s32.totalorder %s15, 1
        %s5511 = scalar_select %p5510, %s15, 1
        %s5512 = smul.addr %s5511, 6
        %s5513 = smul.addr %s5512, 8
        %s5514 = scalar_lea.vmem %s3, %s5513
      $region44: #{conv_block_forward.1} parent=39 // pred_fallthru
        _
    $region40: #{conv_block_forward.1} parent=5 // pred_fallthru
      _
  $region6: #{conv_block_forward.1} parent=0 // loop_footer
    %s13 = sadd.s32 1, %s9
  $region7: #{conv_block_forward.1} parent=0 // loop_footer_branch
    %8 = sbr.rel target = $region3
  $region8: #{conv_block_forward.1} parent=0 // loop_exit
    _

</llo_original>
